<compile_context>
chip_gen: v5e
topology: v5e:2x2
jax: 0.10.0
libtpu: 0.0.40
codegen_flags: <defaults>
</compile_context>

<pallas_src>
import jax
import jax.numpy as jnp
import numpy as np
from jax import lax
from jax.experimental import pallas as pl
from jax.experimental.pallas import tpu as pltpu

LANES = 128   # TPU vreg lane width; channel-padding target


def _make_resblock_kernel(H, W, Cp):
    HW = H * W

    def conv3x3(shin_ref, w_ref):
        # 9 accumulated K=Cp tap matmuls; every tap LHS is a free leading-dim slice.
        acc = jnp.zeros((HW, Cp), jnp.float32)
        for kh in range(3):
            for kw in range(3):
                lhs = shin_ref[kw, kh:kh + H].reshape(HW, Cp)       # bf16 (HW, Cp)
                acc = acc + jnp.dot(lhs, w_ref[kh * 3 + kw],
                                    preferred_element_type=jnp.float32)
        return acc

    def kernel(x_ref, xc_ref, w1_ref, s1_ref, b1_ref, w2_ref, s2_ref, b2_ref,
               o_ref, shin_ref):
        # x_ref : (1, H+2, W+2, Cp) bf16, spatially pre-padded for conv1
        # xc_ref: (1, H, W, Cp) f32, aligned unpadded center (residual)
        # w*_ref: (9, Cp, Cp) bf16; s*/b*_ref: (1, Cp) f32 (folded BN affine)
        # shin_ref: (3, H+2, W, Cp) bf16 scratch, the 3 kw-shifted conv-input copies

        # ---- conv1 input: 3 kw-shifted bf16 copies (2 sublane-shifted loads) ----
        shin_ref[0] = x_ref[0, :, 0:W, :]
        shin_ref[1] = x_ref[0, :, 1:W + 1, :]
        shin_ref[2] = x_ref[0, :, 2:W + 2, :]

        acc1 = conv3x3(shin_ref, w1_ref)
        y1 = jnp.maximum(acc1 * s1_ref[...] + b1_ref[...], 0.0)    # BN1 + ReLU, f32
        y1b = y1.astype(jnp.bfloat16).reshape(H, W, Cp)            # single bf16 cast

        # ---- conv2 input: restage y1 (zero-bordered SAME pad) as 3 kw-shifts ----
        shin_ref[:, 0:1] = jnp.zeros((3, 1, W, Cp), jnp.bfloat16)          # top row
        shin_ref[:, H + 1:H + 2] = jnp.zeros((3, 1, W, Cp), jnp.bfloat16)  # bottom row
        shin_ref[1, 1:1 + H] = y1b                                         # centered
        shin_ref[0, 1:1 + H, 0:1] = jnp.zeros((H, 1, Cp), jnp.bfloat16)
        shin_ref[0, 1:1 + H, 1:W] = y1b[:, 0:W - 1, :]                     # kw=0 shift
        shin_ref[2, 1:1 + H, 0:W - 1] = y1b[:, 1:W, :]                     # kw=2 shift
        shin_ref[2, 1:1 + H, W - 1:W] = jnp.zeros((H, 1, Cp), jnp.bfloat16)

        acc2 = conv3x3(shin_ref, w2_ref)
        y2 = acc2 * s2_ref[...] + b2_ref[...]                       # BN2 (folded)

        # identity shortcut in f32 (aligned block) + final ReLU
        resid = xc_ref[0].reshape(HW, Cp)
        o_ref[0] = jnp.maximum(y2 + resid, 0.0).reshape(H, W, Cp)

    return kernel


def _vmem_limit_bytes():
    try:
        kind = jax.devices()[0].device_kind.lower()
    except Exception:
        kind = ""
    if "v7" in kind or "7x" in kind:
        return 48 * 1024 * 1024     # v7x: 64 MiB physical VMEM per TensorCore
    return 64 * 1024 * 1024         # v5e/v6e: 128 MiB physical


@jax.jit
def residual_block_pallas(x_nchw, w1, s1, b1, w2, s2, b2):
    """x_nchw: (N,C,H,W) f32; w*: (3,3,Cin,Cout) HWIO; s*/b*: folded BN per-channel."""
    x = jnp.transpose(x_nchw, (0, 2, 3, 1)).astype(jnp.float32)    # NCHW -> NHWC
    N, H, W, C = x.shape
    Cout = w1.shape[-1]
    assert C == Cout, "example covers the identity-shortcut branch"
    Cp = ((C + LANES - 1) // LANES) * LANES                        # lane-dense channels

    # channel-padded f32 center (aligned residual) + bf16 spatially-padded conv input
    xc = jnp.pad(x, ((0, 0), (0, 0), (0, 0), (0, Cp - C)))
    x_pad = jnp.pad(x, ((0, 0), (1, 1), (1, 1), (0, Cp - C))).astype(jnp.bfloat16)

    def prep_w(w):   # (3,3,C,C) HWIO -> (9, Cp, Cp) bf16, one dense tap matrix per row
        wp = jnp.pad(w, ((0, 0), (0, 0), (0, Cp - C), (0, Cp - C)))
        return wp.reshape(9, Cp, Cp).astype(jnp.bfloat16)

    def prep_v(v):   # per-channel scale/bias -> (1, Cp) f32, zero-padded channels
        return jnp.pad(v.reshape(-1), (0, Cp - C)).reshape(1, Cp).astype(jnp.float32)

    w1p, w2p = prep_w(w1), prep_w(w2)
    s1p, b1p, s2p, b2p = prep_v(s1), prep_v(b1), prep_v(s2), prep_v(b2)

    out_nhwc = pl.pallas_call(
        _make_resblock_kernel(H, W, Cp),
        out_shape=jax.ShapeDtypeStruct((N, H, W, Cp), jnp.float32),
        grid_spec=pltpu.PrefetchScalarGridSpec(
            num_scalar_prefetch=0,
            grid=(N,),
            in_specs=[
                pl.BlockSpec((1, H + 2, W + 2, Cp), lambda n: (n, 0, 0, 0)),
                pl.BlockSpec((1, H, W, Cp),         lambda n: (n, 0, 0, 0)),
                pl.BlockSpec((9, Cp, Cp),           lambda n: (0, 0, 0)),
                pl.BlockSpec((1, Cp),               lambda n: (0, 0)),
                pl.BlockSpec((1, Cp),               lambda n: (0, 0)),
                pl.BlockSpec((9, Cp, Cp),           lambda n: (0, 0, 0)),
                pl.BlockSpec((1, Cp),               lambda n: (0, 0)),
                pl.BlockSpec((1, Cp),               lambda n: (0, 0)),
            ],
            out_specs=pl.BlockSpec((1, H, W, Cp), lambda n: (n, 0, 0, 0)),
            scratch_shapes=[
                pltpu.VMEM((3, H + 2, W, Cp), jnp.bfloat16),   # kw-shifted conv input
            ],
        ),
        compiler_params=pltpu.CompilerParams(
            dimension_semantics=("parallel",),
            vmem_limit_bytes=_vmem_limit_bytes()),
    )(x_pad, xc, w1p, s1p, b1p, w2p, s2p, b2p)

    # drop the zero pad channels, back to NCHW (fused with the pallas output by jit)
    return jnp.transpose(out_nhwc[..., :C], (0, 3, 1, 2))


def _fold_bn(gamma, beta, mean, var, eps=1e-5):
    scale = gamma / jnp.sqrt(var + eps)
    bias = beta - mean * scale
    return scale, bias


def _reference(x_nchw, w1, bn1, w2, bn2, eps=1e-5):
    """Pure-JAX f32 reference matching the PyTorch module in eval mode."""
    g1, be1, m1, v1 = bn1
    g2, be2, m2, v2 = bn2
    x = jnp.transpose(x_nchw, (0, 2, 3, 1))
    dn = lax.conv_dimension_numbers(x.shape, w1.shape, ('NHWC', 'HWIO', 'NHWC'))
    y = lax.conv_general_dilated(x, w1, (1, 1), 'SAME', dimension_numbers=dn)
    y = (y - m1) / jnp.sqrt(v1 + eps) * g1 + be1
    y = jnp.maximum(y, 0.0)
    y = lax.conv_general_dilated(y, w2, (1, 1), 'SAME', dimension_numbers=dn)
    y = (y - m2) / jnp.sqrt(v2 + eps) * g2 + be2
    y = jnp.maximum(y + x, 0.0)
    return jnp.transpose(y, (0, 3, 1, 2))


if __name__ == "__main__":
    N, C, H, W = 2, 4, 16, 16            # in_channels == out_channels, stride = 1
    key = jax.random.PRNGKey(0)
    keys = jax.random.split(key, 11)

    x = jax.random.normal(keys[0], (N, C, H, W), jnp.float32)

    # Conv weights (HWIO) -- PyTorch would be (Cout, Cin, 3, 3); same values either way.
    w1 = 0.1 * jax.random.normal(keys[1], (3, 3, C, C), jnp.float32)
    w2 = 0.1 * jax.random.normal(keys[2], (3, 3, C, C), jnp.float32)

    # BatchNorm params / running stats (deterministic, non-trivial).
    g1 = jax.random.uniform(keys[3], (C,), jnp.float32, 0.5, 1.5)
    be1 = 0.1 * jax.random.normal(keys[4], (C,), jnp.float32)
    m1 = 0.1 * jax.random.normal(keys[5], (C,), jnp.float32)
    v1 = jax.random.uniform(keys[6], (C,), jnp.float32, 0.5, 1.5)
    g2 = jax.random.uniform(keys[7], (C,), jnp.float32, 0.5, 1.5)
    be2 = 0.1 * jax.random.normal(keys[8], (C,), jnp.float32)
    m2 = 0.1 * jax.random.normal(keys[9], (C,), jnp.float32)
    v2 = jax.random.uniform(keys[10], (C,), jnp.float32, 0.5, 1.5)

    s1, b1 = _fold_bn(g1, be1, m1, v1)
    s2, b2 = _fold_bn(g2, be2, m2, v2)

    out = residual_block_pallas(x, w1, s1, b1, w2, s2, b2)
    out = jax.block_until_ready(out)

    ref = _reference(x, w1, (g1, be1, m1, v1), w2, (g2, be2, m2, v2))
    # Conv matmuls run in bf16 on the MXU (f32 accumulation); reference is pure f32.
    np.testing.assert_allclose(np.asarray(out), np.asarray(ref),
                               rtol=5e-2, atol=5e-2)
    print("KERNEL_OK")
</pallas_src>

<mosaic_0001>
module attributes {stable_mosaic.version = 11 : i64} {
  func.func @kernel(%arg0: i32, %arg1: memref<1x18x18x128xbf16, #tpu.memory_space<vmem>>, %arg2: memref<1x16x16x128xf32, #tpu.memory_space<vmem>>, %arg3: memref<9x128x128xbf16, #tpu.memory_space<vmem>>, %arg4: memref<1x128xf32, #tpu.memory_space<vmem>>, %arg5: memref<1x128xf32, #tpu.memory_space<vmem>>, %arg6: memref<9x128x128xbf16, #tpu.memory_space<vmem>>, %arg7: memref<1x128xf32, #tpu.memory_space<vmem>>, %arg8: memref<1x128xf32, #tpu.memory_space<vmem>>, %arg9: memref<1x16x16x128xf32, #tpu.memory_space<vmem>>, %arg10: memref<3x18x16x128xbf16, #tpu.memory_space<vmem>>) attributes {dimension_semantics = [#tpu.dimension_semantics<parallel>], iteration_bounds = array<i64: 2>, scalar_prefetch = 0 : i64, scratch_operands = 1 : i64, tpu.core_type = #tpu.core_type<tc>, window_params = [{transform_indices = @transform_0, window_bounds = array<i64: 1, 18, 18, 128>}, {transform_indices = @transform_1, window_bounds = array<i64: 1, 16, 16, 128>}, {pipeline_mode = #tpu.pipeline_mode<synchronous>, transform_indices = @transform_2, window_bounds = array<i64: 9, 128, 128>}, {pipeline_mode = #tpu.pipeline_mode<synchronous>, transform_indices = @transform_3, window_bounds = array<i64: 1, 128>}, {pipeline_mode = #tpu.pipeline_mode<synchronous>, transform_indices = @transform_4, window_bounds = array<i64: 1, 128>}, {pipeline_mode = #tpu.pipeline_mode<synchronous>, transform_indices = @transform_5, window_bounds = array<i64: 9, 128, 128>}, {pipeline_mode = #tpu.pipeline_mode<synchronous>, transform_indices = @transform_6, window_bounds = array<i64: 1, 128>}, {pipeline_mode = #tpu.pipeline_mode<synchronous>, transform_indices = @transform_7, window_bounds = array<i64: 1, 128>}, {transform_indices = @transform_8, window_bounds = array<i64: 1, 16, 16, 128>}]} {
    %c0 = arith.constant 0 : index
    %c0_0 = arith.constant 0 : index
    %c0_1 = arith.constant 0 : index
    %c0_2 = arith.constant 0 : index
    %0 = vector.load %arg1[%c0, %c0_0, %c0_1, %c0_2] : memref<1x18x18x128xbf16, #tpu.memory_space<vmem>>, vector<1x18x16x128xbf16>
    %1 = vector.shape_cast %0 : vector<1x18x16x128xbf16> to vector<18x16x128xbf16>
    %c0_3 = arith.constant 0 : index
    %c0_4 = arith.constant 0 : index
    %c0_5 = arith.constant 0 : index
    %c0_6 = arith.constant 0 : index
    %2 = vector.load %arg10[%c0_3, %c0_4, %c0_5, %c0_6] : memref<3x18x16x128xbf16, #tpu.memory_space<vmem>>, vector<1x18x16x128xbf16>
    %3 = vector.shape_cast %2 : vector<1x18x16x128xbf16> to vector<18x16x128xbf16>
    %4 = vector.shape_cast %1 : vector<18x16x128xbf16> to vector<1x18x16x128xbf16>
    tpu.vector_store %arg10[%c0_3, %c0_4, %c0_5, %c0_6], %4 {strides = array<i32>} : memref<3x18x16x128xbf16, #tpu.memory_space<vmem>>, vector<1x18x16x128xbf16>,
    %c0_7 = arith.constant 0 : index
    %c0_8 = arith.constant 0 : index
    %c1 = arith.constant 1 : index
    %c0_9 = arith.constant 0 : index
    %5 = vector.load %arg1[%c0_7, %c0_8, %c1, %c0_9] : memref<1x18x18x128xbf16, #tpu.memory_space<vmem>>, vector<1x18x16x128xbf16>
    %6 = vector.shape_cast %5 : vector<1x18x16x128xbf16> to vector<18x16x128xbf16>
    %c1_10 = arith.constant 1 : index
    %c0_11 = arith.constant 0 : index
    %c0_12 = arith.constant 0 : index
    %c0_13 = arith.constant 0 : index
    %7 = vector.load %arg10[%c1_10, %c0_11, %c0_12, %c0_13] : memref<3x18x16x128xbf16, #tpu.memory_space<vmem>>, vector<1x18x16x128xbf16>
    %8 = vector.shape_cast %7 : vector<1x18x16x128xbf16> to vector<18x16x128xbf16>
    %9 = vector.shape_cast %6 : vector<18x16x128xbf16> to vector<1x18x16x128xbf16>
    tpu.vector_store %arg10[%c1_10, %c0_11, %c0_12, %c0_13], %9 {strides = array<i32>} : memref<3x18x16x128xbf16, #tpu.memory_space<vmem>>, vector<1x18x16x128xbf16>,
    %c0_14 = arith.constant 0 : index
    %c0_15 = arith.constant 0 : index
    %c2 = arith.constant 2 : index
    %c0_16 = arith.constant 0 : index
    %10 = vector.load %arg1[%c0_14, %c0_15, %c2, %c0_16] : memref<1x18x18x128xbf16, #tpu.memory_space<vmem>>, vector<1x18x16x128xbf16>
    %11 = vector.shape_cast %10 : vector<1x18x16x128xbf16> to vector<18x16x128xbf16>
    %c2_17 = arith.constant 2 : index
    %c0_18 = arith.constant 0 : index
    %c0_19 = arith.constant 0 : index
    %c0_20 = arith.constant 0 : index
    %12 = vector.load %arg10[%c2_17, %c0_18, %c0_19, %c0_20] : memref<3x18x16x128xbf16, #tpu.memory_space<vmem>>, vector<1x18x16x128xbf16>
    %13 = vector.shape_cast %12 : vector<1x18x16x128xbf16> to vector<18x16x128xbf16>
    %14 = vector.shape_cast %11 : vector<18x16x128xbf16> to vector<1x18x16x128xbf16>
    tpu.vector_store %arg10[%c2_17, %c0_18, %c0_19, %c0_20], %14 {strides = array<i32>} : memref<3x18x16x128xbf16, #tpu.memory_space<vmem>>, vector<1x18x16x128xbf16>,
    %cst = arith.constant 0.000000e+00 : f32
    %15 = vector.broadcast %cst : f32 to vector<256x128xf32>
    %c0_21 = arith.constant 0 : index
    %c0_22 = arith.constant 0 : index
    %c0_23 = arith.constant 0 : index
    %c0_24 = arith.constant 0 : index
    %16 = vector.load %arg10[%c0_21, %c0_22, %c0_23, %c0_24] : memref<3x18x16x128xbf16, #tpu.memory_space<vmem>>, vector<1x16x16x128xbf16>
    %17 = vector.shape_cast %16 : vector<1x16x16x128xbf16> to vector<16x16x128xbf16>
    %18 = vector.shape_cast %17 : vector<16x16x128xbf16> to vector<256x128xbf16>
    %c0_25 = arith.constant 0 : index
    %c0_26 = arith.constant 0 : index
    %c0_27 = arith.constant 0 : index
    %19 = vector.load %arg3[%c0_25, %c0_26, %c0_27] : memref<9x128x128xbf16, #tpu.memory_space<vmem>>, vector<1x128x128xbf16>
    %20 = vector.shape_cast %19 : vector<1x128x128xbf16> to vector<128x128xbf16>
    %cst_28 = arith.constant dense<0.000000e+00> : vector<256x128xf32>
    %21 = tpu.matmul %18, %20, %cst_28 {dimension_numbers = #tpu.dot_dimension_numbers<[1], [0], [0], [1], [0, 0, 1, 1], [], []>} : vector<256x128xbf16>, vector<128x128xbf16>, vector<256x128xf32> -> vector<256x128xf32>
    %22 = arith.addf %15, %21 : vector<256x128xf32>
    %c1_29 = arith.constant 1 : index
    %c0_30 = arith.constant 0 : index
    %c0_31 = arith.constant 0 : index
    %c0_32 = arith.constant 0 : index
    %23 = vector.load %arg10[%c1_29, %c0_30, %c0_31, %c0_32] : memref<3x18x16x128xbf16, #tpu.memory_space<vmem>>, vector<1x16x16x128xbf16>
    %24 = vector.shape_cast %23 : vector<1x16x16x128xbf16> to vector<16x16x128xbf16>
    %25 = vector.shape_cast %24 : vector<16x16x128xbf16> to vector<256x128xbf16>
    %c1_33 = arith.constant 1 : index
    %c0_34 = arith.constant 0 : index
    %c0_35 = arith.constant 0 : index
    %26 = vector.load %arg3[%c1_33, %c0_34, %c0_35] : memref<9x128x128xbf16, #tpu.memory_space<vmem>>, vector<1x128x128xbf16>
    %27 = vector.shape_cast %26 : vector<1x128x128xbf16> to vector<128x128xbf16>
    %cst_36 = arith.constant dense<0.000000e+00> : vector<256x128xf32>
    %28 = tpu.matmul %25, %27, %cst_36 {dimension_numbers = #tpu.dot_dimension_numbers<[1], [0], [0], [1], [0, 0, 1, 1], [], []>} : vector<256x128xbf16>, vector<128x128xbf16>, vector<256x128xf32> -> vector<256x128xf32>
    %29 = arith.addf %22, %28 : vector<256x128xf32>
    %c2_37 = arith.constant 2 : index
    %c0_38 = arith.constant 0 : index
    %c0_39 = arith.constant 0 : index
    %c0_40 = arith.constant 0 : index
    %30 = vector.load %arg10[%c2_37, %c0_38, %c0_39, %c0_40] : memref<3x18x16x128xbf16, #tpu.memory_space<vmem>>, vector<1x16x16x128xbf16>
    %31 = vector.shape_cast %30 : vector<1x16x16x128xbf16> to vector<16x16x128xbf16>
    %32 = vector.shape_cast %31 : vector<16x16x128xbf16> to vector<256x128xbf16>
    %c2_41 = arith.constant 2 : index
    %c0_42 = arith.constant 0 : index
    %c0_43 = arith.constant 0 : index
    %33 = vector.load %arg3[%c2_41, %c0_42, %c0_43] : memref<9x128x128xbf16, #tpu.memory_space<vmem>>, vector<1x128x128xbf16>
    %34 = vector.shape_cast %33 : vector<1x128x128xbf16> to vector<128x128xbf16>
    %cst_44 = arith.constant dense<0.000000e+00> : vector<256x128xf32>
    %35 = tpu.matmul %32, %34, %cst_44 {dimension_numbers = #tpu.dot_dimension_numbers<[1], [0], [0], [1], [0, 0, 1, 1], [], []>} : vector<256x128xbf16>, vector<128x128xbf16>, vector<256x128xf32> -> vector<256x128xf32>
    %36 = arith.addf %29, %35 : vector<256x128xf32>
    %c0_45 = arith.constant 0 : index
    %c1_46 = arith.constant 1 : index
    %c0_47 = arith.constant 0 : index
    %c0_48 = arith.constant 0 : index
    %37 = vector.load %arg10[%c0_45, %c1_46, %c0_47, %c0_48] : memref<3x18x16x128xbf16, #tpu.memory_space<vmem>>, vector<1x16x16x128xbf16>
    %38 = vector.shape_cast %37 : vector<1x16x16x128xbf16> to vector<16x16x128xbf16>
    %39 = vector.shape_cast %38 : vector<16x16x128xbf16> to vector<256x128xbf16>
    %c3 = arith.constant 3 : index
    %c0_49 = arith.constant 0 : index
    %c0_50 = arith.constant 0 : index
    %40 = vector.load %arg3[%c3, %c0_49, %c0_50] : memref<9x128x128xbf16, #tpu.memory_space<vmem>>, vector<1x128x128xbf16>
    %41 = vector.shape_cast %40 : vector<1x128x128xbf16> to vector<128x128xbf16>
    %cst_51 = arith.constant dense<0.000000e+00> : vector<256x128xf32>
    %42 = tpu.matmul %39, %41, %cst_51 {dimension_numbers = #tpu.dot_dimension_numbers<[1], [0], [0], [1], [0, 0, 1, 1], [], []>} : vector<256x128xbf16>, vector<128x128xbf16>, vector<256x128xf32> -> vector<256x128xf32>
    %43 = arith.addf %36, %42 : vector<256x128xf32>
    %c1_52 = arith.constant 1 : index
    %c1_53 = arith.constant 1 : index
    %c0_54 = arith.constant 0 : index
    %c0_55 = arith.constant 0 : index
    %44 = vector.load %arg10[%c1_52, %c1_53, %c0_54, %c0_55] : memref<3x18x16x128xbf16, #tpu.memory_space<vmem>>, vector<1x16x16x128xbf16>
    %45 = vector.shape_cast %44 : vector<1x16x16x128xbf16> to vector<16x16x128xbf16>
    %46 = vector.shape_cast %45 : vector<16x16x128xbf16> to vector<256x128xbf16>
    %c4 = arith.constant 4 : index
    %c0_56 = arith.constant 0 : index
    %c0_57 = arith.constant 0 : index
    %47 = vector.load %arg3[%c4, %c0_56, %c0_57] : memref<9x128x128xbf16, #tpu.memory_space<vmem>>, vector<1x128x128xbf16>
    %48 = vector.shape_cast %47 : vector<1x128x128xbf16> to vector<128x128xbf16>
    %cst_58 = arith.constant dense<0.000000e+00> : vector<256x128xf32>
    %49 = tpu.matmul %46, %48, %cst_58 {dimension_numbers = #tpu.dot_dimension_numbers<[1], [0], [0], [1], [0, 0, 1, 1], [], []>} : vector<256x128xbf16>, vector<128x128xbf16>, vector<256x128xf32> -> vector<256x128xf32>
    %50 = arith.addf %43, %49 : vector<256x128xf32>
    %c2_59 = arith.constant 2 : index
    %c1_60 = arith.constant 1 : index
    %c0_61 = arith.constant 0 : index
    %c0_62 = arith.constant 0 : index
    %51 = vector.load %arg10[%c2_59, %c1_60, %c0_61, %c0_62] : memref<3x18x16x128xbf16, #tpu.memory_space<vmem>>, vector<1x16x16x128xbf16>
    %52 = vector.shape_cast %51 : vector<1x16x16x128xbf16> to vector<16x16x128xbf16>
    %53 = vector.shape_cast %52 : vector<16x16x128xbf16> to vector<256x128xbf16>
    %c5 = arith.constant 5 : index
    %c0_63 = arith.constant 0 : index
    %c0_64 = arith.constant 0 : index
    %54 = vector.load %arg3[%c5, %c0_63, %c0_64] : memref<9x128x128xbf16, #tpu.memory_space<vmem>>, vector<1x128x128xbf16>
    %55 = vector.shape_cast %54 : vector<1x128x128xbf16> to vector<128x128xbf16>
    %cst_65 = arith.constant dense<0.000000e+00> : vector<256x128xf32>
    %56 = tpu.matmul %53, %55, %cst_65 {dimension_numbers = #tpu.dot_dimension_numbers<[1], [0], [0], [1], [0, 0, 1, 1], [], []>} : vector<256x128xbf16>, vector<128x128xbf16>, vector<256x128xf32> -> vector<256x128xf32>
    %57 = arith.addf %50, %56 : vector<256x128xf32>
    %c0_66 = arith.constant 0 : index
    %c2_67 = arith.constant 2 : index
    %c0_68 = arith.constant 0 : index
    %c0_69 = arith.constant 0 : index
    %58 = vector.load %arg10[%c0_66, %c2_67, %c0_68, %c0_69] : memref<3x18x16x128xbf16, #tpu.memory_space<vmem>>, vector<1x16x16x128xbf16>
    %59 = vector.shape_cast %58 : vector<1x16x16x128xbf16> to vector<16x16x128xbf16>
    %60 = vector.shape_cast %59 : vector<16x16x128xbf16> to vector<256x128xbf16>
    %c6 = arith.constant 6 : index
    %c0_70 = arith.constant 0 : index
    %c0_71 = arith.constant 0 : index
    %61 = vector.load %arg3[%c6, %c0_70, %c0_71] : memref<9x128x128xbf16, #tpu.memory_space<vmem>>, vector<1x128x128xbf16>
    %62 = vector.shape_cast %61 : vector<1x128x128xbf16> to vector<128x128xbf16>
    %cst_72 = arith.constant dense<0.000000e+00> : vector<256x128xf32>
    %63 = tpu.matmul %60, %62, %cst_72 {dimension_numbers = #tpu.dot_dimension_numbers<[1], [0], [0], [1], [0, 0, 1, 1], [], []>} : vector<256x128xbf16>, vector<128x128xbf16>, vector<256x128xf32> -> vector<256x128xf32>
    %64 = arith.addf %57, %63 : vector<256x128xf32>
    %c1_73 = arith.constant 1 : index
    %c2_74 = arith.constant 2 : index
    %c0_75 = arith.constant 0 : index
    %c0_76 = arith.constant 0 : index
    %65 = vector.load %arg10[%c1_73, %c2_74, %c0_75, %c0_76] : memref<3x18x16x128xbf16, #tpu.memory_space<vmem>>, vector<1x16x16x128xbf16>
    %66 = vector.shape_cast %65 : vector<1x16x16x128xbf16> to vector<16x16x128xbf16>
    %67 = vector.shape_cast %66 : vector<16x16x128xbf16> to vector<256x128xbf16>
    %c7 = arith.constant 7 : index
    %c0_77 = arith.constant 0 : index
    %c0_78 = arith.constant 0 : index
    %68 = vector.load %arg3[%c7, %c0_77, %c0_78] : memref<9x128x128xbf16, #tpu.memory_space<vmem>>, vector<1x128x128xbf16>
    %69 = vector.shape_cast %68 : vector<1x128x128xbf16> to vector<128x128xbf16>
    %cst_79 = arith.constant dense<0.000000e+00> : vector<256x128xf32>
    %70 = tpu.matmul %67, %69, %cst_79 {dimension_numbers = #tpu.dot_dimension_numbers<[1], [0], [0], [1], [0, 0, 1, 1], [], []>} : vector<256x128xbf16>, vector<128x128xbf16>, vector<256x128xf32> -> vector<256x128xf32>
    %71 = arith.addf %64, %70 : vector<256x128xf32>
    %c2_80 = arith.constant 2 : index
    %c2_81 = arith.constant 2 : index
    %c0_82 = arith.constant 0 : index
    %c0_83 = arith.constant 0 : index
    %72 = vector.load %arg10[%c2_80, %c2_81, %c0_82, %c0_83] : memref<3x18x16x128xbf16, #tpu.memory_space<vmem>>, vector<1x16x16x128xbf16>
    %73 = vector.shape_cast %72 : vector<1x16x16x128xbf16> to vector<16x16x128xbf16>
    %74 = vector.shape_cast %73 : vector<16x16x128xbf16> to vector<256x128xbf16>
    %c8 = arith.constant 8 : index
    %c0_84 = arith.constant 0 : index
    %c0_85 = arith.constant 0 : index
    %75 = vector.load %arg3[%c8, %c0_84, %c0_85] : memref<9x128x128xbf16, #tpu.memory_space<vmem>>, vector<1x128x128xbf16>
    %76 = vector.shape_cast %75 : vector<1x128x128xbf16> to vector<128x128xbf16>
    %cst_86 = arith.constant dense<0.000000e+00> : vector<256x128xf32>
    %77 = tpu.matmul %74, %76, %cst_86 {dimension_numbers = #tpu.dot_dimension_numbers<[1], [0], [0], [1], [0, 0, 1, 1], [], []>} : vector<256x128xbf16>, vector<128x128xbf16>, vector<256x128xf32> -> vector<256x128xf32>
    %78 = arith.addf %71, %77 : vector<256x128xf32>
    %c0_87 = arith.constant 0 : index
    %c0_88 = arith.constant 0 : index
    %79 = vector.load %arg4[%c0_87, %c0_88] : memref<1x128xf32, #tpu.memory_space<vmem>>, vector<1x128xf32>
    %80 = vector.broadcast %79 : vector<1x128xf32> to vector<256x128xf32>
    %81 = arith.mulf %78, %80 : vector<256x128xf32>
    %c0_89 = arith.constant 0 : index
    %c0_90 = arith.constant 0 : index
    %82 = vector.load %arg5[%c0_89, %c0_90] : memref<1x128xf32, #tpu.memory_space<vmem>>, vector<1x128xf32>
    %83 = vector.broadcast %82 : vector<1x128xf32> to vector<256x128xf32>
    %84 = arith.addf %81, %83 : vector<256x128xf32>
    %cst_91 = arith.constant 0.000000e+00 : f32
    %85 = vector.broadcast %cst_91 : f32 to vector<256x128xf32>
    %86 = arith.maximumf %84, %85 : vector<256x128xf32>
    %87 = arith.truncf %86 : vector<256x128xf32> to vector<256x128xbf16>
    %88 = vector.shape_cast %87 : vector<256x128xbf16> to vector<16x16x128xbf16>
    %cst_92 = arith.constant 0.000000e+00 : bf16
    %89 = vector.broadcast %cst_92 : bf16 to vector<3x1x16x128xbf16>
    %c0_93 = arith.constant 0 : index
    %c0_94 = arith.constant 0 : index
    %c0_95 = arith.constant 0 : index
    %c0_96 = arith.constant 0 : index
    %90 = vector.load %arg10[%c0_93, %c0_94, %c0_95, %c0_96] : memref<3x18x16x128xbf16, #tpu.memory_space<vmem>>, vector<3x1x16x128xbf16>
    tpu.vector_store %arg10[%c0_93, %c0_94, %c0_95, %c0_96], %89 {strides = array<i32>} : memref<3x18x16x128xbf16, #tpu.memory_space<vmem>>, vector<3x1x16x128xbf16>,
    %cst_97 = arith.constant 0.000000e+00 : bf16
    %91 = vector.broadcast %cst_97 : bf16 to vector<3x1x16x128xbf16>
    %c0_98 = arith.constant 0 : index
    %c17 = arith.constant 17 : index
    %c0_99 = arith.constant 0 : index
    %c0_100 = arith.constant 0 : index
    %92 = vector.load %arg10[%c0_98, %c17, %c0_99, %c0_100] : memref<3x18x16x128xbf16, #tpu.memory_space<vmem>>, vector<3x1x16x128xbf16>
    tpu.vector_store %arg10[%c0_98, %c17, %c0_99, %c0_100], %91 {strides = array<i32>} : memref<3x18x16x128xbf16, #tpu.memory_space<vmem>>, vector<3x1x16x128xbf16>,
    %c1_101 = arith.constant 1 : index
    %c1_102 = arith.constant 1 : index
    %c0_103 = arith.constant 0 : index
    %c0_104 = arith.constant 0 : index
    %93 = vector.load %arg10[%c1_101, %c1_102, %c0_103, %c0_104] : memref<3x18x16x128xbf16, #tpu.memory_space<vmem>>, vector<1x16x16x128xbf16>
    %94 = vector.shape_cast %93 : vector<1x16x16x128xbf16> to vector<16x16x128xbf16>
    %95 = vector.shape_cast %88 : vector<16x16x128xbf16> to vector<1x16x16x128xbf16>
    tpu.vector_store %arg10[%c1_101, %c1_102, %c0_103, %c0_104], %95 {strides = array<i32>} : memref<3x18x16x128xbf16, #tpu.memory_space<vmem>>, vector<1x16x16x128xbf16>,
    %cst_105 = arith.constant 0.000000e+00 : bf16
    %96 = vector.broadcast %cst_105 : bf16 to vector<16x1x128xbf16>
    %c0_106 = arith.constant 0 : index
    %c1_107 = arith.constant 1 : index
    %c0_108 = arith.constant 0 : index
    %c0_109 = arith.constant 0 : index
    %97 = vector.load %arg10[%c0_106, %c1_107, %c0_108, %c0_109] : memref<3x18x16x128xbf16, #tpu.memory_space<vmem>>, vector<1x16x1x128xbf16>
    %98 = vector.shape_cast %97 : vector<1x16x1x128xbf16> to vector<16x1x128xbf16>
    %99 = vector.shape_cast %96 : vector<16x1x128xbf16> to vector<1x16x1x128xbf16>
    tpu.vector_store %arg10[%c0_106, %c1_107, %c0_108, %c0_109], %99 {strides = array<i32>} : memref<3x18x16x128xbf16, #tpu.memory_space<vmem>>, vector<1x16x1x128xbf16>,
    %100 = vector.extract_strided_slice %88 {offsets = [0, 0, 0], sizes = [16, 15, 128], strides = [1, 1, 1]} : vector<16x16x128xbf16> to vector<16x15x128xbf16>
    %c0_110 = arith.constant 0 : index
    %c1_111 = arith.constant 1 : index
    %c1_112 = arith.constant 1 : index
    %c0_113 = arith.constant 0 : index
    %101 = vector.load %arg10[%c0_110, %c1_111, %c1_112, %c0_113] : memref<3x18x16x128xbf16, #tpu.memory_space<vmem>>, vector<1x16x15x128xbf16>
    %102 = vector.shape_cast %101 : vector<1x16x15x128xbf16> to vector<16x15x128xbf16>
    %103 = vector.shape_cast %100 : vector<16x15x128xbf16> to vector<1x16x15x128xbf16>
    tpu.vector_store %arg10[%c0_110, %c1_111, %c1_112, %c0_113], %103 {strides = array<i32>} : memref<3x18x16x128xbf16, #tpu.memory_space<vmem>>, vector<1x16x15x128xbf16>,
    %104 = vector.extract_strided_slice %88 {offsets = [0, 1, 0], sizes = [16, 15, 128], strides = [1, 1, 1]} : vector<16x16x128xbf16> to vector<16x15x128xbf16>
    %c2_114 = arith.constant 2 : index
    %c1_115 = arith.constant 1 : index
    %c0_116 = arith.constant 0 : index
    %c0_117 = arith.constant 0 : index
    %105 = vector.load %arg10[%c2_114, %c1_115, %c0_116, %c0_117] : memref<3x18x16x128xbf16, #tpu.memory_space<vmem>>, vector<1x16x15x128xbf16>
    %106 = vector.shape_cast %105 : vector<1x16x15x128xbf16> to vector<16x15x128xbf16>
    %107 = vector.shape_cast %104 : vector<16x15x128xbf16> to vector<1x16x15x128xbf16>
    tpu.vector_store %arg10[%c2_114, %c1_115, %c0_116, %c0_117], %107 {strides = array<i32>} : memref<3x18x16x128xbf16, #tpu.memory_space<vmem>>, vector<1x16x15x128xbf16>,
    %cst_118 = arith.constant 0.000000e+00 : bf16
    %108 = vector.broadcast %cst_118 : bf16 to vector<16x1x128xbf16>
    %c2_119 = arith.constant 2 : index
    %c1_120 = arith.constant 1 : index
    %c15 = arith.constant 15 : index
    %c0_121 = arith.constant 0 : index
    %109 = vector.load %arg10[%c2_119, %c1_120, %c15, %c0_121] : memref<3x18x16x128xbf16, #tpu.memory_space<vmem>>, vector<1x16x1x128xbf16>
    %110 = vector.shape_cast %109 : vector<1x16x1x128xbf16> to vector<16x1x128xbf16>
    %111 = vector.shape_cast %108 : vector<16x1x128xbf16> to vector<1x16x1x128xbf16>
    tpu.vector_store %arg10[%c2_119, %c1_120, %c15, %c0_121], %111 {strides = array<i32>} : memref<3x18x16x128xbf16, #tpu.memory_space<vmem>>, vector<1x16x1x128xbf16>,
    %cst_122 = arith.constant 0.000000e+00 : f32
    %112 = vector.broadcast %cst_122 : f32 to vector<256x128xf32>
    %c0_123 = arith.constant 0 : index
    %c0_124 = arith.constant 0 : index
    %c0_125 = arith.constant 0 : index
    %c0_126 = arith.constant 0 : index
    %113 = vector.load %arg10[%c0_123, %c0_124, %c0_125, %c0_126] : memref<3x18x16x128xbf16, #tpu.memory_space<vmem>>, vector<1x16x16x128xbf16>
    %114 = vector.shape_cast %113 : vector<1x16x16x128xbf16> to vector<16x16x128xbf16>
    %115 = vector.shape_cast %114 : vector<16x16x128xbf16> to vector<256x128xbf16>
    %c0_127 = arith.constant 0 : index
    %c0_128 = arith.constant 0 : index
    %c0_129 = arith.constant 0 : index
    %116 = vector.load %arg6[%c0_127, %c0_128, %c0_129] : memref<9x128x128xbf16, #tpu.memory_space<vmem>>, vector<1x128x128xbf16>
    %117 = vector.shape_cast %116 : vector<1x128x128xbf16> to vector<128x128xbf16>
    %cst_130 = arith.constant dense<0.000000e+00> : vector<256x128xf32>
    %118 = tpu.matmul %115, %117, %cst_130 {dimension_numbers = #tpu.dot_dimension_numbers<[1], [0], [0], [1], [0, 0, 1, 1], [], []>} : vector<256x128xbf16>, vector<128x128xbf16>, vector<256x128xf32> -> vector<256x128xf32>
    %119 = arith.addf %112, %118 : vector<256x128xf32>
    %c1_131 = arith.constant 1 : index
    %c0_132 = arith.constant 0 : index
    %c0_133 = arith.constant 0 : index
    %c0_134 = arith.constant 0 : index
    %120 = vector.load %arg10[%c1_131, %c0_132, %c0_133, %c0_134] : memref<3x18x16x128xbf16, #tpu.memory_space<vmem>>, vector<1x16x16x128xbf16>
    %121 = vector.shape_cast %120 : vector<1x16x16x128xbf16> to vector<16x16x128xbf16>
    %122 = vector.shape_cast %121 : vector<16x16x128xbf16> to vector<256x128xbf16>
    %c1_135 = arith.constant 1 : index
    %c0_136 = arith.constant 0 : index
    %c0_137 = arith.constant 0 : index
    %123 = vector.load %arg6[%c1_135, %c0_136, %c0_137] : memref<9x128x128xbf16, #tpu.memory_space<vmem>>, vector<1x128x128xbf16>
    %124 = vector.shape_cast %123 : vector<1x128x128xbf16> to vector<128x128xbf16>
    %cst_138 = arith.constant dense<0.000000e+00> : vector<256x128xf32>
    %125 = tpu.matmul %122, %124, %cst_138 {dimension_numbers = #tpu.dot_dimension_numbers<[1], [0], [0], [1], [0, 0, 1, 1], [], []>} : vector<256x128xbf16>, vector<128x128xbf16>, vector<256x128xf32> -> vector<256x128xf32>
    %126 = arith.addf %119, %125 : vector<256x128xf32>
    %c2_139 = arith.constant 2 : index
    %c0_140 = arith.constant 0 : index
    %c0_141 = arith.constant 0 : index
    %c0_142 = arith.constant 0 : index
    %127 = vector.load %arg10[%c2_139, %c0_140, %c0_141, %c0_142] : memref<3x18x16x128xbf16, #tpu.memory_space<vmem>>, vector<1x16x16x128xbf16>
    %128 = vector.shape_cast %127 : vector<1x16x16x128xbf16> to vector<16x16x128xbf16>
    %129 = vector.shape_cast %128 : vector<16x16x128xbf16> to vector<256x128xbf16>
    %c2_143 = arith.constant 2 : index
    %c0_144 = arith.constant 0 : index
    %c0_145 = arith.constant 0 : index
    %130 = vector.load %arg6[%c2_143, %c0_144, %c0_145] : memref<9x128x128xbf16, #tpu.memory_space<vmem>>, vector<1x128x128xbf16>
    %131 = vector.shape_cast %130 : vector<1x128x128xbf16> to vector<128x128xbf16>
    %cst_146 = arith.constant dense<0.000000e+00> : vector<256x128xf32>
    %132 = tpu.matmul %129, %131, %cst_146 {dimension_numbers = #tpu.dot_dimension_numbers<[1], [0], [0], [1], [0, 0, 1, 1], [], []>} : vector<256x128xbf16>, vector<128x128xbf16>, vector<256x128xf32> -> vector<256x128xf32>
    %133 = arith.addf %126, %132 : vector<256x128xf32>
    %c0_147 = arith.constant 0 : index
    %c1_148 = arith.constant 1 : index
    %c0_149 = arith.constant 0 : index
    %c0_150 = arith.constant 0 : index
    %134 = vector.load %arg10[%c0_147, %c1_148, %c0_149, %c0_150] : memref<3x18x16x128xbf16, #tpu.memory_space<vmem>>, vector<1x16x16x128xbf16>
    %135 = vector.shape_cast %134 : vector<1x16x16x128xbf16> to vector<16x16x128xbf16>
    %136 = vector.shape_cast %135 : vector<16x16x128xbf16> to vector<256x128xbf16>
    %c3_151 = arith.constant 3 : index
    %c0_152 = arith.constant 0 : index
    %c0_153 = arith.constant 0 : index
    %137 = vector.load %arg6[%c3_151, %c0_152, %c0_153] : memref<9x128x128xbf16, #tpu.memory_space<vmem>>, vector<1x128x128xbf16>
    %138 = vector.shape_cast %137 : vector<1x128x128xbf16> to vector<128x128xbf16>
    %cst_154 = arith.constant dense<0.000000e+00> : vector<256x128xf32>
    %139 = tpu.matmul %136, %138, %cst_154 {dimension_numbers = #tpu.dot_dimension_numbers<[1], [0], [0], [1], [0, 0, 1, 1], [], []>} : vector<256x128xbf16>, vector<128x128xbf16>, vector<256x128xf32> -> vector<256x128xf32>
    %140 = arith.addf %133, %139 : vector<256x128xf32>
    %c1_155 = arith.constant 1 : index
    %c1_156 = arith.constant 1 : index
    %c0_157 = arith.constant 0 : index
    %c0_158 = arith.constant 0 : index
    %141 = vector.load %arg10[%c1_155, %c1_156, %c0_157, %c0_158] : memref<3x18x16x128xbf16, #tpu.memory_space<vmem>>, vector<1x16x16x128xbf16>
    %142 = vector.shape_cast %141 : vector<1x16x16x128xbf16> to vector<16x16x128xbf16>
    %143 = vector.shape_cast %142 : vector<16x16x128xbf16> to vector<256x128xbf16>
    %c4_159 = arith.constant 4 : index
    %c0_160 = arith.constant 0 : index
    %c0_161 = arith.constant 0 : index
    %144 = vector.load %arg6[%c4_159, %c0_160, %c0_161] : memref<9x128x128xbf16, #tpu.memory_space<vmem>>, vector<1x128x128xbf16>
    %145 = vector.shape_cast %144 : vector<1x128x128xbf16> to vector<128x128xbf16>
    %cst_162 = arith.constant dense<0.000000e+00> : vector<256x128xf32>
    %146 = tpu.matmul %143, %145, %cst_162 {dimension_numbers = #tpu.dot_dimension_numbers<[1], [0], [0], [1], [0, 0, 1, 1], [], []>} : vector<256x128xbf16>, vector<128x128xbf16>, vector<256x128xf32> -> vector<256x128xf32>
    %147 = arith.addf %140, %146 : vector<256x128xf32>
    %c2_163 = arith.constant 2 : index
    %c1_164 = arith.constant 1 : index
    %c0_165 = arith.constant 0 : index
    %c0_166 = arith.constant 0 : index
    %148 = vector.load %arg10[%c2_163, %c1_164, %c0_165, %c0_166] : memref<3x18x16x128xbf16, #tpu.memory_space<vmem>>, vector<1x16x16x128xbf16>
    %149 = vector.shape_cast %148 : vector<1x16x16x128xbf16> to vector<16x16x128xbf16>
    %150 = vector.shape_cast %149 : vector<16x16x128xbf16> to vector<256x128xbf16>
    %c5_167 = arith.constant 5 : index
    %c0_168 = arith.constant 0 : index
    %c0_169 = arith.constant 0 : index
    %151 = vector.load %arg6[%c5_167, %c0_168, %c0_169] : memref<9x128x128xbf16, #tpu.memory_space<vmem>>, vector<1x128x128xbf16>
    %152 = vector.shape_cast %151 : vector<1x128x128xbf16> to vector<128x128xbf16>
    %cst_170 = arith.constant dense<0.000000e+00> : vector<256x128xf32>
    %153 = tpu.matmul %150, %152, %cst_170 {dimension_numbers = #tpu.dot_dimension_numbers<[1], [0], [0], [1], [0, 0, 1, 1], [], []>} : vector<256x128xbf16>, vector<128x128xbf16>, vector<256x128xf32> -> vector<256x128xf32>
    %154 = arith.addf %147, %153 : vector<256x128xf32>
    %c0_171 = arith.constant 0 : index
    %c2_172 = arith.constant 2 : index
    %c0_173 = arith.constant 0 : index
    %c0_174 = arith.constant 0 : index
    %155 = vector.load %arg10[%c0_171, %c2_172, %c0_173, %c0_174] : memref<3x18x16x128xbf16, #tpu.memory_space<vmem>>, vector<1x16x16x128xbf16>
    %156 = vector.shape_cast %155 : vector<1x16x16x128xbf16> to vector<16x16x128xbf16>
    %157 = vector.shape_cast %156 : vector<16x16x128xbf16> to vector<256x128xbf16>
    %c6_175 = arith.constant 6 : index
    %c0_176 = arith.constant 0 : index
    %c0_177 = arith.constant 0 : index
    %158 = vector.load %arg6[%c6_175, %c0_176, %c0_177] : memref<9x128x128xbf16, #tpu.memory_space<vmem>>, vector<1x128x128xbf16>
    %159 = vector.shape_cast %158 : vector<1x128x128xbf16> to vector<128x128xbf16>
    %cst_178 = arith.constant dense<0.000000e+00> : vector<256x128xf32>
    %160 = tpu.matmul %157, %159, %cst_178 {dimension_numbers = #tpu.dot_dimension_numbers<[1], [0], [0], [1], [0, 0, 1, 1], [], []>} : vector<256x128xbf16>, vector<128x128xbf16>, vector<256x128xf32> -> vector<256x128xf32>
    %161 = arith.addf %154, %160 : vector<256x128xf32>
    %c1_179 = arith.constant 1 : index
    %c2_180 = arith.constant 2 : index
    %c0_181 = arith.constant 0 : index
    %c0_182 = arith.constant 0 : index
    %162 = vector.load %arg10[%c1_179, %c2_180, %c0_181, %c0_182] : memref<3x18x16x128xbf16, #tpu.memory_space<vmem>>, vector<1x16x16x128xbf16>
    %163 = vector.shape_cast %162 : vector<1x16x16x128xbf16> to vector<16x16x128xbf16>
    %164 = vector.shape_cast %163 : vector<16x16x128xbf16> to vector<256x128xbf16>
    %c7_183 = arith.constant 7 : index
    %c0_184 = arith.constant 0 : index
    %c0_185 = arith.constant 0 : index
    %165 = vector.load %arg6[%c7_183, %c0_184, %c0_185] : memref<9x128x128xbf16, #tpu.memory_space<vmem>>, vector<1x128x128xbf16>
    %166 = vector.shape_cast %165 : vector<1x128x128xbf16> to vector<128x128xbf16>
    %cst_186 = arith.constant dense<0.000000e+00> : vector<256x128xf32>
    %167 = tpu.matmul %164, %166, %cst_186 {dimension_numbers = #tpu.dot_dimension_numbers<[1], [0], [0], [1], [0, 0, 1, 1], [], []>} : vector<256x128xbf16>, vector<128x128xbf16>, vector<256x128xf32> -> vector<256x128xf32>
    %168 = arith.addf %161, %167 : vector<256x128xf32>
    %c2_187 = arith.constant 2 : index
    %c2_188 = arith.constant 2 : index
    %c0_189 = arith.constant 0 : index
    %c0_190 = arith.constant 0 : index
    %169 = vector.load %arg10[%c2_187, %c2_188, %c0_189, %c0_190] : memref<3x18x16x128xbf16, #tpu.memory_space<vmem>>, vector<1x16x16x128xbf16>
    %170 = vector.shape_cast %169 : vector<1x16x16x128xbf16> to vector<16x16x128xbf16>
    %171 = vector.shape_cast %170 : vector<16x16x128xbf16> to vector<256x128xbf16>
    %c8_191 = arith.constant 8 : index
    %c0_192 = arith.constant 0 : index
    %c0_193 = arith.constant 0 : index
    %172 = vector.load %arg6[%c8_191, %c0_192, %c0_193] : memref<9x128x128xbf16, #tpu.memory_space<vmem>>, vector<1x128x128xbf16>
    %173 = vector.shape_cast %172 : vector<1x128x128xbf16> to vector<128x128xbf16>
    %cst_194 = arith.constant dense<0.000000e+00> : vector<256x128xf32>
    %174 = tpu.matmul %171, %173, %cst_194 {dimension_numbers = #tpu.dot_dimension_numbers<[1], [0], [0], [1], [0, 0, 1, 1], [], []>} : vector<256x128xbf16>, vector<128x128xbf16>, vector<256x128xf32> -> vector<256x128xf32>
    %175 = arith.addf %168, %174 : vector<256x128xf32>
    %c0_195 = arith.constant 0 : index
    %c0_196 = arith.constant 0 : index
    %176 = vector.load %arg7[%c0_195, %c0_196] : memref<1x128xf32, #tpu.memory_space<vmem>>, vector<1x128xf32>
    %177 = vector.broadcast %176 : vector<1x128xf32> to vector<256x128xf32>
    %178 = arith.mulf %175, %177 : vector<256x128xf32>
    %c0_197 = arith.constant 0 : index
    %c0_198 = arith.constant 0 : index
    %179 = vector.load %arg8[%c0_197, %c0_198] : memref<1x128xf32, #tpu.memory_space<vmem>>, vector<1x128xf32>
    %180 = vector.broadcast %179 : vector<1x128xf32> to vector<256x128xf32>
    %181 = arith.addf %178, %180 : vector<256x128xf32>
    %c0_199 = arith.constant 0 : index
    %c0_200 = arith.constant 0 : index
    %c0_201 = arith.constant 0 : index
    %c0_202 = arith.constant 0 : index
    %182 = vector.load %arg2[%c0_199, %c0_200, %c0_201, %c0_202] : memref<1x16x16x128xf32, #tpu.memory_space<vmem>>, vector<1x16x16x128xf32>
    %183 = vector.shape_cast %182 : vector<1x16x16x128xf32> to vector<16x16x128xf32>
    %184 = vector.shape_cast %183 : vector<16x16x128xf32> to vector<256x128xf32>
    %185 = arith.addf %181, %184 : vector<256x128xf32>
    %cst_203 = arith.constant 0.000000e+00 : f32
    %186 = vector.broadcast %cst_203 : f32 to vector<256x128xf32>
    %187 = arith.maximumf %185, %186 : vector<256x128xf32>
    %188 = vector.shape_cast %187 : vector<256x128xf32> to vector<16x16x128xf32>
    %c0_204 = arith.constant 0 : index
    %c0_205 = arith.constant 0 : index
    %c0_206 = arith.constant 0 : index
    %c0_207 = arith.constant 0 : index
    %189 = vector.load %arg9[%c0_204, %c0_205, %c0_206, %c0_207] : memref<1x16x16x128xf32, #tpu.memory_space<vmem>>, vector<1x16x16x128xf32>
    %190 = vector.shape_cast %189 : vector<1x16x16x128xf32> to vector<16x16x128xf32>
    %191 = vector.shape_cast %188 : vector<16x16x128xf32> to vector<1x16x16x128xf32>
    tpu.vector_store %arg9[%c0_204, %c0_205, %c0_206, %c0_207], %191 {strides = array<i32>} : memref<1x16x16x128xf32, #tpu.memory_space<vmem>>, vector<1x16x16x128xf32>,
    return
  }
  func.func @transform_0(%arg0: i32) -> (i32, i32, i32, i32) {
    %c0_i32 = arith.constant 0 : i32
    %c0_i32_0 = arith.constant 0 : i32
    %c0_i32_1 = arith.constant 0 : i32
    %c0_i32_2 = arith.constant 0 : i32
    return %arg0, %c0_i32, %c0_i32_0, %c0_i32_1 : i32, i32, i32, i32
  }
  func.func @transform_1(%arg0: i32) -> (i32, i32, i32, i32) {
    %c0_i32 = arith.constant 0 : i32
    %c0_i32_0 = arith.constant 0 : i32
    %c0_i32_1 = arith.constant 0 : i32
    %c0_i32_2 = arith.constant 0 : i32
    return %arg0, %c0_i32, %c0_i32_0, %c0_i32_1 : i32, i32, i32, i32
  }
  func.func @transform_2(%arg0: i32) -> (i32, i32, i32) {
    %c0_i32 = arith.constant 0 : i32
    %c0_i32_0 = arith.constant 0 : i32
    %c0_i32_1 = arith.constant 0 : i32
    %c0_i32_2 = arith.constant 0 : i32
    return %c0_i32, %c0_i32_0, %c0_i32_1 : i32, i32, i32
  }
  func.func @transform_3(%arg0: i32) -> (i32, i32) {
    %c0_i32 = arith.constant 0 : i32
    %c0_i32_0 = arith.constant 0 : i32
    %c0_i32_1 = arith.constant 0 : i32
    return %c0_i32, %c0_i32_0 : i32, i32
  }
  func.func @transform_4(%arg0: i32) -> (i32, i32) {
    %c0_i32 = arith.constant 0 : i32
    %c0_i32_0 = arith.constant 0 : i32
    %c0_i32_1 = arith.constant 0 : i32
    return %c0_i32, %c0_i32_0 : i32, i32
  }
  func.func @transform_5(%arg0: i32) -> (i32, i32, i32) {
    %c0_i32 = arith.constant 0 : i32
    %c0_i32_0 = arith.constant 0 : i32
    %c0_i32_1 = arith.constant 0 : i32
    %c0_i32_2 = arith.constant 0 : i32
    return %c0_i32, %c0_i32_0, %c0_i32_1 : i32, i32, i32
  }
  func.func @transform_6(%arg0: i32) -> (i32, i32) {
    %c0_i32 = arith.constant 0 : i32
    %c0_i32_0 = arith.constant 0 : i32
    %c0_i32_1 = arith.constant 0 : i32
    return %c0_i32, %c0_i32_0 : i32, i32
  }
  func.func @transform_7(%arg0: i32) -> (i32, i32) {
    %c0_i32 = arith.constant 0 : i32
    %c0_i32_0 = arith.constant 0 : i32
    %c0_i32_1 = arith.constant 0 : i32
    return %c0_i32, %c0_i32_0 : i32, i32
  }
  func.func @transform_8(%arg0: i32) -> (i32, i32, i32, i32) {
    %c0_i32 = arith.constant 0 : i32
    %c0_i32_0 = arith.constant 0 : i32
    %c0_i32_1 = arith.constant 0 : i32
    %c0_i32_2 = arith.constant 0 : i32
    return %arg0, %c0_i32, %c0_i32_0, %c0_i32_1 : i32, i32, i32, i32
  }
}

</mosaic_0001>

<llo_original>
// kernel: residual_block_pallas.1
$region0: #{residual_block_pallas.1}
  #allocation0 [shape = 'u32[]', space=smem, size = 0x4, offset = 0x4, fixed_abs, tag = 'smem constant byte address 0x4 - core index']
  #allocation1 [shape = 'u32[72,128]{1,0:T(1,128)}', space=vmem, size = 0x9000, scoped, tag = 'internal scratch']
  #allocation2 [shape = 'bf16[3,18,16,128]{3,2,1,0:T(8,128)(2,1)}', space=vmem, size = 0x36000, scoped, tag = 'scratch operand']
  %s0 = inlined_call_operand.vmem [shape: bf16[2,18,18,128], index: 0, kind: input, shape index: {}]
  %s1 = inlined_call_operand.vmem [shape: f32[2,16,16,128], index: 1, kind: input, shape index: {}]
  %s2 = inlined_call_operand.vmem [shape: bf16[9,128,128], index: 2, kind: input, shape index: {}]
  %s3 = inlined_call_operand.vmem [shape: f32[1,128], index: 3, kind: input, shape index: {}]
  %s4 = inlined_call_operand.vmem [shape: f32[1,128], index: 4, kind: input, shape index: {}]
  %s5 = inlined_call_operand.vmem [shape: bf16[9,128,128], index: 5, kind: input, shape index: {}]
  %s6 = inlined_call_operand.vmem [shape: f32[1,128], index: 6, kind: input, shape index: {}]
  %s7 = inlined_call_operand.vmem [shape: f32[1,128], index: 7, kind: input, shape index: {}]
  %s8 = inlined_call_operand.vmem [shape: f32[2,16,16,128], index: 8, kind: output, shape index: {}]
  %s9 = sld [smem:[#allocation0]]
  $region65: #{residual_block_pallas.1} parent=0
    _
  %s11 = ssub.s32 1, %s9
  %s12 = scalar_select 0, %s11, %s9
  loop: start=0, step=1, limit=4
  $region2: #{residual_block_pallas.1} parent=0 // loop_pre_header
    _
  $region3: #{residual_block_pallas.1} parent=0 // loop_header
    %s14 = sphi 0, %s18
    %p15 = scmp.ge.s32.totalorder %s14, 4
    %s24 = sphi 0, %s26
    %s27 = sphi 0, %s24
    %s28 = sphi 0, %s27
    %s44 = sphi 0, %s28
    %s50 = sphi 0, %s52
    %s53 = sphi 0, %s50
    %s54 = sphi 0, %s53
    %s70 = sphi 0, %s54
    %s74 = sphi 0, %s74
    %s76 = sphi 0, %s74
    %s77 = sphi 0, %s76
    %s91 = sphi 0, %s77
    %s95 = sphi 0, %s95
    %s97 = sphi 0, %s95
    %s98 = sphi 0, %s97
    %s112 = sphi 0, %s98
    %s116 = sphi 0, %s116
    %s118 = sphi 0, %s116
    %s119 = sphi 0, %s118
    %s133 = sphi 0, %s119
    %s137 = sphi 0, %s137
    %s139 = sphi 0, %s137
    %s140 = sphi 0, %s139
    %s154 = sphi 0, %s140
    %s158 = sphi 0, %s158
    %s160 = sphi 0, %s158
    %s161 = sphi 0, %s160
    %s175 = sphi 0, %s161
    %s179 = sphi 0, %s179
    %s181 = sphi 0, %s179
    %s182 = sphi 0, %s181
    %s196 = sphi 0, %s182
    %s202 = sphi 0, %s204
    %s205 = sphi 0, %s202
    %s206 = sphi 0, %s205
    %s222 = sphi 0, %s206
  $region4: #{residual_block_pallas.1} parent=0 // loop_header_branch
    %17 = sbr.rel (%p15) target = $region8
  $region5: #{residual_block_pallas.1} parent=0 // loop_body
    %s19 = ssub.s32 %s14, 1
    %s20 = ssub.s32 %s14, 2
    %s21 = sadd.s32 %s14, 1
    %s22 = ssub.s32 %s14, %s21
    %p23 = scmp.eq.s32.totalorder %s22, 0
    %s25 = sadd.s32 %s24, 1
    %s26 = scalar_select %p23, %s24, %s25
    %p29 = pneg %p23
    %p30 = scmp.eq.s32.totalorder %s14, 1
    %p31 = por %p29, %p30
    %p32 = scmp.ne.s32.totalorder %s24, %s27
    %p33 = scmp.eq.s32.totalorder %s14, 0
    %p34 = por %p32, %p33
    %p35 = scmp.ne.s32.totalorder %s24, %s27
    %p36 = scmp.eq.s32.totalorder %s19, 1
    %p37 = por %p35, %p36
    %p38 = scmp.ne.s32.totalorder %s27, %s28
    %p39 = scmp.eq.s32.totalorder %s19, 0
    %p40 = por %p38, %p39
    %p41 = scmp.ne.s32.totalorder %s27, %s28
    %p42 = scmp.eq.s32.totalorder %s20, 1
    %p43 = por %p41, %p42
    %p45 = scmp.ne.s32.totalorder %s28, %s44
    %p46 = scmp.eq.s32.totalorder %s20, 0
    %p47 = por %p45, %p46
    %s48 = ssub.s32 %s14, %s21
    %p49 = scmp.eq.s32.totalorder %s48, 0
    %s51 = sadd.s32 %s50, 1
    %s52 = scalar_select %p49, %s50, %s51
    %p55 = pneg %p49
    %p56 = scmp.eq.s32.totalorder %s14, 1
    %p57 = por %p55, %p56
    %p58 = scmp.ne.s32.totalorder %s50, %s53
    %p59 = scmp.eq.s32.totalorder %s14, 0
    %p60 = por %p58, %p59
    %p61 = scmp.ne.s32.totalorder %s50, %s53
    %p62 = scmp.eq.s32.totalorder %s19, 1
    %p63 = por %p61, %p62
    %p64 = scmp.ne.s32.totalorder %s53, %s54
    %p65 = scmp.eq.s32.totalorder %s19, 0
    %p66 = por %p64, %p65
    %p67 = scmp.ne.s32.totalorder %s53, %s54
    %p68 = scmp.eq.s32.totalorder %s20, 1
    %p69 = por %p67, %p68
    %p71 = scmp.ne.s32.totalorder %s54, %s70
    %p72 = scmp.eq.s32.totalorder %s20, 0
    %p73 = por %p71, %p72
    %s75 = sadd.s32 %s74, 1
    %p78 = scmp.eq.s32.totalorder %s14, 1
    %p79 = scmp.ne.s32.totalorder %s74, %s76
    %p80 = scmp.eq.s32.totalorder %s14, 0
    %p81 = por %p79, %p80
    %p82 = scmp.ne.s32.totalorder %s74, %s76
    %p83 = scmp.eq.s32.totalorder %s19, 1
    %p84 = por %p82, %p83
    %p85 = scmp.ne.s32.totalorder %s76, %s77
    %p86 = scmp.eq.s32.totalorder %s19, 0
    %p87 = por %p85, %p86
    %p88 = scmp.ne.s32.totalorder %s76, %s77
    %p89 = scmp.eq.s32.totalorder %s20, 1
    %p90 = por %p88, %p89
    %p92 = scmp.ne.s32.totalorder %s77, %s91
    %p93 = scmp.eq.s32.totalorder %s20, 0
    %p94 = por %p92, %p93
    %s96 = sadd.s32 %s95, 1
    %p99 = scmp.eq.s32.totalorder %s14, 1
    %p100 = scmp.ne.s32.totalorder %s95, %s97
    %p101 = scmp.eq.s32.totalorder %s14, 0
    %p102 = por %p100, %p101
    %p103 = scmp.ne.s32.totalorder %s95, %s97
    %p104 = scmp.eq.s32.totalorder %s19, 1
    %p105 = por %p103, %p104
    %p106 = scmp.ne.s32.totalorder %s97, %s98
    %p107 = scmp.eq.s32.totalorder %s19, 0
    %p108 = por %p106, %p107
    %p109 = scmp.ne.s32.totalorder %s97, %s98
    %p110 = scmp.eq.s32.totalorder %s20, 1
    %p111 = por %p109, %p110
    %p113 = scmp.ne.s32.totalorder %s98, %s112
    %p114 = scmp.eq.s32.totalorder %s20, 0
    %p115 = por %p113, %p114
    %s117 = sadd.s32 %s116, 1
    %p120 = scmp.eq.s32.totalorder %s14, 1
    %p121 = scmp.ne.s32.totalorder %s116, %s118
    %p122 = scmp.eq.s32.totalorder %s14, 0
    %p123 = por %p121, %p122
    %p124 = scmp.ne.s32.totalorder %s116, %s118
    %p125 = scmp.eq.s32.totalorder %s19, 1
    %p126 = por %p124, %p125
    %p127 = scmp.ne.s32.totalorder %s118, %s119
    %p128 = scmp.eq.s32.totalorder %s19, 0
    %p129 = por %p127, %p128
    %p130 = scmp.ne.s32.totalorder %s118, %s119
    %p131 = scmp.eq.s32.totalorder %s20, 1
    %p132 = por %p130, %p131
    %p134 = scmp.ne.s32.totalorder %s119, %s133
    %p135 = scmp.eq.s32.totalorder %s20, 0
    %p136 = por %p134, %p135
    %s138 = sadd.s32 %s137, 1
    %p141 = scmp.eq.s32.totalorder %s14, 1
    %p142 = scmp.ne.s32.totalorder %s137, %s139
    %p143 = scmp.eq.s32.totalorder %s14, 0
    %p144 = por %p142, %p143
    %p145 = scmp.ne.s32.totalorder %s137, %s139
    %p146 = scmp.eq.s32.totalorder %s19, 1
    %p147 = por %p145, %p146
    %p148 = scmp.ne.s32.totalorder %s139, %s140
    %p149 = scmp.eq.s32.totalorder %s19, 0
    %p150 = por %p148, %p149
    %p151 = scmp.ne.s32.totalorder %s139, %s140
    %p152 = scmp.eq.s32.totalorder %s20, 1
    %p153 = por %p151, %p152
    %p155 = scmp.ne.s32.totalorder %s140, %s154
    %p156 = scmp.eq.s32.totalorder %s20, 0
    %p157 = por %p155, %p156
    %s159 = sadd.s32 %s158, 1
    %p162 = scmp.eq.s32.totalorder %s14, 1
    %p163 = scmp.ne.s32.totalorder %s158, %s160
    %p164 = scmp.eq.s32.totalorder %s14, 0
    %p165 = por %p163, %p164
    %p166 = scmp.ne.s32.totalorder %s158, %s160
    %p167 = scmp.eq.s32.totalorder %s19, 1
    %p168 = por %p166, %p167
    %p169 = scmp.ne.s32.totalorder %s160, %s161
    %p170 = scmp.eq.s32.totalorder %s19, 0
    %p171 = por %p169, %p170
    %p172 = scmp.ne.s32.totalorder %s160, %s161
    %p173 = scmp.eq.s32.totalorder %s20, 1
    %p174 = por %p172, %p173
    %p176 = scmp.ne.s32.totalorder %s161, %s175
    %p177 = scmp.eq.s32.totalorder %s20, 0
    %p178 = por %p176, %p177
    %s180 = sadd.s32 %s179, 1
    %p183 = scmp.eq.s32.totalorder %s14, 1
    %p184 = scmp.ne.s32.totalorder %s179, %s181
    %p185 = scmp.eq.s32.totalorder %s14, 0
    %p186 = por %p184, %p185
    %p187 = scmp.ne.s32.totalorder %s179, %s181
    %p188 = scmp.eq.s32.totalorder %s19, 1
    %p189 = por %p187, %p188
    %p190 = scmp.ne.s32.totalorder %s181, %s182
    %p191 = scmp.eq.s32.totalorder %s19, 0
    %p192 = por %p190, %p191
    %p193 = scmp.ne.s32.totalorder %s181, %s182
    %p194 = scmp.eq.s32.totalorder %s20, 1
    %p195 = por %p193, %p194
    %p197 = scmp.ne.s32.totalorder %s182, %s196
    %p198 = scmp.eq.s32.totalorder %s20, 0
    %p199 = por %p197, %p198
    %s200 = ssub.s32 %s14, %s21
    %p201 = scmp.eq.s32.totalorder %s200, 0
    %s203 = sadd.s32 %s202, 1
    %s204 = scalar_select %p201, %s202, %s203
    %p207 = pneg %p201
    %p208 = scmp.eq.s32.totalorder %s14, 1
    %p209 = por %p207, %p208
    %p210 = scmp.ne.s32.totalorder %s202, %s205
    %p211 = scmp.eq.s32.totalorder %s14, 0
    %p212 = por %p210, %p211
    %p213 = scmp.ne.s32.totalorder %s202, %s205
    %p214 = scmp.eq.s32.totalorder %s19, 1
    %p215 = por %p213, %p214
    %p216 = scmp.ne.s32.totalorder %s205, %s206
    %p217 = scmp.eq.s32.totalorder %s19, 0
    %p218 = por %p216, %p217
    %p219 = scmp.ne.s32.totalorder %s205, %s206
    %p220 = scmp.eq.s32.totalorder %s20, 1
    %p221 = por %p219, %p220
    %p223 = scmp.ne.s32.totalorder %s206, %s222
    %p224 = scmp.eq.s32.totalorder %s20, 0
    %p225 = por %p223, %p224
    %p226 = scmp.le.s32.totalorder 1, %s14
    %p227 = scmp.lt.s32.totalorder %s14, 3
    %p228 = pnand %p226, %p227
    %p229 = pneg %p228
    // Predicated region
    $region9: #{residual_block_pallas.1} parent=5 // pred_check
      _
    $region10: #{residual_block_pallas.1} parent=5 // pred_check_branch
      %231 = sbr.rel (%p228) target = $region12
    $region11: #{residual_block_pallas.1} parent=5 // pred_region
      %s232 = ssub.s32 %s14, 1
      // Predicated region
      $region13: #{residual_block_pallas.1} parent=11 // pred_check
        %p233 = pneg %p87
      $region14: #{residual_block_pallas.1} parent=11 // pred_check_branch
        %235 = sbr.rel (%p233) target = $region16
      $region15: #{residual_block_pallas.1} parent=11 // pred_region
        _
      $region16: #{residual_block_pallas.1} parent=11 // pred_fallthru
        _
      // Predicated region
      $region17: #{residual_block_pallas.1} parent=11 // pred_check
        %p236 = pneg %p108
      $region18: #{residual_block_pallas.1} parent=11 // pred_check_branch
        %238 = sbr.rel (%p236) target = $region20
      $region19: #{residual_block_pallas.1} parent=11 // pred_region
        _
      $region20: #{residual_block_pallas.1} parent=11 // pred_fallthru
        _
      // Predicated region
      $region21: #{residual_block_pallas.1} parent=11 // pred_check
        %p239 = pneg %p129
      $region22: #{residual_block_pallas.1} parent=11 // pred_check_branch
        %241 = sbr.rel (%p239) target = $region24
      $region23: #{residual_block_pallas.1} parent=11 // pred_region
        _
      $region24: #{residual_block_pallas.1} parent=11 // pred_fallthru
        _
      // Predicated region
      $region25: #{residual_block_pallas.1} parent=11 // pred_check
        %p242 = pneg %p150
      $region26: #{residual_block_pallas.1} parent=11 // pred_check_branch
        %244 = sbr.rel (%p242) target = $region28
      $region27: #{residual_block_pallas.1} parent=11 // pred_region
        _
      $region28: #{residual_block_pallas.1} parent=11 // pred_fallthru
        _
      // Predicated region
      $region29: #{residual_block_pallas.1} parent=11 // pred_check
        %p245 = pneg %p171
      $region30: #{residual_block_pallas.1} parent=11 // pred_check_branch
        %247 = sbr.rel (%p245) target = $region32
      $region31: #{residual_block_pallas.1} parent=11 // pred_region
        _
      $region32: #{residual_block_pallas.1} parent=11 // pred_fallthru
        _
      // Predicated region
      $region33: #{residual_block_pallas.1} parent=11 // pred_check
        %p248 = pneg %p192
      $region34: #{residual_block_pallas.1} parent=11 // pred_check_branch
        %250 = sbr.rel (%p248) target = $region36
      $region35: #{residual_block_pallas.1} parent=11 // pred_region
        _
      $region36: #{residual_block_pallas.1} parent=11 // pred_fallthru
        _
    $region12: #{residual_block_pallas.1} parent=5 // pred_fallthru
      _
    %p251 = scmp.lt.s32.totalorder %s14, 2
    // Predicated region
    $region37: #{residual_block_pallas.1} parent=5 // pred_check
      %p252 = pneg %p251
    $region38: #{residual_block_pallas.1} parent=5 // pred_check_branch
      %254 = sbr.rel (%p252) target = $region40
    $region39: #{residual_block_pallas.1} parent=5 // pred_region
      // Predicated region
      $region41: #{residual_block_pallas.1} parent=39 // pred_check
        %p255 = pneg %p34
      $region42: #{residual_block_pallas.1} parent=39 // pred_check_branch
        %257 = sbr.rel (%p255) target = $region44
      $region43: #{residual_block_pallas.1} parent=39 // pred_region
        %p258 = scmp.lt.s32.totalorder %s14, 1
        %s259 = scalar_select %p258, %s14, 1
        %s260 = smul.addr %s259, 54
        %s261 = smul.addr %s260, 4
        %s262 = scalar_lea.vmem %s0, %s261
      $region44: #{residual_block_pallas.1} parent=39 // pred_fallthru
        _
      // Predicated region
      $region45: #{residual_block_pallas.1} parent=39 // pred_check
        %p263 = pneg %p60
      $region46: #{residual_block_pallas.1} parent=39 // pred_check_branch
        %265 = sbr.rel (%p263) target = $region48
      $region47: #{residual_block_pallas.1} parent=39 // pred_region
        %p266 = scmp.lt.s32.totalorder %s14, 1
        %s267 = scalar_select %p266, %s14, 1
        %s268 = smul.addr %s267, 32
        %s269 = smul.addr %s268, 8
        %s270 = scalar_lea.vmem %s1, %s269
      $region48: #{residual_block_pallas.1} parent=39 // pred_fallthru
        _
    $region40: #{residual_block_pallas.1} parent=5 // pred_fallthru
      _
    %p271 = scmp.le.s32.totalorder 1, %s14
    %p272 = scmp.lt.s32.totalorder %s14, 3
    %p273 = pnand %p271, %p272
    %p274 = pneg %p273
    // Predicated region
    $region49: #{residual_block_pallas.1} parent=5 // pred_check
      _
    $region50: #{residual_block_pallas.1} parent=5 // pred_check_branch
      %276 = sbr.rel (%p273) target = $region52
    $region51: #{residual_block_pallas.1} parent=5 // pred_region
      %s277 = ssub.s32 %s14, 1
      %p278 = scmp.lt.s32.totalorder %s19, 1
      %s279 = scalar_select %p278, %s19, 1
      %s280 = smul.addr %s279, 54
      %s281 = smul.addr %s280, 4
      %s282 = scalar_lea.vmem %s0, %s281
      %p283 = pneg %p40
      %p284 = pneg %p37
      %p285 = scmp.lt.s32.totalorder %s19, 1
      %s286 = scalar_select %p285, %s19, 1
      %s287 = smul.addr %s286, 32
      %s288 = smul.addr %s287, 8
      %s289 = scalar_lea.vmem %s1, %s288
      %p290 = pneg %p66
      %p291 = pneg %p63
      %p292 = pneg %p87
      %p293 = pneg %p84
      %p294 = pneg %p108
      %p295 = pneg %p105
      %p296 = pneg %p129
      %p297 = pneg %p126
      %p298 = pneg %p150
      %p299 = pneg %p147
      %p300 = pneg %p171
      %p301 = pneg %p168
      %p302 = pneg %p192
      %p303 = pneg %p189
      %p304 = pneg %p218
      %p305 = pneg %p215
      %p306 = scmp.lt.s32.totalorder %s19, 1
      %s307 = scalar_select %p306, %s19, 1
      %s308 = smul.addr %s307, 32
      %s309 = smul.addr %s308, 8
      %s310 = scalar_lea.vmem %s8, %s309
      %p311 = scmp.lt.s32.totalorder %s19, 1
      %s312 = scalar_select %p311, %s19, 1
      %s313 = smul.addr %s312, 54
      %s314 = smul.addr %s313, 4
      %s315 = scalar_lea.vmem %s0, %s314
      %p316 = scmp.lt.s32.totalorder %s19, 1
      %s317 = scalar_select %p316, %s19, 1
      %s318 = smul.addr %s317, 32
      %s319 = smul.addr %s318, 8
      %s320 = scalar_lea.vmem %s1, %s319
      %p321 = scmp.lt.s32.totalorder %s19, 1
      %s322 = scalar_select %p321, %s19, 1
      %s323 = smul.addr %s322, 32
      %s324 = smul.addr %s323, 8
      %s325 = scalar_lea.vmem %s8, %s324
      %v327 = vld [vmem:[%s315] sm:$0xf]
      %v328 = vld [vmem:[%s315 + $0x4] sm:$0xf]
      %v329 = vld [vmem:[%s315 + $0xc] sm:$0xf]
      %v330 = vld [vmem:[%s315 + $0x10] sm:$0xf]
      %v331 = vld [vmem:[%s315 + $0x18] sm:$0xf]
      %v332 = vld [vmem:[%s315 + $0x1c] sm:$0xf]
      %v333 = vld [vmem:[%s315 + $0x24] sm:$0xf]
      %v334 = vld [vmem:[%s315 + $0x28] sm:$0xf]
      %v335 = vld [vmem:[%s315 + $0x30] sm:$0xf]
      %v336 = vld [vmem:[%s315 + $0x34] sm:$0xf]
      %v337 = vld [vmem:[%s315 + $0x3c] sm:$0xf]
      %v338 = vld [vmem:[%s315 + $0x40] sm:$0xf]
      %v339 = vld [vmem:[%s315 + $0x48] sm:$0xf]
      %v340 = vld [vmem:[%s315 + $0x4c] sm:$0xf]
      %v341 = vld [vmem:[%s315 + $0x54] sm:$0xf]
      %v342 = vld [vmem:[%s315 + $0x58] sm:$0xf]
      %v343 = vld [vmem:[%s315 + $0x60] sm:$0xf]
      %v344 = vld [vmem:[%s315 + $0x64] sm:$0xf]
      %v345 = vld [vmem:[%s315 + $0x6c] sm:$0xf]
      %v346 = vld [vmem:[%s315 + $0x70] sm:$0xf]
      %v347 = vld [vmem:[%s315 + $0x78] sm:$0xf]
      %v348 = vld [vmem:[%s315 + $0x7c] sm:$0xf]
      %v349 = vld [vmem:[%s315 + $0x84] sm:$0xf]
      %v350 = vld [vmem:[%s315 + $0x88] sm:$0xf]
      %v351 = vld [vmem:[%s315 + $0x90] sm:$0xf]
      %v352 = vld [vmem:[%s315 + $0x94] sm:$0xf]
      %v353 = vld [vmem:[%s315 + $0x9c] sm:$0xf]
      %v354 = vld [vmem:[%s315 + $0xa0] sm:$0xf]
      %v355 = vld [vmem:[%s315 + $0xa8] sm:$0xf]
      %v356 = vld [vmem:[%s315 + $0xac] sm:$0xf]
      %v357 = vld [vmem:[%s315 + $0xb4] sm:$0xf]
      %v358 = vld [vmem:[%s315 + $0xb8] sm:$0xf]
      %v359 = vld [vmem:[%s315 + $0xc0] sm:$0xf]
      %v360 = vld [vmem:[%s315 + $0xc4] sm:$0xf]
      %v361 = vld [vmem:[%s315 + $0xcc] sm:$0xf]
      %v362 = vld [vmem:[%s315 + $0xd0] sm:$0xf]
      %363 = vst [vmem:[#allocation2] sm:$0xf] %v327
      %364 = vst [vmem:[#allocation2 + $0x4] sm:$0xf] %v328
      %365 = vst [vmem:[#allocation2 + $0x8] sm:$0xf] %v329
      %366 = vst [vmem:[#allocation2 + $0xc] sm:$0xf] %v330
      %367 = vst [vmem:[#allocation2 + $0x10] sm:$0xf] %v331
      %368 = vst [vmem:[#allocation2 + $0x14] sm:$0xf] %v332
      %369 = vst [vmem:[#allocation2 + $0x18] sm:$0xf] %v333
      %370 = vst [vmem:[#allocation2 + $0x1c] sm:$0xf] %v334
      %371 = vst [vmem:[#allocation2 + $0x20] sm:$0xf] %v335
      %372 = vst [vmem:[#allocation2 + $0x24] sm:$0xf] %v336
      %373 = vst [vmem:[#allocation2 + $0x28] sm:$0xf] %v337
      %374 = vst [vmem:[#allocation2 + $0x2c] sm:$0xf] %v338
      %375 = vst [vmem:[#allocation2 + $0x30] sm:$0xf] %v339
      %376 = vst [vmem:[#allocation2 + $0x34] sm:$0xf] %v340
      %377 = vst [vmem:[#allocation2 + $0x38] sm:$0xf] %v341
      %378 = vst [vmem:[#allocation2 + $0x3c] sm:$0xf] %v342
      %379 = vst [vmem:[#allocation2 + $0x40] sm:$0xf] %v343
      %380 = vst [vmem:[#allocation2 + $0x44] sm:$0xf] %v344
      %381 = vst [vmem:[#allocation2 + $0x48] sm:$0xf] %v345
      %382 = vst [vmem:[#allocation2 + $0x4c] sm:$0xf] %v346
      %383 = vst [vmem:[#allocation2 + $0x50] sm:$0xf] %v347
      %384 = vst [vmem:[#allocation2 + $0x54] sm:$0xf] %v348
      %385 = vst [vmem:[#allocation2 + $0x58] sm:$0xf] %v349
      %386 = vst [vmem:[#allocation2 + $0x5c] sm:$0xf] %v350
      %387 = vst [vmem:[#allocation2 + $0x60] sm:$0xf] %v351
      %388 = vst [vmem:[#allocation2 + $0x64] sm:$0xf] %v352
      %389 = vst [vmem:[#allocation2 + $0x68] sm:$0xf] %v353
      %390 = vst [vmem:[#allocation2 + $0x6c] sm:$0xf] %v354
      %391 = vst [vmem:[#allocation2 + $0x70] sm:$0xf] %v355
      %392 = vst [vmem:[#allocation2 + $0x74] sm:$0xf] %v356
      %393 = vst [vmem:[#allocation2 + $0x78] sm:$0xf] %v357
      %394 = vst [vmem:[#allocation2 + $0x7c] sm:$0xf] %v358
      %395 = vst [vmem:[#allocation2 + $0x80] sm:$0xf] %v359
      %396 = vst [vmem:[#allocation2 + $0x84] sm:$0xf] %v360
      %397 = vst [vmem:[#allocation2 + $0x88] sm:$0xf] %v361
      %398 = vst [vmem:[#allocation2 + $0x8c] sm:$0xf] %v362
      %v399 = vld [vmem:[%s315] sm:$0xf]
      %v400 = vld [vmem:[%s315 + $0x4] sm:$0xf]
      %v401 = vld [vmem:[%s315 + $0x8] sm:$0x1]
      %v402 = vld [vmem:[%s315 + $0xc] sm:$0xf]
      %v403 = vld [vmem:[%s315 + $0x10] sm:$0xf]
      %v404 = vld [vmem:[%s315 + $0x14] sm:$0x1]
      %v405 = vld [vmem:[%s315 + $0x18] sm:$0xf]
      %v406 = vld [vmem:[%s315 + $0x1c] sm:$0xf]
      %v407 = vld [vmem:[%s315 + $0x20] sm:$0x1]
      %v408 = vld [vmem:[%s315 + $0x24] sm:$0xf]
      %v409 = vld [vmem:[%s315 + $0x28] sm:$0xf]
      %v410 = vld [vmem:[%s315 + $0x2c] sm:$0x1]
      %v411 = vld [vmem:[%s315 + $0x30] sm:$0xf]
      %v412 = vld [vmem:[%s315 + $0x34] sm:$0xf]
      %v413 = vld [vmem:[%s315 + $0x38] sm:$0x1]
      %v414 = vld [vmem:[%s315 + $0x3c] sm:$0xf]
      %v415 = vld [vmem:[%s315 + $0x40] sm:$0xf]
      %v416 = vld [vmem:[%s315 + $0x44] sm:$0x1]
      %v417 = vld [vmem:[%s315 + $0x48] sm:$0xf]
      %v418 = vld [vmem:[%s315 + $0x4c] sm:$0xf]
      %v419 = vld [vmem:[%s315 + $0x50] sm:$0x1]
      %v420 = vld [vmem:[%s315 + $0x54] sm:$0xf]
      %v421 = vld [vmem:[%s315 + $0x58] sm:$0xf]
      %v422 = vld [vmem:[%s315 + $0x5c] sm:$0x1]
      %v423 = vld [vmem:[%s315 + $0x60] sm:$0xf]
      %v424 = vld [vmem:[%s315 + $0x64] sm:$0xf]
      %v425 = vld [vmem:[%s315 + $0x68] sm:$0x1]
      %v426 = vld [vmem:[%s315 + $0x6c] sm:$0xf]
      %v427 = vld [vmem:[%s315 + $0x70] sm:$0xf]
      %v428 = vld [vmem:[%s315 + $0x74] sm:$0x1]
      %v429 = vld [vmem:[%s315 + $0x78] sm:$0xf]
      %v430 = vld [vmem:[%s315 + $0x7c] sm:$0xf]
      %v431 = vld [vmem:[%s315 + $0x80] sm:$0x1]
      %v432 = vld [vmem:[%s315 + $0x84] sm:$0xf]
      %v433 = vld [vmem:[%s315 + $0x88] sm:$0xf]
      %v434 = vld [vmem:[%s315 + $0x8c] sm:$0x1]
      %v435 = vld [vmem:[%s315 + $0x90] sm:$0xf]
      %v436 = vld [vmem:[%s315 + $0x94] sm:$0xf]
      %v437 = vld [vmem:[%s315 + $0x98] sm:$0x1]
      %v438 = vld [vmem:[%s315 + $0x9c] sm:$0xf]
      %v439 = vld [vmem:[%s315 + $0xa0] sm:$0xf]
      %v440 = vld [vmem:[%s315 + $0xa4] sm:$0x1]
      %v441 = vld [vmem:[%s315 + $0xa8] sm:$0xf]
      %v442 = vld [vmem:[%s315 + $0xac] sm:$0xf]
      %v443 = vld [vmem:[%s315 + $0xb0] sm:$0x1]
      %v444 = vld [vmem:[%s315 + $0xb4] sm:$0xf]
      %v445 = vld [vmem:[%s315 + $0xb8] sm:$0xf]
      %v446 = vld [vmem:[%s315 + $0xbc] sm:$0x1]
      %v447 = vld [vmem:[%s315 + $0xc0] sm:$0xf]
      %v448 = vld [vmem:[%s315 + $0xc4] sm:$0xf]
      %v449 = vld [vmem:[%s315 + $0xc8] sm:$0x1]
      %v450 = vld [vmem:[%s315 + $0xcc] sm:$0xf]
      %v451 = vld [vmem:[%s315 + $0xd0] sm:$0xf]
      %v452 = vld [vmem:[%s315 + $0xd4] sm:$0x1]
      %vm453 = vsmask.f32 3328
      %vm454 = vsmask.f32 7440
      %vm455 = vmor %vm453, %vm454
      %v457 = vshrl.u32 %v399, 16
      %v459 = vrot.slane %v457, 4
      %v460 = vshll.u32 %v399, 16
      %v462 = vrot.slane %v460, 5
      %v463 = vor.u32 %v459, %v462
      %v464 = vrot.slane %v463, 4
      %v466 = vshll.u32 %v400, 16
      %v468 = vrot.slane %v466, 5
      %v469 = vsel %vm455, %v464, %v468
      %v470 = vshrl.u32 %v400, 16
      %v472 = vrot.slane %v470, 4
      %v473 = vor.u32 %v472, %v468
      %v474 = vrot.slane %v473, 4
      %v476 = vshll.u32 %v401, 16
      %v478 = vrot.slane %v476, 5
      %v479 = vsel %vm455, %v474, %v478
      %v481 = vshrl.u32 %v402, 16
      %v483 = vrot.slane %v481, 4
      %v484 = vshll.u32 %v402, 16
      %v486 = vrot.slane %v484, 5
      %v487 = vor.u32 %v483, %v486
      %v488 = vrot.slane %v487, 4
      %v490 = vshll.u32 %v403, 16
      %v492 = vrot.slane %v490, 5
      %v493 = vsel %vm455, %v488, %v492
      %v494 = vshrl.u32 %v403, 16
      %v496 = vrot.slane %v494, 4
      %v497 = vor.u32 %v496, %v492
      %v498 = vrot.slane %v497, 4
      %v500 = vshll.u32 %v404, 16
      %v502 = vrot.slane %v500, 5
      %v503 = vsel %vm455, %v498, %v502
      %v505 = vshrl.u32 %v405, 16
      %v507 = vrot.slane %v505, 4
      %v508 = vshll.u32 %v405, 16
      %v510 = vrot.slane %v508, 5
      %v511 = vor.u32 %v507, %v510
      %v512 = vrot.slane %v511, 4
      %v514 = vshll.u32 %v406, 16
      %v516 = vrot.slane %v514, 5
      %v517 = vsel %vm455, %v512, %v516
      %v518 = vshrl.u32 %v406, 16
      %v520 = vrot.slane %v518, 4
      %v521 = vor.u32 %v520, %v516
      %v522 = vrot.slane %v521, 4
      %v524 = vshll.u32 %v407, 16
      %v526 = vrot.slane %v524, 5
      %v527 = vsel %vm455, %v522, %v526
      %v529 = vshrl.u32 %v408, 16
      %v531 = vrot.slane %v529, 4
      %v532 = vshll.u32 %v408, 16
      %v534 = vrot.slane %v532, 5
      %v535 = vor.u32 %v531, %v534
      %v536 = vrot.slane %v535, 4
      %v538 = vshll.u32 %v409, 16
      %v540 = vrot.slane %v538, 5
      %v541 = vsel %vm455, %v536, %v540
      %v542 = vshrl.u32 %v409, 16
      %v544 = vrot.slane %v542, 4
      %v545 = vor.u32 %v544, %v540
      %v546 = vrot.slane %v545, 4
      %v548 = vshll.u32 %v410, 16
      %v550 = vrot.slane %v548, 5
      %v551 = vsel %vm455, %v546, %v550
      %v553 = vshrl.u32 %v411, 16
      %v555 = vrot.slane %v553, 4
      %v556 = vshll.u32 %v411, 16
      %v558 = vrot.slane %v556, 5
      %v559 = vor.u32 %v555, %v558
      %v560 = vrot.slane %v559, 4
      %v562 = vshll.u32 %v412, 16
      %v564 = vrot.slane %v562, 5
      %v565 = vsel %vm455, %v560, %v564
      %v566 = vshrl.u32 %v412, 16
      %v568 = vrot.slane %v566, 4
      %v569 = vor.u32 %v568, %v564
      %v570 = vrot.slane %v569, 4
      %v572 = vshll.u32 %v413, 16
      %v574 = vrot.slane %v572, 5
      %v575 = vsel %vm455, %v570, %v574
      %v577 = vshrl.u32 %v414, 16
      %v579 = vrot.slane %v577, 4
      %v580 = vshll.u32 %v414, 16
      %v582 = vrot.slane %v580, 5
      %v583 = vor.u32 %v579, %v582
      %v584 = vrot.slane %v583, 4
      %v586 = vshll.u32 %v415, 16
      %v588 = vrot.slane %v586, 5
      %v589 = vsel %vm455, %v584, %v588
      %v590 = vshrl.u32 %v415, 16
      %v592 = vrot.slane %v590, 4
      %v593 = vor.u32 %v592, %v588
      %v594 = vrot.slane %v593, 4
      %v596 = vshll.u32 %v416, 16
      %v598 = vrot.slane %v596, 5
      %v599 = vsel %vm455, %v594, %v598
      %v601 = vshrl.u32 %v417, 16
      %v603 = vrot.slane %v601, 4
      %v604 = vshll.u32 %v417, 16
      %v606 = vrot.slane %v604, 5
      %v607 = vor.u32 %v603, %v606
      %v608 = vrot.slane %v607, 4
      %v610 = vshll.u32 %v418, 16
      %v612 = vrot.slane %v610, 5
      %v613 = vsel %vm455, %v608, %v612
      %v614 = vshrl.u32 %v418, 16
      %v616 = vrot.slane %v614, 4
      %v617 = vor.u32 %v616, %v612
      %v618 = vrot.slane %v617, 4
      %v620 = vshll.u32 %v419, 16
      %v622 = vrot.slane %v620, 5
      %v623 = vsel %vm455, %v618, %v622
      %v625 = vshrl.u32 %v420, 16
      %v627 = vrot.slane %v625, 4
      %v628 = vshll.u32 %v420, 16
      %v630 = vrot.slane %v628, 5
      %v631 = vor.u32 %v627, %v630
      %v632 = vrot.slane %v631, 4
      %v634 = vshll.u32 %v421, 16
      %v636 = vrot.slane %v634, 5
      %v637 = vsel %vm455, %v632, %v636
      %v638 = vshrl.u32 %v421, 16
      %v640 = vrot.slane %v638, 4
      %v641 = vor.u32 %v640, %v636
      %v642 = vrot.slane %v641, 4
      %v644 = vshll.u32 %v422, 16
      %v646 = vrot.slane %v644, 5
      %v647 = vsel %vm455, %v642, %v646
      %v649 = vshrl.u32 %v423, 16
      %v651 = vrot.slane %v649, 4
      %v652 = vshll.u32 %v423, 16
      %v654 = vrot.slane %v652, 5
      %v655 = vor.u32 %v651, %v654
      %v656 = vrot.slane %v655, 4
      %v658 = vshll.u32 %v424, 16
      %v660 = vrot.slane %v658, 5
      %v661 = vsel %vm455, %v656, %v660
      %v662 = vshrl.u32 %v424, 16
      %v664 = vrot.slane %v662, 4
      %v665 = vor.u32 %v664, %v660
      %v666 = vrot.slane %v665, 4
      %v668 = vshll.u32 %v425, 16
      %v670 = vrot.slane %v668, 5
      %v671 = vsel %vm455, %v666, %v670
      %v673 = vshrl.u32 %v426, 16
      %v675 = vrot.slane %v673, 4
      %v676 = vshll.u32 %v426, 16
      %v678 = vrot.slane %v676, 5
      %v679 = vor.u32 %v675, %v678
      %v680 = vrot.slane %v679, 4
      %v682 = vshll.u32 %v427, 16
      %v684 = vrot.slane %v682, 5
      %v685 = vsel %vm455, %v680, %v684
      %v686 = vshrl.u32 %v427, 16
      %v688 = vrot.slane %v686, 4
      %v689 = vor.u32 %v688, %v684
      %v690 = vrot.slane %v689, 4
      %v692 = vshll.u32 %v428, 16
      %v694 = vrot.slane %v692, 5
      %v695 = vsel %vm455, %v690, %v694
      %v697 = vshrl.u32 %v429, 16
      %v699 = vrot.slane %v697, 4
      %v700 = vshll.u32 %v429, 16
      %v702 = vrot.slane %v700, 5
      %v703 = vor.u32 %v699, %v702
      %v704 = vrot.slane %v703, 4
      %v706 = vshll.u32 %v430, 16
      %v708 = vrot.slane %v706, 5
      %v709 = vsel %vm455, %v704, %v708
      %v710 = vshrl.u32 %v430, 16
      %v712 = vrot.slane %v710, 4
      %v713 = vor.u32 %v712, %v708
      %v714 = vrot.slane %v713, 4
      %v716 = vshll.u32 %v431, 16
      %v718 = vrot.slane %v716, 5
      %v719 = vsel %vm455, %v714, %v718
      %v721 = vshrl.u32 %v432, 16
      %v723 = vrot.slane %v721, 4
      %v724 = vshll.u32 %v432, 16
      %v726 = vrot.slane %v724, 5
      %v727 = vor.u32 %v723, %v726
      %v728 = vrot.slane %v727, 4
      %v730 = vshll.u32 %v433, 16
      %v732 = vrot.slane %v730, 5
      %v733 = vsel %vm455, %v728, %v732
      %v734 = vshrl.u32 %v433, 16
      %v736 = vrot.slane %v734, 4
      %v737 = vor.u32 %v736, %v732
      %v738 = vrot.slane %v737, 4
      %v740 = vshll.u32 %v434, 16
      %v742 = vrot.slane %v740, 5
      %v743 = vsel %vm455, %v738, %v742
      %v745 = vshrl.u32 %v435, 16
      %v747 = vrot.slane %v745, 4
      %v748 = vshll.u32 %v435, 16
      %v750 = vrot.slane %v748, 5
      %v751 = vor.u32 %v747, %v750
      %v752 = vrot.slane %v751, 4
      %v754 = vshll.u32 %v436, 16
      %v756 = vrot.slane %v754, 5
      %v757 = vsel %vm455, %v752, %v756
      %v758 = vshrl.u32 %v436, 16
      %v760 = vrot.slane %v758, 4
      %v761 = vor.u32 %v760, %v756
      %v762 = vrot.slane %v761, 4
      %v764 = vshll.u32 %v437, 16
      %v766 = vrot.slane %v764, 5
      %v767 = vsel %vm455, %v762, %v766
      %v769 = vshrl.u32 %v438, 16
      %v771 = vrot.slane %v769, 4
      %v772 = vshll.u32 %v438, 16
      %v774 = vrot.slane %v772, 5
      %v775 = vor.u32 %v771, %v774
      %v776 = vrot.slane %v775, 4
      %v778 = vshll.u32 %v439, 16
      %v780 = vrot.slane %v778, 5
      %v781 = vsel %vm455, %v776, %v780
      %v782 = vshrl.u32 %v439, 16
      %v784 = vrot.slane %v782, 4
      %v785 = vor.u32 %v784, %v780
      %v786 = vrot.slane %v785, 4
      %v788 = vshll.u32 %v440, 16
      %v790 = vrot.slane %v788, 5
      %v791 = vsel %vm455, %v786, %v790
      %v793 = vshrl.u32 %v441, 16
      %v795 = vrot.slane %v793, 4
      %v796 = vshll.u32 %v441, 16
      %v798 = vrot.slane %v796, 5
      %v799 = vor.u32 %v795, %v798
      %v800 = vrot.slane %v799, 4
      %v802 = vshll.u32 %v442, 16
      %v804 = vrot.slane %v802, 5
      %v805 = vsel %vm455, %v800, %v804
      %v806 = vshrl.u32 %v442, 16
      %v808 = vrot.slane %v806, 4
      %v809 = vor.u32 %v808, %v804
      %v810 = vrot.slane %v809, 4
      %v812 = vshll.u32 %v443, 16
      %v814 = vrot.slane %v812, 5
      %v815 = vsel %vm455, %v810, %v814
      %v817 = vshrl.u32 %v444, 16
      %v819 = vrot.slane %v817, 4
      %v820 = vshll.u32 %v444, 16
      %v822 = vrot.slane %v820, 5
      %v823 = vor.u32 %v819, %v822
      %v824 = vrot.slane %v823, 4
      %v826 = vshll.u32 %v445, 16
      %v828 = vrot.slane %v826, 5
      %v829 = vsel %vm455, %v824, %v828
      %v830 = vshrl.u32 %v445, 16
      %v832 = vrot.slane %v830, 4
      %v833 = vor.u32 %v832, %v828
      %v834 = vrot.slane %v833, 4
      %v836 = vshll.u32 %v446, 16
      %v838 = vrot.slane %v836, 5
      %v839 = vsel %vm455, %v834, %v838
      %v841 = vshrl.u32 %v447, 16
      %v843 = vrot.slane %v841, 4
      %v844 = vshll.u32 %v447, 16
      %v846 = vrot.slane %v844, 5
      %v847 = vor.u32 %v843, %v846
      %v848 = vrot.slane %v847, 4
      %v850 = vshll.u32 %v448, 16
      %v852 = vrot.slane %v850, 5
      %v853 = vsel %vm455, %v848, %v852
      %v854 = vshrl.u32 %v448, 16
      %v856 = vrot.slane %v854, 4
      %v857 = vor.u32 %v856, %v852
      %v858 = vrot.slane %v857, 4
      %v860 = vshll.u32 %v449, 16
      %v862 = vrot.slane %v860, 5
      %v863 = vsel %vm455, %v858, %v862
      %v865 = vshrl.u32 %v450, 16
      %v867 = vrot.slane %v865, 4
      %v868 = vshll.u32 %v450, 16
      %v870 = vrot.slane %v868, 5
      %v871 = vor.u32 %v867, %v870
      %v872 = vrot.slane %v871, 4
      %v874 = vshll.u32 %v451, 16
      %v876 = vrot.slane %v874, 5
      %v877 = vsel %vm455, %v872, %v876
      %v878 = vshrl.u32 %v451, 16
      %v880 = vrot.slane %v878, 4
      %v881 = vor.u32 %v880, %v876
      %v882 = vrot.slane %v881, 4
      %v884 = vshll.u32 %v452, 16
      %v886 = vrot.slane %v884, 5
      %v887 = vsel %vm455, %v882, %v886
      %s924 = scalar_lea.vmem [#allocation2], 144
      %925 = vst [vmem:[%s924] sm:$0xf] %v469
      %926 = vst [vmem:[%s924 + $0x4] sm:$0xf] %v479
      %927 = vst [vmem:[%s924 + $0x8] sm:$0xf] %v493
      %928 = vst [vmem:[%s924 + $0xc] sm:$0xf] %v503
      %929 = vst [vmem:[%s924 + $0x10] sm:$0xf] %v517
      %930 = vst [vmem:[%s924 + $0x14] sm:$0xf] %v527
      %931 = vst [vmem:[%s924 + $0x18] sm:$0xf] %v541
      %932 = vst [vmem:[%s924 + $0x1c] sm:$0xf] %v551
      %933 = vst [vmem:[%s924 + $0x20] sm:$0xf] %v565
      %934 = vst [vmem:[%s924 + $0x24] sm:$0xf] %v575
      %935 = vst [vmem:[%s924 + $0x28] sm:$0xf] %v589
      %936 = vst [vmem:[%s924 + $0x2c] sm:$0xf] %v599
      %937 = vst [vmem:[%s924 + $0x30] sm:$0xf] %v613
      %938 = vst [vmem:[%s924 + $0x34] sm:$0xf] %v623
      %939 = vst [vmem:[%s924 + $0x38] sm:$0xf] %v637
      %940 = vst [vmem:[%s924 + $0x3c] sm:$0xf] %v647
      %941 = vst [vmem:[%s924 + $0x40] sm:$0xf] %v661
      %942 = vst [vmem:[%s924 + $0x44] sm:$0xf] %v671
      %943 = vst [vmem:[%s924 + $0x48] sm:$0xf] %v685
      %944 = vst [vmem:[%s924 + $0x4c] sm:$0xf] %v695
      %945 = vst [vmem:[%s924 + $0x50] sm:$0xf] %v709
      %946 = vst [vmem:[%s924 + $0x54] sm:$0xf] %v719
      %947 = vst [vmem:[%s924 + $0x58] sm:$0xf] %v733
      %948 = vst [vmem:[%s924 + $0x5c] sm:$0xf] %v743
      %949 = vst [vmem:[%s924 + $0x60] sm:$0xf] %v757
      %950 = vst [vmem:[%s924 + $0x64] sm:$0xf] %v767
      %951 = vst [vmem:[%s924 + $0x68] sm:$0xf] %v781
      %952 = vst [vmem:[%s924 + $0x6c] sm:$0xf] %v791
      %953 = vst [vmem:[%s924 + $0x70] sm:$0xf] %v805
      %954 = vst [vmem:[%s924 + $0x74] sm:$0xf] %v815
      %955 = vst [vmem:[%s924 + $0x78] sm:$0xf] %v829
      %956 = vst [vmem:[%s924 + $0x7c] sm:$0xf] %v839
      %957 = vst [vmem:[%s924 + $0x80] sm:$0xf] %v853
      %958 = vst [vmem:[%s924 + $0x84] sm:$0xf] %v863
      %959 = vst [vmem:[%s924 + $0x88] sm:$0xf] %v877
      %960 = vst [vmem:[%s924 + $0x8c] sm:$0xf] %v887
      %v961 = vld [vmem:[%s315] sm:$0xe]
      %v962 = vld [vmem:[%s315 + $0x4] sm:$0xf]
      %v963 = vld [vmem:[%s315 + $0x8] sm:$0x1]
      %v964 = vld [vmem:[%s315 + $0xc] sm:$0xe]
      %v965 = vld [vmem:[%s315 + $0x10] sm:$0xf]
      %v966 = vld [vmem:[%s315 + $0x14] sm:$0x1]
      %v967 = vld [vmem:[%s315 + $0x18] sm:$0xe]
      %v968 = vld [vmem:[%s315 + $0x1c] sm:$0xf]
      %v969 = vld [vmem:[%s315 + $0x20] sm:$0x1]
      %v970 = vld [vmem:[%s315 + $0x24] sm:$0xe]
      %v971 = vld [vmem:[%s315 + $0x28] sm:$0xf]
      %v972 = vld [vmem:[%s315 + $0x2c] sm:$0x1]
      %v973 = vld [vmem:[%s315 + $0x30] sm:$0xe]
      %v974 = vld [vmem:[%s315 + $0x34] sm:$0xf]
      %v975 = vld [vmem:[%s315 + $0x38] sm:$0x1]
      %v976 = vld [vmem:[%s315 + $0x3c] sm:$0xe]
      %v977 = vld [vmem:[%s315 + $0x40] sm:$0xf]
      %v978 = vld [vmem:[%s315 + $0x44] sm:$0x1]
      %v979 = vld [vmem:[%s315 + $0x48] sm:$0xe]
      %v980 = vld [vmem:[%s315 + $0x4c] sm:$0xf]
      %v981 = vld [vmem:[%s315 + $0x50] sm:$0x1]
      %v982 = vld [vmem:[%s315 + $0x54] sm:$0xe]
      %v983 = vld [vmem:[%s315 + $0x58] sm:$0xf]
      %v984 = vld [vmem:[%s315 + $0x5c] sm:$0x1]
      %v985 = vld [vmem:[%s315 + $0x60] sm:$0xe]
      %v986 = vld [vmem:[%s315 + $0x64] sm:$0xf]
      %v987 = vld [vmem:[%s315 + $0x68] sm:$0x1]
      %v988 = vld [vmem:[%s315 + $0x6c] sm:$0xe]
      %v989 = vld [vmem:[%s315 + $0x70] sm:$0xf]
      %v990 = vld [vmem:[%s315 + $0x74] sm:$0x1]
      %v991 = vld [vmem:[%s315 + $0x78] sm:$0xe]
      %v992 = vld [vmem:[%s315 + $0x7c] sm:$0xf]
      %v993 = vld [vmem:[%s315 + $0x80] sm:$0x1]
      %v994 = vld [vmem:[%s315 + $0x84] sm:$0xe]
      %v995 = vld [vmem:[%s315 + $0x88] sm:$0xf]
      %v996 = vld [vmem:[%s315 + $0x8c] sm:$0x1]
      %v997 = vld [vmem:[%s315 + $0x90] sm:$0xe]
      %v998 = vld [vmem:[%s315 + $0x94] sm:$0xf]
      %v999 = vld [vmem:[%s315 + $0x98] sm:$0x1]
      %v1000 = vld [vmem:[%s315 + $0x9c] sm:$0xe]
      %v1001 = vld [vmem:[%s315 + $0xa0] sm:$0xf]
      %v1002 = vld [vmem:[%s315 + $0xa4] sm:$0x1]
      %v1003 = vld [vmem:[%s315 + $0xa8] sm:$0xe]
      %v1004 = vld [vmem:[%s315 + $0xac] sm:$0xf]
      %v1005 = vld [vmem:[%s315 + $0xb0] sm:$0x1]
      %v1006 = vld [vmem:[%s315 + $0xb4] sm:$0xe]
      %v1007 = vld [vmem:[%s315 + $0xb8] sm:$0xf]
      %v1008 = vld [vmem:[%s315 + $0xbc] sm:$0x1]
      %v1009 = vld [vmem:[%s315 + $0xc0] sm:$0xe]
      %v1010 = vld [vmem:[%s315 + $0xc4] sm:$0xf]
      %v1011 = vld [vmem:[%s315 + $0xc8] sm:$0x1]
      %v1012 = vld [vmem:[%s315 + $0xcc] sm:$0xe]
      %v1013 = vld [vmem:[%s315 + $0xd0] sm:$0xf]
      %v1014 = vld [vmem:[%s315 + $0xd4] sm:$0x1]
      %vm1069 = vcmask 1042432
      %vm1070 = vcmask 1046532
      %vm1071 = vmor %vm1069, %vm1070
      %v1072 = vrot.slane %v961, 5
      %v1073 = vrot.slane %v1072, 4
      %v1074 = vrot.slane %v962, 5
      %v1075 = vsel %vm1071, %v1073, %v1074
      %v1076 = vrot.slane %v1074, 4
      %v1077 = vrot.slane %v963, 5
      %v1078 = vsel %vm1071, %v1076, %v1077
      %v1079 = vrot.slane %v964, 5
      %v1080 = vrot.slane %v1079, 4
      %v1081 = vrot.slane %v965, 5
      %v1082 = vsel %vm1071, %v1080, %v1081
      %v1083 = vrot.slane %v1081, 4
      %v1084 = vrot.slane %v966, 5
      %v1085 = vsel %vm1071, %v1083, %v1084
      %v1086 = vrot.slane %v967, 5
      %v1087 = vrot.slane %v1086, 4
      %v1088 = vrot.slane %v968, 5
      %v1089 = vsel %vm1071, %v1087, %v1088
      %v1090 = vrot.slane %v1088, 4
      %v1091 = vrot.slane %v969, 5
      %v1092 = vsel %vm1071, %v1090, %v1091
      %v1093 = vrot.slane %v970, 5
      %v1094 = vrot.slane %v1093, 4
      %v1095 = vrot.slane %v971, 5
      %v1096 = vsel %vm1071, %v1094, %v1095
      %v1097 = vrot.slane %v1095, 4
      %v1098 = vrot.slane %v972, 5
      %v1099 = vsel %vm1071, %v1097, %v1098
      %v1100 = vrot.slane %v973, 5
      %v1101 = vrot.slane %v1100, 4
      %v1102 = vrot.slane %v974, 5
      %v1103 = vsel %vm1071, %v1101, %v1102
      %v1104 = vrot.slane %v1102, 4
      %v1105 = vrot.slane %v975, 5
      %v1106 = vsel %vm1071, %v1104, %v1105
      %v1107 = vrot.slane %v976, 5
      %v1108 = vrot.slane %v1107, 4
      %v1109 = vrot.slane %v977, 5
      %v1110 = vsel %vm1071, %v1108, %v1109
      %v1111 = vrot.slane %v1109, 4
      %v1112 = vrot.slane %v978, 5
      %v1113 = vsel %vm1071, %v1111, %v1112
      %v1114 = vrot.slane %v979, 5
      %v1115 = vrot.slane %v1114, 4
      %v1116 = vrot.slane %v980, 5
      %v1117 = vsel %vm1071, %v1115, %v1116
      %v1118 = vrot.slane %v1116, 4
      %v1119 = vrot.slane %v981, 5
      %v1120 = vsel %vm1071, %v1118, %v1119
      %v1121 = vrot.slane %v982, 5
      %v1122 = vrot.slane %v1121, 4
      %v1123 = vrot.slane %v983, 5
      %v1124 = vsel %vm1071, %v1122, %v1123
      %v1125 = vrot.slane %v1123, 4
      %v1126 = vrot.slane %v984, 5
      %v1127 = vsel %vm1071, %v1125, %v1126
      %v1128 = vrot.slane %v985, 5
      %v1129 = vrot.slane %v1128, 4
      %v1130 = vrot.slane %v986, 5
      %v1131 = vsel %vm1071, %v1129, %v1130
      %v1132 = vrot.slane %v1130, 4
      %v1133 = vrot.slane %v987, 5
      %v1134 = vsel %vm1071, %v1132, %v1133
      %v1135 = vrot.slane %v988, 5
      %v1136 = vrot.slane %v1135, 4
      %v1137 = vrot.slane %v989, 5
      %v1138 = vsel %vm1071, %v1136, %v1137
      %v1139 = vrot.slane %v1137, 4
      %v1140 = vrot.slane %v990, 5
      %v1141 = vsel %vm1071, %v1139, %v1140
      %v1142 = vrot.slane %v991, 5
      %v1143 = vrot.slane %v1142, 4
      %v1144 = vrot.slane %v992, 5
      %v1145 = vsel %vm1071, %v1143, %v1144
      %v1146 = vrot.slane %v1144, 4
      %v1147 = vrot.slane %v993, 5
      %v1148 = vsel %vm1071, %v1146, %v1147
      %v1149 = vrot.slane %v994, 5
      %v1150 = vrot.slane %v1149, 4
      %v1151 = vrot.slane %v995, 5
      %v1152 = vsel %vm1071, %v1150, %v1151
      %v1153 = vrot.slane %v1151, 4
      %v1154 = vrot.slane %v996, 5
      %v1155 = vsel %vm1071, %v1153, %v1154
      %v1156 = vrot.slane %v997, 5
      %v1157 = vrot.slane %v1156, 4
      %v1158 = vrot.slane %v998, 5
      %v1159 = vsel %vm1071, %v1157, %v1158
      %v1160 = vrot.slane %v1158, 4
      %v1161 = vrot.slane %v999, 5
      %v1162 = vsel %vm1071, %v1160, %v1161
      %v1163 = vrot.slane %v1000, 5
      %v1164 = vrot.slane %v1163, 4
      %v1165 = vrot.slane %v1001, 5
      %v1166 = vsel %vm1071, %v1164, %v1165
      %v1167 = vrot.slane %v1165, 4
      %v1168 = vrot.slane %v1002, 5
      %v1169 = vsel %vm1071, %v1167, %v1168
      %v1170 = vrot.slane %v1003, 5
      %v1171 = vrot.slane %v1170, 4
      %v1172 = vrot.slane %v1004, 5
      %v1173 = vsel %vm1071, %v1171, %v1172
      %v1174 = vrot.slane %v1172, 4
      %v1175 = vrot.slane %v1005, 5
      %v1176 = vsel %vm1071, %v1174, %v1175
      %v1177 = vrot.slane %v1006, 5
      %v1178 = vrot.slane %v1177, 4
      %v1179 = vrot.slane %v1007, 5
      %v1180 = vsel %vm1071, %v1178, %v1179
      %v1181 = vrot.slane %v1179, 4
      %v1182 = vrot.slane %v1008, 5
      %v1183 = vsel %vm1071, %v1181, %v1182
      %v1184 = vrot.slane %v1009, 5
      %v1185 = vrot.slane %v1184, 4
      %v1186 = vrot.slane %v1010, 5
      %v1187 = vsel %vm1071, %v1185, %v1186
      %v1188 = vrot.slane %v1186, 4
      %v1189 = vrot.slane %v1011, 5
      %v1190 = vsel %vm1071, %v1188, %v1189
      %v1191 = vrot.slane %v1012, 5
      %v1192 = vrot.slane %v1191, 4
      %v1193 = vrot.slane %v1013, 5
      %v1194 = vsel %vm1071, %v1192, %v1193
      %v1195 = vrot.slane %v1193, 4
      %v1196 = vrot.slane %v1014, 5
      %v1197 = vsel %vm1071, %v1195, %v1196
      %s1234 = scalar_lea.vmem [#allocation2], 288
      %1235 = vst [vmem:[%s1234] sm:$0xf] %v1075
      %1236 = vst [vmem:[%s1234 + $0x4] sm:$0xf] %v1078
      %1237 = vst [vmem:[%s1234 + $0x8] sm:$0xf] %v1082
      %1238 = vst [vmem:[%s1234 + $0xc] sm:$0xf] %v1085
      %1239 = vst [vmem:[%s1234 + $0x10] sm:$0xf] %v1089
      %1240 = vst [vmem:[%s1234 + $0x14] sm:$0xf] %v1092
      %1241 = vst [vmem:[%s1234 + $0x18] sm:$0xf] %v1096
      %1242 = vst [vmem:[%s1234 + $0x1c] sm:$0xf] %v1099
      %1243 = vst [vmem:[%s1234 + $0x20] sm:$0xf] %v1103
      %1244 = vst [vmem:[%s1234 + $0x24] sm:$0xf] %v1106
      %1245 = vst [vmem:[%s1234 + $0x28] sm:$0xf] %v1110
      %1246 = vst [vmem:[%s1234 + $0x2c] sm:$0xf] %v1113
      %1247 = vst [vmem:[%s1234 + $0x30] sm:$0xf] %v1117
      %1248 = vst [vmem:[%s1234 + $0x34] sm:$0xf] %v1120
      %1249 = vst [vmem:[%s1234 + $0x38] sm:$0xf] %v1124
      %1250 = vst [vmem:[%s1234 + $0x3c] sm:$0xf] %v1127
      %1251 = vst [vmem:[%s1234 + $0x40] sm:$0xf] %v1131
      %1252 = vst [vmem:[%s1234 + $0x44] sm:$0xf] %v1134
      %1253 = vst [vmem:[%s1234 + $0x48] sm:$0xf] %v1138
      %1254 = vst [vmem:[%s1234 + $0x4c] sm:$0xf] %v1141
      %1255 = vst [vmem:[%s1234 + $0x50] sm:$0xf] %v1145
      %1256 = vst [vmem:[%s1234 + $0x54] sm:$0xf] %v1148
      %1257 = vst [vmem:[%s1234 + $0x58] sm:$0xf] %v1152
      %1258 = vst [vmem:[%s1234 + $0x5c] sm:$0xf] %v1155
      %1259 = vst [vmem:[%s1234 + $0x60] sm:$0xf] %v1159
      %1260 = vst [vmem:[%s1234 + $0x64] sm:$0xf] %v1162
      %1261 = vst [vmem:[%s1234 + $0x68] sm:$0xf] %v1166
      %1262 = vst [vmem:[%s1234 + $0x6c] sm:$0xf] %v1169
      %1263 = vst [vmem:[%s1234 + $0x70] sm:$0xf] %v1173
      %1264 = vst [vmem:[%s1234 + $0x74] sm:$0xf] %v1176
      %1265 = vst [vmem:[%s1234 + $0x78] sm:$0xf] %v1180
      %1266 = vst [vmem:[%s1234 + $0x7c] sm:$0xf] %v1183
      %1267 = vst [vmem:[%s1234 + $0x80] sm:$0xf] %v1187
      %1268 = vst [vmem:[%s1234 + $0x84] sm:$0xf] %v1190
      %1269 = vst [vmem:[%s1234 + $0x88] sm:$0xf] %v1194
      %1270 = vst [vmem:[%s1234 + $0x8c] sm:$0xf] %v1197
      %v1271 = vld [vmem:[#allocation2] sm:$0xf]
      %v1272 = vld [vmem:[#allocation2 + $0x4] sm:$0xf]
      %v1273 = vld [vmem:[#allocation2 + $0x8] sm:$0xf]
      %v1274 = vld [vmem:[#allocation2 + $0xc] sm:$0xf]
      %v1275 = vld [vmem:[#allocation2 + $0x10] sm:$0xf]
      %v1276 = vld [vmem:[#allocation2 + $0x14] sm:$0xf]
      %v1277 = vld [vmem:[#allocation2 + $0x18] sm:$0xf]
      %v1278 = vld [vmem:[#allocation2 + $0x1c] sm:$0xf]
      %v1279 = vld [vmem:[#allocation2 + $0x20] sm:$0xf]
      %v1280 = vld [vmem:[#allocation2 + $0x24] sm:$0xf]
      %v1281 = vld [vmem:[#allocation2 + $0x28] sm:$0xf]
      %v1282 = vld [vmem:[#allocation2 + $0x2c] sm:$0xf]
      %v1283 = vld [vmem:[#allocation2 + $0x30] sm:$0xf]
      %v1284 = vld [vmem:[#allocation2 + $0x34] sm:$0xf]
      %v1285 = vld [vmem:[#allocation2 + $0x38] sm:$0xf]
      %v1286 = vld [vmem:[#allocation2 + $0x3c] sm:$0xf]
      %v1287 = vld [vmem:[#allocation2 + $0x40] sm:$0xf]
      %v1288 = vld [vmem:[#allocation2 + $0x44] sm:$0xf]
      %v1289 = vld [vmem:[#allocation2 + $0x48] sm:$0xf]
      %v1290 = vld [vmem:[#allocation2 + $0x4c] sm:$0xf]
      %v1291 = vld [vmem:[#allocation2 + $0x50] sm:$0xf]
      %v1292 = vld [vmem:[#allocation2 + $0x54] sm:$0xf]
      %v1293 = vld [vmem:[#allocation2 + $0x58] sm:$0xf]
      %v1294 = vld [vmem:[#allocation2 + $0x5c] sm:$0xf]
      %v1295 = vld [vmem:[#allocation2 + $0x60] sm:$0xf]
      %v1296 = vld [vmem:[#allocation2 + $0x64] sm:$0xf]
      %v1297 = vld [vmem:[#allocation2 + $0x68] sm:$0xf]
      %v1298 = vld [vmem:[#allocation2 + $0x6c] sm:$0xf]
      %v1299 = vld [vmem:[#allocation2 + $0x70] sm:$0xf]
      %v1300 = vld [vmem:[#allocation2 + $0x74] sm:$0xf]
      %v1301 = vld [vmem:[#allocation2 + $0x78] sm:$0xf]
      %v1302 = vld [vmem:[#allocation2 + $0x7c] sm:$0xf]
      %v1303 = vld [vmem:[%s2] sm:$0xf]
      %v1304 = vld [vmem:[%s2 + $0x4] sm:$0xf]
      %v1305 = vld [vmem:[%s2 + $0x8] sm:$0xf]
      %v1306 = vld [vmem:[%s2 + $0xc] sm:$0xf]
      %v1307 = vld [vmem:[%s2 + $0x10] sm:$0xf]
      %v1308 = vld [vmem:[%s2 + $0x14] sm:$0xf]
      %v1309 = vld [vmem:[%s2 + $0x18] sm:$0xf]
      %v1310 = vld [vmem:[%s2 + $0x1c] sm:$0xf]
      %v1311 = vld [vmem:[%s2 + $0x20] sm:$0xf]
      %v1312 = vld [vmem:[%s2 + $0x24] sm:$0xf]
      %v1313 = vld [vmem:[%s2 + $0x28] sm:$0xf]
      %v1314 = vld [vmem:[%s2 + $0x2c] sm:$0xf]
      %v1315 = vld [vmem:[%s2 + $0x30] sm:$0xf]
      %v1316 = vld [vmem:[%s2 + $0x34] sm:$0xf]
      %v1317 = vld [vmem:[%s2 + $0x38] sm:$0xf]
      %v1318 = vld [vmem:[%s2 + $0x3c] sm:$0xf]
      %v1319 = vld [vmem:[%s924] sm:$0xf]
      %v1320 = vld [vmem:[%s924 + $0x4] sm:$0xf]
      %v1321 = vld [vmem:[%s924 + $0x8] sm:$0xf]
      %v1322 = vld [vmem:[%s924 + $0xc] sm:$0xf]
      %v1323 = vld [vmem:[%s924 + $0x10] sm:$0xf]
      %v1324 = vld [vmem:[%s924 + $0x14] sm:$0xf]
      %v1325 = vld [vmem:[%s924 + $0x18] sm:$0xf]
      %v1326 = vld [vmem:[%s924 + $0x1c] sm:$0xf]
      %v1327 = vld [vmem:[%s924 + $0x20] sm:$0xf]
      %v1328 = vld [vmem:[%s924 + $0x24] sm:$0xf]
      %v1329 = vld [vmem:[%s924 + $0x28] sm:$0xf]
      %v1330 = vld [vmem:[%s924 + $0x2c] sm:$0xf]
      %v1331 = vld [vmem:[%s924 + $0x30] sm:$0xf]
      %v1332 = vld [vmem:[%s924 + $0x34] sm:$0xf]
      %v1333 = vld [vmem:[%s924 + $0x38] sm:$0xf]
      %v1334 = vld [vmem:[%s924 + $0x3c] sm:$0xf]
      %v1335 = vld [vmem:[%s924 + $0x40] sm:$0xf]
      %v1336 = vld [vmem:[%s924 + $0x44] sm:$0xf]
      %v1337 = vld [vmem:[%s924 + $0x48] sm:$0xf]
      %v1338 = vld [vmem:[%s924 + $0x4c] sm:$0xf]
      %v1339 = vld [vmem:[%s924 + $0x50] sm:$0xf]
      %v1340 = vld [vmem:[%s924 + $0x54] sm:$0xf]
      %v1341 = vld [vmem:[%s924 + $0x58] sm:$0xf]
      %v1342 = vld [vmem:[%s924 + $0x5c] sm:$0xf]
      %v1343 = vld [vmem:[%s924 + $0x60] sm:$0xf]
      %v1344 = vld [vmem:[%s924 + $0x64] sm:$0xf]
      %v1345 = vld [vmem:[%s924 + $0x68] sm:$0xf]
      %v1346 = vld [vmem:[%s924 + $0x6c] sm:$0xf]
      %v1347 = vld [vmem:[%s924 + $0x70] sm:$0xf]
      %v1348 = vld [vmem:[%s924 + $0x74] sm:$0xf]
      %v1349 = vld [vmem:[%s924 + $0x78] sm:$0xf]
      %v1350 = vld [vmem:[%s924 + $0x7c] sm:$0xf]
      %s1351 = scalar_lea.vmem %s2, 64
      %v1352 = vld [vmem:[%s1351] sm:$0xf]
      %v1353 = vld [vmem:[%s1351 + $0x4] sm:$0xf]
      %v1354 = vld [vmem:[%s1351 + $0x8] sm:$0xf]
      %v1355 = vld [vmem:[%s1351 + $0xc] sm:$0xf]
      %v1356 = vld [vmem:[%s1351 + $0x10] sm:$0xf]
      %v1357 = vld [vmem:[%s1351 + $0x14] sm:$0xf]
      %v1358 = vld [vmem:[%s1351 + $0x18] sm:$0xf]
      %v1359 = vld [vmem:[%s1351 + $0x1c] sm:$0xf]
      %v1360 = vld [vmem:[%s1351 + $0x20] sm:$0xf]
      %v1361 = vld [vmem:[%s1351 + $0x24] sm:$0xf]
      %v1362 = vld [vmem:[%s1351 + $0x28] sm:$0xf]
      %v1363 = vld [vmem:[%s1351 + $0x2c] sm:$0xf]
      %v1364 = vld [vmem:[%s1351 + $0x30] sm:$0xf]
      %v1365 = vld [vmem:[%s1351 + $0x34] sm:$0xf]
      %v1366 = vld [vmem:[%s1351 + $0x38] sm:$0xf]
      %v1367 = vld [vmem:[%s1351 + $0x3c] sm:$0xf]
      %v1400 = vunpack.c.l.b16 %v1319
      %v1401 = vunpack.c.l.b16 %v1320
      %v1402 = vunpack.c.l.b16 %v1321
      %v1403 = vunpack.c.l.b16 %v1322
      %v1404 = vunpack.c.l.b16 %v1323
      %v1405 = vunpack.c.l.b16 %v1324
      %v1406 = vunpack.c.l.b16 %v1325
      %v1407 = vunpack.c.l.b16 %v1326
      %v1408 = vunpack.c.l.b16 %v1327
      %v1409 = vunpack.c.l.b16 %v1328
      %v1410 = vunpack.c.l.b16 %v1329
      %v1411 = vunpack.c.l.b16 %v1330
      %v1412 = vunpack.c.l.b16 %v1331
      %v1413 = vunpack.c.l.b16 %v1332
      %v1414 = vunpack.c.l.b16 %v1333
      %v1415 = vunpack.c.l.b16 %v1334
      %v1416 = vunpack.c.l.b16 %v1335
      %v1417 = vunpack.c.l.b16 %v1336
      %v1418 = vunpack.c.l.b16 %v1337
      %v1419 = vunpack.c.l.b16 %v1338
      %v1420 = vunpack.c.l.b16 %v1339
      %v1421 = vunpack.c.l.b16 %v1340
      %v1422 = vunpack.c.l.b16 %v1341
      %v1423 = vunpack.c.l.b16 %v1342
      %v1424 = vunpack.c.l.b16 %v1343
      %v1425 = vunpack.c.l.b16 %v1344
      %v1426 = vunpack.c.l.b16 %v1345
      %v1427 = vunpack.c.l.b16 %v1346
      %v1428 = vunpack.c.l.b16 %v1347
      %v1429 = vunpack.c.l.b16 %v1348
      %v1430 = vunpack.c.l.b16 %v1349
      %v1431 = vunpack.c.l.b16 %v1350
      %v1432 = vpack.c.b16 %v1401, %v1400
      %v1433 = vpack.c.b16 %v1403, %v1402
      %v1434 = vpack.c.b16 %v1405, %v1404
      %v1435 = vpack.c.b16 %v1407, %v1406
      %v1436 = vpack.c.b16 %v1409, %v1408
      %v1437 = vpack.c.b16 %v1411, %v1410
      %v1438 = vpack.c.b16 %v1413, %v1412
      %v1439 = vpack.c.b16 %v1415, %v1414
      %v1440 = vpack.c.b16 %v1417, %v1416
      %v1441 = vpack.c.b16 %v1419, %v1418
      %v1442 = vpack.c.b16 %v1421, %v1420
      %v1443 = vpack.c.b16 %v1423, %v1422
      %v1444 = vpack.c.b16 %v1425, %v1424
      %v1445 = vpack.c.b16 %v1427, %v1426
      %v1446 = vpack.c.b16 %v1429, %v1428
      %v1447 = vpack.c.b16 %v1431, %v1430
      %v1480 = vunpack.c.l.b16 %v1352
      %v1481 = vunpack.c.l.b16 %v1353
      %v1482 = vunpack.c.l.b16 %v1354
      %v1483 = vunpack.c.l.b16 %v1355
      %v1484 = vunpack.c.l.b16 %v1356
      %v1485 = vunpack.c.l.b16 %v1357
      %v1486 = vunpack.c.l.b16 %v1358
      %v1487 = vunpack.c.l.b16 %v1359
      %v1488 = vunpack.c.l.b16 %v1360
      %v1489 = vunpack.c.l.b16 %v1361
      %v1490 = vunpack.c.l.b16 %v1362
      %v1491 = vunpack.c.l.b16 %v1363
      %v1492 = vunpack.c.l.b16 %v1364
      %v1493 = vunpack.c.l.b16 %v1365
      %v1494 = vunpack.c.l.b16 %v1366
      %v1495 = vunpack.c.l.b16 %v1367
      %v1496 = vpack.c.b16 %v1481, %v1480
      %v1497 = vpack.c.b16 %v1483, %v1482
      %v1498 = vpack.c.b16 %v1485, %v1484
      %v1499 = vpack.c.b16 %v1487, %v1486
      %v1500 = vpack.c.b16 %v1489, %v1488
      %v1501 = vpack.c.b16 %v1491, %v1490
      %v1502 = vpack.c.b16 %v1493, %v1492
      %v1503 = vpack.c.b16 %v1495, %v1494
      %1512 = vmatpush.bf16.msra.mxu0 %v1503
      %1513 = vmatpush.bf16.msra.mxu0 %v1502
      %1514 = vmatpush.bf16.msra.mxu0 %v1501
      %1515 = vmatpush.bf16.msra.mxu0 %v1500
      %1516 = vmatpush.bf16.msra.mxu0 %v1499
      %1517 = vmatpush.bf16.msra.mxu0 %v1498
      %1518 = vmatpush.bf16.msra.mxu0 %v1497
      %1519 = vmatpush.bf16.msra.mxu0 %v1496
      %1520 = vmatmul.bf16.gmra.mxu0 %v1432
      %v1521 = vpop.f32.mrf.mxu0
      %v1522 = vadd.f32 0.0, %v1521
      %v1523 = vpop.f32.mrf.mxu0
      %v1524 = vadd.f32 0.0, %v1523
      %1525 = vmatmul.bf16.gmra.mxu0 %v1433
      %v1526 = vpop.f32.mrf.mxu0
      %v1527 = vadd.f32 0.0, %v1526
      %v1528 = vpop.f32.mrf.mxu0
      %v1529 = vadd.f32 0.0, %v1528
      %1530 = vmatmul.bf16.gmra.mxu0 %v1434
      %v1531 = vpop.f32.mrf.mxu0
      %v1532 = vadd.f32 0.0, %v1531
      %v1533 = vpop.f32.mrf.mxu0
      %v1534 = vadd.f32 0.0, %v1533
      %1535 = vmatmul.bf16.gmra.mxu0 %v1435
      %v1536 = vpop.f32.mrf.mxu0
      %v1537 = vadd.f32 0.0, %v1536
      %v1538 = vpop.f32.mrf.mxu0
      %v1539 = vadd.f32 0.0, %v1538
      %1540 = vmatmul.bf16.gmra.mxu0 %v1436
      %v1541 = vpop.f32.mrf.mxu0
      %v1542 = vadd.f32 0.0, %v1541
      %v1543 = vpop.f32.mrf.mxu0
      %v1544 = vadd.f32 0.0, %v1543
      %1545 = vmatmul.bf16.gmra.mxu0 %v1437
      %v1546 = vpop.f32.mrf.mxu0
      %v1547 = vadd.f32 0.0, %v1546
      %v1548 = vpop.f32.mrf.mxu0
      %v1549 = vadd.f32 0.0, %v1548
      %1550 = vmatmul.bf16.gmra.mxu0 %v1438
      %v1551 = vpop.f32.mrf.mxu0
      %v1552 = vadd.f32 0.0, %v1551
      %v1553 = vpop.f32.mrf.mxu0
      %v1554 = vadd.f32 0.0, %v1553
      %1555 = vmatmul.bf16.gmra.mxu0 %v1439
      %v1556 = vpop.f32.mrf.mxu0
      %v1557 = vadd.f32 0.0, %v1556
      %v1558 = vpop.f32.mrf.mxu0
      %v1559 = vadd.f32 0.0, %v1558
      %1560 = vmatmul.bf16.gmra.mxu0 %v1440
      %v1561 = vpop.f32.mrf.mxu0
      %v1562 = vadd.f32 0.0, %v1561
      %v1563 = vpop.f32.mrf.mxu0
      %v1564 = vadd.f32 0.0, %v1563
      %1565 = vmatmul.bf16.gmra.mxu0 %v1441
      %v1566 = vpop.f32.mrf.mxu0
      %v1567 = vadd.f32 0.0, %v1566
      %v1568 = vpop.f32.mrf.mxu0
      %v1569 = vadd.f32 0.0, %v1568
      %1570 = vmatmul.bf16.gmra.mxu0 %v1442
      %v1571 = vpop.f32.mrf.mxu0
      %v1572 = vadd.f32 0.0, %v1571
      %v1573 = vpop.f32.mrf.mxu0
      %v1574 = vadd.f32 0.0, %v1573
      %1575 = vmatmul.bf16.gmra.mxu0 %v1443
      %v1576 = vpop.f32.mrf.mxu0
      %v1577 = vadd.f32 0.0, %v1576
      %v1578 = vpop.f32.mrf.mxu0
      %v1579 = vadd.f32 0.0, %v1578
      %1580 = vmatmul.bf16.gmra.mxu0 %v1444
      %v1581 = vpop.f32.mrf.mxu0
      %v1582 = vadd.f32 0.0, %v1581
      %v1583 = vpop.f32.mrf.mxu0
      %v1584 = vadd.f32 0.0, %v1583
      %1585 = vmatmul.bf16.gmra.mxu0 %v1445
      %v1586 = vpop.f32.mrf.mxu0
      %v1587 = vadd.f32 0.0, %v1586
      %v1588 = vpop.f32.mrf.mxu0
      %v1589 = vadd.f32 0.0, %v1588
      %1590 = vmatmul.bf16.gmra.mxu0 %v1446
      %v1591 = vpop.f32.mrf.mxu0
      %v1592 = vadd.f32 0.0, %v1591
      %v1593 = vpop.f32.mrf.mxu0
      %v1594 = vadd.f32 0.0, %v1593
      %1595 = vmatmul.bf16.gmra.mxu0 %v1447
      %v1596 = vpop.f32.mrf.mxu0
      %v1597 = vadd.f32 0.0, %v1596
      %v1598 = vpop.f32.mrf.mxu0
      %v1599 = vadd.f32 0.0, %v1598
      %1600 = vdwg.mxu0
      %v1633 = vunpack.c.l.b16 %v1271
      %v1634 = vunpack.c.l.b16 %v1272
      %v1635 = vunpack.c.l.b16 %v1273
      %v1636 = vunpack.c.l.b16 %v1274
      %v1637 = vunpack.c.l.b16 %v1275
      %v1638 = vunpack.c.l.b16 %v1276
      %v1639 = vunpack.c.l.b16 %v1277
      %v1640 = vunpack.c.l.b16 %v1278
      %v1641 = vunpack.c.l.b16 %v1279
      %v1642 = vunpack.c.l.b16 %v1280
      %v1643 = vunpack.c.l.b16 %v1281
      %v1644 = vunpack.c.l.b16 %v1282
      %v1645 = vunpack.c.l.b16 %v1283
      %v1646 = vunpack.c.l.b16 %v1284
      %v1647 = vunpack.c.l.b16 %v1285
      %v1648 = vunpack.c.l.b16 %v1286
      %v1649 = vunpack.c.l.b16 %v1287
      %v1650 = vunpack.c.l.b16 %v1288
      %v1651 = vunpack.c.l.b16 %v1289
      %v1652 = vunpack.c.l.b16 %v1290
      %v1653 = vunpack.c.l.b16 %v1291
      %v1654 = vunpack.c.l.b16 %v1292
      %v1655 = vunpack.c.l.b16 %v1293
      %v1656 = vunpack.c.l.b16 %v1294
      %v1657 = vunpack.c.l.b16 %v1295
      %v1658 = vunpack.c.l.b16 %v1296
      %v1659 = vunpack.c.l.b16 %v1297
      %v1660 = vunpack.c.l.b16 %v1298
      %v1661 = vunpack.c.l.b16 %v1299
      %v1662 = vunpack.c.l.b16 %v1300
      %v1663 = vunpack.c.l.b16 %v1301
      %v1664 = vunpack.c.l.b16 %v1302
      %v1665 = vpack.c.b16 %v1634, %v1633
      %v1666 = vpack.c.b16 %v1636, %v1635
      %v1667 = vpack.c.b16 %v1638, %v1637
      %v1668 = vpack.c.b16 %v1640, %v1639
      %v1669 = vpack.c.b16 %v1642, %v1641
      %v1670 = vpack.c.b16 %v1644, %v1643
      %v1671 = vpack.c.b16 %v1646, %v1645
      %v1672 = vpack.c.b16 %v1648, %v1647
      %v1673 = vpack.c.b16 %v1650, %v1649
      %v1674 = vpack.c.b16 %v1652, %v1651
      %v1675 = vpack.c.b16 %v1654, %v1653
      %v1676 = vpack.c.b16 %v1656, %v1655
      %v1677 = vpack.c.b16 %v1658, %v1657
      %v1678 = vpack.c.b16 %v1660, %v1659
      %v1679 = vpack.c.b16 %v1662, %v1661
      %v1680 = vpack.c.b16 %v1664, %v1663
      %v1713 = vunpack.c.l.b16 %v1303
      %v1714 = vunpack.c.l.b16 %v1304
      %v1715 = vunpack.c.l.b16 %v1305
      %v1716 = vunpack.c.l.b16 %v1306
      %v1717 = vunpack.c.l.b16 %v1307
      %v1718 = vunpack.c.l.b16 %v1308
      %v1719 = vunpack.c.l.b16 %v1309
      %v1720 = vunpack.c.l.b16 %v1310
      %v1721 = vunpack.c.l.b16 %v1311
      %v1722 = vunpack.c.l.b16 %v1312
      %v1723 = vunpack.c.l.b16 %v1313
      %v1724 = vunpack.c.l.b16 %v1314
      %v1725 = vunpack.c.l.b16 %v1315
      %v1726 = vunpack.c.l.b16 %v1316
      %v1727 = vunpack.c.l.b16 %v1317
      %v1728 = vunpack.c.l.b16 %v1318
      %v1729 = vpack.c.b16 %v1714, %v1713
      %v1730 = vpack.c.b16 %v1716, %v1715
      %v1731 = vpack.c.b16 %v1718, %v1717
      %v1732 = vpack.c.b16 %v1720, %v1719
      %v1733 = vpack.c.b16 %v1722, %v1721
      %v1734 = vpack.c.b16 %v1724, %v1723
      %v1735 = vpack.c.b16 %v1726, %v1725
      %v1736 = vpack.c.b16 %v1728, %v1727
      %1745 = vmatpush.bf16.msra.mxu0 %v1736
      %1746 = vmatpush.bf16.msra.mxu0 %v1735
      %1747 = vmatpush.bf16.msra.mxu0 %v1734
      %1748 = vmatpush.bf16.msra.mxu0 %v1733
      %1749 = vmatpush.bf16.msra.mxu0 %v1732
      %1750 = vmatpush.bf16.msra.mxu0 %v1731
      %1751 = vmatpush.bf16.msra.mxu0 %v1730
      %1752 = vmatpush.bf16.msra.mxu0 %v1729
      %1753 = vmatmul.bf16.gmra.mxu0 %v1665
      %v1754 = vpop.f32.mrf.mxu0
      %v1755 = vadd.f32 %v1522, %v1754
      %v1756 = vpop.f32.mrf.mxu0
      %v1757 = vadd.f32 %v1524, %v1756
      %1758 = vmatmul.bf16.gmra.mxu0 %v1666
      %v1759 = vpop.f32.mrf.mxu0
      %v1760 = vadd.f32 %v1527, %v1759
      %v1761 = vpop.f32.mrf.mxu0
      %v1762 = vadd.f32 %v1529, %v1761
      %1763 = vmatmul.bf16.gmra.mxu0 %v1667
      %v1764 = vpop.f32.mrf.mxu0
      %v1765 = vadd.f32 %v1532, %v1764
      %v1766 = vpop.f32.mrf.mxu0
      %v1767 = vadd.f32 %v1534, %v1766
      %1768 = vmatmul.bf16.gmra.mxu0 %v1668
      %v1769 = vpop.f32.mrf.mxu0
      %v1770 = vadd.f32 %v1537, %v1769
      %v1771 = vpop.f32.mrf.mxu0
      %v1772 = vadd.f32 %v1539, %v1771
      %1773 = vmatmul.bf16.gmra.mxu0 %v1669
      %v1774 = vpop.f32.mrf.mxu0
      %v1775 = vadd.f32 %v1542, %v1774
      %v1776 = vpop.f32.mrf.mxu0
      %v1777 = vadd.f32 %v1544, %v1776
      %1778 = vmatmul.bf16.gmra.mxu0 %v1670
      %v1779 = vpop.f32.mrf.mxu0
      %v1780 = vadd.f32 %v1547, %v1779
      %v1781 = vpop.f32.mrf.mxu0
      %v1782 = vadd.f32 %v1549, %v1781
      %1783 = vmatmul.bf16.gmra.mxu0 %v1671
      %v1784 = vpop.f32.mrf.mxu0
      %v1785 = vadd.f32 %v1552, %v1784
      %v1786 = vpop.f32.mrf.mxu0
      %v1787 = vadd.f32 %v1554, %v1786
      %1788 = vmatmul.bf16.gmra.mxu0 %v1672
      %v1789 = vpop.f32.mrf.mxu0
      %v1790 = vadd.f32 %v1557, %v1789
      %v1791 = vpop.f32.mrf.mxu0
      %v1792 = vadd.f32 %v1559, %v1791
      %1793 = vmatmul.bf16.gmra.mxu0 %v1673
      %v1794 = vpop.f32.mrf.mxu0
      %v1795 = vadd.f32 %v1562, %v1794
      %v1796 = vpop.f32.mrf.mxu0
      %v1797 = vadd.f32 %v1564, %v1796
      %1798 = vmatmul.bf16.gmra.mxu0 %v1674
      %v1799 = vpop.f32.mrf.mxu0
      %v1800 = vadd.f32 %v1567, %v1799
      %v1801 = vpop.f32.mrf.mxu0
      %v1802 = vadd.f32 %v1569, %v1801
      %1803 = vmatmul.bf16.gmra.mxu0 %v1675
      %v1804 = vpop.f32.mrf.mxu0
      %v1805 = vadd.f32 %v1572, %v1804
      %v1806 = vpop.f32.mrf.mxu0
      %v1807 = vadd.f32 %v1574, %v1806
      %1808 = vmatmul.bf16.gmra.mxu0 %v1676
      %v1809 = vpop.f32.mrf.mxu0
      %v1810 = vadd.f32 %v1577, %v1809
      %v1811 = vpop.f32.mrf.mxu0
      %v1812 = vadd.f32 %v1579, %v1811
      %1813 = vmatmul.bf16.gmra.mxu0 %v1677
      %v1814 = vpop.f32.mrf.mxu0
      %v1815 = vadd.f32 %v1582, %v1814
      %v1816 = vpop.f32.mrf.mxu0
      %v1817 = vadd.f32 %v1584, %v1816
      %1818 = vmatmul.bf16.gmra.mxu0 %v1678
      %v1819 = vpop.f32.mrf.mxu0
      %v1820 = vadd.f32 %v1587, %v1819
      %v1821 = vpop.f32.mrf.mxu0
      %v1822 = vadd.f32 %v1589, %v1821
      %1823 = vmatmul.bf16.gmra.mxu0 %v1679
      %v1824 = vpop.f32.mrf.mxu0
      %v1825 = vadd.f32 %v1592, %v1824
      %v1826 = vpop.f32.mrf.mxu0
      %v1827 = vadd.f32 %v1594, %v1826
      %1828 = vmatmul.bf16.gmra.mxu0 %v1680
      %v1829 = vpop.f32.mrf.mxu0
      %v1830 = vadd.f32 %v1597, %v1829
      %v1831 = vpop.f32.mrf.mxu0
      %v1832 = vadd.f32 %v1599, %v1831
      %1833 = vdwg.mxu0
      %v1834 = vld [vmem:[%s1234] sm:$0xf]
      %v1835 = vld [vmem:[%s1234 + $0x4] sm:$0xf]
      %v1836 = vld [vmem:[%s1234 + $0x8] sm:$0xf]
      %v1837 = vld [vmem:[%s1234 + $0xc] sm:$0xf]
      %v1838 = vld [vmem:[%s1234 + $0x10] sm:$0xf]
      %v1839 = vld [vmem:[%s1234 + $0x14] sm:$0xf]
      %v1840 = vld [vmem:[%s1234 + $0x18] sm:$0xf]
      %v1841 = vld [vmem:[%s1234 + $0x1c] sm:$0xf]
      %v1842 = vld [vmem:[%s1234 + $0x20] sm:$0xf]
      %v1843 = vld [vmem:[%s1234 + $0x24] sm:$0xf]
      %v1844 = vld [vmem:[%s1234 + $0x28] sm:$0xf]
      %v1845 = vld [vmem:[%s1234 + $0x2c] sm:$0xf]
      %v1846 = vld [vmem:[%s1234 + $0x30] sm:$0xf]
      %v1847 = vld [vmem:[%s1234 + $0x34] sm:$0xf]
      %v1848 = vld [vmem:[%s1234 + $0x38] sm:$0xf]
      %v1849 = vld [vmem:[%s1234 + $0x3c] sm:$0xf]
      %v1850 = vld [vmem:[%s1234 + $0x40] sm:$0xf]
      %v1851 = vld [vmem:[%s1234 + $0x44] sm:$0xf]
      %v1852 = vld [vmem:[%s1234 + $0x48] sm:$0xf]
      %v1853 = vld [vmem:[%s1234 + $0x4c] sm:$0xf]
      %v1854 = vld [vmem:[%s1234 + $0x50] sm:$0xf]
      %v1855 = vld [vmem:[%s1234 + $0x54] sm:$0xf]
      %v1856 = vld [vmem:[%s1234 + $0x58] sm:$0xf]
      %v1857 = vld [vmem:[%s1234 + $0x5c] sm:$0xf]
      %v1858 = vld [vmem:[%s1234 + $0x60] sm:$0xf]
      %v1859 = vld [vmem:[%s1234 + $0x64] sm:$0xf]
      %v1860 = vld [vmem:[%s1234 + $0x68] sm:$0xf]
      %v1861 = vld [vmem:[%s1234 + $0x6c] sm:$0xf]
      %v1862 = vld [vmem:[%s1234 + $0x70] sm:$0xf]
      %v1863 = vld [vmem:[%s1234 + $0x74] sm:$0xf]
      %v1864 = vld [vmem:[%s1234 + $0x78] sm:$0xf]
      %v1865 = vld [vmem:[%s1234 + $0x7c] sm:$0xf]
      %s1866 = scalar_lea.vmem %s2, 128
      %v1867 = vld [vmem:[%s1866] sm:$0xf]
      %v1868 = vld [vmem:[%s1866 + $0x4] sm:$0xf]
      %v1869 = vld [vmem:[%s1866 + $0x8] sm:$0xf]
      %v1870 = vld [vmem:[%s1866 + $0xc] sm:$0xf]
      %v1871 = vld [vmem:[%s1866 + $0x10] sm:$0xf]
      %v1872 = vld [vmem:[%s1866 + $0x14] sm:$0xf]
      %v1873 = vld [vmem:[%s1866 + $0x18] sm:$0xf]
      %v1874 = vld [vmem:[%s1866 + $0x1c] sm:$0xf]
      %v1875 = vld [vmem:[%s1866 + $0x20] sm:$0xf]
      %v1876 = vld [vmem:[%s1866 + $0x24] sm:$0xf]
      %v1877 = vld [vmem:[%s1866 + $0x28] sm:$0xf]
      %v1878 = vld [vmem:[%s1866 + $0x2c] sm:$0xf]
      %v1879 = vld [vmem:[%s1866 + $0x30] sm:$0xf]
      %v1880 = vld [vmem:[%s1866 + $0x34] sm:$0xf]
      %v1881 = vld [vmem:[%s1866 + $0x38] sm:$0xf]
      %v1882 = vld [vmem:[%s1866 + $0x3c] sm:$0xf]
      %v1915 = vunpack.c.l.b16 %v1834
      %v1916 = vunpack.c.l.b16 %v1835
      %v1917 = vunpack.c.l.b16 %v1836
      %v1918 = vunpack.c.l.b16 %v1837
      %v1919 = vunpack.c.l.b16 %v1838
      %v1920 = vunpack.c.l.b16 %v1839
      %v1921 = vunpack.c.l.b16 %v1840
      %v1922 = vunpack.c.l.b16 %v1841
      %v1923 = vunpack.c.l.b16 %v1842
      %v1924 = vunpack.c.l.b16 %v1843
      %v1925 = vunpack.c.l.b16 %v1844
      %v1926 = vunpack.c.l.b16 %v1845
      %v1927 = vunpack.c.l.b16 %v1846
      %v1928 = vunpack.c.l.b16 %v1847
      %v1929 = vunpack.c.l.b16 %v1848
      %v1930 = vunpack.c.l.b16 %v1849
      %v1931 = vunpack.c.l.b16 %v1850
      %v1932 = vunpack.c.l.b16 %v1851
      %v1933 = vunpack.c.l.b16 %v1852
      %v1934 = vunpack.c.l.b16 %v1853
      %v1935 = vunpack.c.l.b16 %v1854
      %v1936 = vunpack.c.l.b16 %v1855
      %v1937 = vunpack.c.l.b16 %v1856
      %v1938 = vunpack.c.l.b16 %v1857
      %v1939 = vunpack.c.l.b16 %v1858
      %v1940 = vunpack.c.l.b16 %v1859
      %v1941 = vunpack.c.l.b16 %v1860
      %v1942 = vunpack.c.l.b16 %v1861
      %v1943 = vunpack.c.l.b16 %v1862
      %v1944 = vunpack.c.l.b16 %v1863
      %v1945 = vunpack.c.l.b16 %v1864
      %v1946 = vunpack.c.l.b16 %v1865
      %v1947 = vpack.c.b16 %v1916, %v1915
      %v1948 = vpack.c.b16 %v1918, %v1917
      %v1949 = vpack.c.b16 %v1920, %v1919
      %v1950 = vpack.c.b16 %v1922, %v1921
      %v1951 = vpack.c.b16 %v1924, %v1923
      %v1952 = vpack.c.b16 %v1926, %v1925
      %v1953 = vpack.c.b16 %v1928, %v1927
      %v1954 = vpack.c.b16 %v1930, %v1929
      %v1955 = vpack.c.b16 %v1932, %v1931
      %v1956 = vpack.c.b16 %v1934, %v1933
      %v1957 = vpack.c.b16 %v1936, %v1935
      %v1958 = vpack.c.b16 %v1938, %v1937
      %v1959 = vpack.c.b16 %v1940, %v1939
      %v1960 = vpack.c.b16 %v1942, %v1941
      %v1961 = vpack.c.b16 %v1944, %v1943
      %v1962 = vpack.c.b16 %v1946, %v1945
      %v1995 = vunpack.c.l.b16 %v1867
      %v1996 = vunpack.c.l.b16 %v1868
      %v1997 = vunpack.c.l.b16 %v1869
      %v1998 = vunpack.c.l.b16 %v1870
      %v1999 = vunpack.c.l.b16 %v1871
      %v2000 = vunpack.c.l.b16 %v1872
      %v2001 = vunpack.c.l.b16 %v1873
      %v2002 = vunpack.c.l.b16 %v1874
      %v2003 = vunpack.c.l.b16 %v1875
      %v2004 = vunpack.c.l.b16 %v1876
      %v2005 = vunpack.c.l.b16 %v1877
      %v2006 = vunpack.c.l.b16 %v1878
      %v2007 = vunpack.c.l.b16 %v1879
      %v2008 = vunpack.c.l.b16 %v1880
      %v2009 = vunpack.c.l.b16 %v1881
      %v2010 = vunpack.c.l.b16 %v1882
      %v2011 = vpack.c.b16 %v1996, %v1995
      %v2012 = vpack.c.b16 %v1998, %v1997
      %v2013 = vpack.c.b16 %v2000, %v1999
      %v2014 = vpack.c.b16 %v2002, %v2001
      %v2015 = vpack.c.b16 %v2004, %v2003
      %v2016 = vpack.c.b16 %v2006, %v2005
      %v2017 = vpack.c.b16 %v2008, %v2007
      %v2018 = vpack.c.b16 %v2010, %v2009
      %2027 = vmatpush.bf16.msra.mxu0 %v2018
      %2028 = vmatpush.bf16.msra.mxu0 %v2017
      %2029 = vmatpush.bf16.msra.mxu0 %v2016
      %2030 = vmatpush.bf16.msra.mxu0 %v2015
      %2031 = vmatpush.bf16.msra.mxu0 %v2014
      %2032 = vmatpush.bf16.msra.mxu0 %v2013
      %2033 = vmatpush.bf16.msra.mxu0 %v2012
      %2034 = vmatpush.bf16.msra.mxu0 %v2011
      %2035 = vmatmul.bf16.gmra.mxu0 %v1947
      %v2036 = vpop.f32.mrf.mxu0
      %v2037 = vadd.f32 0.0, %v2036
      %v2038 = vpop.f32.mrf.mxu0
      %v2039 = vadd.f32 0.0, %v2038
      %2040 = vmatmul.bf16.gmra.mxu0 %v1948
      %v2041 = vpop.f32.mrf.mxu0
      %v2042 = vadd.f32 0.0, %v2041
      %v2043 = vpop.f32.mrf.mxu0
      %v2044 = vadd.f32 0.0, %v2043
      %2045 = vmatmul.bf16.gmra.mxu0 %v1949
      %v2046 = vpop.f32.mrf.mxu0
      %v2047 = vadd.f32 0.0, %v2046
      %v2048 = vpop.f32.mrf.mxu0
      %v2049 = vadd.f32 0.0, %v2048
      %2050 = vmatmul.bf16.gmra.mxu0 %v1950
      %v2051 = vpop.f32.mrf.mxu0
      %v2052 = vadd.f32 0.0, %v2051
      %v2053 = vpop.f32.mrf.mxu0
      %v2054 = vadd.f32 0.0, %v2053
      %2055 = vmatmul.bf16.gmra.mxu0 %v1951
      %v2056 = vpop.f32.mrf.mxu0
      %v2057 = vadd.f32 0.0, %v2056
      %v2058 = vpop.f32.mrf.mxu0
      %v2059 = vadd.f32 0.0, %v2058
      %2060 = vmatmul.bf16.gmra.mxu0 %v1952
      %v2061 = vpop.f32.mrf.mxu0
      %v2062 = vadd.f32 0.0, %v2061
      %v2063 = vpop.f32.mrf.mxu0
      %v2064 = vadd.f32 0.0, %v2063
      %2065 = vmatmul.bf16.gmra.mxu0 %v1953
      %v2066 = vpop.f32.mrf.mxu0
      %v2067 = vadd.f32 0.0, %v2066
      %v2068 = vpop.f32.mrf.mxu0
      %v2069 = vadd.f32 0.0, %v2068
      %2070 = vmatmul.bf16.gmra.mxu0 %v1954
      %v2071 = vpop.f32.mrf.mxu0
      %v2072 = vadd.f32 0.0, %v2071
      %v2073 = vpop.f32.mrf.mxu0
      %v2074 = vadd.f32 0.0, %v2073
      %2075 = vmatmul.bf16.gmra.mxu0 %v1955
      %v2076 = vpop.f32.mrf.mxu0
      %v2077 = vadd.f32 0.0, %v2076
      %v2078 = vpop.f32.mrf.mxu0
      %v2079 = vadd.f32 0.0, %v2078
      %2080 = vmatmul.bf16.gmra.mxu0 %v1956
      %v2081 = vpop.f32.mrf.mxu0
      %v2082 = vadd.f32 0.0, %v2081
      %v2083 = vpop.f32.mrf.mxu0
      %v2084 = vadd.f32 0.0, %v2083
      %2085 = vmatmul.bf16.gmra.mxu0 %v1957
      %v2086 = vpop.f32.mrf.mxu0
      %v2087 = vadd.f32 0.0, %v2086
      %v2088 = vpop.f32.mrf.mxu0
      %v2089 = vadd.f32 0.0, %v2088
      %2090 = vmatmul.bf16.gmra.mxu0 %v1958
      %v2091 = vpop.f32.mrf.mxu0
      %v2092 = vadd.f32 0.0, %v2091
      %v2093 = vpop.f32.mrf.mxu0
      %v2094 = vadd.f32 0.0, %v2093
      %2095 = vmatmul.bf16.gmra.mxu0 %v1959
      %v2096 = vpop.f32.mrf.mxu0
      %v2097 = vadd.f32 0.0, %v2096
      %v2098 = vpop.f32.mrf.mxu0
      %v2099 = vadd.f32 0.0, %v2098
      %2100 = vmatmul.bf16.gmra.mxu0 %v1960
      %v2101 = vpop.f32.mrf.mxu0
      %v2102 = vadd.f32 0.0, %v2101
      %v2103 = vpop.f32.mrf.mxu0
      %v2104 = vadd.f32 0.0, %v2103
      %2105 = vmatmul.bf16.gmra.mxu0 %v1961
      %v2106 = vpop.f32.mrf.mxu0
      %v2107 = vadd.f32 0.0, %v2106
      %v2108 = vpop.f32.mrf.mxu0
      %v2109 = vadd.f32 0.0, %v2108
      %2110 = vmatmul.bf16.gmra.mxu0 %v1962
      %v2111 = vpop.f32.mrf.mxu0
      %v2112 = vadd.f32 0.0, %v2111
      %v2113 = vpop.f32.mrf.mxu0
      %v2114 = vadd.f32 0.0, %v2113
      %2115 = vdwg.mxu0
      %v2116 = vadd.f32 %v1755, %v2037
      %v2117 = vadd.f32 %v1757, %v2039
      %v2118 = vadd.f32 %v1760, %v2042
      %v2119 = vadd.f32 %v1762, %v2044
      %v2120 = vadd.f32 %v1765, %v2047
      %v2121 = vadd.f32 %v1767, %v2049
      %v2122 = vadd.f32 %v1770, %v2052
      %v2123 = vadd.f32 %v1772, %v2054
      %v2124 = vadd.f32 %v1775, %v2057
      %v2125 = vadd.f32 %v1777, %v2059
      %v2126 = vadd.f32 %v1780, %v2062
      %v2127 = vadd.f32 %v1782, %v2064
      %v2128 = vadd.f32 %v1785, %v2067
      %v2129 = vadd.f32 %v1787, %v2069
      %v2130 = vadd.f32 %v1790, %v2072
      %v2131 = vadd.f32 %v1792, %v2074
      %v2132 = vadd.f32 %v1795, %v2077
      %v2133 = vadd.f32 %v1797, %v2079
      %v2134 = vadd.f32 %v1800, %v2082
      %v2135 = vadd.f32 %v1802, %v2084
      %v2136 = vadd.f32 %v1805, %v2087
      %v2137 = vadd.f32 %v1807, %v2089
      %v2138 = vadd.f32 %v1810, %v2092
      %v2139 = vadd.f32 %v1812, %v2094
      %v2140 = vadd.f32 %v1815, %v2097
      %v2141 = vadd.f32 %v1817, %v2099
      %v2142 = vadd.f32 %v1820, %v2102
      %v2143 = vadd.f32 %v1822, %v2104
      %v2144 = vadd.f32 %v1825, %v2107
      %v2145 = vadd.f32 %v1827, %v2109
      %v2146 = vadd.f32 %v1830, %v2112
      %v2147 = vadd.f32 %v1832, %v2114
      %s2148 = scalar_lea.vmem [#allocation2], 8
      %v2149 = vld [vmem:[%s2148] sm:$0xf]
      %v2150 = vld [vmem:[%s2148 + $0x4] sm:$0xf]
      %v2151 = vld [vmem:[%s2148 + $0x8] sm:$0xf]
      %v2152 = vld [vmem:[%s2148 + $0xc] sm:$0xf]
      %v2153 = vld [vmem:[%s2148 + $0x10] sm:$0xf]
      %v2154 = vld [vmem:[%s2148 + $0x14] sm:$0xf]
      %v2155 = vld [vmem:[%s2148 + $0x18] sm:$0xf]
      %v2156 = vld [vmem:[%s2148 + $0x1c] sm:$0xf]
      %v2157 = vld [vmem:[%s2148 + $0x20] sm:$0xf]
      %v2158 = vld [vmem:[%s2148 + $0x24] sm:$0xf]
      %v2159 = vld [vmem:[%s2148 + $0x28] sm:$0xf]
      %v2160 = vld [vmem:[%s2148 + $0x2c] sm:$0xf]
      %v2161 = vld [vmem:[%s2148 + $0x30] sm:$0xf]
      %v2162 = vld [vmem:[%s2148 + $0x34] sm:$0xf]
      %v2163 = vld [vmem:[%s2148 + $0x38] sm:$0xf]
      %v2164 = vld [vmem:[%s2148 + $0x3c] sm:$0xf]
      %v2165 = vld [vmem:[%s2148 + $0x40] sm:$0xf]
      %v2166 = vld [vmem:[%s2148 + $0x44] sm:$0xf]
      %v2167 = vld [vmem:[%s2148 + $0x48] sm:$0xf]
      %v2168 = vld [vmem:[%s2148 + $0x4c] sm:$0xf]
      %v2169 = vld [vmem:[%s2148 + $0x50] sm:$0xf]
      %v2170 = vld [vmem:[%s2148 + $0x54] sm:$0xf]
      %v2171 = vld [vmem:[%s2148 + $0x58] sm:$0xf]
      %v2172 = vld [vmem:[%s2148 + $0x5c] sm:$0xf]
      %v2173 = vld [vmem:[%s2148 + $0x60] sm:$0xf]
      %v2174 = vld [vmem:[%s2148 + $0x64] sm:$0xf]
      %v2175 = vld [vmem:[%s2148 + $0x68] sm:$0xf]
      %v2176 = vld [vmem:[%s2148 + $0x6c] sm:$0xf]
      %v2177 = vld [vmem:[%s2148 + $0x70] sm:$0xf]
      %v2178 = vld [vmem:[%s2148 + $0x74] sm:$0xf]
      %v2179 = vld [vmem:[%s2148 + $0x78] sm:$0xf]
      %v2180 = vld [vmem:[%s2148 + $0x7c] sm:$0xf]
      %s2181 = scalar_lea.vmem %s2, 192
      %v2182 = vld [vmem:[%s2181] sm:$0xf]
      %v2183 = vld [vmem:[%s2181 + $0x4] sm:$0xf]
      %v2184 = vld [vmem:[%s2181 + $0x8] sm:$0xf]
      %v2185 = vld [vmem:[%s2181 + $0xc] sm:$0xf]
      %v2186 = vld [vmem:[%s2181 + $0x10] sm:$0xf]
      %v2187 = vld [vmem:[%s2181 + $0x14] sm:$0xf]
      %v2188 = vld [vmem:[%s2181 + $0x18] sm:$0xf]
      %v2189 = vld [vmem:[%s2181 + $0x1c] sm:$0xf]
      %v2190 = vld [vmem:[%s2181 + $0x20] sm:$0xf]
      %v2191 = vld [vmem:[%s2181 + $0x24] sm:$0xf]
      %v2192 = vld [vmem:[%s2181 + $0x28] sm:$0xf]
      %v2193 = vld [vmem:[%s2181 + $0x2c] sm:$0xf]
      %v2194 = vld [vmem:[%s2181 + $0x30] sm:$0xf]
      %v2195 = vld [vmem:[%s2181 + $0x34] sm:$0xf]
      %v2196 = vld [vmem:[%s2181 + $0x38] sm:$0xf]
      %v2197 = vld [vmem:[%s2181 + $0x3c] sm:$0xf]
      %v2230 = vunpack.c.l.b16 %v2149
      %v2231 = vunpack.c.l.b16 %v2150
      %v2232 = vunpack.c.l.b16 %v2151
      %v2233 = vunpack.c.l.b16 %v2152
      %v2234 = vunpack.c.l.b16 %v2153
      %v2235 = vunpack.c.l.b16 %v2154
      %v2236 = vunpack.c.l.b16 %v2155
      %v2237 = vunpack.c.l.b16 %v2156
      %v2238 = vunpack.c.l.b16 %v2157
      %v2239 = vunpack.c.l.b16 %v2158
      %v2240 = vunpack.c.l.b16 %v2159
      %v2241 = vunpack.c.l.b16 %v2160
      %v2242 = vunpack.c.l.b16 %v2161
      %v2243 = vunpack.c.l.b16 %v2162
      %v2244 = vunpack.c.l.b16 %v2163
      %v2245 = vunpack.c.l.b16 %v2164
      %v2246 = vunpack.c.l.b16 %v2165
      %v2247 = vunpack.c.l.b16 %v2166
      %v2248 = vunpack.c.l.b16 %v2167
      %v2249 = vunpack.c.l.b16 %v2168
      %v2250 = vunpack.c.l.b16 %v2169
      %v2251 = vunpack.c.l.b16 %v2170
      %v2252 = vunpack.c.l.b16 %v2171
      %v2253 = vunpack.c.l.b16 %v2172
      %v2254 = vunpack.c.l.b16 %v2173
      %v2255 = vunpack.c.l.b16 %v2174
      %v2256 = vunpack.c.l.b16 %v2175
      %v2257 = vunpack.c.l.b16 %v2176
      %v2258 = vunpack.c.l.b16 %v2177
      %v2259 = vunpack.c.l.b16 %v2178
      %v2260 = vunpack.c.l.b16 %v2179
      %v2261 = vunpack.c.l.b16 %v2180
      %v2262 = vpack.c.b16 %v2231, %v2230
      %v2263 = vpack.c.b16 %v2233, %v2232
      %v2264 = vpack.c.b16 %v2235, %v2234
      %v2265 = vpack.c.b16 %v2237, %v2236
      %v2266 = vpack.c.b16 %v2239, %v2238
      %v2267 = vpack.c.b16 %v2241, %v2240
      %v2268 = vpack.c.b16 %v2243, %v2242
      %v2269 = vpack.c.b16 %v2245, %v2244
      %v2270 = vpack.c.b16 %v2247, %v2246
      %v2271 = vpack.c.b16 %v2249, %v2248
      %v2272 = vpack.c.b16 %v2251, %v2250
      %v2273 = vpack.c.b16 %v2253, %v2252
      %v2274 = vpack.c.b16 %v2255, %v2254
      %v2275 = vpack.c.b16 %v2257, %v2256
      %v2276 = vpack.c.b16 %v2259, %v2258
      %v2277 = vpack.c.b16 %v2261, %v2260
      %v2310 = vunpack.c.l.b16 %v2182
      %v2311 = vunpack.c.l.b16 %v2183
      %v2312 = vunpack.c.l.b16 %v2184
      %v2313 = vunpack.c.l.b16 %v2185
      %v2314 = vunpack.c.l.b16 %v2186
      %v2315 = vunpack.c.l.b16 %v2187
      %v2316 = vunpack.c.l.b16 %v2188
      %v2317 = vunpack.c.l.b16 %v2189
      %v2318 = vunpack.c.l.b16 %v2190
      %v2319 = vunpack.c.l.b16 %v2191
      %v2320 = vunpack.c.l.b16 %v2192
      %v2321 = vunpack.c.l.b16 %v2193
      %v2322 = vunpack.c.l.b16 %v2194
      %v2323 = vunpack.c.l.b16 %v2195
      %v2324 = vunpack.c.l.b16 %v2196
      %v2325 = vunpack.c.l.b16 %v2197
      %v2326 = vpack.c.b16 %v2311, %v2310
      %v2327 = vpack.c.b16 %v2313, %v2312
      %v2328 = vpack.c.b16 %v2315, %v2314
      %v2329 = vpack.c.b16 %v2317, %v2316
      %v2330 = vpack.c.b16 %v2319, %v2318
      %v2331 = vpack.c.b16 %v2321, %v2320
      %v2332 = vpack.c.b16 %v2323, %v2322
      %v2333 = vpack.c.b16 %v2325, %v2324
      %2342 = vmatpush.bf16.msra.mxu0 %v2333
      %2343 = vmatpush.bf16.msra.mxu0 %v2332
      %2344 = vmatpush.bf16.msra.mxu0 %v2331
      %2345 = vmatpush.bf16.msra.mxu0 %v2330
      %2346 = vmatpush.bf16.msra.mxu0 %v2329
      %2347 = vmatpush.bf16.msra.mxu0 %v2328
      %2348 = vmatpush.bf16.msra.mxu0 %v2327
      %2349 = vmatpush.bf16.msra.mxu0 %v2326
      %2350 = vmatmul.bf16.gmra.mxu0 %v2262
      %v2351 = vpop.f32.mrf.mxu0
      %v2352 = vadd.f32 0.0, %v2351
      %v2353 = vpop.f32.mrf.mxu0
      %v2354 = vadd.f32 0.0, %v2353
      %2355 = vmatmul.bf16.gmra.mxu0 %v2263
      %v2356 = vpop.f32.mrf.mxu0
      %v2357 = vadd.f32 0.0, %v2356
      %v2358 = vpop.f32.mrf.mxu0
      %v2359 = vadd.f32 0.0, %v2358
      %2360 = vmatmul.bf16.gmra.mxu0 %v2264
      %v2361 = vpop.f32.mrf.mxu0
      %v2362 = vadd.f32 0.0, %v2361
      %v2363 = vpop.f32.mrf.mxu0
      %v2364 = vadd.f32 0.0, %v2363
      %2365 = vmatmul.bf16.gmra.mxu0 %v2265
      %v2366 = vpop.f32.mrf.mxu0
      %v2367 = vadd.f32 0.0, %v2366
      %v2368 = vpop.f32.mrf.mxu0
      %v2369 = vadd.f32 0.0, %v2368
      %2370 = vmatmul.bf16.gmra.mxu0 %v2266
      %v2371 = vpop.f32.mrf.mxu0
      %v2372 = vadd.f32 0.0, %v2371
      %v2373 = vpop.f32.mrf.mxu0
      %v2374 = vadd.f32 0.0, %v2373
      %2375 = vmatmul.bf16.gmra.mxu0 %v2267
      %v2376 = vpop.f32.mrf.mxu0
      %v2377 = vadd.f32 0.0, %v2376
      %v2378 = vpop.f32.mrf.mxu0
      %v2379 = vadd.f32 0.0, %v2378
      %2380 = vmatmul.bf16.gmra.mxu0 %v2268
      %v2381 = vpop.f32.mrf.mxu0
      %v2382 = vadd.f32 0.0, %v2381
      %v2383 = vpop.f32.mrf.mxu0
      %v2384 = vadd.f32 0.0, %v2383
      %2385 = vmatmul.bf16.gmra.mxu0 %v2269
      %v2386 = vpop.f32.mrf.mxu0
      %v2387 = vadd.f32 0.0, %v2386
      %v2388 = vpop.f32.mrf.mxu0
      %v2389 = vadd.f32 0.0, %v2388
      %2390 = vmatmul.bf16.gmra.mxu0 %v2270
      %v2391 = vpop.f32.mrf.mxu0
      %v2392 = vadd.f32 0.0, %v2391
      %v2393 = vpop.f32.mrf.mxu0
      %v2394 = vadd.f32 0.0, %v2393
      %2395 = vmatmul.bf16.gmra.mxu0 %v2271
      %v2396 = vpop.f32.mrf.mxu0
      %v2397 = vadd.f32 0.0, %v2396
      %v2398 = vpop.f32.mrf.mxu0
      %v2399 = vadd.f32 0.0, %v2398
      %2400 = vmatmul.bf16.gmra.mxu0 %v2272
      %v2401 = vpop.f32.mrf.mxu0
      %v2402 = vadd.f32 0.0, %v2401
      %v2403 = vpop.f32.mrf.mxu0
      %v2404 = vadd.f32 0.0, %v2403
      %2405 = vmatmul.bf16.gmra.mxu0 %v2273
      %v2406 = vpop.f32.mrf.mxu0
      %v2407 = vadd.f32 0.0, %v2406
      %v2408 = vpop.f32.mrf.mxu0
      %v2409 = vadd.f32 0.0, %v2408
      %2410 = vmatmul.bf16.gmra.mxu0 %v2274
      %v2411 = vpop.f32.mrf.mxu0
      %v2412 = vadd.f32 0.0, %v2411
      %v2413 = vpop.f32.mrf.mxu0
      %v2414 = vadd.f32 0.0, %v2413
      %2415 = vmatmul.bf16.gmra.mxu0 %v2275
      %v2416 = vpop.f32.mrf.mxu0
      %v2417 = vadd.f32 0.0, %v2416
      %v2418 = vpop.f32.mrf.mxu0
      %v2419 = vadd.f32 0.0, %v2418
      %2420 = vmatmul.bf16.gmra.mxu0 %v2276
      %v2421 = vpop.f32.mrf.mxu0
      %v2422 = vadd.f32 0.0, %v2421
      %v2423 = vpop.f32.mrf.mxu0
      %v2424 = vadd.f32 0.0, %v2423
      %2425 = vmatmul.bf16.gmra.mxu0 %v2277
      %v2426 = vpop.f32.mrf.mxu0
      %v2427 = vadd.f32 0.0, %v2426
      %v2428 = vpop.f32.mrf.mxu0
      %v2429 = vadd.f32 0.0, %v2428
      %2430 = vdwg.mxu0
      %v2431 = vadd.f32 %v2116, %v2352
      %v2432 = vadd.f32 %v2117, %v2354
      %v2433 = vadd.f32 %v2118, %v2357
      %v2434 = vadd.f32 %v2119, %v2359
      %v2435 = vadd.f32 %v2120, %v2362
      %v2436 = vadd.f32 %v2121, %v2364
      %v2437 = vadd.f32 %v2122, %v2367
      %v2438 = vadd.f32 %v2123, %v2369
      %v2439 = vadd.f32 %v2124, %v2372
      %v2440 = vadd.f32 %v2125, %v2374
      %v2441 = vadd.f32 %v2126, %v2377
      %v2442 = vadd.f32 %v2127, %v2379
      %v2443 = vadd.f32 %v2128, %v2382
      %v2444 = vadd.f32 %v2129, %v2384
      %v2445 = vadd.f32 %v2130, %v2387
      %v2446 = vadd.f32 %v2131, %v2389
      %v2447 = vadd.f32 %v2132, %v2392
      %v2448 = vadd.f32 %v2133, %v2394
      %v2449 = vadd.f32 %v2134, %v2397
      %v2450 = vadd.f32 %v2135, %v2399
      %v2451 = vadd.f32 %v2136, %v2402
      %v2452 = vadd.f32 %v2137, %v2404
      %v2453 = vadd.f32 %v2138, %v2407
      %v2454 = vadd.f32 %v2139, %v2409
      %v2455 = vadd.f32 %v2140, %v2412
      %v2456 = vadd.f32 %v2141, %v2414
      %v2457 = vadd.f32 %v2142, %v2417
      %v2458 = vadd.f32 %v2143, %v2419
      %v2459 = vadd.f32 %v2144, %v2422
      %v2460 = vadd.f32 %v2145, %v2424
      %v2461 = vadd.f32 %v2146, %v2427
      %v2462 = vadd.f32 %v2147, %v2429
      %s2463 = scalar_lea.vmem [#allocation2], 152
      %v2464 = vld [vmem:[%s2463] sm:$0xf]
      %v2465 = vld [vmem:[%s2463 + $0x4] sm:$0xf]
      %v2466 = vld [vmem:[%s2463 + $0x8] sm:$0xf]
      %v2467 = vld [vmem:[%s2463 + $0xc] sm:$0xf]
      %v2468 = vld [vmem:[%s2463 + $0x10] sm:$0xf]
      %v2469 = vld [vmem:[%s2463 + $0x14] sm:$0xf]
      %v2470 = vld [vmem:[%s2463 + $0x18] sm:$0xf]
      %v2471 = vld [vmem:[%s2463 + $0x1c] sm:$0xf]
      %v2472 = vld [vmem:[%s2463 + $0x20] sm:$0xf]
      %v2473 = vld [vmem:[%s2463 + $0x24] sm:$0xf]
      %v2474 = vld [vmem:[%s2463 + $0x28] sm:$0xf]
      %v2475 = vld [vmem:[%s2463 + $0x2c] sm:$0xf]
      %v2476 = vld [vmem:[%s2463 + $0x30] sm:$0xf]
      %v2477 = vld [vmem:[%s2463 + $0x34] sm:$0xf]
      %v2478 = vld [vmem:[%s2463 + $0x38] sm:$0xf]
      %v2479 = vld [vmem:[%s2463 + $0x3c] sm:$0xf]
      %v2480 = vld [vmem:[%s2463 + $0x40] sm:$0xf]
      %v2481 = vld [vmem:[%s2463 + $0x44] sm:$0xf]
      %v2482 = vld [vmem:[%s2463 + $0x48] sm:$0xf]
      %v2483 = vld [vmem:[%s2463 + $0x4c] sm:$0xf]
      %v2484 = vld [vmem:[%s2463 + $0x50] sm:$0xf]
      %v2485 = vld [vmem:[%s2463 + $0x54] sm:$0xf]
      %v2486 = vld [vmem:[%s2463 + $0x58] sm:$0xf]
      %v2487 = vld [vmem:[%s2463 + $0x5c] sm:$0xf]
      %v2488 = vld [vmem:[%s2463 + $0x60] sm:$0xf]
      %v2489 = vld [vmem:[%s2463 + $0x64] sm:$0xf]
      %v2490 = vld [vmem:[%s2463 + $0x68] sm:$0xf]
      %v2491 = vld [vmem:[%s2463 + $0x6c] sm:$0xf]
      %v2492 = vld [vmem:[%s2463 + $0x70] sm:$0xf]
      %v2493 = vld [vmem:[%s2463 + $0x74] sm:$0xf]
      %v2494 = vld [vmem:[%s2463 + $0x78] sm:$0xf]
      %v2495 = vld [vmem:[%s2463 + $0x7c] sm:$0xf]
      %s2496 = scalar_lea.vmem %s2, 256
      %v2497 = vld [vmem:[%s2496] sm:$0xf]
      %v2498 = vld [vmem:[%s2496 + $0x4] sm:$0xf]
      %v2499 = vld [vmem:[%s2496 + $0x8] sm:$0xf]
      %v2500 = vld [vmem:[%s2496 + $0xc] sm:$0xf]
      %v2501 = vld [vmem:[%s2496 + $0x10] sm:$0xf]
      %v2502 = vld [vmem:[%s2496 + $0x14] sm:$0xf]
      %v2503 = vld [vmem:[%s2496 + $0x18] sm:$0xf]
      %v2504 = vld [vmem:[%s2496 + $0x1c] sm:$0xf]
      %v2505 = vld [vmem:[%s2496 + $0x20] sm:$0xf]
      %v2506 = vld [vmem:[%s2496 + $0x24] sm:$0xf]
      %v2507 = vld [vmem:[%s2496 + $0x28] sm:$0xf]
      %v2508 = vld [vmem:[%s2496 + $0x2c] sm:$0xf]
      %v2509 = vld [vmem:[%s2496 + $0x30] sm:$0xf]
      %v2510 = vld [vmem:[%s2496 + $0x34] sm:$0xf]
      %v2511 = vld [vmem:[%s2496 + $0x38] sm:$0xf]
      %v2512 = vld [vmem:[%s2496 + $0x3c] sm:$0xf]
      %v2545 = vunpack.c.l.b16 %v2464
      %v2546 = vunpack.c.l.b16 %v2465
      %v2547 = vunpack.c.l.b16 %v2466
      %v2548 = vunpack.c.l.b16 %v2467
      %v2549 = vunpack.c.l.b16 %v2468
      %v2550 = vunpack.c.l.b16 %v2469
      %v2551 = vunpack.c.l.b16 %v2470
      %v2552 = vunpack.c.l.b16 %v2471
      %v2553 = vunpack.c.l.b16 %v2472
      %v2554 = vunpack.c.l.b16 %v2473
      %v2555 = vunpack.c.l.b16 %v2474
      %v2556 = vunpack.c.l.b16 %v2475
      %v2557 = vunpack.c.l.b16 %v2476
      %v2558 = vunpack.c.l.b16 %v2477
      %v2559 = vunpack.c.l.b16 %v2478
      %v2560 = vunpack.c.l.b16 %v2479
      %v2561 = vunpack.c.l.b16 %v2480
      %v2562 = vunpack.c.l.b16 %v2481
      %v2563 = vunpack.c.l.b16 %v2482
      %v2564 = vunpack.c.l.b16 %v2483
      %v2565 = vunpack.c.l.b16 %v2484
      %v2566 = vunpack.c.l.b16 %v2485
      %v2567 = vunpack.c.l.b16 %v2486
      %v2568 = vunpack.c.l.b16 %v2487
      %v2569 = vunpack.c.l.b16 %v2488
      %v2570 = vunpack.c.l.b16 %v2489
      %v2571 = vunpack.c.l.b16 %v2490
      %v2572 = vunpack.c.l.b16 %v2491
      %v2573 = vunpack.c.l.b16 %v2492
      %v2574 = vunpack.c.l.b16 %v2493
      %v2575 = vunpack.c.l.b16 %v2494
      %v2576 = vunpack.c.l.b16 %v2495
      %v2577 = vpack.c.b16 %v2546, %v2545
      %v2578 = vpack.c.b16 %v2548, %v2547
      %v2579 = vpack.c.b16 %v2550, %v2549
      %v2580 = vpack.c.b16 %v2552, %v2551
      %v2581 = vpack.c.b16 %v2554, %v2553
      %v2582 = vpack.c.b16 %v2556, %v2555
      %v2583 = vpack.c.b16 %v2558, %v2557
      %v2584 = vpack.c.b16 %v2560, %v2559
      %v2585 = vpack.c.b16 %v2562, %v2561
      %v2586 = vpack.c.b16 %v2564, %v2563
      %v2587 = vpack.c.b16 %v2566, %v2565
      %v2588 = vpack.c.b16 %v2568, %v2567
      %v2589 = vpack.c.b16 %v2570, %v2569
      %v2590 = vpack.c.b16 %v2572, %v2571
      %v2591 = vpack.c.b16 %v2574, %v2573
      %v2592 = vpack.c.b16 %v2576, %v2575
      %v2625 = vunpack.c.l.b16 %v2497
      %v2626 = vunpack.c.l.b16 %v2498
      %v2627 = vunpack.c.l.b16 %v2499
      %v2628 = vunpack.c.l.b16 %v2500
      %v2629 = vunpack.c.l.b16 %v2501
      %v2630 = vunpack.c.l.b16 %v2502
      %v2631 = vunpack.c.l.b16 %v2503
      %v2632 = vunpack.c.l.b16 %v2504
      %v2633 = vunpack.c.l.b16 %v2505
      %v2634 = vunpack.c.l.b16 %v2506
      %v2635 = vunpack.c.l.b16 %v2507
      %v2636 = vunpack.c.l.b16 %v2508
      %v2637 = vunpack.c.l.b16 %v2509
      %v2638 = vunpack.c.l.b16 %v2510
      %v2639 = vunpack.c.l.b16 %v2511
      %v2640 = vunpack.c.l.b16 %v2512
      %v2641 = vpack.c.b16 %v2626, %v2625
      %v2642 = vpack.c.b16 %v2628, %v2627
      %v2643 = vpack.c.b16 %v2630, %v2629
      %v2644 = vpack.c.b16 %v2632, %v2631
      %v2645 = vpack.c.b16 %v2634, %v2633
      %v2646 = vpack.c.b16 %v2636, %v2635
      %v2647 = vpack.c.b16 %v2638, %v2637
      %v2648 = vpack.c.b16 %v2640, %v2639
      %2657 = vmatpush.bf16.msra.mxu0 %v2648
      %2658 = vmatpush.bf16.msra.mxu0 %v2647
      %2659 = vmatpush.bf16.msra.mxu0 %v2646
      %2660 = vmatpush.bf16.msra.mxu0 %v2645
      %2661 = vmatpush.bf16.msra.mxu0 %v2644
      %2662 = vmatpush.bf16.msra.mxu0 %v2643
      %2663 = vmatpush.bf16.msra.mxu0 %v2642
      %2664 = vmatpush.bf16.msra.mxu0 %v2641
      %2665 = vmatmul.bf16.gmra.mxu0 %v2577
      %v2666 = vpop.f32.mrf.mxu0
      %v2667 = vadd.f32 0.0, %v2666
      %v2668 = vpop.f32.mrf.mxu0
      %v2669 = vadd.f32 0.0, %v2668
      %2670 = vmatmul.bf16.gmra.mxu0 %v2578
      %v2671 = vpop.f32.mrf.mxu0
      %v2672 = vadd.f32 0.0, %v2671
      %v2673 = vpop.f32.mrf.mxu0
      %v2674 = vadd.f32 0.0, %v2673
      %2675 = vmatmul.bf16.gmra.mxu0 %v2579
      %v2676 = vpop.f32.mrf.mxu0
      %v2677 = vadd.f32 0.0, %v2676
      %v2678 = vpop.f32.mrf.mxu0
      %v2679 = vadd.f32 0.0, %v2678
      %2680 = vmatmul.bf16.gmra.mxu0 %v2580
      %v2681 = vpop.f32.mrf.mxu0
      %v2682 = vadd.f32 0.0, %v2681
      %v2683 = vpop.f32.mrf.mxu0
      %v2684 = vadd.f32 0.0, %v2683
      %2685 = vmatmul.bf16.gmra.mxu0 %v2581
      %v2686 = vpop.f32.mrf.mxu0
      %v2687 = vadd.f32 0.0, %v2686
      %v2688 = vpop.f32.mrf.mxu0
      %v2689 = vadd.f32 0.0, %v2688
      %2690 = vmatmul.bf16.gmra.mxu0 %v2582
      %v2691 = vpop.f32.mrf.mxu0
      %v2692 = vadd.f32 0.0, %v2691
      %v2693 = vpop.f32.mrf.mxu0
      %v2694 = vadd.f32 0.0, %v2693
      %2695 = vmatmul.bf16.gmra.mxu0 %v2583
      %v2696 = vpop.f32.mrf.mxu0
      %v2697 = vadd.f32 0.0, %v2696
      %v2698 = vpop.f32.mrf.mxu0
      %v2699 = vadd.f32 0.0, %v2698
      %2700 = vmatmul.bf16.gmra.mxu0 %v2584
      %v2701 = vpop.f32.mrf.mxu0
      %v2702 = vadd.f32 0.0, %v2701
      %v2703 = vpop.f32.mrf.mxu0
      %v2704 = vadd.f32 0.0, %v2703
      %2705 = vmatmul.bf16.gmra.mxu0 %v2585
      %v2706 = vpop.f32.mrf.mxu0
      %v2707 = vadd.f32 0.0, %v2706
      %v2708 = vpop.f32.mrf.mxu0
      %v2709 = vadd.f32 0.0, %v2708
      %2710 = vmatmul.bf16.gmra.mxu0 %v2586
      %v2711 = vpop.f32.mrf.mxu0
      %v2712 = vadd.f32 0.0, %v2711
      %v2713 = vpop.f32.mrf.mxu0
      %v2714 = vadd.f32 0.0, %v2713
      %2715 = vmatmul.bf16.gmra.mxu0 %v2587
      %v2716 = vpop.f32.mrf.mxu0
      %v2717 = vadd.f32 0.0, %v2716
      %v2718 = vpop.f32.mrf.mxu0
      %v2719 = vadd.f32 0.0, %v2718
      %2720 = vmatmul.bf16.gmra.mxu0 %v2588
      %v2721 = vpop.f32.mrf.mxu0
      %v2722 = vadd.f32 0.0, %v2721
      %v2723 = vpop.f32.mrf.mxu0
      %v2724 = vadd.f32 0.0, %v2723
      %2725 = vmatmul.bf16.gmra.mxu0 %v2589
      %v2726 = vpop.f32.mrf.mxu0
      %v2727 = vadd.f32 0.0, %v2726
      %v2728 = vpop.f32.mrf.mxu0
      %v2729 = vadd.f32 0.0, %v2728
      %2730 = vmatmul.bf16.gmra.mxu0 %v2590
      %v2731 = vpop.f32.mrf.mxu0
      %v2732 = vadd.f32 0.0, %v2731
      %v2733 = vpop.f32.mrf.mxu0
      %v2734 = vadd.f32 0.0, %v2733
      %2735 = vmatmul.bf16.gmra.mxu0 %v2591
      %v2736 = vpop.f32.mrf.mxu0
      %v2737 = vadd.f32 0.0, %v2736
      %v2738 = vpop.f32.mrf.mxu0
      %v2739 = vadd.f32 0.0, %v2738
      %2740 = vmatmul.bf16.gmra.mxu0 %v2592
      %v2741 = vpop.f32.mrf.mxu0
      %v2742 = vadd.f32 0.0, %v2741
      %v2743 = vpop.f32.mrf.mxu0
      %v2744 = vadd.f32 0.0, %v2743
      %2745 = vdwg.mxu0
      %v2746 = vadd.f32 %v2431, %v2667
      %v2747 = vadd.f32 %v2432, %v2669
      %v2748 = vadd.f32 %v2433, %v2672
      %v2749 = vadd.f32 %v2434, %v2674
      %v2750 = vadd.f32 %v2435, %v2677
      %v2751 = vadd.f32 %v2436, %v2679
      %v2752 = vadd.f32 %v2437, %v2682
      %v2753 = vadd.f32 %v2438, %v2684
      %v2754 = vadd.f32 %v2439, %v2687
      %v2755 = vadd.f32 %v2440, %v2689
      %v2756 = vadd.f32 %v2441, %v2692
      %v2757 = vadd.f32 %v2442, %v2694
      %v2758 = vadd.f32 %v2443, %v2697
      %v2759 = vadd.f32 %v2444, %v2699
      %v2760 = vadd.f32 %v2445, %v2702
      %v2761 = vadd.f32 %v2446, %v2704
      %v2762 = vadd.f32 %v2447, %v2707
      %v2763 = vadd.f32 %v2448, %v2709
      %v2764 = vadd.f32 %v2449, %v2712
      %v2765 = vadd.f32 %v2450, %v2714
      %v2766 = vadd.f32 %v2451, %v2717
      %v2767 = vadd.f32 %v2452, %v2719
      %v2768 = vadd.f32 %v2453, %v2722
      %v2769 = vadd.f32 %v2454, %v2724
      %v2770 = vadd.f32 %v2455, %v2727
      %v2771 = vadd.f32 %v2456, %v2729
      %v2772 = vadd.f32 %v2457, %v2732
      %v2773 = vadd.f32 %v2458, %v2734
      %v2774 = vadd.f32 %v2459, %v2737
      %v2775 = vadd.f32 %v2460, %v2739
      %v2776 = vadd.f32 %v2461, %v2742
      %v2777 = vadd.f32 %v2462, %v2744
      %s2778 = scalar_lea.vmem [#allocation2], 296
      %v2779 = vld [vmem:[%s2778] sm:$0xf]
      %v2780 = vld [vmem:[%s2778 + $0x4] sm:$0xf]
      %v2781 = vld [vmem:[%s2778 + $0x8] sm:$0xf]
      %v2782 = vld [vmem:[%s2778 + $0xc] sm:$0xf]
      %v2783 = vld [vmem:[%s2778 + $0x10] sm:$0xf]
      %v2784 = vld [vmem:[%s2778 + $0x14] sm:$0xf]
      %v2785 = vld [vmem:[%s2778 + $0x18] sm:$0xf]
      %v2786 = vld [vmem:[%s2778 + $0x1c] sm:$0xf]
      %v2787 = vld [vmem:[%s2778 + $0x20] sm:$0xf]
      %v2788 = vld [vmem:[%s2778 + $0x24] sm:$0xf]
      %v2789 = vld [vmem:[%s2778 + $0x28] sm:$0xf]
      %v2790 = vld [vmem:[%s2778 + $0x2c] sm:$0xf]
      %v2791 = vld [vmem:[%s2778 + $0x30] sm:$0xf]
      %v2792 = vld [vmem:[%s2778 + $0x34] sm:$0xf]
      %v2793 = vld [vmem:[%s2778 + $0x38] sm:$0xf]
      %v2794 = vld [vmem:[%s2778 + $0x3c] sm:$0xf]
      %v2795 = vld [vmem:[%s2778 + $0x40] sm:$0xf]
      %v2796 = vld [vmem:[%s2778 + $0x44] sm:$0xf]
      %v2797 = vld [vmem:[%s2778 + $0x48] sm:$0xf]
      %v2798 = vld [vmem:[%s2778 + $0x4c] sm:$0xf]
      %v2799 = vld [vmem:[%s2778 + $0x50] sm:$0xf]
      %v2800 = vld [vmem:[%s2778 + $0x54] sm:$0xf]
      %v2801 = vld [vmem:[%s2778 + $0x58] sm:$0xf]
      %v2802 = vld [vmem:[%s2778 + $0x5c] sm:$0xf]
      %v2803 = vld [vmem:[%s2778 + $0x60] sm:$0xf]
      %v2804 = vld [vmem:[%s2778 + $0x64] sm:$0xf]
      %v2805 = vld [vmem:[%s2778 + $0x68] sm:$0xf]
      %v2806 = vld [vmem:[%s2778 + $0x6c] sm:$0xf]
      %v2807 = vld [vmem:[%s2778 + $0x70] sm:$0xf]
      %v2808 = vld [vmem:[%s2778 + $0x74] sm:$0xf]
      %v2809 = vld [vmem:[%s2778 + $0x78] sm:$0xf]
      %v2810 = vld [vmem:[%s2778 + $0x7c] sm:$0xf]
      %s2811 = scalar_lea.vmem %s2, 320
      %v2812 = vld [vmem:[%s2811] sm:$0xf]
      %v2813 = vld [vmem:[%s2811 + $0x4] sm:$0xf]
      %v2814 = vld [vmem:[%s2811 + $0x8] sm:$0xf]
      %v2815 = vld [vmem:[%s2811 + $0xc] sm:$0xf]
      %v2816 = vld [vmem:[%s2811 + $0x10] sm:$0xf]
      %v2817 = vld [vmem:[%s2811 + $0x14] sm:$0xf]
      %v2818 = vld [vmem:[%s2811 + $0x18] sm:$0xf]
      %v2819 = vld [vmem:[%s2811 + $0x1c] sm:$0xf]
      %v2820 = vld [vmem:[%s2811 + $0x20] sm:$0xf]
      %v2821 = vld [vmem:[%s2811 + $0x24] sm:$0xf]
      %v2822 = vld [vmem:[%s2811 + $0x28] sm:$0xf]
      %v2823 = vld [vmem:[%s2811 + $0x2c] sm:$0xf]
      %v2824 = vld [vmem:[%s2811 + $0x30] sm:$0xf]
      %v2825 = vld [vmem:[%s2811 + $0x34] sm:$0xf]
      %v2826 = vld [vmem:[%s2811 + $0x38] sm:$0xf]
      %v2827 = vld [vmem:[%s2811 + $0x3c] sm:$0xf]
      %v2860 = vunpack.c.l.b16 %v2779
      %v2861 = vunpack.c.l.b16 %v2780
      %v2862 = vunpack.c.l.b16 %v2781
      %v2863 = vunpack.c.l.b16 %v2782
      %v2864 = vunpack.c.l.b16 %v2783
      %v2865 = vunpack.c.l.b16 %v2784
      %v2866 = vunpack.c.l.b16 %v2785
      %v2867 = vunpack.c.l.b16 %v2786
      %v2868 = vunpack.c.l.b16 %v2787
      %v2869 = vunpack.c.l.b16 %v2788
      %v2870 = vunpack.c.l.b16 %v2789
      %v2871 = vunpack.c.l.b16 %v2790
      %v2872 = vunpack.c.l.b16 %v2791
      %v2873 = vunpack.c.l.b16 %v2792
      %v2874 = vunpack.c.l.b16 %v2793
      %v2875 = vunpack.c.l.b16 %v2794
      %v2876 = vunpack.c.l.b16 %v2795
      %v2877 = vunpack.c.l.b16 %v2796
      %v2878 = vunpack.c.l.b16 %v2797
      %v2879 = vunpack.c.l.b16 %v2798
      %v2880 = vunpack.c.l.b16 %v2799
      %v2881 = vunpack.c.l.b16 %v2800
      %v2882 = vunpack.c.l.b16 %v2801
      %v2883 = vunpack.c.l.b16 %v2802
      %v2884 = vunpack.c.l.b16 %v2803
      %v2885 = vunpack.c.l.b16 %v2804
      %v2886 = vunpack.c.l.b16 %v2805
      %v2887 = vunpack.c.l.b16 %v2806
      %v2888 = vunpack.c.l.b16 %v2807
      %v2889 = vunpack.c.l.b16 %v2808
      %v2890 = vunpack.c.l.b16 %v2809
      %v2891 = vunpack.c.l.b16 %v2810
      %v2892 = vpack.c.b16 %v2861, %v2860
      %v2893 = vpack.c.b16 %v2863, %v2862
      %v2894 = vpack.c.b16 %v2865, %v2864
      %v2895 = vpack.c.b16 %v2867, %v2866
      %v2896 = vpack.c.b16 %v2869, %v2868
      %v2897 = vpack.c.b16 %v2871, %v2870
      %v2898 = vpack.c.b16 %v2873, %v2872
      %v2899 = vpack.c.b16 %v2875, %v2874
      %v2900 = vpack.c.b16 %v2877, %v2876
      %v2901 = vpack.c.b16 %v2879, %v2878
      %v2902 = vpack.c.b16 %v2881, %v2880
      %v2903 = vpack.c.b16 %v2883, %v2882
      %v2904 = vpack.c.b16 %v2885, %v2884
      %v2905 = vpack.c.b16 %v2887, %v2886
      %v2906 = vpack.c.b16 %v2889, %v2888
      %v2907 = vpack.c.b16 %v2891, %v2890
      %v2940 = vunpack.c.l.b16 %v2812
      %v2941 = vunpack.c.l.b16 %v2813
      %v2942 = vunpack.c.l.b16 %v2814
      %v2943 = vunpack.c.l.b16 %v2815
      %v2944 = vunpack.c.l.b16 %v2816
      %v2945 = vunpack.c.l.b16 %v2817
      %v2946 = vunpack.c.l.b16 %v2818
      %v2947 = vunpack.c.l.b16 %v2819
      %v2948 = vunpack.c.l.b16 %v2820
      %v2949 = vunpack.c.l.b16 %v2821
      %v2950 = vunpack.c.l.b16 %v2822
      %v2951 = vunpack.c.l.b16 %v2823
      %v2952 = vunpack.c.l.b16 %v2824
      %v2953 = vunpack.c.l.b16 %v2825
      %v2954 = vunpack.c.l.b16 %v2826
      %v2955 = vunpack.c.l.b16 %v2827
      %v2956 = vpack.c.b16 %v2941, %v2940
      %v2957 = vpack.c.b16 %v2943, %v2942
      %v2958 = vpack.c.b16 %v2945, %v2944
      %v2959 = vpack.c.b16 %v2947, %v2946
      %v2960 = vpack.c.b16 %v2949, %v2948
      %v2961 = vpack.c.b16 %v2951, %v2950
      %v2962 = vpack.c.b16 %v2953, %v2952
      %v2963 = vpack.c.b16 %v2955, %v2954
      %2972 = vmatpush.bf16.msra.mxu0 %v2963
      %2973 = vmatpush.bf16.msra.mxu0 %v2962
      %2974 = vmatpush.bf16.msra.mxu0 %v2961
      %2975 = vmatpush.bf16.msra.mxu0 %v2960
      %2976 = vmatpush.bf16.msra.mxu0 %v2959
      %2977 = vmatpush.bf16.msra.mxu0 %v2958
      %2978 = vmatpush.bf16.msra.mxu0 %v2957
      %2979 = vmatpush.bf16.msra.mxu0 %v2956
      %2980 = vmatmul.bf16.gmra.mxu0 %v2892
      %v2981 = vpop.f32.mrf.mxu0
      %v2982 = vadd.f32 0.0, %v2981
      %v2983 = vpop.f32.mrf.mxu0
      %v2984 = vadd.f32 0.0, %v2983
      %2985 = vmatmul.bf16.gmra.mxu0 %v2893
      %v2986 = vpop.f32.mrf.mxu0
      %v2987 = vadd.f32 0.0, %v2986
      %v2988 = vpop.f32.mrf.mxu0
      %v2989 = vadd.f32 0.0, %v2988
      %2990 = vmatmul.bf16.gmra.mxu0 %v2894
      %v2991 = vpop.f32.mrf.mxu0
      %v2992 = vadd.f32 0.0, %v2991
      %v2993 = vpop.f32.mrf.mxu0
      %v2994 = vadd.f32 0.0, %v2993
      %2995 = vmatmul.bf16.gmra.mxu0 %v2895
      %v2996 = vpop.f32.mrf.mxu0
      %v2997 = vadd.f32 0.0, %v2996
      %v2998 = vpop.f32.mrf.mxu0
      %v2999 = vadd.f32 0.0, %v2998
      %3000 = vmatmul.bf16.gmra.mxu0 %v2896
      %v3001 = vpop.f32.mrf.mxu0
      %v3002 = vadd.f32 0.0, %v3001
      %v3003 = vpop.f32.mrf.mxu0
      %v3004 = vadd.f32 0.0, %v3003
      %3005 = vmatmul.bf16.gmra.mxu0 %v2897
      %v3006 = vpop.f32.mrf.mxu0
      %v3007 = vadd.f32 0.0, %v3006
      %v3008 = vpop.f32.mrf.mxu0
      %v3009 = vadd.f32 0.0, %v3008
      %3010 = vmatmul.bf16.gmra.mxu0 %v2898
      %v3011 = vpop.f32.mrf.mxu0
      %v3012 = vadd.f32 0.0, %v3011
      %v3013 = vpop.f32.mrf.mxu0
      %v3014 = vadd.f32 0.0, %v3013
      %3015 = vmatmul.bf16.gmra.mxu0 %v2899
      %v3016 = vpop.f32.mrf.mxu0
      %v3017 = vadd.f32 0.0, %v3016
      %v3018 = vpop.f32.mrf.mxu0
      %v3019 = vadd.f32 0.0, %v3018
      %3020 = vmatmul.bf16.gmra.mxu0 %v2900
      %v3021 = vpop.f32.mrf.mxu0
      %v3022 = vadd.f32 0.0, %v3021
      %v3023 = vpop.f32.mrf.mxu0
      %v3024 = vadd.f32 0.0, %v3023
      %3025 = vmatmul.bf16.gmra.mxu0 %v2901
      %v3026 = vpop.f32.mrf.mxu0
      %v3027 = vadd.f32 0.0, %v3026
      %v3028 = vpop.f32.mrf.mxu0
      %v3029 = vadd.f32 0.0, %v3028
      %3030 = vmatmul.bf16.gmra.mxu0 %v2902
      %v3031 = vpop.f32.mrf.mxu0
      %v3032 = vadd.f32 0.0, %v3031
      %v3033 = vpop.f32.mrf.mxu0
      %v3034 = vadd.f32 0.0, %v3033
      %3035 = vmatmul.bf16.gmra.mxu0 %v2903
      %v3036 = vpop.f32.mrf.mxu0
      %v3037 = vadd.f32 0.0, %v3036
      %v3038 = vpop.f32.mrf.mxu0
      %v3039 = vadd.f32 0.0, %v3038
      %3040 = vmatmul.bf16.gmra.mxu0 %v2904
      %v3041 = vpop.f32.mrf.mxu0
      %v3042 = vadd.f32 0.0, %v3041
      %v3043 = vpop.f32.mrf.mxu0
      %v3044 = vadd.f32 0.0, %v3043
      %3045 = vmatmul.bf16.gmra.mxu0 %v2905
      %v3046 = vpop.f32.mrf.mxu0
      %v3047 = vadd.f32 0.0, %v3046
      %v3048 = vpop.f32.mrf.mxu0
      %v3049 = vadd.f32 0.0, %v3048
      %3050 = vmatmul.bf16.gmra.mxu0 %v2906
      %v3051 = vpop.f32.mrf.mxu0
      %v3052 = vadd.f32 0.0, %v3051
      %v3053 = vpop.f32.mrf.mxu0
      %v3054 = vadd.f32 0.0, %v3053
      %3055 = vmatmul.bf16.gmra.mxu0 %v2907
      %v3056 = vpop.f32.mrf.mxu0
      %v3057 = vadd.f32 0.0, %v3056
      %v3058 = vpop.f32.mrf.mxu0
      %v3059 = vadd.f32 0.0, %v3058
      %3060 = vdwg.mxu0
      %v3061 = vadd.f32 %v2746, %v2982
      %v3062 = vadd.f32 %v2747, %v2984
      %v3063 = vadd.f32 %v2748, %v2987
      %v3064 = vadd.f32 %v2749, %v2989
      %v3065 = vadd.f32 %v2750, %v2992
      %v3066 = vadd.f32 %v2751, %v2994
      %v3067 = vadd.f32 %v2752, %v2997
      %v3068 = vadd.f32 %v2753, %v2999
      %v3069 = vadd.f32 %v2754, %v3002
      %v3070 = vadd.f32 %v2755, %v3004
      %v3071 = vadd.f32 %v2756, %v3007
      %v3072 = vadd.f32 %v2757, %v3009
      %v3073 = vadd.f32 %v2758, %v3012
      %v3074 = vadd.f32 %v2759, %v3014
      %v3075 = vadd.f32 %v2760, %v3017
      %v3076 = vadd.f32 %v2761, %v3019
      %v3077 = vadd.f32 %v2762, %v3022
      %v3078 = vadd.f32 %v2763, %v3024
      %v3079 = vadd.f32 %v2764, %v3027
      %v3080 = vadd.f32 %v2765, %v3029
      %v3081 = vadd.f32 %v2766, %v3032
      %v3082 = vadd.f32 %v2767, %v3034
      %v3083 = vadd.f32 %v2768, %v3037
      %v3084 = vadd.f32 %v2769, %v3039
      %v3085 = vadd.f32 %v2770, %v3042
      %v3086 = vadd.f32 %v2771, %v3044
      %v3087 = vadd.f32 %v2772, %v3047
      %v3088 = vadd.f32 %v2773, %v3049
      %v3089 = vadd.f32 %v2774, %v3052
      %v3090 = vadd.f32 %v2775, %v3054
      %v3091 = vadd.f32 %v2776, %v3057
      %v3092 = vadd.f32 %v2777, %v3059
      %s3093 = scalar_lea.vmem [#allocation2], 16
      %v3094 = vld [vmem:[%s3093] sm:$0xf]
      %v3095 = vld [vmem:[%s3093 + $0x4] sm:$0xf]
      %v3096 = vld [vmem:[%s3093 + $0x8] sm:$0xf]
      %v3097 = vld [vmem:[%s3093 + $0xc] sm:$0xf]
      %v3098 = vld [vmem:[%s3093 + $0x10] sm:$0xf]
      %v3099 = vld [vmem:[%s3093 + $0x14] sm:$0xf]
      %v3100 = vld [vmem:[%s3093 + $0x18] sm:$0xf]
      %v3101 = vld [vmem:[%s3093 + $0x1c] sm:$0xf]
      %v3102 = vld [vmem:[%s3093 + $0x20] sm:$0xf]
      %v3103 = vld [vmem:[%s3093 + $0x24] sm:$0xf]
      %v3104 = vld [vmem:[%s3093 + $0x28] sm:$0xf]
      %v3105 = vld [vmem:[%s3093 + $0x2c] sm:$0xf]
      %v3106 = vld [vmem:[%s3093 + $0x30] sm:$0xf]
      %v3107 = vld [vmem:[%s3093 + $0x34] sm:$0xf]
      %v3108 = vld [vmem:[%s3093 + $0x38] sm:$0xf]
      %v3109 = vld [vmem:[%s3093 + $0x3c] sm:$0xf]
      %v3110 = vld [vmem:[%s3093 + $0x40] sm:$0xf]
      %v3111 = vld [vmem:[%s3093 + $0x44] sm:$0xf]
      %v3112 = vld [vmem:[%s3093 + $0x48] sm:$0xf]
      %v3113 = vld [vmem:[%s3093 + $0x4c] sm:$0xf]
      %v3114 = vld [vmem:[%s3093 + $0x50] sm:$0xf]
      %v3115 = vld [vmem:[%s3093 + $0x54] sm:$0xf]
      %v3116 = vld [vmem:[%s3093 + $0x58] sm:$0xf]
      %v3117 = vld [vmem:[%s3093 + $0x5c] sm:$0xf]
      %v3118 = vld [vmem:[%s3093 + $0x60] sm:$0xf]
      %v3119 = vld [vmem:[%s3093 + $0x64] sm:$0xf]
      %v3120 = vld [vmem:[%s3093 + $0x68] sm:$0xf]
      %v3121 = vld [vmem:[%s3093 + $0x6c] sm:$0xf]
      %v3122 = vld [vmem:[%s3093 + $0x70] sm:$0xf]
      %v3123 = vld [vmem:[%s3093 + $0x74] sm:$0xf]
      %v3124 = vld [vmem:[%s3093 + $0x78] sm:$0xf]
      %v3125 = vld [vmem:[%s3093 + $0x7c] sm:$0xf]
      %s3126 = scalar_lea.vmem %s2, 384
      %v3127 = vld [vmem:[%s3126] sm:$0xf]
      %v3128 = vld [vmem:[%s3126 + $0x4] sm:$0xf]
      %v3129 = vld [vmem:[%s3126 + $0x8] sm:$0xf]
      %v3130 = vld [vmem:[%s3126 + $0xc] sm:$0xf]
      %v3131 = vld [vmem:[%s3126 + $0x10] sm:$0xf]
      %v3132 = vld [vmem:[%s3126 + $0x14] sm:$0xf]
      %v3133 = vld [vmem:[%s3126 + $0x18] sm:$0xf]
      %v3134 = vld [vmem:[%s3126 + $0x1c] sm:$0xf]
      %v3135 = vld [vmem:[%s3126 + $0x20] sm:$0xf]
      %v3136 = vld [vmem:[%s3126 + $0x24] sm:$0xf]
      %v3137 = vld [vmem:[%s3126 + $0x28] sm:$0xf]
      %v3138 = vld [vmem:[%s3126 + $0x2c] sm:$0xf]
      %v3139 = vld [vmem:[%s3126 + $0x30] sm:$0xf]
      %v3140 = vld [vmem:[%s3126 + $0x34] sm:$0xf]
      %v3141 = vld [vmem:[%s3126 + $0x38] sm:$0xf]
      %v3142 = vld [vmem:[%s3126 + $0x3c] sm:$0xf]
      %v3175 = vunpack.c.l.b16 %v3094
      %v3176 = vunpack.c.l.b16 %v3095
      %v3177 = vunpack.c.l.b16 %v3096
      %v3178 = vunpack.c.l.b16 %v3097
      %v3179 = vunpack.c.l.b16 %v3098
      %v3180 = vunpack.c.l.b16 %v3099
      %v3181 = vunpack.c.l.b16 %v3100
      %v3182 = vunpack.c.l.b16 %v3101
      %v3183 = vunpack.c.l.b16 %v3102
      %v3184 = vunpack.c.l.b16 %v3103
      %v3185 = vunpack.c.l.b16 %v3104
      %v3186 = vunpack.c.l.b16 %v3105
      %v3187 = vunpack.c.l.b16 %v3106
      %v3188 = vunpack.c.l.b16 %v3107
      %v3189 = vunpack.c.l.b16 %v3108
      %v3190 = vunpack.c.l.b16 %v3109
      %v3191 = vunpack.c.l.b16 %v3110
      %v3192 = vunpack.c.l.b16 %v3111
      %v3193 = vunpack.c.l.b16 %v3112
      %v3194 = vunpack.c.l.b16 %v3113
      %v3195 = vunpack.c.l.b16 %v3114
      %v3196 = vunpack.c.l.b16 %v3115
      %v3197 = vunpack.c.l.b16 %v3116
      %v3198 = vunpack.c.l.b16 %v3117
      %v3199 = vunpack.c.l.b16 %v3118
      %v3200 = vunpack.c.l.b16 %v3119
      %v3201 = vunpack.c.l.b16 %v3120
      %v3202 = vunpack.c.l.b16 %v3121
      %v3203 = vunpack.c.l.b16 %v3122
      %v3204 = vunpack.c.l.b16 %v3123
      %v3205 = vunpack.c.l.b16 %v3124
      %v3206 = vunpack.c.l.b16 %v3125
      %v3207 = vpack.c.b16 %v3176, %v3175
      %v3208 = vpack.c.b16 %v3178, %v3177
      %v3209 = vpack.c.b16 %v3180, %v3179
      %v3210 = vpack.c.b16 %v3182, %v3181
      %v3211 = vpack.c.b16 %v3184, %v3183
      %v3212 = vpack.c.b16 %v3186, %v3185
      %v3213 = vpack.c.b16 %v3188, %v3187
      %v3214 = vpack.c.b16 %v3190, %v3189
      %v3215 = vpack.c.b16 %v3192, %v3191
      %v3216 = vpack.c.b16 %v3194, %v3193
      %v3217 = vpack.c.b16 %v3196, %v3195
      %v3218 = vpack.c.b16 %v3198, %v3197
      %v3219 = vpack.c.b16 %v3200, %v3199
      %v3220 = vpack.c.b16 %v3202, %v3201
      %v3221 = vpack.c.b16 %v3204, %v3203
      %v3222 = vpack.c.b16 %v3206, %v3205
      %v3255 = vunpack.c.l.b16 %v3127
      %v3256 = vunpack.c.l.b16 %v3128
      %v3257 = vunpack.c.l.b16 %v3129
      %v3258 = vunpack.c.l.b16 %v3130
      %v3259 = vunpack.c.l.b16 %v3131
      %v3260 = vunpack.c.l.b16 %v3132
      %v3261 = vunpack.c.l.b16 %v3133
      %v3262 = vunpack.c.l.b16 %v3134
      %v3263 = vunpack.c.l.b16 %v3135
      %v3264 = vunpack.c.l.b16 %v3136
      %v3265 = vunpack.c.l.b16 %v3137
      %v3266 = vunpack.c.l.b16 %v3138
      %v3267 = vunpack.c.l.b16 %v3139
      %v3268 = vunpack.c.l.b16 %v3140
      %v3269 = vunpack.c.l.b16 %v3141
      %v3270 = vunpack.c.l.b16 %v3142
      %v3271 = vpack.c.b16 %v3256, %v3255
      %v3272 = vpack.c.b16 %v3258, %v3257
      %v3273 = vpack.c.b16 %v3260, %v3259
      %v3274 = vpack.c.b16 %v3262, %v3261
      %v3275 = vpack.c.b16 %v3264, %v3263
      %v3276 = vpack.c.b16 %v3266, %v3265
      %v3277 = vpack.c.b16 %v3268, %v3267
      %v3278 = vpack.c.b16 %v3270, %v3269
      %3287 = vmatpush.bf16.msra.mxu0 %v3278
      %3288 = vmatpush.bf16.msra.mxu0 %v3277
      %3289 = vmatpush.bf16.msra.mxu0 %v3276
      %3290 = vmatpush.bf16.msra.mxu0 %v3275
      %3291 = vmatpush.bf16.msra.mxu0 %v3274
      %3292 = vmatpush.bf16.msra.mxu0 %v3273
      %3293 = vmatpush.bf16.msra.mxu0 %v3272
      %3294 = vmatpush.bf16.msra.mxu0 %v3271
      %3295 = vmatmul.bf16.gmra.mxu0 %v3207
      %v3296 = vpop.f32.mrf.mxu0
      %v3297 = vadd.f32 0.0, %v3296
      %v3298 = vpop.f32.mrf.mxu0
      %v3299 = vadd.f32 0.0, %v3298
      %3300 = vmatmul.bf16.gmra.mxu0 %v3208
      %v3301 = vpop.f32.mrf.mxu0
      %v3302 = vadd.f32 0.0, %v3301
      %v3303 = vpop.f32.mrf.mxu0
      %v3304 = vadd.f32 0.0, %v3303
      %3305 = vmatmul.bf16.gmra.mxu0 %v3209
      %v3306 = vpop.f32.mrf.mxu0
      %v3307 = vadd.f32 0.0, %v3306
      %v3308 = vpop.f32.mrf.mxu0
      %v3309 = vadd.f32 0.0, %v3308
      %3310 = vmatmul.bf16.gmra.mxu0 %v3210
      %v3311 = vpop.f32.mrf.mxu0
      %v3312 = vadd.f32 0.0, %v3311
      %v3313 = vpop.f32.mrf.mxu0
      %v3314 = vadd.f32 0.0, %v3313
      %3315 = vmatmul.bf16.gmra.mxu0 %v3211
      %v3316 = vpop.f32.mrf.mxu0
      %v3317 = vadd.f32 0.0, %v3316
      %v3318 = vpop.f32.mrf.mxu0
      %v3319 = vadd.f32 0.0, %v3318
      %3320 = vmatmul.bf16.gmra.mxu0 %v3212
      %v3321 = vpop.f32.mrf.mxu0
      %v3322 = vadd.f32 0.0, %v3321
      %v3323 = vpop.f32.mrf.mxu0
      %v3324 = vadd.f32 0.0, %v3323
      %3325 = vmatmul.bf16.gmra.mxu0 %v3213
      %v3326 = vpop.f32.mrf.mxu0
      %v3327 = vadd.f32 0.0, %v3326
      %v3328 = vpop.f32.mrf.mxu0
      %v3329 = vadd.f32 0.0, %v3328
      %3330 = vmatmul.bf16.gmra.mxu0 %v3214
      %v3331 = vpop.f32.mrf.mxu0
      %v3332 = vadd.f32 0.0, %v3331
      %v3333 = vpop.f32.mrf.mxu0
      %v3334 = vadd.f32 0.0, %v3333
      %3335 = vmatmul.bf16.gmra.mxu0 %v3215
      %v3336 = vpop.f32.mrf.mxu0
      %v3337 = vadd.f32 0.0, %v3336
      %v3338 = vpop.f32.mrf.mxu0
      %v3339 = vadd.f32 0.0, %v3338
      %3340 = vmatmul.bf16.gmra.mxu0 %v3216
      %v3341 = vpop.f32.mrf.mxu0
      %v3342 = vadd.f32 0.0, %v3341
      %v3343 = vpop.f32.mrf.mxu0
      %v3344 = vadd.f32 0.0, %v3343
      %3345 = vmatmul.bf16.gmra.mxu0 %v3217
      %v3346 = vpop.f32.mrf.mxu0
      %v3347 = vadd.f32 0.0, %v3346
      %v3348 = vpop.f32.mrf.mxu0
      %v3349 = vadd.f32 0.0, %v3348
      %3350 = vmatmul.bf16.gmra.mxu0 %v3218
      %v3351 = vpop.f32.mrf.mxu0
      %v3352 = vadd.f32 0.0, %v3351
      %v3353 = vpop.f32.mrf.mxu0
      %v3354 = vadd.f32 0.0, %v3353
      %3355 = vmatmul.bf16.gmra.mxu0 %v3219
      %v3356 = vpop.f32.mrf.mxu0
      %v3357 = vadd.f32 0.0, %v3356
      %v3358 = vpop.f32.mrf.mxu0
      %v3359 = vadd.f32 0.0, %v3358
      %3360 = vmatmul.bf16.gmra.mxu0 %v3220
      %v3361 = vpop.f32.mrf.mxu0
      %v3362 = vadd.f32 0.0, %v3361
      %v3363 = vpop.f32.mrf.mxu0
      %v3364 = vadd.f32 0.0, %v3363
      %3365 = vmatmul.bf16.gmra.mxu0 %v3221
      %v3366 = vpop.f32.mrf.mxu0
      %v3367 = vadd.f32 0.0, %v3366
      %v3368 = vpop.f32.mrf.mxu0
      %v3369 = vadd.f32 0.0, %v3368
      %3370 = vmatmul.bf16.gmra.mxu0 %v3222
      %v3371 = vpop.f32.mrf.mxu0
      %v3372 = vadd.f32 0.0, %v3371
      %v3373 = vpop.f32.mrf.mxu0
      %v3374 = vadd.f32 0.0, %v3373
      %3375 = vdwg.mxu0
      %v3376 = vadd.f32 %v3061, %v3297
      %v3377 = vadd.f32 %v3062, %v3299
      %v3378 = vadd.f32 %v3063, %v3302
      %v3379 = vadd.f32 %v3064, %v3304
      %v3380 = vadd.f32 %v3065, %v3307
      %v3381 = vadd.f32 %v3066, %v3309
      %v3382 = vadd.f32 %v3067, %v3312
      %v3383 = vadd.f32 %v3068, %v3314
      %v3384 = vadd.f32 %v3069, %v3317
      %v3385 = vadd.f32 %v3070, %v3319
      %v3386 = vadd.f32 %v3071, %v3322
      %v3387 = vadd.f32 %v3072, %v3324
      %v3388 = vadd.f32 %v3073, %v3327
      %v3389 = vadd.f32 %v3074, %v3329
      %v3390 = vadd.f32 %v3075, %v3332
      %v3391 = vadd.f32 %v3076, %v3334
      %v3392 = vadd.f32 %v3077, %v3337
      %v3393 = vadd.f32 %v3078, %v3339
      %v3394 = vadd.f32 %v3079, %v3342
      %v3395 = vadd.f32 %v3080, %v3344
      %v3396 = vadd.f32 %v3081, %v3347
      %v3397 = vadd.f32 %v3082, %v3349
      %v3398 = vadd.f32 %v3083, %v3352
      %v3399 = vadd.f32 %v3084, %v3354
      %v3400 = vadd.f32 %v3085, %v3357
      %v3401 = vadd.f32 %v3086, %v3359
      %v3402 = vadd.f32 %v3087, %v3362
      %v3403 = vadd.f32 %v3088, %v3364
      %v3404 = vadd.f32 %v3089, %v3367
      %v3405 = vadd.f32 %v3090, %v3369
      %v3406 = vadd.f32 %v3091, %v3372
      %v3407 = vadd.f32 %v3092, %v3374
      %s3408 = scalar_lea.vmem [#allocation2], 160
      %v3409 = vld [vmem:[%s3408] sm:$0xf]
      %v3410 = vld [vmem:[%s3408 + $0x4] sm:$0xf]
      %v3411 = vld [vmem:[%s3408 + $0x8] sm:$0xf]
      %v3412 = vld [vmem:[%s3408 + $0xc] sm:$0xf]
      %v3413 = vld [vmem:[%s3408 + $0x10] sm:$0xf]
      %v3414 = vld [vmem:[%s3408 + $0x14] sm:$0xf]
      %v3415 = vld [vmem:[%s3408 + $0x18] sm:$0xf]
      %v3416 = vld [vmem:[%s3408 + $0x1c] sm:$0xf]
      %v3417 = vld [vmem:[%s3408 + $0x20] sm:$0xf]
      %v3418 = vld [vmem:[%s3408 + $0x24] sm:$0xf]
      %v3419 = vld [vmem:[%s3408 + $0x28] sm:$0xf]
      %v3420 = vld [vmem:[%s3408 + $0x2c] sm:$0xf]
      %v3421 = vld [vmem:[%s3408 + $0x30] sm:$0xf]
      %v3422 = vld [vmem:[%s3408 + $0x34] sm:$0xf]
      %v3423 = vld [vmem:[%s3408 + $0x38] sm:$0xf]
      %v3424 = vld [vmem:[%s3408 + $0x3c] sm:$0xf]
      %v3425 = vld [vmem:[%s3408 + $0x40] sm:$0xf]
      %v3426 = vld [vmem:[%s3408 + $0x44] sm:$0xf]
      %v3427 = vld [vmem:[%s3408 + $0x48] sm:$0xf]
      %v3428 = vld [vmem:[%s3408 + $0x4c] sm:$0xf]
      %v3429 = vld [vmem:[%s3408 + $0x50] sm:$0xf]
      %v3430 = vld [vmem:[%s3408 + $0x54] sm:$0xf]
      %v3431 = vld [vmem:[%s3408 + $0x58] sm:$0xf]
      %v3432 = vld [vmem:[%s3408 + $0x5c] sm:$0xf]
      %v3433 = vld [vmem:[%s3408 + $0x60] sm:$0xf]
      %v3434 = vld [vmem:[%s3408 + $0x64] sm:$0xf]
      %v3435 = vld [vmem:[%s3408 + $0x68] sm:$0xf]
      %v3436 = vld [vmem:[%s3408 + $0x6c] sm:$0xf]
      %v3437 = vld [vmem:[%s3408 + $0x70] sm:$0xf]
      %v3438 = vld [vmem:[%s3408 + $0x74] sm:$0xf]
      %v3439 = vld [vmem:[%s3408 + $0x78] sm:$0xf]
      %v3440 = vld [vmem:[%s3408 + $0x7c] sm:$0xf]
      %s3441 = scalar_lea.vmem %s2, 448
      %v3442 = vld [vmem:[%s3441] sm:$0xf]
      %v3443 = vld [vmem:[%s3441 + $0x4] sm:$0xf]
      %v3444 = vld [vmem:[%s3441 + $0x8] sm:$0xf]
      %v3445 = vld [vmem:[%s3441 + $0xc] sm:$0xf]
      %v3446 = vld [vmem:[%s3441 + $0x10] sm:$0xf]
      %v3447 = vld [vmem:[%s3441 + $0x14] sm:$0xf]
      %v3448 = vld [vmem:[%s3441 + $0x18] sm:$0xf]
      %v3449 = vld [vmem:[%s3441 + $0x1c] sm:$0xf]
      %v3450 = vld [vmem:[%s3441 + $0x20] sm:$0xf]
      %v3451 = vld [vmem:[%s3441 + $0x24] sm:$0xf]
      %v3452 = vld [vmem:[%s3441 + $0x28] sm:$0xf]
      %v3453 = vld [vmem:[%s3441 + $0x2c] sm:$0xf]
      %v3454 = vld [vmem:[%s3441 + $0x30] sm:$0xf]
      %v3455 = vld [vmem:[%s3441 + $0x34] sm:$0xf]
      %v3456 = vld [vmem:[%s3441 + $0x38] sm:$0xf]
      %v3457 = vld [vmem:[%s3441 + $0x3c] sm:$0xf]
      %v3490 = vunpack.c.l.b16 %v3409
      %v3491 = vunpack.c.l.b16 %v3410
      %v3492 = vunpack.c.l.b16 %v3411
      %v3493 = vunpack.c.l.b16 %v3412
      %v3494 = vunpack.c.l.b16 %v3413
      %v3495 = vunpack.c.l.b16 %v3414
      %v3496 = vunpack.c.l.b16 %v3415
      %v3497 = vunpack.c.l.b16 %v3416
      %v3498 = vunpack.c.l.b16 %v3417
      %v3499 = vunpack.c.l.b16 %v3418
      %v3500 = vunpack.c.l.b16 %v3419
      %v3501 = vunpack.c.l.b16 %v3420
      %v3502 = vunpack.c.l.b16 %v3421
      %v3503 = vunpack.c.l.b16 %v3422
      %v3504 = vunpack.c.l.b16 %v3423
      %v3505 = vunpack.c.l.b16 %v3424
      %v3506 = vunpack.c.l.b16 %v3425
      %v3507 = vunpack.c.l.b16 %v3426
      %v3508 = vunpack.c.l.b16 %v3427
      %v3509 = vunpack.c.l.b16 %v3428
      %v3510 = vunpack.c.l.b16 %v3429
      %v3511 = vunpack.c.l.b16 %v3430
      %v3512 = vunpack.c.l.b16 %v3431
      %v3513 = vunpack.c.l.b16 %v3432
      %v3514 = vunpack.c.l.b16 %v3433
      %v3515 = vunpack.c.l.b16 %v3434
      %v3516 = vunpack.c.l.b16 %v3435
      %v3517 = vunpack.c.l.b16 %v3436
      %v3518 = vunpack.c.l.b16 %v3437
      %v3519 = vunpack.c.l.b16 %v3438
      %v3520 = vunpack.c.l.b16 %v3439
      %v3521 = vunpack.c.l.b16 %v3440
      %v3522 = vpack.c.b16 %v3491, %v3490
      %v3523 = vpack.c.b16 %v3493, %v3492
      %v3524 = vpack.c.b16 %v3495, %v3494
      %v3525 = vpack.c.b16 %v3497, %v3496
      %v3526 = vpack.c.b16 %v3499, %v3498
      %v3527 = vpack.c.b16 %v3501, %v3500
      %v3528 = vpack.c.b16 %v3503, %v3502
      %v3529 = vpack.c.b16 %v3505, %v3504
      %v3530 = vpack.c.b16 %v3507, %v3506
      %v3531 = vpack.c.b16 %v3509, %v3508
      %v3532 = vpack.c.b16 %v3511, %v3510
      %v3533 = vpack.c.b16 %v3513, %v3512
      %v3534 = vpack.c.b16 %v3515, %v3514
      %v3535 = vpack.c.b16 %v3517, %v3516
      %v3536 = vpack.c.b16 %v3519, %v3518
      %v3537 = vpack.c.b16 %v3521, %v3520
      %v3570 = vunpack.c.l.b16 %v3442
      %v3571 = vunpack.c.l.b16 %v3443
      %v3572 = vunpack.c.l.b16 %v3444
      %v3573 = vunpack.c.l.b16 %v3445
      %v3574 = vunpack.c.l.b16 %v3446
      %v3575 = vunpack.c.l.b16 %v3447
      %v3576 = vunpack.c.l.b16 %v3448
      %v3577 = vunpack.c.l.b16 %v3449
      %v3578 = vunpack.c.l.b16 %v3450
      %v3579 = vunpack.c.l.b16 %v3451
      %v3580 = vunpack.c.l.b16 %v3452
      %v3581 = vunpack.c.l.b16 %v3453
      %v3582 = vunpack.c.l.b16 %v3454
      %v3583 = vunpack.c.l.b16 %v3455
      %v3584 = vunpack.c.l.b16 %v3456
      %v3585 = vunpack.c.l.b16 %v3457
      %v3586 = vpack.c.b16 %v3571, %v3570
      %v3587 = vpack.c.b16 %v3573, %v3572
      %v3588 = vpack.c.b16 %v3575, %v3574
      %v3589 = vpack.c.b16 %v3577, %v3576
      %v3590 = vpack.c.b16 %v3579, %v3578
      %v3591 = vpack.c.b16 %v3581, %v3580
      %v3592 = vpack.c.b16 %v3583, %v3582
      %v3593 = vpack.c.b16 %v3585, %v3584
      %3602 = vmatpush.bf16.msra.mxu0 %v3593
      %3603 = vmatpush.bf16.msra.mxu0 %v3592
      %3604 = vmatpush.bf16.msra.mxu0 %v3591
      %3605 = vmatpush.bf16.msra.mxu0 %v3590
      %3606 = vmatpush.bf16.msra.mxu0 %v3589
      %3607 = vmatpush.bf16.msra.mxu0 %v3588
      %3608 = vmatpush.bf16.msra.mxu0 %v3587
      %3609 = vmatpush.bf16.msra.mxu0 %v3586
      %3610 = vmatmul.bf16.gmra.mxu0 %v3522
      %v3611 = vpop.f32.mrf.mxu0
      %v3612 = vadd.f32 0.0, %v3611
      %v3613 = vpop.f32.mrf.mxu0
      %v3614 = vadd.f32 0.0, %v3613
      %3615 = vmatmul.bf16.gmra.mxu0 %v3523
      %v3616 = vpop.f32.mrf.mxu0
      %v3617 = vadd.f32 0.0, %v3616
      %v3618 = vpop.f32.mrf.mxu0
      %v3619 = vadd.f32 0.0, %v3618
      %3620 = vmatmul.bf16.gmra.mxu0 %v3524
      %v3621 = vpop.f32.mrf.mxu0
      %v3622 = vadd.f32 0.0, %v3621
      %v3623 = vpop.f32.mrf.mxu0
      %v3624 = vadd.f32 0.0, %v3623
      %3625 = vmatmul.bf16.gmra.mxu0 %v3525
      %v3626 = vpop.f32.mrf.mxu0
      %v3627 = vadd.f32 0.0, %v3626
      %v3628 = vpop.f32.mrf.mxu0
      %v3629 = vadd.f32 0.0, %v3628
      %3630 = vmatmul.bf16.gmra.mxu0 %v3526
      %v3631 = vpop.f32.mrf.mxu0
      %v3632 = vadd.f32 0.0, %v3631
      %v3633 = vpop.f32.mrf.mxu0
      %v3634 = vadd.f32 0.0, %v3633
      %3635 = vmatmul.bf16.gmra.mxu0 %v3527
      %v3636 = vpop.f32.mrf.mxu0
      %v3637 = vadd.f32 0.0, %v3636
      %v3638 = vpop.f32.mrf.mxu0
      %v3639 = vadd.f32 0.0, %v3638
      %3640 = vmatmul.bf16.gmra.mxu0 %v3528
      %v3641 = vpop.f32.mrf.mxu0
      %v3642 = vadd.f32 0.0, %v3641
      %v3643 = vpop.f32.mrf.mxu0
      %v3644 = vadd.f32 0.0, %v3643
      %3645 = vmatmul.bf16.gmra.mxu0 %v3529
      %v3646 = vpop.f32.mrf.mxu0
      %v3647 = vadd.f32 0.0, %v3646
      %v3648 = vpop.f32.mrf.mxu0
      %v3649 = vadd.f32 0.0, %v3648
      %3650 = vmatmul.bf16.gmra.mxu0 %v3530
      %v3651 = vpop.f32.mrf.mxu0
      %v3652 = vadd.f32 0.0, %v3651
      %v3653 = vpop.f32.mrf.mxu0
      %v3654 = vadd.f32 0.0, %v3653
      %3655 = vmatmul.bf16.gmra.mxu0 %v3531
      %v3656 = vpop.f32.mrf.mxu0
      %v3657 = vadd.f32 0.0, %v3656
      %v3658 = vpop.f32.mrf.mxu0
      %v3659 = vadd.f32 0.0, %v3658
      %3660 = vmatmul.bf16.gmra.mxu0 %v3532
      %v3661 = vpop.f32.mrf.mxu0
      %v3662 = vadd.f32 0.0, %v3661
      %v3663 = vpop.f32.mrf.mxu0
      %v3664 = vadd.f32 0.0, %v3663
      %3665 = vmatmul.bf16.gmra.mxu0 %v3533
      %v3666 = vpop.f32.mrf.mxu0
      %v3667 = vadd.f32 0.0, %v3666
      %v3668 = vpop.f32.mrf.mxu0
      %v3669 = vadd.f32 0.0, %v3668
      %3670 = vmatmul.bf16.gmra.mxu0 %v3534
      %v3671 = vpop.f32.mrf.mxu0
      %v3672 = vadd.f32 0.0, %v3671
      %v3673 = vpop.f32.mrf.mxu0
      %v3674 = vadd.f32 0.0, %v3673
      %3675 = vmatmul.bf16.gmra.mxu0 %v3535
      %v3676 = vpop.f32.mrf.mxu0
      %v3677 = vadd.f32 0.0, %v3676
      %v3678 = vpop.f32.mrf.mxu0
      %v3679 = vadd.f32 0.0, %v3678
      %3680 = vmatmul.bf16.gmra.mxu0 %v3536
      %v3681 = vpop.f32.mrf.mxu0
      %v3682 = vadd.f32 0.0, %v3681
      %v3683 = vpop.f32.mrf.mxu0
      %v3684 = vadd.f32 0.0, %v3683
      %3685 = vmatmul.bf16.gmra.mxu0 %v3537
      %v3686 = vpop.f32.mrf.mxu0
      %v3687 = vadd.f32 0.0, %v3686
      %v3688 = vpop.f32.mrf.mxu0
      %v3689 = vadd.f32 0.0, %v3688
      %3690 = vdwg.mxu0
      %v3691 = vadd.f32 %v3376, %v3612
      %v3692 = vadd.f32 %v3377, %v3614
      %v3693 = vadd.f32 %v3378, %v3617
      %v3694 = vadd.f32 %v3379, %v3619
      %v3695 = vadd.f32 %v3380, %v3622
      %v3696 = vadd.f32 %v3381, %v3624
      %v3697 = vadd.f32 %v3382, %v3627
      %v3698 = vadd.f32 %v3383, %v3629
      %v3699 = vadd.f32 %v3384, %v3632
      %v3700 = vadd.f32 %v3385, %v3634
      %v3701 = vadd.f32 %v3386, %v3637
      %v3702 = vadd.f32 %v3387, %v3639
      %v3703 = vadd.f32 %v3388, %v3642
      %v3704 = vadd.f32 %v3389, %v3644
      %v3705 = vadd.f32 %v3390, %v3647
      %v3706 = vadd.f32 %v3391, %v3649
      %v3707 = vadd.f32 %v3392, %v3652
      %v3708 = vadd.f32 %v3393, %v3654
      %v3709 = vadd.f32 %v3394, %v3657
      %v3710 = vadd.f32 %v3395, %v3659
      %v3711 = vadd.f32 %v3396, %v3662
      %v3712 = vadd.f32 %v3397, %v3664
      %v3713 = vadd.f32 %v3398, %v3667
      %v3714 = vadd.f32 %v3399, %v3669
      %v3715 = vadd.f32 %v3400, %v3672
      %v3716 = vadd.f32 %v3401, %v3674
      %v3717 = vadd.f32 %v3402, %v3677
      %v3718 = vadd.f32 %v3403, %v3679
      %v3719 = vadd.f32 %v3404, %v3682
      %v3720 = vadd.f32 %v3405, %v3684
      %v3721 = vadd.f32 %v3406, %v3687
      %v3722 = vadd.f32 %v3407, %v3689
      %s3723 = scalar_lea.vmem [#allocation2], 304
      %v3724 = vld [vmem:[%s3723] sm:$0xf]
      %v3725 = vld [vmem:[%s3723 + $0x4] sm:$0xf]
      %v3726 = vld [vmem:[%s3723 + $0x8] sm:$0xf]
      %v3727 = vld [vmem:[%s3723 + $0xc] sm:$0xf]
      %v3728 = vld [vmem:[%s3723 + $0x10] sm:$0xf]
      %v3729 = vld [vmem:[%s3723 + $0x14] sm:$0xf]
      %v3730 = vld [vmem:[%s3723 + $0x18] sm:$0xf]
      %v3731 = vld [vmem:[%s3723 + $0x1c] sm:$0xf]
      %v3732 = vld [vmem:[%s3723 + $0x20] sm:$0xf]
      %v3733 = vld [vmem:[%s3723 + $0x24] sm:$0xf]
      %v3734 = vld [vmem:[%s3723 + $0x28] sm:$0xf]
      %v3735 = vld [vmem:[%s3723 + $0x2c] sm:$0xf]
      %v3736 = vld [vmem:[%s3723 + $0x30] sm:$0xf]
      %v3737 = vld [vmem:[%s3723 + $0x34] sm:$0xf]
      %v3738 = vld [vmem:[%s3723 + $0x38] sm:$0xf]
      %v3739 = vld [vmem:[%s3723 + $0x3c] sm:$0xf]
      %v3740 = vld [vmem:[%s3723 + $0x40] sm:$0xf]
      %v3741 = vld [vmem:[%s3723 + $0x44] sm:$0xf]
      %v3742 = vld [vmem:[%s3723 + $0x48] sm:$0xf]
      %v3743 = vld [vmem:[%s3723 + $0x4c] sm:$0xf]
      %v3744 = vld [vmem:[%s3723 + $0x50] sm:$0xf]
      %v3745 = vld [vmem:[%s3723 + $0x54] sm:$0xf]
      %v3746 = vld [vmem:[%s3723 + $0x58] sm:$0xf]
      %v3747 = vld [vmem:[%s3723 + $0x5c] sm:$0xf]
      %v3748 = vld [vmem:[%s3723 + $0x60] sm:$0xf]
      %v3749 = vld [vmem:[%s3723 + $0x64] sm:$0xf]
      %v3750 = vld [vmem:[%s3723 + $0x68] sm:$0xf]
      %v3751 = vld [vmem:[%s3723 + $0x6c] sm:$0xf]
      %v3752 = vld [vmem:[%s3723 + $0x70] sm:$0xf]
      %v3753 = vld [vmem:[%s3723 + $0x74] sm:$0xf]
      %v3754 = vld [vmem:[%s3723 + $0x78] sm:$0xf]
      %v3755 = vld [vmem:[%s3723 + $0x7c] sm:$0xf]
      %s3756 = scalar_lea.vmem %s2, 512
      %v3757 = vld [vmem:[%s3756] sm:$0xf]
      %v3758 = vld [vmem:[%s3756 + $0x4] sm:$0xf]
      %v3759 = vld [vmem:[%s3756 + $0x8] sm:$0xf]
      %v3760 = vld [vmem:[%s3756 + $0xc] sm:$0xf]
      %v3761 = vld [vmem:[%s3756 + $0x10] sm:$0xf]
      %v3762 = vld [vmem:[%s3756 + $0x14] sm:$0xf]
      %v3763 = vld [vmem:[%s3756 + $0x18] sm:$0xf]
      %v3764 = vld [vmem:[%s3756 + $0x1c] sm:$0xf]
      %v3765 = vld [vmem:[%s3756 + $0x20] sm:$0xf]
      %v3766 = vld [vmem:[%s3756 + $0x24] sm:$0xf]
      %v3767 = vld [vmem:[%s3756 + $0x28] sm:$0xf]
      %v3768 = vld [vmem:[%s3756 + $0x2c] sm:$0xf]
      %v3769 = vld [vmem:[%s3756 + $0x30] sm:$0xf]
      %v3770 = vld [vmem:[%s3756 + $0x34] sm:$0xf]
      %v3771 = vld [vmem:[%s3756 + $0x38] sm:$0xf]
      %v3772 = vld [vmem:[%s3756 + $0x3c] sm:$0xf]
      %v3805 = vunpack.c.l.b16 %v3724
      %v3806 = vunpack.c.l.b16 %v3725
      %v3807 = vunpack.c.l.b16 %v3726
      %v3808 = vunpack.c.l.b16 %v3727
      %v3809 = vunpack.c.l.b16 %v3728
      %v3810 = vunpack.c.l.b16 %v3729
      %v3811 = vunpack.c.l.b16 %v3730
      %v3812 = vunpack.c.l.b16 %v3731
      %v3813 = vunpack.c.l.b16 %v3732
      %v3814 = vunpack.c.l.b16 %v3733
      %v3815 = vunpack.c.l.b16 %v3734
      %v3816 = vunpack.c.l.b16 %v3735
      %v3817 = vunpack.c.l.b16 %v3736
      %v3818 = vunpack.c.l.b16 %v3737
      %v3819 = vunpack.c.l.b16 %v3738
      %v3820 = vunpack.c.l.b16 %v3739
      %v3821 = vunpack.c.l.b16 %v3740
      %v3822 = vunpack.c.l.b16 %v3741
      %v3823 = vunpack.c.l.b16 %v3742
      %v3824 = vunpack.c.l.b16 %v3743
      %v3825 = vunpack.c.l.b16 %v3744
      %v3826 = vunpack.c.l.b16 %v3745
      %v3827 = vunpack.c.l.b16 %v3746
      %v3828 = vunpack.c.l.b16 %v3747
      %v3829 = vunpack.c.l.b16 %v3748
      %v3830 = vunpack.c.l.b16 %v3749
      %v3831 = vunpack.c.l.b16 %v3750
      %v3832 = vunpack.c.l.b16 %v3751
      %v3833 = vunpack.c.l.b16 %v3752
      %v3834 = vunpack.c.l.b16 %v3753
      %v3835 = vunpack.c.l.b16 %v3754
      %v3836 = vunpack.c.l.b16 %v3755
      %v3837 = vpack.c.b16 %v3806, %v3805
      %v3838 = vpack.c.b16 %v3808, %v3807
      %v3839 = vpack.c.b16 %v3810, %v3809
      %v3840 = vpack.c.b16 %v3812, %v3811
      %v3841 = vpack.c.b16 %v3814, %v3813
      %v3842 = vpack.c.b16 %v3816, %v3815
      %v3843 = vpack.c.b16 %v3818, %v3817
      %v3844 = vpack.c.b16 %v3820, %v3819
      %v3845 = vpack.c.b16 %v3822, %v3821
      %v3846 = vpack.c.b16 %v3824, %v3823
      %v3847 = vpack.c.b16 %v3826, %v3825
      %v3848 = vpack.c.b16 %v3828, %v3827
      %v3849 = vpack.c.b16 %v3830, %v3829
      %v3850 = vpack.c.b16 %v3832, %v3831
      %v3851 = vpack.c.b16 %v3834, %v3833
      %v3852 = vpack.c.b16 %v3836, %v3835
      %v3885 = vunpack.c.l.b16 %v3757
      %v3886 = vunpack.c.l.b16 %v3758
      %v3887 = vunpack.c.l.b16 %v3759
      %v3888 = vunpack.c.l.b16 %v3760
      %v3889 = vunpack.c.l.b16 %v3761
      %v3890 = vunpack.c.l.b16 %v3762
      %v3891 = vunpack.c.l.b16 %v3763
      %v3892 = vunpack.c.l.b16 %v3764
      %v3893 = vunpack.c.l.b16 %v3765
      %v3894 = vunpack.c.l.b16 %v3766
      %v3895 = vunpack.c.l.b16 %v3767
      %v3896 = vunpack.c.l.b16 %v3768
      %v3897 = vunpack.c.l.b16 %v3769
      %v3898 = vunpack.c.l.b16 %v3770
      %v3899 = vunpack.c.l.b16 %v3771
      %v3900 = vunpack.c.l.b16 %v3772
      %v3901 = vpack.c.b16 %v3886, %v3885
      %v3902 = vpack.c.b16 %v3888, %v3887
      %v3903 = vpack.c.b16 %v3890, %v3889
      %v3904 = vpack.c.b16 %v3892, %v3891
      %v3905 = vpack.c.b16 %v3894, %v3893
      %v3906 = vpack.c.b16 %v3896, %v3895
      %v3907 = vpack.c.b16 %v3898, %v3897
      %v3908 = vpack.c.b16 %v3900, %v3899
      %3917 = vmatpush.bf16.msra.mxu0 %v3908
      %3918 = vmatpush.bf16.msra.mxu0 %v3907
      %3919 = vmatpush.bf16.msra.mxu0 %v3906
      %3920 = vmatpush.bf16.msra.mxu0 %v3905
      %3921 = vmatpush.bf16.msra.mxu0 %v3904
      %3922 = vmatpush.bf16.msra.mxu0 %v3903
      %3923 = vmatpush.bf16.msra.mxu0 %v3902
      %3924 = vmatpush.bf16.msra.mxu0 %v3901
      %3925 = vmatmul.bf16.gmra.mxu0 %v3837
      %v3926 = vpop.f32.mrf.mxu0
      %v3927 = vadd.f32 0.0, %v3926
      %v3928 = vpop.f32.mrf.mxu0
      %v3929 = vadd.f32 0.0, %v3928
      %3930 = vmatmul.bf16.gmra.mxu0 %v3838
      %v3931 = vpop.f32.mrf.mxu0
      %v3932 = vadd.f32 0.0, %v3931
      %v3933 = vpop.f32.mrf.mxu0
      %v3934 = vadd.f32 0.0, %v3933
      %3935 = vmatmul.bf16.gmra.mxu0 %v3839
      %v3936 = vpop.f32.mrf.mxu0
      %v3937 = vadd.f32 0.0, %v3936
      %v3938 = vpop.f32.mrf.mxu0
      %v3939 = vadd.f32 0.0, %v3938
      %3940 = vmatmul.bf16.gmra.mxu0 %v3840
      %v3941 = vpop.f32.mrf.mxu0
      %v3942 = vadd.f32 0.0, %v3941
      %v3943 = vpop.f32.mrf.mxu0
      %v3944 = vadd.f32 0.0, %v3943
      %3945 = vmatmul.bf16.gmra.mxu0 %v3841
      %v3946 = vpop.f32.mrf.mxu0
      %v3947 = vadd.f32 0.0, %v3946
      %v3948 = vpop.f32.mrf.mxu0
      %v3949 = vadd.f32 0.0, %v3948
      %3950 = vmatmul.bf16.gmra.mxu0 %v3842
      %v3951 = vpop.f32.mrf.mxu0
      %v3952 = vadd.f32 0.0, %v3951
      %v3953 = vpop.f32.mrf.mxu0
      %v3954 = vadd.f32 0.0, %v3953
      %3955 = vmatmul.bf16.gmra.mxu0 %v3843
      %v3956 = vpop.f32.mrf.mxu0
      %v3957 = vadd.f32 0.0, %v3956
      %v3958 = vpop.f32.mrf.mxu0
      %v3959 = vadd.f32 0.0, %v3958
      %3960 = vmatmul.bf16.gmra.mxu0 %v3844
      %v3961 = vpop.f32.mrf.mxu0
      %v3962 = vadd.f32 0.0, %v3961
      %v3963 = vpop.f32.mrf.mxu0
      %v3964 = vadd.f32 0.0, %v3963
      %3965 = vmatmul.bf16.gmra.mxu0 %v3845
      %v3966 = vpop.f32.mrf.mxu0
      %v3967 = vadd.f32 0.0, %v3966
      %v3968 = vpop.f32.mrf.mxu0
      %v3969 = vadd.f32 0.0, %v3968
      %3970 = vmatmul.bf16.gmra.mxu0 %v3846
      %v3971 = vpop.f32.mrf.mxu0
      %v3972 = vadd.f32 0.0, %v3971
      %v3973 = vpop.f32.mrf.mxu0
      %v3974 = vadd.f32 0.0, %v3973
      %3975 = vmatmul.bf16.gmra.mxu0 %v3847
      %v3976 = vpop.f32.mrf.mxu0
      %v3977 = vadd.f32 0.0, %v3976
      %v3978 = vpop.f32.mrf.mxu0
      %v3979 = vadd.f32 0.0, %v3978
      %3980 = vmatmul.bf16.gmra.mxu0 %v3848
      %v3981 = vpop.f32.mrf.mxu0
      %v3982 = vadd.f32 0.0, %v3981
      %v3983 = vpop.f32.mrf.mxu0
      %v3984 = vadd.f32 0.0, %v3983
      %3985 = vmatmul.bf16.gmra.mxu0 %v3849
      %v3986 = vpop.f32.mrf.mxu0
      %v3987 = vadd.f32 0.0, %v3986
      %v3988 = vpop.f32.mrf.mxu0
      %v3989 = vadd.f32 0.0, %v3988
      %3990 = vmatmul.bf16.gmra.mxu0 %v3850
      %v3991 = vpop.f32.mrf.mxu0
      %v3992 = vadd.f32 0.0, %v3991
      %v3993 = vpop.f32.mrf.mxu0
      %v3994 = vadd.f32 0.0, %v3993
      %3995 = vmatmul.bf16.gmra.mxu0 %v3851
      %v3996 = vpop.f32.mrf.mxu0
      %v3997 = vadd.f32 0.0, %v3996
      %v3998 = vpop.f32.mrf.mxu0
      %v3999 = vadd.f32 0.0, %v3998
      %4000 = vmatmul.bf16.gmra.mxu0 %v3852
      %v4001 = vpop.f32.mrf.mxu0
      %v4002 = vadd.f32 0.0, %v4001
      %v4003 = vpop.f32.mrf.mxu0
      %v4004 = vadd.f32 0.0, %v4003
      %4005 = vdwg.mxu0
      %v4006 = vadd.f32 %v3691, %v3927
      %v4007 = vadd.f32 %v3692, %v3929
      %v4008 = vadd.f32 %v3693, %v3932
      %v4009 = vadd.f32 %v3694, %v3934
      %v4010 = vadd.f32 %v3695, %v3937
      %v4011 = vadd.f32 %v3696, %v3939
      %v4012 = vadd.f32 %v3697, %v3942
      %v4013 = vadd.f32 %v3698, %v3944
      %v4014 = vadd.f32 %v3699, %v3947
      %v4015 = vadd.f32 %v3700, %v3949
      %v4016 = vadd.f32 %v3701, %v3952
      %v4017 = vadd.f32 %v3702, %v3954
      %v4018 = vadd.f32 %v3703, %v3957
      %v4019 = vadd.f32 %v3704, %v3959
      %v4020 = vadd.f32 %v3705, %v3962
      %v4021 = vadd.f32 %v3706, %v3964
      %v4022 = vadd.f32 %v3707, %v3967
      %v4023 = vadd.f32 %v3708, %v3969
      %v4024 = vadd.f32 %v3709, %v3972
      %v4025 = vadd.f32 %v3710, %v3974
      %v4026 = vadd.f32 %v3711, %v3977
      %v4027 = vadd.f32 %v3712, %v3979
      %v4028 = vadd.f32 %v3713, %v3982
      %v4029 = vadd.f32 %v3714, %v3984
      %v4030 = vadd.f32 %v3715, %v3987
      %v4031 = vadd.f32 %v3716, %v3989
      %v4032 = vadd.f32 %v3717, %v3992
      %v4033 = vadd.f32 %v3718, %v3994
      %v4034 = vadd.f32 %v3719, %v3997
      %v4035 = vadd.f32 %v3720, %v3999
      %v4036 = vadd.f32 %v3721, %v4002
      %v4037 = vadd.f32 %v3722, %v4004
      %v4038 = vld [vmem:[%s3] sm:$0x1]
      %v4040 = vperm.slane %v4038, 0
      %v4042 = vmul.f32 %v4006, %v4040
      %v4043 = vmul.f32 %v4007, %v4040
      %v4044 = vmul.f32 %v4008, %v4040
      %v4045 = vmul.f32 %v4009, %v4040
      %v4046 = vmul.f32 %v4010, %v4040
      %v4047 = vmul.f32 %v4011, %v4040
      %v4048 = vmul.f32 %v4012, %v4040
      %v4049 = vmul.f32 %v4013, %v4040
      %v4050 = vmul.f32 %v4014, %v4040
      %v4051 = vmul.f32 %v4015, %v4040
      %v4052 = vmul.f32 %v4016, %v4040
      %v4053 = vmul.f32 %v4017, %v4040
      %v4054 = vmul.f32 %v4018, %v4040
      %v4055 = vmul.f32 %v4019, %v4040
      %v4056 = vmul.f32 %v4020, %v4040
      %v4057 = vmul.f32 %v4021, %v4040
      %v4058 = vmul.f32 %v4022, %v4040
      %v4059 = vmul.f32 %v4023, %v4040
      %v4060 = vmul.f32 %v4024, %v4040
      %v4061 = vmul.f32 %v4025, %v4040
      %v4062 = vmul.f32 %v4026, %v4040
      %v4063 = vmul.f32 %v4027, %v4040
      %v4064 = vmul.f32 %v4028, %v4040
      %v4065 = vmul.f32 %v4029, %v4040
      %v4066 = vmul.f32 %v4030, %v4040
      %v4067 = vmul.f32 %v4031, %v4040
      %v4068 = vmul.f32 %v4032, %v4040
      %v4069 = vmul.f32 %v4033, %v4040
      %v4070 = vmul.f32 %v4034, %v4040
      %v4071 = vmul.f32 %v4035, %v4040
      %v4072 = vmul.f32 %v4036, %v4040
      %v4073 = vmul.f32 %v4037, %v4040
      %v4074 = vld [vmem:[%s4] sm:$0x1]
      %v4076 = vperm.slane %v4074, 0
      %v4078 = vadd.f32 %v4042, %v4076
      %v4079 = vadd.f32 %v4043, %v4076
      %v4080 = vadd.f32 %v4044, %v4076
      %v4081 = vadd.f32 %v4045, %v4076
      %v4082 = vadd.f32 %v4046, %v4076
      %v4083 = vadd.f32 %v4047, %v4076
      %v4084 = vadd.f32 %v4048, %v4076
      %v4085 = vadd.f32 %v4049, %v4076
      %v4086 = vadd.f32 %v4050, %v4076
      %v4087 = vadd.f32 %v4051, %v4076
      %v4088 = vadd.f32 %v4052, %v4076
      %v4089 = vadd.f32 %v4053, %v4076
      %v4090 = vadd.f32 %v4054, %v4076
      %v4091 = vadd.f32 %v4055, %v4076
      %v4092 = vadd.f32 %v4056, %v4076
      %v4093 = vadd.f32 %v4057, %v4076
      %v4094 = vadd.f32 %v4058, %v4076
      %v4095 = vadd.f32 %v4059, %v4076
      %v4096 = vadd.f32 %v4060, %v4076
      %v4097 = vadd.f32 %v4061, %v4076
      %v4098 = vadd.f32 %v4062, %v4076
      %v4099 = vadd.f32 %v4063, %v4076
      %v4100 = vadd.f32 %v4064, %v4076
      %v4101 = vadd.f32 %v4065, %v4076
      %v4102 = vadd.f32 %v4066, %v4076
      %v4103 = vadd.f32 %v4067, %v4076
      %v4104 = vadd.f32 %v4068, %v4076
      %v4105 = vadd.f32 %v4069, %v4076
      %v4106 = vadd.f32 %v4070, %v4076
      %v4107 = vadd.f32 %v4071, %v4076
      %v4108 = vadd.f32 %v4072, %v4076
      %v4109 = vadd.f32 %v4073, %v4076
      %v4110 = vmax.f32 %v4078, 0.0
      %v4111 = vmax.f32 %v4079, 0.0
      %v4112 = vmax.f32 %v4080, 0.0
      %v4113 = vmax.f32 %v4081, 0.0
      %v4114 = vmax.f32 %v4082, 0.0
      %v4115 = vmax.f32 %v4083, 0.0
      %v4116 = vmax.f32 %v4084, 0.0
      %v4117 = vmax.f32 %v4085, 0.0
      %v4118 = vmax.f32 %v4086, 0.0
      %v4119 = vmax.f32 %v4087, 0.0
      %v4120 = vmax.f32 %v4088, 0.0
      %v4121 = vmax.f32 %v4089, 0.0
      %v4122 = vmax.f32 %v4090, 0.0
      %v4123 = vmax.f32 %v4091, 0.0
      %v4124 = vmax.f32 %v4092, 0.0
      %v4125 = vmax.f32 %v4093, 0.0
      %v4126 = vmax.f32 %v4094, 0.0
      %v4127 = vmax.f32 %v4095, 0.0
      %v4128 = vmax.f32 %v4096, 0.0
      %v4129 = vmax.f32 %v4097, 0.0
      %v4130 = vmax.f32 %v4098, 0.0
      %v4131 = vmax.f32 %v4099, 0.0
      %v4132 = vmax.f32 %v4100, 0.0
      %v4133 = vmax.f32 %v4101, 0.0
      %v4134 = vmax.f32 %v4102, 0.0
      %v4135 = vmax.f32 %v4103, 0.0
      %v4136 = vmax.f32 %v4104, 0.0
      %v4137 = vmax.f32 %v4105, 0.0
      %v4138 = vmax.f32 %v4106, 0.0
      %v4139 = vmax.f32 %v4107, 0.0
      %v4140 = vmax.f32 %v4108, 0.0
      %v4141 = vmax.f32 %v4109, 0.0
      %v4142 = vpack.c.bf16 %v4110, %v4110
      %v4143 = vpack.c.bf16 %v4111, %v4111
      %v4144 = vpack.c.bf16 %v4112, %v4112
      %v4145 = vpack.c.bf16 %v4113, %v4113
      %v4146 = vpack.c.bf16 %v4114, %v4114
      %v4147 = vpack.c.bf16 %v4115, %v4115
      %v4148 = vpack.c.bf16 %v4116, %v4116
      %v4149 = vpack.c.bf16 %v4117, %v4117
      %v4150 = vpack.c.bf16 %v4118, %v4118
      %v4151 = vpack.c.bf16 %v4119, %v4119
      %v4152 = vpack.c.bf16 %v4120, %v4120
      %v4153 = vpack.c.bf16 %v4121, %v4121
      %v4154 = vpack.c.bf16 %v4122, %v4122
      %v4155 = vpack.c.bf16 %v4123, %v4123
      %v4156 = vpack.c.bf16 %v4124, %v4124
      %v4157 = vpack.c.bf16 %v4125, %v4125
      %v4158 = vpack.c.bf16 %v4126, %v4126
      %v4159 = vpack.c.bf16 %v4127, %v4127
      %v4160 = vpack.c.bf16 %v4128, %v4128
      %v4161 = vpack.c.bf16 %v4129, %v4129
      %v4162 = vpack.c.bf16 %v4130, %v4130
      %v4163 = vpack.c.bf16 %v4131, %v4131
      %v4164 = vpack.c.bf16 %v4132, %v4132
      %v4165 = vpack.c.bf16 %v4133, %v4133
      %v4166 = vpack.c.bf16 %v4134, %v4134
      %v4167 = vpack.c.bf16 %v4135, %v4135
      %v4168 = vpack.c.bf16 %v4136, %v4136
      %v4169 = vpack.c.bf16 %v4137, %v4137
      %v4170 = vpack.c.bf16 %v4138, %v4138
      %v4171 = vpack.c.bf16 %v4139, %v4139
      %v4172 = vpack.c.bf16 %v4140, %v4140
      %v4173 = vpack.c.bf16 %v4141, %v4141
      %4174 = vst [vmem:[#allocation2] sm:$0xf] 0
      %4175 = vst [vmem:[#allocation2 + $0x4] sm:$0xf] 0
      %4176 = vst [vmem:[#allocation2 + $0x90] sm:$0xf] 0
      %4177 = vst [vmem:[#allocation2 + $0x94] sm:$0xf] 0
      %4178 = vst [vmem:[#allocation2 + $0x120] sm:$0xf] 0
      %4179 = vst [vmem:[#allocation2 + $0x124] sm:$0xf] 0
      %s4180 = scalar_lea.vmem [#allocation2], 136
      %4181 = vst [vmem:[%s4180] sm:$0xf] 0
      %4182 = vst [vmem:[%s4180 + $0x4] sm:$0xf] 0
      %4183 = vst [vmem:[%s4180 + $0x90] sm:$0xf] 0
      %4184 = vst [vmem:[%s4180 + $0x94] sm:$0xf] 0
      %4185 = vst [vmem:[%s4180 + $0x120] sm:$0xf] 0
      %4186 = vst [vmem:[%s4180 + $0x124] sm:$0xf] 0
      %4187 = vst [vmem:[%s2463] sm:$0xf] %v4142
      %4188 = vst [vmem:[%s2463 + $0x4] sm:$0xf] %v4143
      %4189 = vst [vmem:[%s2463 + $0x8] sm:$0xf] %v4144
      %4190 = vst [vmem:[%s2463 + $0xc] sm:$0xf] %v4145
      %4191 = vst [vmem:[%s2463 + $0x10] sm:$0xf] %v4146
      %4192 = vst [vmem:[%s2463 + $0x14] sm:$0xf] %v4147
      %4193 = vst [vmem:[%s2463 + $0x18] sm:$0xf] %v4148
      %4194 = vst [vmem:[%s2463 + $0x1c] sm:$0xf] %v4149
      %4195 = vst [vmem:[%s2463 + $0x20] sm:$0xf] %v4150
      %4196 = vst [vmem:[%s2463 + $0x24] sm:$0xf] %v4151
      %4197 = vst [vmem:[%s2463 + $0x28] sm:$0xf] %v4152
      %4198 = vst [vmem:[%s2463 + $0x2c] sm:$0xf] %v4153
      %4199 = vst [vmem:[%s2463 + $0x30] sm:$0xf] %v4154
      %4200 = vst [vmem:[%s2463 + $0x34] sm:$0xf] %v4155
      %4201 = vst [vmem:[%s2463 + $0x38] sm:$0xf] %v4156
      %4202 = vst [vmem:[%s2463 + $0x3c] sm:$0xf] %v4157
      %4203 = vst [vmem:[%s2463 + $0x40] sm:$0xf] %v4158
      %4204 = vst [vmem:[%s2463 + $0x44] sm:$0xf] %v4159
      %4205 = vst [vmem:[%s2463 + $0x48] sm:$0xf] %v4160
      %4206 = vst [vmem:[%s2463 + $0x4c] sm:$0xf] %v4161
      %4207 = vst [vmem:[%s2463 + $0x50] sm:$0xf] %v4162
      %4208 = vst [vmem:[%s2463 + $0x54] sm:$0xf] %v4163
      %4209 = vst [vmem:[%s2463 + $0x58] sm:$0xf] %v4164
      %4210 = vst [vmem:[%s2463 + $0x5c] sm:$0xf] %v4165
      %4211 = vst [vmem:[%s2463 + $0x60] sm:$0xf] %v4166
      %4212 = vst [vmem:[%s2463 + $0x64] sm:$0xf] %v4167
      %4213 = vst [vmem:[%s2463 + $0x68] sm:$0xf] %v4168
      %4214 = vst [vmem:[%s2463 + $0x6c] sm:$0xf] %v4169
      %4215 = vst [vmem:[%s2463 + $0x70] sm:$0xf] %v4170
      %4216 = vst [vmem:[%s2463 + $0x74] sm:$0xf] %v4171
      %4217 = vst [vmem:[%s2463 + $0x78] sm:$0xf] %v4172
      %4218 = vst [vmem:[%s2463 + $0x7c] sm:$0xf] %v4173
      %vm4219 = vcmask 1040384
      %vm4220 = vsmask.f32 256
      %vm4221 = vmand %vm4219, %vm4220
      %v4222 = vld [vmem:[%s2148] sm:$0x1]
      %v4223 = vsel %vm4221, 0, %v4222
      %4224 = vst [vmem:[%s2148] sm:$0x1] %v4223
      %v4225 = vld [vmem:[%s2148 + $0x8] sm:$0x1]
      %v4226 = vsel %vm4221, 0, %v4225
      %4227 = vst [vmem:[%s2148 + $0x8] sm:$0x1] %v4226
      %v4228 = vld [vmem:[%s2148 + $0x10] sm:$0x1]
      %v4229 = vsel %vm4221, 0, %v4228
      %4230 = vst [vmem:[%s2148 + $0x10] sm:$0x1] %v4229
      %v4231 = vld [vmem:[%s2148 + $0x18] sm:$0x1]
      %v4232 = vsel %vm4221, 0, %v4231
      %4233 = vst [vmem:[%s2148 + $0x18] sm:$0x1] %v4232
      %v4234 = vld [vmem:[%s2148 + $0x20] sm:$0x1]
      %v4235 = vsel %vm4221, 0, %v4234
      %4236 = vst [vmem:[%s2148 + $0x20] sm:$0x1] %v4235
      %v4237 = vld [vmem:[%s2148 + $0x28] sm:$0x1]
      %v4238 = vsel %vm4221, 0, %v4237
      %4239 = vst [vmem:[%s2148 + $0x28] sm:$0x1] %v4238
      %v4240 = vld [vmem:[%s2148 + $0x30] sm:$0x1]
      %v4241 = vsel %vm4221, 0, %v4240
      %4242 = vst [vmem:[%s2148 + $0x30] sm:$0x1] %v4241
      %v4243 = vld [vmem:[%s2148 + $0x38] sm:$0x1]
      %v4244 = vsel %vm4221, 0, %v4243
      %4245 = vst [vmem:[%s2148 + $0x38] sm:$0x1] %v4244
      %v4246 = vld [vmem:[%s2148 + $0x40] sm:$0x1]
      %v4247 = vsel %vm4221, 0, %v4246
      %4248 = vst [vmem:[%s2148 + $0x40] sm:$0x1] %v4247
      %v4249 = vld [vmem:[%s2148 + $0x48] sm:$0x1]
      %v4250 = vsel %vm4221, 0, %v4249
      %4251 = vst [vmem:[%s2148 + $0x48] sm:$0x1] %v4250
      %v4252 = vld [vmem:[%s2148 + $0x50] sm:$0x1]
      %v4253 = vsel %vm4221, 0, %v4252
      %4254 = vst [vmem:[%s2148 + $0x50] sm:$0x1] %v4253
      %v4255 = vld [vmem:[%s2148 + $0x58] sm:$0x1]
      %v4256 = vsel %vm4221, 0, %v4255
      %4257 = vst [vmem:[%s2148 + $0x58] sm:$0x1] %v4256
      %v4258 = vld [vmem:[%s2148 + $0x60] sm:$0x1]
      %v4259 = vsel %vm4221, 0, %v4258
      %4260 = vst [vmem:[%s2148 + $0x60] sm:$0x1] %v4259
      %v4261 = vld [vmem:[%s2148 + $0x68] sm:$0x1]
      %v4262 = vsel %vm4221, 0, %v4261
      %4263 = vst [vmem:[%s2148 + $0x68] sm:$0x1] %v4262
      %v4264 = vld [vmem:[%s2148 + $0x70] sm:$0x1]
      %v4265 = vsel %vm4221, 0, %v4264
      %4266 = vst [vmem:[%s2148 + $0x70] sm:$0x1] %v4265
      %v4267 = vld [vmem:[%s2148 + $0x78] sm:$0x1]
      %v4268 = vsel %vm4221, 0, %v4267
      %4269 = vst [vmem:[%s2148 + $0x78] sm:$0x1] %v4268
      %vm4270 = vsmask.f32 4368
      %vm4271 = vmor %vm4220, %vm4270
      %v4273 = vshrl.u32 %v4142, 16
      %v4275 = vrot.slane %v4273, 7
      %v4276 = vshll.u32 %v4142, 16
      %v4278 = vor.u32 %v4275, %v4276
      %v4279 = vrot.slane %v4275, 4
      %v4281 = vshrl.u32 %v4143, 16
      %v4283 = vrot.slane %v4281, 7
      %v4284 = vshll.u32 %v4143, 16
      %v4286 = vor.u32 %v4283, %v4284
      %v4287 = vsel %vm4271, %v4279, %v4286
      %v4289 = vshrl.u32 %v4144, 16
      %v4291 = vrot.slane %v4289, 7
      %v4292 = vshll.u32 %v4144, 16
      %v4294 = vor.u32 %v4291, %v4292
      %v4295 = vrot.slane %v4291, 4
      %v4297 = vshrl.u32 %v4145, 16
      %v4299 = vrot.slane %v4297, 7
      %v4300 = vshll.u32 %v4145, 16
      %v4302 = vor.u32 %v4299, %v4300
      %v4303 = vsel %vm4271, %v4295, %v4302
      %v4305 = vshrl.u32 %v4146, 16
      %v4307 = vrot.slane %v4305, 7
      %v4308 = vshll.u32 %v4146, 16
      %v4310 = vor.u32 %v4307, %v4308
      %v4311 = vrot.slane %v4307, 4
      %v4313 = vshrl.u32 %v4147, 16
      %v4315 = vrot.slane %v4313, 7
      %v4316 = vshll.u32 %v4147, 16
      %v4318 = vor.u32 %v4315, %v4316
      %v4319 = vsel %vm4271, %v4311, %v4318
      %v4321 = vshrl.u32 %v4148, 16
      %v4323 = vrot.slane %v4321, 7
      %v4324 = vshll.u32 %v4148, 16
      %v4326 = vor.u32 %v4323, %v4324
      %v4327 = vrot.slane %v4323, 4
      %v4329 = vshrl.u32 %v4149, 16
      %v4331 = vrot.slane %v4329, 7
      %v4332 = vshll.u32 %v4149, 16
      %v4334 = vor.u32 %v4331, %v4332
      %v4335 = vsel %vm4271, %v4327, %v4334
      %v4337 = vshrl.u32 %v4150, 16
      %v4339 = vrot.slane %v4337, 7
      %v4340 = vshll.u32 %v4150, 16
      %v4342 = vor.u32 %v4339, %v4340
      %v4343 = vrot.slane %v4339, 4
      %v4345 = vshrl.u32 %v4151, 16
      %v4347 = vrot.slane %v4345, 7
      %v4348 = vshll.u32 %v4151, 16
      %v4350 = vor.u32 %v4347, %v4348
      %v4351 = vsel %vm4271, %v4343, %v4350
      %v4353 = vshrl.u32 %v4152, 16
      %v4355 = vrot.slane %v4353, 7
      %v4356 = vshll.u32 %v4152, 16
      %v4358 = vor.u32 %v4355, %v4356
      %v4359 = vrot.slane %v4355, 4
      %v4361 = vshrl.u32 %v4153, 16
      %v4363 = vrot.slane %v4361, 7
      %v4364 = vshll.u32 %v4153, 16
      %v4366 = vor.u32 %v4363, %v4364
      %v4367 = vsel %vm4271, %v4359, %v4366
      %v4369 = vshrl.u32 %v4154, 16
      %v4371 = vrot.slane %v4369, 7
      %v4372 = vshll.u32 %v4154, 16
      %v4374 = vor.u32 %v4371, %v4372
      %v4375 = vrot.slane %v4371, 4
      %v4377 = vshrl.u32 %v4155, 16
      %v4379 = vrot.slane %v4377, 7
      %v4380 = vshll.u32 %v4155, 16
      %v4382 = vor.u32 %v4379, %v4380
      %v4383 = vsel %vm4271, %v4375, %v4382
      %v4385 = vshrl.u32 %v4156, 16
      %v4387 = vrot.slane %v4385, 7
      %v4388 = vshll.u32 %v4156, 16
      %v4390 = vor.u32 %v4387, %v4388
      %v4391 = vrot.slane %v4387, 4
      %v4393 = vshrl.u32 %v4157, 16
      %v4395 = vrot.slane %v4393, 7
      %v4396 = vshll.u32 %v4157, 16
      %v4398 = vor.u32 %v4395, %v4396
      %v4399 = vsel %vm4271, %v4391, %v4398
      %v4401 = vshrl.u32 %v4158, 16
      %v4403 = vrot.slane %v4401, 7
      %v4404 = vshll.u32 %v4158, 16
      %v4406 = vor.u32 %v4403, %v4404
      %v4407 = vrot.slane %v4403, 4
      %v4409 = vshrl.u32 %v4159, 16
      %v4411 = vrot.slane %v4409, 7
      %v4412 = vshll.u32 %v4159, 16
      %v4414 = vor.u32 %v4411, %v4412
      %v4415 = vsel %vm4271, %v4407, %v4414
      %v4417 = vshrl.u32 %v4160, 16
      %v4419 = vrot.slane %v4417, 7
      %v4420 = vshll.u32 %v4160, 16
      %v4422 = vor.u32 %v4419, %v4420
      %v4423 = vrot.slane %v4419, 4
      %v4425 = vshrl.u32 %v4161, 16
      %v4427 = vrot.slane %v4425, 7
      %v4428 = vshll.u32 %v4161, 16
      %v4430 = vor.u32 %v4427, %v4428
      %v4431 = vsel %vm4271, %v4423, %v4430
      %v4433 = vshrl.u32 %v4162, 16
      %v4435 = vrot.slane %v4433, 7
      %v4436 = vshll.u32 %v4162, 16
      %v4438 = vor.u32 %v4435, %v4436
      %v4439 = vrot.slane %v4435, 4
      %v4441 = vshrl.u32 %v4163, 16
      %v4443 = vrot.slane %v4441, 7
      %v4444 = vshll.u32 %v4163, 16
      %v4446 = vor.u32 %v4443, %v4444
      %v4447 = vsel %vm4271, %v4439, %v4446
      %v4449 = vshrl.u32 %v4164, 16
      %v4451 = vrot.slane %v4449, 7
      %v4452 = vshll.u32 %v4164, 16
      %v4454 = vor.u32 %v4451, %v4452
      %v4455 = vrot.slane %v4451, 4
      %v4457 = vshrl.u32 %v4165, 16
      %v4459 = vrot.slane %v4457, 7
      %v4460 = vshll.u32 %v4165, 16
      %v4462 = vor.u32 %v4459, %v4460
      %v4463 = vsel %vm4271, %v4455, %v4462
      %v4465 = vshrl.u32 %v4166, 16
      %v4467 = vrot.slane %v4465, 7
      %v4468 = vshll.u32 %v4166, 16
      %v4470 = vor.u32 %v4467, %v4468
      %v4471 = vrot.slane %v4467, 4
      %v4473 = vshrl.u32 %v4167, 16
      %v4475 = vrot.slane %v4473, 7
      %v4476 = vshll.u32 %v4167, 16
      %v4478 = vor.u32 %v4475, %v4476
      %v4479 = vsel %vm4271, %v4471, %v4478
      %v4481 = vshrl.u32 %v4168, 16
      %v4483 = vrot.slane %v4481, 7
      %v4484 = vshll.u32 %v4168, 16
      %v4486 = vor.u32 %v4483, %v4484
      %v4487 = vrot.slane %v4483, 4
      %v4489 = vshrl.u32 %v4169, 16
      %v4491 = vrot.slane %v4489, 7
      %v4492 = vshll.u32 %v4169, 16
      %v4494 = vor.u32 %v4491, %v4492
      %v4495 = vsel %vm4271, %v4487, %v4494
      %v4497 = vshrl.u32 %v4170, 16
      %v4499 = vrot.slane %v4497, 7
      %v4500 = vshll.u32 %v4170, 16
      %v4502 = vor.u32 %v4499, %v4500
      %v4503 = vrot.slane %v4499, 4
      %v4505 = vshrl.u32 %v4171, 16
      %v4507 = vrot.slane %v4505, 7
      %v4508 = vshll.u32 %v4171, 16
      %v4510 = vor.u32 %v4507, %v4508
      %v4511 = vsel %vm4271, %v4503, %v4510
      %v4513 = vshrl.u32 %v4172, 16
      %v4515 = vrot.slane %v4513, 7
      %v4516 = vshll.u32 %v4172, 16
      %v4518 = vor.u32 %v4515, %v4516
      %v4519 = vrot.slane %v4515, 4
      %v4521 = vshrl.u32 %v4173, 16
      %v4523 = vrot.slane %v4521, 7
      %v4524 = vshll.u32 %v4173, 16
      %v4526 = vor.u32 %v4523, %v4524
      %v4527 = vsel %vm4271, %v4519, %v4526
      %vm4560 = vcmask 1043456
      %vm4561 = vsmask.f32 7938
      %vm4562 = vmand %vm4560, %vm4561
      %v4563 = vld [vmem:[%s2148] sm:$0xf]
      %v4564 = vsel %vm4562, %v4278, %v4563
      %4565 = vst [vmem:[%s2148] sm:$0xf] %v4564
      %4566 = vst [vmem:[%s2148 + $0x4] sm:$0xf] %v4287
      %v4567 = vld [vmem:[%s2148 + $0x8] sm:$0xf]
      %v4568 = vsel %vm4562, %v4294, %v4567
      %4569 = vst [vmem:[%s2148 + $0x8] sm:$0xf] %v4568
      %4570 = vst [vmem:[%s2148 + $0xc] sm:$0xf] %v4303
      %v4571 = vld [vmem:[%s2148 + $0x10] sm:$0xf]
      %v4572 = vsel %vm4562, %v4310, %v4571
      %4573 = vst [vmem:[%s2148 + $0x10] sm:$0xf] %v4572
      %4574 = vst [vmem:[%s2148 + $0x14] sm:$0xf] %v4319
      %v4575 = vld [vmem:[%s2148 + $0x18] sm:$0xf]
      %v4576 = vsel %vm4562, %v4326, %v4575
      %4577 = vst [vmem:[%s2148 + $0x18] sm:$0xf] %v4576
      %4578 = vst [vmem:[%s2148 + $0x1c] sm:$0xf] %v4335
      %v4579 = vld [vmem:[%s2148 + $0x20] sm:$0xf]
      %v4580 = vsel %vm4562, %v4342, %v4579
      %4581 = vst [vmem:[%s2148 + $0x20] sm:$0xf] %v4580
      %4582 = vst [vmem:[%s2148 + $0x24] sm:$0xf] %v4351
      %v4583 = vld [vmem:[%s2148 + $0x28] sm:$0xf]
      %v4584 = vsel %vm4562, %v4358, %v4583
      %4585 = vst [vmem:[%s2148 + $0x28] sm:$0xf] %v4584
      %4586 = vst [vmem:[%s2148 + $0x2c] sm:$0xf] %v4367
      %v4587 = vld [vmem:[%s2148 + $0x30] sm:$0xf]
      %v4588 = vsel %vm4562, %v4374, %v4587
      %4589 = vst [vmem:[%s2148 + $0x30] sm:$0xf] %v4588
      %4590 = vst [vmem:[%s2148 + $0x34] sm:$0xf] %v4383
      %v4591 = vld [vmem:[%s2148 + $0x38] sm:$0xf]
      %v4592 = vsel %vm4562, %v4390, %v4591
      %4593 = vst [vmem:[%s2148 + $0x38] sm:$0xf] %v4592
      %4594 = vst [vmem:[%s2148 + $0x3c] sm:$0xf] %v4399
      %v4595 = vld [vmem:[%s2148 + $0x40] sm:$0xf]
      %v4596 = vsel %vm4562, %v4406, %v4595
      %4597 = vst [vmem:[%s2148 + $0x40] sm:$0xf] %v4596
      %4598 = vst [vmem:[%s2148 + $0x44] sm:$0xf] %v4415
      %v4599 = vld [vmem:[%s2148 + $0x48] sm:$0xf]
      %v4600 = vsel %vm4562, %v4422, %v4599
      %4601 = vst [vmem:[%s2148 + $0x48] sm:$0xf] %v4600
      %4602 = vst [vmem:[%s2148 + $0x4c] sm:$0xf] %v4431
      %v4603 = vld [vmem:[%s2148 + $0x50] sm:$0xf]
      %v4604 = vsel %vm4562, %v4438, %v4603
      %4605 = vst [vmem:[%s2148 + $0x50] sm:$0xf] %v4604
      %4606 = vst [vmem:[%s2148 + $0x54] sm:$0xf] %v4447
      %v4607 = vld [vmem:[%s2148 + $0x58] sm:$0xf]
      %v4608 = vsel %vm4562, %v4454, %v4607
      %4609 = vst [vmem:[%s2148 + $0x58] sm:$0xf] %v4608
      %4610 = vst [vmem:[%s2148 + $0x5c] sm:$0xf] %v4463
      %v4611 = vld [vmem:[%s2148 + $0x60] sm:$0xf]
      %v4612 = vsel %vm4562, %v4470, %v4611
      %4613 = vst [vmem:[%s2148 + $0x60] sm:$0xf] %v4612
      %4614 = vst [vmem:[%s2148 + $0x64] sm:$0xf] %v4479
      %v4615 = vld [vmem:[%s2148 + $0x68] sm:$0xf]
      %v4616 = vsel %vm4562, %v4486, %v4615
      %4617 = vst [vmem:[%s2148 + $0x68] sm:$0xf] %v4616
      %4618 = vst [vmem:[%s2148 + $0x6c] sm:$0xf] %v4495
      %v4619 = vld [vmem:[%s2148 + $0x70] sm:$0xf]
      %v4620 = vsel %vm4562, %v4502, %v4619
      %4621 = vst [vmem:[%s2148 + $0x70] sm:$0xf] %v4620
      %4622 = vst [vmem:[%s2148 + $0x74] sm:$0xf] %v4511
      %v4623 = vld [vmem:[%s2148 + $0x78] sm:$0xf]
      %v4624 = vsel %vm4562, %v4518, %v4623
      %4625 = vst [vmem:[%s2148 + $0x78] sm:$0xf] %v4624
      %4626 = vst [vmem:[%s2148 + $0x7c] sm:$0xf] %v4527
      %v4627 = vrot.slane %v4273, 4
      %v4628 = vrot.slane %v4276, 5
      %v4629 = vor.u32 %v4627, %v4628
      %v4630 = vrot.slane %v4629, 4
      %v4631 = vrot.slane %v4284, 5
      %v4632 = vsel %vm455, %v4630, %v4631
      %v4633 = vrot.slane %v4281, 4
      %v4634 = vor.u32 %v4633, %v4631
      %v4635 = vrot.slane %v4634, 4
      %v4636 = vrot.slane %v4289, 4
      %v4637 = vrot.slane %v4292, 5
      %v4638 = vor.u32 %v4636, %v4637
      %v4639 = vrot.slane %v4638, 4
      %v4640 = vrot.slane %v4300, 5
      %v4641 = vsel %vm455, %v4639, %v4640
      %v4642 = vrot.slane %v4297, 4
      %v4643 = vor.u32 %v4642, %v4640
      %v4644 = vrot.slane %v4643, 4
      %v4645 = vrot.slane %v4305, 4
      %v4646 = vrot.slane %v4308, 5
      %v4647 = vor.u32 %v4645, %v4646
      %v4648 = vrot.slane %v4647, 4
      %v4649 = vrot.slane %v4316, 5
      %v4650 = vsel %vm455, %v4648, %v4649
      %v4651 = vrot.slane %v4313, 4
      %v4652 = vor.u32 %v4651, %v4649
      %v4653 = vrot.slane %v4652, 4
      %v4654 = vrot.slane %v4321, 4
      %v4655 = vrot.slane %v4324, 5
      %v4656 = vor.u32 %v4654, %v4655
      %v4657 = vrot.slane %v4656, 4
      %v4658 = vrot.slane %v4332, 5
      %v4659 = vsel %vm455, %v4657, %v4658
      %v4660 = vrot.slane %v4329, 4
      %v4661 = vor.u32 %v4660, %v4658
      %v4662 = vrot.slane %v4661, 4
      %v4663 = vrot.slane %v4337, 4
      %v4664 = vrot.slane %v4340, 5
      %v4665 = vor.u32 %v4663, %v4664
      %v4666 = vrot.slane %v4665, 4
      %v4667 = vrot.slane %v4348, 5
      %v4668 = vsel %vm455, %v4666, %v4667
      %v4669 = vrot.slane %v4345, 4
      %v4670 = vor.u32 %v4669, %v4667
      %v4671 = vrot.slane %v4670, 4
      %v4672 = vrot.slane %v4353, 4
      %v4673 = vrot.slane %v4356, 5
      %v4674 = vor.u32 %v4672, %v4673
      %v4675 = vrot.slane %v4674, 4
      %v4676 = vrot.slane %v4364, 5
      %v4677 = vsel %vm455, %v4675, %v4676
      %v4678 = vrot.slane %v4361, 4
      %v4679 = vor.u32 %v4678, %v4676
      %v4680 = vrot.slane %v4679, 4
      %v4681 = vrot.slane %v4369, 4
      %v4682 = vrot.slane %v4372, 5
      %v4683 = vor.u32 %v4681, %v4682
      %v4684 = vrot.slane %v4683, 4
      %v4685 = vrot.slane %v4380, 5
      %v4686 = vsel %vm455, %v4684, %v4685
      %v4687 = vrot.slane %v4377, 4
      %v4688 = vor.u32 %v4687, %v4685
      %v4689 = vrot.slane %v4688, 4
      %v4690 = vrot.slane %v4385, 4
      %v4691 = vrot.slane %v4388, 5
      %v4692 = vor.u32 %v4690, %v4691
      %v4693 = vrot.slane %v4692, 4
      %v4694 = vrot.slane %v4396, 5
      %v4695 = vsel %vm455, %v4693, %v4694
      %v4696 = vrot.slane %v4393, 4
      %v4697 = vor.u32 %v4696, %v4694
      %v4698 = vrot.slane %v4697, 4
      %v4699 = vrot.slane %v4401, 4
      %v4700 = vrot.slane %v4404, 5
      %v4701 = vor.u32 %v4699, %v4700
      %v4702 = vrot.slane %v4701, 4
      %v4703 = vrot.slane %v4412, 5
      %v4704 = vsel %vm455, %v4702, %v4703
      %v4705 = vrot.slane %v4409, 4
      %v4706 = vor.u32 %v4705, %v4703
      %v4707 = vrot.slane %v4706, 4
      %v4708 = vrot.slane %v4417, 4
      %v4709 = vrot.slane %v4420, 5
      %v4710 = vor.u32 %v4708, %v4709
      %v4711 = vrot.slane %v4710, 4
      %v4712 = vrot.slane %v4428, 5
      %v4713 = vsel %vm455, %v4711, %v4712
      %v4714 = vrot.slane %v4425, 4
      %v4715 = vor.u32 %v4714, %v4712
      %v4716 = vrot.slane %v4715, 4
      %v4717 = vrot.slane %v4433, 4
      %v4718 = vrot.slane %v4436, 5
      %v4719 = vor.u32 %v4717, %v4718
      %v4720 = vrot.slane %v4719, 4
      %v4721 = vrot.slane %v4444, 5
      %v4722 = vsel %vm455, %v4720, %v4721
      %v4723 = vrot.slane %v4441, 4
      %v4724 = vor.u32 %v4723, %v4721
      %v4725 = vrot.slane %v4724, 4
      %v4726 = vrot.slane %v4449, 4
      %v4727 = vrot.slane %v4452, 5
      %v4728 = vor.u32 %v4726, %v4727
      %v4729 = vrot.slane %v4728, 4
      %v4730 = vrot.slane %v4460, 5
      %v4731 = vsel %vm455, %v4729, %v4730
      %v4732 = vrot.slane %v4457, 4
      %v4733 = vor.u32 %v4732, %v4730
      %v4734 = vrot.slane %v4733, 4
      %v4735 = vrot.slane %v4465, 4
      %v4736 = vrot.slane %v4468, 5
      %v4737 = vor.u32 %v4735, %v4736
      %v4738 = vrot.slane %v4737, 4
      %v4739 = vrot.slane %v4476, 5
      %v4740 = vsel %vm455, %v4738, %v4739
      %v4741 = vrot.slane %v4473, 4
      %v4742 = vor.u32 %v4741, %v4739
      %v4743 = vrot.slane %v4742, 4
      %v4744 = vrot.slane %v4481, 4
      %v4745 = vrot.slane %v4484, 5
      %v4746 = vor.u32 %v4744, %v4745
      %v4747 = vrot.slane %v4746, 4
      %v4748 = vrot.slane %v4492, 5
      %v4749 = vsel %vm455, %v4747, %v4748
      %v4750 = vrot.slane %v4489, 4
      %v4751 = vor.u32 %v4750, %v4748
      %v4752 = vrot.slane %v4751, 4
      %v4753 = vrot.slane %v4497, 4
      %v4754 = vrot.slane %v4500, 5
      %v4755 = vor.u32 %v4753, %v4754
      %v4756 = vrot.slane %v4755, 4
      %v4757 = vrot.slane %v4508, 5
      %v4758 = vsel %vm455, %v4756, %v4757
      %v4759 = vrot.slane %v4505, 4
      %v4760 = vor.u32 %v4759, %v4757
      %v4761 = vrot.slane %v4760, 4
      %v4762 = vrot.slane %v4513, 4
      %v4763 = vrot.slane %v4516, 5
      %v4764 = vor.u32 %v4762, %v4763
      %v4765 = vrot.slane %v4764, 4
      %v4766 = vrot.slane %v4524, 5
      %v4767 = vsel %vm455, %v4765, %v4766
      %v4768 = vrot.slane %v4521, 4
      %v4769 = vor.u32 %v4768, %v4766
      %v4770 = vrot.slane %v4769, 4
      %4803 = vst [vmem:[%s2778] sm:$0xf] %v4632
      %vm4804 = vmand %vm4560, %vm453
      %v4805 = vld [vmem:[%s2778 + $0x4] sm:$0xf]
      %v4806 = vsel %vm4804, %v4635, %v4805
      %4807 = vst [vmem:[%s2778 + $0x4] sm:$0xf] %v4806
      %4808 = vst [vmem:[%s2778 + $0x8] sm:$0xf] %v4641
      %v4809 = vld [vmem:[%s2778 + $0xc] sm:$0xf]
      %v4810 = vsel %vm4804, %v4644, %v4809
      %4811 = vst [vmem:[%s2778 + $0xc] sm:$0xf] %v4810
      %4812 = vst [vmem:[%s2778 + $0x10] sm:$0xf] %v4650
      %v4813 = vld [vmem:[%s2778 + $0x14] sm:$0xf]
      %v4814 = vsel %vm4804, %v4653, %v4813
      %4815 = vst [vmem:[%s2778 + $0x14] sm:$0xf] %v4814
      %4816 = vst [vmem:[%s2778 + $0x18] sm:$0xf] %v4659
      %v4817 = vld [vmem:[%s2778 + $0x1c] sm:$0xf]
      %v4818 = vsel %vm4804, %v4662, %v4817
      %4819 = vst [vmem:[%s2778 + $0x1c] sm:$0xf] %v4818
      %4820 = vst [vmem:[%s2778 + $0x20] sm:$0xf] %v4668
      %v4821 = vld [vmem:[%s2778 + $0x24] sm:$0xf]
      %v4822 = vsel %vm4804, %v4671, %v4821
      %4823 = vst [vmem:[%s2778 + $0x24] sm:$0xf] %v4822
      %4824 = vst [vmem:[%s2778 + $0x28] sm:$0xf] %v4677
      %v4825 = vld [vmem:[%s2778 + $0x2c] sm:$0xf]
      %v4826 = vsel %vm4804, %v4680, %v4825
      %4827 = vst [vmem:[%s2778 + $0x2c] sm:$0xf] %v4826
      %4828 = vst [vmem:[%s2778 + $0x30] sm:$0xf] %v4686
      %v4829 = vld [vmem:[%s2778 + $0x34] sm:$0xf]
      %v4830 = vsel %vm4804, %v4689, %v4829
      %4831 = vst [vmem:[%s2778 + $0x34] sm:$0xf] %v4830
      %4832 = vst [vmem:[%s2778 + $0x38] sm:$0xf] %v4695
      %v4833 = vld [vmem:[%s2778 + $0x3c] sm:$0xf]
      %v4834 = vsel %vm4804, %v4698, %v4833
      %4835 = vst [vmem:[%s2778 + $0x3c] sm:$0xf] %v4834
      %4836 = vst [vmem:[%s2778 + $0x40] sm:$0xf] %v4704
      %v4837 = vld [vmem:[%s2778 + $0x44] sm:$0xf]
      %v4838 = vsel %vm4804, %v4707, %v4837
      %4839 = vst [vmem:[%s2778 + $0x44] sm:$0xf] %v4838
      %4840 = vst [vmem:[%s2778 + $0x48] sm:$0xf] %v4713
      %v4841 = vld [vmem:[%s2778 + $0x4c] sm:$0xf]
      %v4842 = vsel %vm4804, %v4716, %v4841
      %4843 = vst [vmem:[%s2778 + $0x4c] sm:$0xf] %v4842
      %4844 = vst [vmem:[%s2778 + $0x50] sm:$0xf] %v4722
      %v4845 = vld [vmem:[%s2778 + $0x54] sm:$0xf]
      %v4846 = vsel %vm4804, %v4725, %v4845
      %4847 = vst [vmem:[%s2778 + $0x54] sm:$0xf] %v4846
      %4848 = vst [vmem:[%s2778 + $0x58] sm:$0xf] %v4731
      %v4849 = vld [vmem:[%s2778 + $0x5c] sm:$0xf]
      %v4850 = vsel %vm4804, %v4734, %v4849
      %4851 = vst [vmem:[%s2778 + $0x5c] sm:$0xf] %v4850
      %4852 = vst [vmem:[%s2778 + $0x60] sm:$0xf] %v4740
      %v4853 = vld [vmem:[%s2778 + $0x64] sm:$0xf]
      %v4854 = vsel %vm4804, %v4743, %v4853
      %4855 = vst [vmem:[%s2778 + $0x64] sm:$0xf] %v4854
      %4856 = vst [vmem:[%s2778 + $0x68] sm:$0xf] %v4749
      %v4857 = vld [vmem:[%s2778 + $0x6c] sm:$0xf]
      %v4858 = vsel %vm4804, %v4752, %v4857
      %4859 = vst [vmem:[%s2778 + $0x6c] sm:$0xf] %v4858
      %4860 = vst [vmem:[%s2778 + $0x70] sm:$0xf] %v4758
      %v4861 = vld [vmem:[%s2778 + $0x74] sm:$0xf]
      %v4862 = vsel %vm4804, %v4761, %v4861
      %4863 = vst [vmem:[%s2778 + $0x74] sm:$0xf] %v4862
      %4864 = vst [vmem:[%s2778 + $0x78] sm:$0xf] %v4767
      %v4865 = vld [vmem:[%s2778 + $0x7c] sm:$0xf]
      %v4866 = vsel %vm4804, %v4770, %v4865
      %4867 = vst [vmem:[%s2778 + $0x7c] sm:$0xf] %v4866
      %vm4868 = vcmask 1043459
      %vm4869 = vsmask.f32 7950
      %vm4870 = vmand %vm4868, %vm4869
      %v4871 = vld [vmem:[%s2778 + $0x4] sm:$0x8]
      %v4872 = vsel %vm4870, 0, %v4871
      %4873 = vst [vmem:[%s2778 + $0x4] sm:$0x8] %v4872
      %v4874 = vld [vmem:[%s2778 + $0xc] sm:$0x8]
      %v4875 = vsel %vm4870, 0, %v4874
      %4876 = vst [vmem:[%s2778 + $0xc] sm:$0x8] %v4875
      %v4877 = vld [vmem:[%s2778 + $0x14] sm:$0x8]
      %v4878 = vsel %vm4870, 0, %v4877
      %4879 = vst [vmem:[%s2778 + $0x14] sm:$0x8] %v4878
      %v4880 = vld [vmem:[%s2778 + $0x1c] sm:$0x8]
      %v4881 = vsel %vm4870, 0, %v4880
      %4882 = vst [vmem:[%s2778 + $0x1c] sm:$0x8] %v4881
      %v4883 = vld [vmem:[%s2778 + $0x24] sm:$0x8]
      %v4884 = vsel %vm4870, 0, %v4883
      %4885 = vst [vmem:[%s2778 + $0x24] sm:$0x8] %v4884
      %v4886 = vld [vmem:[%s2778 + $0x2c] sm:$0x8]
      %v4887 = vsel %vm4870, 0, %v4886
      %4888 = vst [vmem:[%s2778 + $0x2c] sm:$0x8] %v4887
      %v4889 = vld [vmem:[%s2778 + $0x34] sm:$0x8]
      %v4890 = vsel %vm4870, 0, %v4889
      %4891 = vst [vmem:[%s2778 + $0x34] sm:$0x8] %v4890
      %v4892 = vld [vmem:[%s2778 + $0x3c] sm:$0x8]
      %v4893 = vsel %vm4870, 0, %v4892
      %4894 = vst [vmem:[%s2778 + $0x3c] sm:$0x8] %v4893
      %v4895 = vld [vmem:[%s2778 + $0x44] sm:$0x8]
      %v4896 = vsel %vm4870, 0, %v4895
      %4897 = vst [vmem:[%s2778 + $0x44] sm:$0x8] %v4896
      %v4898 = vld [vmem:[%s2778 + $0x4c] sm:$0x8]
      %v4899 = vsel %vm4870, 0, %v4898
      %4900 = vst [vmem:[%s2778 + $0x4c] sm:$0x8] %v4899
      %v4901 = vld [vmem:[%s2778 + $0x54] sm:$0x8]
      %v4902 = vsel %vm4870, 0, %v4901
      %4903 = vst [vmem:[%s2778 + $0x54] sm:$0x8] %v4902
      %v4904 = vld [vmem:[%s2778 + $0x5c] sm:$0x8]
      %v4905 = vsel %vm4870, 0, %v4904
      %4906 = vst [vmem:[%s2778 + $0x5c] sm:$0x8] %v4905
      %v4907 = vld [vmem:[%s2778 + $0x64] sm:$0x8]
      %v4908 = vsel %vm4870, 0, %v4907
      %4909 = vst [vmem:[%s2778 + $0x64] sm:$0x8] %v4908
      %v4910 = vld [vmem:[%s2778 + $0x6c] sm:$0x8]
      %v4911 = vsel %vm4870, 0, %v4910
      %4912 = vst [vmem:[%s2778 + $0x6c] sm:$0x8] %v4911
      %v4913 = vld [vmem:[%s2778 + $0x74] sm:$0x8]
      %v4914 = vsel %vm4870, 0, %v4913
      %4915 = vst [vmem:[%s2778 + $0x74] sm:$0x8] %v4914
      %v4916 = vld [vmem:[%s2778 + $0x7c] sm:$0x8]
      %v4917 = vsel %vm4870, 0, %v4916
      %4918 = vst [vmem:[%s2778 + $0x7c] sm:$0x8] %v4917
      %v4919 = vld [vmem:[#allocation2] sm:$0xf]
      %v4920 = vld [vmem:[#allocation2 + $0x4] sm:$0xf]
      %v4921 = vld [vmem:[#allocation2 + $0x8] sm:$0xf]
      %v4922 = vld [vmem:[#allocation2 + $0xc] sm:$0xf]
      %v4923 = vld [vmem:[#allocation2 + $0x10] sm:$0xf]
      %v4924 = vld [vmem:[#allocation2 + $0x14] sm:$0xf]
      %v4925 = vld [vmem:[#allocation2 + $0x18] sm:$0xf]
      %v4926 = vld [vmem:[#allocation2 + $0x1c] sm:$0xf]
      %v4927 = vld [vmem:[#allocation2 + $0x20] sm:$0xf]
      %v4928 = vld [vmem:[#allocation2 + $0x24] sm:$0xf]
      %v4929 = vld [vmem:[#allocation2 + $0x28] sm:$0xf]
      %v4930 = vld [vmem:[#allocation2 + $0x2c] sm:$0xf]
      %v4931 = vld [vmem:[#allocation2 + $0x30] sm:$0xf]
      %v4932 = vld [vmem:[#allocation2 + $0x34] sm:$0xf]
      %v4933 = vld [vmem:[#allocation2 + $0x38] sm:$0xf]
      %v4934 = vld [vmem:[#allocation2 + $0x3c] sm:$0xf]
      %v4935 = vld [vmem:[#allocation2 + $0x40] sm:$0xf]
      %v4936 = vld [vmem:[#allocation2 + $0x44] sm:$0xf]
      %v4937 = vld [vmem:[#allocation2 + $0x48] sm:$0xf]
      %v4938 = vld [vmem:[#allocation2 + $0x4c] sm:$0xf]
      %v4939 = vld [vmem:[#allocation2 + $0x50] sm:$0xf]
      %v4940 = vld [vmem:[#allocation2 + $0x54] sm:$0xf]
      %v4941 = vld [vmem:[#allocation2 + $0x58] sm:$0xf]
      %v4942 = vld [vmem:[#allocation2 + $0x5c] sm:$0xf]
      %v4943 = vld [vmem:[#allocation2 + $0x60] sm:$0xf]
      %v4944 = vld [vmem:[#allocation2 + $0x64] sm:$0xf]
      %v4945 = vld [vmem:[#allocation2 + $0x68] sm:$0xf]
      %v4946 = vld [vmem:[#allocation2 + $0x6c] sm:$0xf]
      %v4947 = vld [vmem:[#allocation2 + $0x70] sm:$0xf]
      %v4948 = vld [vmem:[#allocation2 + $0x74] sm:$0xf]
      %v4949 = vld [vmem:[#allocation2 + $0x78] sm:$0xf]
      %v4950 = vld [vmem:[#allocation2 + $0x7c] sm:$0xf]
      %v4951 = vld [vmem:[%s5] sm:$0xf]
      %v4952 = vld [vmem:[%s5 + $0x4] sm:$0xf]
      %v4953 = vld [vmem:[%s5 + $0x8] sm:$0xf]
      %v4954 = vld [vmem:[%s5 + $0xc] sm:$0xf]
      %v4955 = vld [vmem:[%s5 + $0x10] sm:$0xf]
      %v4956 = vld [vmem:[%s5 + $0x14] sm:$0xf]
      %v4957 = vld [vmem:[%s5 + $0x18] sm:$0xf]
      %v4958 = vld [vmem:[%s5 + $0x1c] sm:$0xf]
      %v4959 = vld [vmem:[%s5 + $0x20] sm:$0xf]
      %v4960 = vld [vmem:[%s5 + $0x24] sm:$0xf]
      %v4961 = vld [vmem:[%s5 + $0x28] sm:$0xf]
      %v4962 = vld [vmem:[%s5 + $0x2c] sm:$0xf]
      %v4963 = vld [vmem:[%s5 + $0x30] sm:$0xf]
      %v4964 = vld [vmem:[%s5 + $0x34] sm:$0xf]
      %v4965 = vld [vmem:[%s5 + $0x38] sm:$0xf]
      %v4966 = vld [vmem:[%s5 + $0x3c] sm:$0xf]
      %v4967 = vld [vmem:[%s924] sm:$0xf]
      %v4968 = vld [vmem:[%s924 + $0x4] sm:$0xf]
      %v4969 = vld [vmem:[%s924 + $0x8] sm:$0xf]
      %v4970 = vld [vmem:[%s924 + $0xc] sm:$0xf]
      %v4971 = vld [vmem:[%s924 + $0x10] sm:$0xf]
      %v4972 = vld [vmem:[%s924 + $0x14] sm:$0xf]
      %v4973 = vld [vmem:[%s924 + $0x18] sm:$0xf]
      %v4974 = vld [vmem:[%s924 + $0x1c] sm:$0xf]
      %v4975 = vld [vmem:[%s924 + $0x20] sm:$0xf]
      %v4976 = vld [vmem:[%s924 + $0x24] sm:$0xf]
      %v4977 = vld [vmem:[%s924 + $0x28] sm:$0xf]
      %v4978 = vld [vmem:[%s924 + $0x2c] sm:$0xf]
      %v4979 = vld [vmem:[%s924 + $0x30] sm:$0xf]
      %v4980 = vld [vmem:[%s924 + $0x34] sm:$0xf]
      %v4981 = vld [vmem:[%s924 + $0x38] sm:$0xf]
      %v4982 = vld [vmem:[%s924 + $0x3c] sm:$0xf]
      %v4983 = vld [vmem:[%s924 + $0x40] sm:$0xf]
      %v4984 = vld [vmem:[%s924 + $0x44] sm:$0xf]
      %v4985 = vld [vmem:[%s924 + $0x48] sm:$0xf]
      %v4986 = vld [vmem:[%s924 + $0x4c] sm:$0xf]
      %v4987 = vld [vmem:[%s924 + $0x50] sm:$0xf]
      %v4988 = vld [vmem:[%s924 + $0x54] sm:$0xf]
      %v4989 = vld [vmem:[%s924 + $0x58] sm:$0xf]
      %v4990 = vld [vmem:[%s924 + $0x5c] sm:$0xf]
      %v4991 = vld [vmem:[%s924 + $0x60] sm:$0xf]
      %v4992 = vld [vmem:[%s924 + $0x64] sm:$0xf]
      %v4993 = vld [vmem:[%s924 + $0x68] sm:$0xf]
      %v4994 = vld [vmem:[%s924 + $0x6c] sm:$0xf]
      %v4995 = vld [vmem:[%s924 + $0x70] sm:$0xf]
      %v4996 = vld [vmem:[%s924 + $0x74] sm:$0xf]
      %v4997 = vld [vmem:[%s924 + $0x78] sm:$0xf]
      %v4998 = vld [vmem:[%s924 + $0x7c] sm:$0xf]
      %s4999 = scalar_lea.vmem %s5, 64
      %v5000 = vld [vmem:[%s4999] sm:$0xf]
      %v5001 = vld [vmem:[%s4999 + $0x4] sm:$0xf]
      %v5002 = vld [vmem:[%s4999 + $0x8] sm:$0xf]
      %v5003 = vld [vmem:[%s4999 + $0xc] sm:$0xf]
      %v5004 = vld [vmem:[%s4999 + $0x10] sm:$0xf]
      %v5005 = vld [vmem:[%s4999 + $0x14] sm:$0xf]
      %v5006 = vld [vmem:[%s4999 + $0x18] sm:$0xf]
      %v5007 = vld [vmem:[%s4999 + $0x1c] sm:$0xf]
      %v5008 = vld [vmem:[%s4999 + $0x20] sm:$0xf]
      %v5009 = vld [vmem:[%s4999 + $0x24] sm:$0xf]
      %v5010 = vld [vmem:[%s4999 + $0x28] sm:$0xf]
      %v5011 = vld [vmem:[%s4999 + $0x2c] sm:$0xf]
      %v5012 = vld [vmem:[%s4999 + $0x30] sm:$0xf]
      %v5013 = vld [vmem:[%s4999 + $0x34] sm:$0xf]
      %v5014 = vld [vmem:[%s4999 + $0x38] sm:$0xf]
      %v5015 = vld [vmem:[%s4999 + $0x3c] sm:$0xf]
      %v5048 = vunpack.c.l.b16 %v4967
      %v5049 = vunpack.c.l.b16 %v4968
      %v5050 = vunpack.c.l.b16 %v4969
      %v5051 = vunpack.c.l.b16 %v4970
      %v5052 = vunpack.c.l.b16 %v4971
      %v5053 = vunpack.c.l.b16 %v4972
      %v5054 = vunpack.c.l.b16 %v4973
      %v5055 = vunpack.c.l.b16 %v4974
      %v5056 = vunpack.c.l.b16 %v4975
      %v5057 = vunpack.c.l.b16 %v4976
      %v5058 = vunpack.c.l.b16 %v4977
      %v5059 = vunpack.c.l.b16 %v4978
      %v5060 = vunpack.c.l.b16 %v4979
      %v5061 = vunpack.c.l.b16 %v4980
      %v5062 = vunpack.c.l.b16 %v4981
      %v5063 = vunpack.c.l.b16 %v4982
      %v5064 = vunpack.c.l.b16 %v4983
      %v5065 = vunpack.c.l.b16 %v4984
      %v5066 = vunpack.c.l.b16 %v4985
      %v5067 = vunpack.c.l.b16 %v4986
      %v5068 = vunpack.c.l.b16 %v4987
      %v5069 = vunpack.c.l.b16 %v4988
      %v5070 = vunpack.c.l.b16 %v4989
      %v5071 = vunpack.c.l.b16 %v4990
      %v5072 = vunpack.c.l.b16 %v4991
      %v5073 = vunpack.c.l.b16 %v4992
      %v5074 = vunpack.c.l.b16 %v4993
      %v5075 = vunpack.c.l.b16 %v4994
      %v5076 = vunpack.c.l.b16 %v4995
      %v5077 = vunpack.c.l.b16 %v4996
      %v5078 = vunpack.c.l.b16 %v4997
      %v5079 = vunpack.c.l.b16 %v4998
      %v5080 = vpack.c.b16 %v5049, %v5048
      %v5081 = vpack.c.b16 %v5051, %v5050
      %v5082 = vpack.c.b16 %v5053, %v5052
      %v5083 = vpack.c.b16 %v5055, %v5054
      %v5084 = vpack.c.b16 %v5057, %v5056
      %v5085 = vpack.c.b16 %v5059, %v5058
      %v5086 = vpack.c.b16 %v5061, %v5060
      %v5087 = vpack.c.b16 %v5063, %v5062
      %v5088 = vpack.c.b16 %v5065, %v5064
      %v5089 = vpack.c.b16 %v5067, %v5066
      %v5090 = vpack.c.b16 %v5069, %v5068
      %v5091 = vpack.c.b16 %v5071, %v5070
      %v5092 = vpack.c.b16 %v5073, %v5072
      %v5093 = vpack.c.b16 %v5075, %v5074
      %v5094 = vpack.c.b16 %v5077, %v5076
      %v5095 = vpack.c.b16 %v5079, %v5078
      %v5128 = vunpack.c.l.b16 %v5000
      %v5129 = vunpack.c.l.b16 %v5001
      %v5130 = vunpack.c.l.b16 %v5002
      %v5131 = vunpack.c.l.b16 %v5003
      %v5132 = vunpack.c.l.b16 %v5004
      %v5133 = vunpack.c.l.b16 %v5005
      %v5134 = vunpack.c.l.b16 %v5006
      %v5135 = vunpack.c.l.b16 %v5007
      %v5136 = vunpack.c.l.b16 %v5008
      %v5137 = vunpack.c.l.b16 %v5009
      %v5138 = vunpack.c.l.b16 %v5010
      %v5139 = vunpack.c.l.b16 %v5011
      %v5140 = vunpack.c.l.b16 %v5012
      %v5141 = vunpack.c.l.b16 %v5013
      %v5142 = vunpack.c.l.b16 %v5014
      %v5143 = vunpack.c.l.b16 %v5015
      %v5144 = vpack.c.b16 %v5129, %v5128
      %v5145 = vpack.c.b16 %v5131, %v5130
      %v5146 = vpack.c.b16 %v5133, %v5132
      %v5147 = vpack.c.b16 %v5135, %v5134
      %v5148 = vpack.c.b16 %v5137, %v5136
      %v5149 = vpack.c.b16 %v5139, %v5138
      %v5150 = vpack.c.b16 %v5141, %v5140
      %v5151 = vpack.c.b16 %v5143, %v5142
      %5160 = vmatpush.bf16.msra.mxu0 %v5151
      %5161 = vmatpush.bf16.msra.mxu0 %v5150
      %5162 = vmatpush.bf16.msra.mxu0 %v5149
      %5163 = vmatpush.bf16.msra.mxu0 %v5148
      %5164 = vmatpush.bf16.msra.mxu0 %v5147
      %5165 = vmatpush.bf16.msra.mxu0 %v5146
      %5166 = vmatpush.bf16.msra.mxu0 %v5145
      %5167 = vmatpush.bf16.msra.mxu0 %v5144
      %5168 = vmatmul.bf16.gmra.mxu0 %v5080
      %v5169 = vpop.f32.mrf.mxu0
      %v5170 = vadd.f32 0.0, %v5169
      %v5171 = vpop.f32.mrf.mxu0
      %v5172 = vadd.f32 0.0, %v5171
      %5173 = vmatmul.bf16.gmra.mxu0 %v5081
      %v5174 = vpop.f32.mrf.mxu0
      %v5175 = vadd.f32 0.0, %v5174
      %v5176 = vpop.f32.mrf.mxu0
      %v5177 = vadd.f32 0.0, %v5176
      %5178 = vmatmul.bf16.gmra.mxu0 %v5082
      %v5179 = vpop.f32.mrf.mxu0
      %v5180 = vadd.f32 0.0, %v5179
      %v5181 = vpop.f32.mrf.mxu0
      %v5182 = vadd.f32 0.0, %v5181
      %5183 = vmatmul.bf16.gmra.mxu0 %v5083
      %v5184 = vpop.f32.mrf.mxu0
      %v5185 = vadd.f32 0.0, %v5184
      %v5186 = vpop.f32.mrf.mxu0
      %v5187 = vadd.f32 0.0, %v5186
      %5188 = vmatmul.bf16.gmra.mxu0 %v5084
      %v5189 = vpop.f32.mrf.mxu0
      %v5190 = vadd.f32 0.0, %v5189
      %v5191 = vpop.f32.mrf.mxu0
      %v5192 = vadd.f32 0.0, %v5191
      %5193 = vmatmul.bf16.gmra.mxu0 %v5085
      %v5194 = vpop.f32.mrf.mxu0
      %v5195 = vadd.f32 0.0, %v5194
      %v5196 = vpop.f32.mrf.mxu0
      %v5197 = vadd.f32 0.0, %v5196
      %5198 = vmatmul.bf16.gmra.mxu0 %v5086
      %v5199 = vpop.f32.mrf.mxu0
      %v5200 = vadd.f32 0.0, %v5199
      %v5201 = vpop.f32.mrf.mxu0
      %v5202 = vadd.f32 0.0, %v5201
      %5203 = vmatmul.bf16.gmra.mxu0 %v5087
      %v5204 = vpop.f32.mrf.mxu0
      %v5205 = vadd.f32 0.0, %v5204
      %v5206 = vpop.f32.mrf.mxu0
      %v5207 = vadd.f32 0.0, %v5206
      %5208 = vmatmul.bf16.gmra.mxu0 %v5088
      %v5209 = vpop.f32.mrf.mxu0
      %v5210 = vadd.f32 0.0, %v5209
      %v5211 = vpop.f32.mrf.mxu0
      %v5212 = vadd.f32 0.0, %v5211
      %5213 = vmatmul.bf16.gmra.mxu0 %v5089
      %v5214 = vpop.f32.mrf.mxu0
      %v5215 = vadd.f32 0.0, %v5214
      %v5216 = vpop.f32.mrf.mxu0
      %v5217 = vadd.f32 0.0, %v5216
      %5218 = vmatmul.bf16.gmra.mxu0 %v5090
      %v5219 = vpop.f32.mrf.mxu0
      %v5220 = vadd.f32 0.0, %v5219
      %v5221 = vpop.f32.mrf.mxu0
      %v5222 = vadd.f32 0.0, %v5221
      %5223 = vmatmul.bf16.gmra.mxu0 %v5091
      %v5224 = vpop.f32.mrf.mxu0
      %v5225 = vadd.f32 0.0, %v5224
      %v5226 = vpop.f32.mrf.mxu0
      %v5227 = vadd.f32 0.0, %v5226
      %5228 = vmatmul.bf16.gmra.mxu0 %v5092
      %v5229 = vpop.f32.mrf.mxu0
      %v5230 = vadd.f32 0.0, %v5229
      %v5231 = vpop.f32.mrf.mxu0
      %v5232 = vadd.f32 0.0, %v5231
      %5233 = vmatmul.bf16.gmra.mxu0 %v5093
      %v5234 = vpop.f32.mrf.mxu0
      %v5235 = vadd.f32 0.0, %v5234
      %v5236 = vpop.f32.mrf.mxu0
      %v5237 = vadd.f32 0.0, %v5236
      %5238 = vmatmul.bf16.gmra.mxu0 %v5094
      %v5239 = vpop.f32.mrf.mxu0
      %v5240 = vadd.f32 0.0, %v5239
      %v5241 = vpop.f32.mrf.mxu0
      %v5242 = vadd.f32 0.0, %v5241
      %5243 = vmatmul.bf16.gmra.mxu0 %v5095
      %v5244 = vpop.f32.mrf.mxu0
      %v5245 = vadd.f32 0.0, %v5244
      %v5246 = vpop.f32.mrf.mxu0
      %v5247 = vadd.f32 0.0, %v5246
      %5248 = vdwg.mxu0
      %v5281 = vunpack.c.l.b16 %v4919
      %v5282 = vunpack.c.l.b16 %v4920
      %v5283 = vunpack.c.l.b16 %v4921
      %v5284 = vunpack.c.l.b16 %v4922
      %v5285 = vunpack.c.l.b16 %v4923
      %v5286 = vunpack.c.l.b16 %v4924
      %v5287 = vunpack.c.l.b16 %v4925
      %v5288 = vunpack.c.l.b16 %v4926
      %v5289 = vunpack.c.l.b16 %v4927
      %v5290 = vunpack.c.l.b16 %v4928
      %v5291 = vunpack.c.l.b16 %v4929
      %v5292 = vunpack.c.l.b16 %v4930
      %v5293 = vunpack.c.l.b16 %v4931
      %v5294 = vunpack.c.l.b16 %v4932
      %v5295 = vunpack.c.l.b16 %v4933
      %v5296 = vunpack.c.l.b16 %v4934
      %v5297 = vunpack.c.l.b16 %v4935
      %v5298 = vunpack.c.l.b16 %v4936
      %v5299 = vunpack.c.l.b16 %v4937
      %v5300 = vunpack.c.l.b16 %v4938
      %v5301 = vunpack.c.l.b16 %v4939
      %v5302 = vunpack.c.l.b16 %v4940
      %v5303 = vunpack.c.l.b16 %v4941
      %v5304 = vunpack.c.l.b16 %v4942
      %v5305 = vunpack.c.l.b16 %v4943
      %v5306 = vunpack.c.l.b16 %v4944
      %v5307 = vunpack.c.l.b16 %v4945
      %v5308 = vunpack.c.l.b16 %v4946
      %v5309 = vunpack.c.l.b16 %v4947
      %v5310 = vunpack.c.l.b16 %v4948
      %v5311 = vunpack.c.l.b16 %v4949
      %v5312 = vunpack.c.l.b16 %v4950
      %v5313 = vpack.c.b16 %v5282, %v5281
      %v5314 = vpack.c.b16 %v5284, %v5283
      %v5315 = vpack.c.b16 %v5286, %v5285
      %v5316 = vpack.c.b16 %v5288, %v5287
      %v5317 = vpack.c.b16 %v5290, %v5289
      %v5318 = vpack.c.b16 %v5292, %v5291
      %v5319 = vpack.c.b16 %v5294, %v5293
      %v5320 = vpack.c.b16 %v5296, %v5295
      %v5321 = vpack.c.b16 %v5298, %v5297
      %v5322 = vpack.c.b16 %v5300, %v5299
      %v5323 = vpack.c.b16 %v5302, %v5301
      %v5324 = vpack.c.b16 %v5304, %v5303
      %v5325 = vpack.c.b16 %v5306, %v5305
      %v5326 = vpack.c.b16 %v5308, %v5307
      %v5327 = vpack.c.b16 %v5310, %v5309
      %v5328 = vpack.c.b16 %v5312, %v5311
      %v5361 = vunpack.c.l.b16 %v4951
      %v5362 = vunpack.c.l.b16 %v4952
      %v5363 = vunpack.c.l.b16 %v4953
      %v5364 = vunpack.c.l.b16 %v4954
      %v5365 = vunpack.c.l.b16 %v4955
      %v5366 = vunpack.c.l.b16 %v4956
      %v5367 = vunpack.c.l.b16 %v4957
      %v5368 = vunpack.c.l.b16 %v4958
      %v5369 = vunpack.c.l.b16 %v4959
      %v5370 = vunpack.c.l.b16 %v4960
      %v5371 = vunpack.c.l.b16 %v4961
      %v5372 = vunpack.c.l.b16 %v4962
      %v5373 = vunpack.c.l.b16 %v4963
      %v5374 = vunpack.c.l.b16 %v4964
      %v5375 = vunpack.c.l.b16 %v4965
      %v5376 = vunpack.c.l.b16 %v4966
      %v5377 = vpack.c.b16 %v5362, %v5361
      %v5378 = vpack.c.b16 %v5364, %v5363
      %v5379 = vpack.c.b16 %v5366, %v5365
      %v5380 = vpack.c.b16 %v5368, %v5367
      %v5381 = vpack.c.b16 %v5370, %v5369
      %v5382 = vpack.c.b16 %v5372, %v5371
      %v5383 = vpack.c.b16 %v5374, %v5373
      %v5384 = vpack.c.b16 %v5376, %v5375
      %5393 = vmatpush.bf16.msra.mxu0 %v5384
      %5394 = vmatpush.bf16.msra.mxu0 %v5383
      %5395 = vmatpush.bf16.msra.mxu0 %v5382
      %5396 = vmatpush.bf16.msra.mxu0 %v5381
      %5397 = vmatpush.bf16.msra.mxu0 %v5380
      %5398 = vmatpush.bf16.msra.mxu0 %v5379
      %5399 = vmatpush.bf16.msra.mxu0 %v5378
      %5400 = vmatpush.bf16.msra.mxu0 %v5377
      %5401 = vmatmul.bf16.gmra.mxu0 %v5313
      %v5402 = vpop.f32.mrf.mxu0
      %v5403 = vadd.f32 %v5170, %v5402
      %v5404 = vpop.f32.mrf.mxu0
      %v5405 = vadd.f32 %v5172, %v5404
      %5406 = vmatmul.bf16.gmra.mxu0 %v5314
      %v5407 = vpop.f32.mrf.mxu0
      %v5408 = vadd.f32 %v5175, %v5407
      %v5409 = vpop.f32.mrf.mxu0
      %v5410 = vadd.f32 %v5177, %v5409
      %5411 = vmatmul.bf16.gmra.mxu0 %v5315
      %v5412 = vpop.f32.mrf.mxu0
      %v5413 = vadd.f32 %v5180, %v5412
      %v5414 = vpop.f32.mrf.mxu0
      %v5415 = vadd.f32 %v5182, %v5414
      %5416 = vmatmul.bf16.gmra.mxu0 %v5316
      %v5417 = vpop.f32.mrf.mxu0
      %v5418 = vadd.f32 %v5185, %v5417
      %v5419 = vpop.f32.mrf.mxu0
      %v5420 = vadd.f32 %v5187, %v5419
      %5421 = vmatmul.bf16.gmra.mxu0 %v5317
      %v5422 = vpop.f32.mrf.mxu0
      %v5423 = vadd.f32 %v5190, %v5422
      %v5424 = vpop.f32.mrf.mxu0
      %v5425 = vadd.f32 %v5192, %v5424
      %5426 = vmatmul.bf16.gmra.mxu0 %v5318
      %v5427 = vpop.f32.mrf.mxu0
      %v5428 = vadd.f32 %v5195, %v5427
      %v5429 = vpop.f32.mrf.mxu0
      %v5430 = vadd.f32 %v5197, %v5429
      %5431 = vmatmul.bf16.gmra.mxu0 %v5319
      %v5432 = vpop.f32.mrf.mxu0
      %v5433 = vadd.f32 %v5200, %v5432
      %v5434 = vpop.f32.mrf.mxu0
      %v5435 = vadd.f32 %v5202, %v5434
      %5436 = vmatmul.bf16.gmra.mxu0 %v5320
      %v5437 = vpop.f32.mrf.mxu0
      %v5438 = vadd.f32 %v5205, %v5437
      %v5439 = vpop.f32.mrf.mxu0
      %v5440 = vadd.f32 %v5207, %v5439
      %5441 = vmatmul.bf16.gmra.mxu0 %v5321
      %v5442 = vpop.f32.mrf.mxu0
      %v5443 = vadd.f32 %v5210, %v5442
      %v5444 = vpop.f32.mrf.mxu0
      %v5445 = vadd.f32 %v5212, %v5444
      %5446 = vmatmul.bf16.gmra.mxu0 %v5322
      %v5447 = vpop.f32.mrf.mxu0
      %v5448 = vadd.f32 %v5215, %v5447
      %v5449 = vpop.f32.mrf.mxu0
      %v5450 = vadd.f32 %v5217, %v5449
      %5451 = vmatmul.bf16.gmra.mxu0 %v5323
      %v5452 = vpop.f32.mrf.mxu0
      %v5453 = vadd.f32 %v5220, %v5452
      %v5454 = vpop.f32.mrf.mxu0
      %v5455 = vadd.f32 %v5222, %v5454
      %5456 = vmatmul.bf16.gmra.mxu0 %v5324
      %v5457 = vpop.f32.mrf.mxu0
      %v5458 = vadd.f32 %v5225, %v5457
      %v5459 = vpop.f32.mrf.mxu0
      %v5460 = vadd.f32 %v5227, %v5459
      %5461 = vmatmul.bf16.gmra.mxu0 %v5325
      %v5462 = vpop.f32.mrf.mxu0
      %v5463 = vadd.f32 %v5230, %v5462
      %v5464 = vpop.f32.mrf.mxu0
      %v5465 = vadd.f32 %v5232, %v5464
      %5466 = vmatmul.bf16.gmra.mxu0 %v5326
      %v5467 = vpop.f32.mrf.mxu0
      %v5468 = vadd.f32 %v5235, %v5467
      %v5469 = vpop.f32.mrf.mxu0
      %v5470 = vadd.f32 %v5237, %v5469
      %5471 = vmatmul.bf16.gmra.mxu0 %v5327
      %v5472 = vpop.f32.mrf.mxu0
      %v5473 = vadd.f32 %v5240, %v5472
      %v5474 = vpop.f32.mrf.mxu0
      %v5475 = vadd.f32 %v5242, %v5474
      %5476 = vmatmul.bf16.gmra.mxu0 %v5328
      %v5477 = vpop.f32.mrf.mxu0
      %v5478 = vadd.f32 %v5245, %v5477
      %v5479 = vpop.f32.mrf.mxu0
      %v5480 = vadd.f32 %v5247, %v5479
      %5481 = vdwg.mxu0
      %v5482 = vld [vmem:[%s1234] sm:$0xf]
      %v5483 = vld [vmem:[%s1234 + $0x4] sm:$0xf]
      %v5484 = vld [vmem:[%s1234 + $0x8] sm:$0xf]
      %v5485 = vld [vmem:[%s1234 + $0xc] sm:$0xf]
      %v5486 = vld [vmem:[%s1234 + $0x10] sm:$0xf]
      %v5487 = vld [vmem:[%s1234 + $0x14] sm:$0xf]
      %v5488 = vld [vmem:[%s1234 + $0x18] sm:$0xf]
      %v5489 = vld [vmem:[%s1234 + $0x1c] sm:$0xf]
      %v5490 = vld [vmem:[%s1234 + $0x20] sm:$0xf]
      %v5491 = vld [vmem:[%s1234 + $0x24] sm:$0xf]
      %v5492 = vld [vmem:[%s1234 + $0x28] sm:$0xf]
      %v5493 = vld [vmem:[%s1234 + $0x2c] sm:$0xf]
      %v5494 = vld [vmem:[%s1234 + $0x30] sm:$0xf]
      %v5495 = vld [vmem:[%s1234 + $0x34] sm:$0xf]
      %v5496 = vld [vmem:[%s1234 + $0x38] sm:$0xf]
      %v5497 = vld [vmem:[%s1234 + $0x3c] sm:$0xf]
      %v5498 = vld [vmem:[%s1234 + $0x40] sm:$0xf]
      %v5499 = vld [vmem:[%s1234 + $0x44] sm:$0xf]
      %v5500 = vld [vmem:[%s1234 + $0x48] sm:$0xf]
      %v5501 = vld [vmem:[%s1234 + $0x4c] sm:$0xf]
      %v5502 = vld [vmem:[%s1234 + $0x50] sm:$0xf]
      %v5503 = vld [vmem:[%s1234 + $0x54] sm:$0xf]
      %v5504 = vld [vmem:[%s1234 + $0x58] sm:$0xf]
      %v5505 = vld [vmem:[%s1234 + $0x5c] sm:$0xf]
      %v5506 = vld [vmem:[%s1234 + $0x60] sm:$0xf]
      %v5507 = vld [vmem:[%s1234 + $0x64] sm:$0xf]
      %v5508 = vld [vmem:[%s1234 + $0x68] sm:$0xf]
      %v5509 = vld [vmem:[%s1234 + $0x6c] sm:$0xf]
      %v5510 = vld [vmem:[%s1234 + $0x70] sm:$0xf]
      %v5511 = vld [vmem:[%s1234 + $0x74] sm:$0xf]
      %v5512 = vld [vmem:[%s1234 + $0x78] sm:$0xf]
      %v5513 = vld [vmem:[%s1234 + $0x7c] sm:$0xf]
      %s5514 = scalar_lea.vmem %s5, 128
      %v5515 = vld [vmem:[%s5514] sm:$0xf]
      %v5516 = vld [vmem:[%s5514 + $0x4] sm:$0xf]
      %v5517 = vld [vmem:[%s5514 + $0x8] sm:$0xf]
      %v5518 = vld [vmem:[%s5514 + $0xc] sm:$0xf]
      %v5519 = vld [vmem:[%s5514 + $0x10] sm:$0xf]
      %v5520 = vld [vmem:[%s5514 + $0x14] sm:$0xf]
      %v5521 = vld [vmem:[%s5514 + $0x18] sm:$0xf]
      %v5522 = vld [vmem:[%s5514 + $0x1c] sm:$0xf]
      %v5523 = vld [vmem:[%s5514 + $0x20] sm:$0xf]
      %v5524 = vld [vmem:[%s5514 + $0x24] sm:$0xf]
      %v5525 = vld [vmem:[%s5514 + $0x28] sm:$0xf]
      %v5526 = vld [vmem:[%s5514 + $0x2c] sm:$0xf]
      %v5527 = vld [vmem:[%s5514 + $0x30] sm:$0xf]
      %v5528 = vld [vmem:[%s5514 + $0x34] sm:$0xf]
      %v5529 = vld [vmem:[%s5514 + $0x38] sm:$0xf]
      %v5530 = vld [vmem:[%s5514 + $0x3c] sm:$0xf]
      %v5563 = vunpack.c.l.b16 %v5482
      %v5564 = vunpack.c.l.b16 %v5483
      %v5565 = vunpack.c.l.b16 %v5484
      %v5566 = vunpack.c.l.b16 %v5485
      %v5567 = vunpack.c.l.b16 %v5486
      %v5568 = vunpack.c.l.b16 %v5487
      %v5569 = vunpack.c.l.b16 %v5488
      %v5570 = vunpack.c.l.b16 %v5489
      %v5571 = vunpack.c.l.b16 %v5490
      %v5572 = vunpack.c.l.b16 %v5491
      %v5573 = vunpack.c.l.b16 %v5492
      %v5574 = vunpack.c.l.b16 %v5493
      %v5575 = vunpack.c.l.b16 %v5494
      %v5576 = vunpack.c.l.b16 %v5495
      %v5577 = vunpack.c.l.b16 %v5496
      %v5578 = vunpack.c.l.b16 %v5497
      %v5579 = vunpack.c.l.b16 %v5498
      %v5580 = vunpack.c.l.b16 %v5499
      %v5581 = vunpack.c.l.b16 %v5500
      %v5582 = vunpack.c.l.b16 %v5501
      %v5583 = vunpack.c.l.b16 %v5502
      %v5584 = vunpack.c.l.b16 %v5503
      %v5585 = vunpack.c.l.b16 %v5504
      %v5586 = vunpack.c.l.b16 %v5505
      %v5587 = vunpack.c.l.b16 %v5506
      %v5588 = vunpack.c.l.b16 %v5507
      %v5589 = vunpack.c.l.b16 %v5508
      %v5590 = vunpack.c.l.b16 %v5509
      %v5591 = vunpack.c.l.b16 %v5510
      %v5592 = vunpack.c.l.b16 %v5511
      %v5593 = vunpack.c.l.b16 %v5512
      %v5594 = vunpack.c.l.b16 %v5513
      %v5595 = vpack.c.b16 %v5564, %v5563
      %v5596 = vpack.c.b16 %v5566, %v5565
      %v5597 = vpack.c.b16 %v5568, %v5567
      %v5598 = vpack.c.b16 %v5570, %v5569
      %v5599 = vpack.c.b16 %v5572, %v5571
      %v5600 = vpack.c.b16 %v5574, %v5573
      %v5601 = vpack.c.b16 %v5576, %v5575
      %v5602 = vpack.c.b16 %v5578, %v5577
      %v5603 = vpack.c.b16 %v5580, %v5579
      %v5604 = vpack.c.b16 %v5582, %v5581
      %v5605 = vpack.c.b16 %v5584, %v5583
      %v5606 = vpack.c.b16 %v5586, %v5585
      %v5607 = vpack.c.b16 %v5588, %v5587
      %v5608 = vpack.c.b16 %v5590, %v5589
      %v5609 = vpack.c.b16 %v5592, %v5591
      %v5610 = vpack.c.b16 %v5594, %v5593
      %v5643 = vunpack.c.l.b16 %v5515
      %v5644 = vunpack.c.l.b16 %v5516
      %v5645 = vunpack.c.l.b16 %v5517
      %v5646 = vunpack.c.l.b16 %v5518
      %v5647 = vunpack.c.l.b16 %v5519
      %v5648 = vunpack.c.l.b16 %v5520
      %v5649 = vunpack.c.l.b16 %v5521
      %v5650 = vunpack.c.l.b16 %v5522
      %v5651 = vunpack.c.l.b16 %v5523
      %v5652 = vunpack.c.l.b16 %v5524
      %v5653 = vunpack.c.l.b16 %v5525
      %v5654 = vunpack.c.l.b16 %v5526
      %v5655 = vunpack.c.l.b16 %v5527
      %v5656 = vunpack.c.l.b16 %v5528
      %v5657 = vunpack.c.l.b16 %v5529
      %v5658 = vunpack.c.l.b16 %v5530
      %v5659 = vpack.c.b16 %v5644, %v5643
      %v5660 = vpack.c.b16 %v5646, %v5645
      %v5661 = vpack.c.b16 %v5648, %v5647
      %v5662 = vpack.c.b16 %v5650, %v5649
      %v5663 = vpack.c.b16 %v5652, %v5651
      %v5664 = vpack.c.b16 %v5654, %v5653
      %v5665 = vpack.c.b16 %v5656, %v5655
      %v5666 = vpack.c.b16 %v5658, %v5657
      %5675 = vmatpush.bf16.msra.mxu0 %v5666
      %5676 = vmatpush.bf16.msra.mxu0 %v5665
      %5677 = vmatpush.bf16.msra.mxu0 %v5664
      %5678 = vmatpush.bf16.msra.mxu0 %v5663
      %5679 = vmatpush.bf16.msra.mxu0 %v5662
      %5680 = vmatpush.bf16.msra.mxu0 %v5661
      %5681 = vmatpush.bf16.msra.mxu0 %v5660
      %5682 = vmatpush.bf16.msra.mxu0 %v5659
      %5683 = vmatmul.bf16.gmra.mxu0 %v5595
      %v5684 = vpop.f32.mrf.mxu0
      %v5685 = vadd.f32 0.0, %v5684
      %v5686 = vpop.f32.mrf.mxu0
      %v5687 = vadd.f32 0.0, %v5686
      %5688 = vmatmul.bf16.gmra.mxu0 %v5596
      %v5689 = vpop.f32.mrf.mxu0
      %v5690 = vadd.f32 0.0, %v5689
      %v5691 = vpop.f32.mrf.mxu0
      %v5692 = vadd.f32 0.0, %v5691
      %5693 = vmatmul.bf16.gmra.mxu0 %v5597
      %v5694 = vpop.f32.mrf.mxu0
      %v5695 = vadd.f32 0.0, %v5694
      %v5696 = vpop.f32.mrf.mxu0
      %v5697 = vadd.f32 0.0, %v5696
      %5698 = vmatmul.bf16.gmra.mxu0 %v5598
      %v5699 = vpop.f32.mrf.mxu0
      %v5700 = vadd.f32 0.0, %v5699
      %v5701 = vpop.f32.mrf.mxu0
      %v5702 = vadd.f32 0.0, %v5701
      %5703 = vmatmul.bf16.gmra.mxu0 %v5599
      %v5704 = vpop.f32.mrf.mxu0
      %v5705 = vadd.f32 0.0, %v5704
      %v5706 = vpop.f32.mrf.mxu0
      %v5707 = vadd.f32 0.0, %v5706
      %5708 = vmatmul.bf16.gmra.mxu0 %v5600
      %v5709 = vpop.f32.mrf.mxu0
      %v5710 = vadd.f32 0.0, %v5709
      %v5711 = vpop.f32.mrf.mxu0
      %v5712 = vadd.f32 0.0, %v5711
      %5713 = vmatmul.bf16.gmra.mxu0 %v5601
      %v5714 = vpop.f32.mrf.mxu0
      %v5715 = vadd.f32 0.0, %v5714
      %v5716 = vpop.f32.mrf.mxu0
      %v5717 = vadd.f32 0.0, %v5716
      %5718 = vmatmul.bf16.gmra.mxu0 %v5602
      %v5719 = vpop.f32.mrf.mxu0
      %v5720 = vadd.f32 0.0, %v5719
      %v5721 = vpop.f32.mrf.mxu0
      %v5722 = vadd.f32 0.0, %v5721
      %5723 = vmatmul.bf16.gmra.mxu0 %v5603
      %v5724 = vpop.f32.mrf.mxu0
      %v5725 = vadd.f32 0.0, %v5724
      %v5726 = vpop.f32.mrf.mxu0
      %v5727 = vadd.f32 0.0, %v5726
      %5728 = vmatmul.bf16.gmra.mxu0 %v5604
      %v5729 = vpop.f32.mrf.mxu0
      %v5730 = vadd.f32 0.0, %v5729
      %v5731 = vpop.f32.mrf.mxu0
      %v5732 = vadd.f32 0.0, %v5731
      %5733 = vmatmul.bf16.gmra.mxu0 %v5605
      %v5734 = vpop.f32.mrf.mxu0
      %v5735 = vadd.f32 0.0, %v5734
      %v5736 = vpop.f32.mrf.mxu0
      %v5737 = vadd.f32 0.0, %v5736
      %5738 = vmatmul.bf16.gmra.mxu0 %v5606
      %v5739 = vpop.f32.mrf.mxu0
      %v5740 = vadd.f32 0.0, %v5739
      %v5741 = vpop.f32.mrf.mxu0
      %v5742 = vadd.f32 0.0, %v5741
      %5743 = vmatmul.bf16.gmra.mxu0 %v5607
      %v5744 = vpop.f32.mrf.mxu0
      %v5745 = vadd.f32 0.0, %v5744
      %v5746 = vpop.f32.mrf.mxu0
      %v5747 = vadd.f32 0.0, %v5746
      %5748 = vmatmul.bf16.gmra.mxu0 %v5608
      %v5749 = vpop.f32.mrf.mxu0
      %v5750 = vadd.f32 0.0, %v5749
      %v5751 = vpop.f32.mrf.mxu0
      %v5752 = vadd.f32 0.0, %v5751
      %5753 = vmatmul.bf16.gmra.mxu0 %v5609
      %v5754 = vpop.f32.mrf.mxu0
      %v5755 = vadd.f32 0.0, %v5754
      %v5756 = vpop.f32.mrf.mxu0
      %v5757 = vadd.f32 0.0, %v5756
      %5758 = vmatmul.bf16.gmra.mxu0 %v5610
      %v5759 = vpop.f32.mrf.mxu0
      %v5760 = vadd.f32 0.0, %v5759
      %v5761 = vpop.f32.mrf.mxu0
      %v5762 = vadd.f32 0.0, %v5761
      %5763 = vdwg.mxu0
      %v5764 = vadd.f32 %v5403, %v5685
      %v5765 = vadd.f32 %v5405, %v5687
      %v5766 = vadd.f32 %v5408, %v5690
      %v5767 = vadd.f32 %v5410, %v5692
      %v5768 = vadd.f32 %v5413, %v5695
      %v5769 = vadd.f32 %v5415, %v5697
      %v5770 = vadd.f32 %v5418, %v5700
      %v5771 = vadd.f32 %v5420, %v5702
      %v5772 = vadd.f32 %v5423, %v5705
      %v5773 = vadd.f32 %v5425, %v5707
      %v5774 = vadd.f32 %v5428, %v5710
      %v5775 = vadd.f32 %v5430, %v5712
      %v5776 = vadd.f32 %v5433, %v5715
      %v5777 = vadd.f32 %v5435, %v5717
      %v5778 = vadd.f32 %v5438, %v5720
      %v5779 = vadd.f32 %v5440, %v5722
      %v5780 = vadd.f32 %v5443, %v5725
      %v5781 = vadd.f32 %v5445, %v5727
      %v5782 = vadd.f32 %v5448, %v5730
      %v5783 = vadd.f32 %v5450, %v5732
      %v5784 = vadd.f32 %v5453, %v5735
      %v5785 = vadd.f32 %v5455, %v5737
      %v5786 = vadd.f32 %v5458, %v5740
      %v5787 = vadd.f32 %v5460, %v5742
      %v5788 = vadd.f32 %v5463, %v5745
      %v5789 = vadd.f32 %v5465, %v5747
      %v5790 = vadd.f32 %v5468, %v5750
      %v5791 = vadd.f32 %v5470, %v5752
      %v5792 = vadd.f32 %v5473, %v5755
      %v5793 = vadd.f32 %v5475, %v5757
      %v5794 = vadd.f32 %v5478, %v5760
      %v5795 = vadd.f32 %v5480, %v5762
      %v5796 = vld [vmem:[%s2148] sm:$0xf]
      %v5797 = vld [vmem:[%s2148 + $0x4] sm:$0xf]
      %v5798 = vld [vmem:[%s2148 + $0x8] sm:$0xf]
      %v5799 = vld [vmem:[%s2148 + $0xc] sm:$0xf]
      %v5800 = vld [vmem:[%s2148 + $0x10] sm:$0xf]
      %v5801 = vld [vmem:[%s2148 + $0x14] sm:$0xf]
      %v5802 = vld [vmem:[%s2148 + $0x18] sm:$0xf]
      %v5803 = vld [vmem:[%s2148 + $0x1c] sm:$0xf]
      %v5804 = vld [vmem:[%s2148 + $0x20] sm:$0xf]
      %v5805 = vld [vmem:[%s2148 + $0x24] sm:$0xf]
      %v5806 = vld [vmem:[%s2148 + $0x28] sm:$0xf]
      %v5807 = vld [vmem:[%s2148 + $0x2c] sm:$0xf]
      %v5808 = vld [vmem:[%s2148 + $0x30] sm:$0xf]
      %v5809 = vld [vmem:[%s2148 + $0x34] sm:$0xf]
      %v5810 = vld [vmem:[%s2148 + $0x38] sm:$0xf]
      %v5811 = vld [vmem:[%s2148 + $0x3c] sm:$0xf]
      %v5812 = vld [vmem:[%s2148 + $0x40] sm:$0xf]
      %v5813 = vld [vmem:[%s2148 + $0x44] sm:$0xf]
      %v5814 = vld [vmem:[%s2148 + $0x48] sm:$0xf]
      %v5815 = vld [vmem:[%s2148 + $0x4c] sm:$0xf]
      %v5816 = vld [vmem:[%s2148 + $0x50] sm:$0xf]
      %v5817 = vld [vmem:[%s2148 + $0x54] sm:$0xf]
      %v5818 = vld [vmem:[%s2148 + $0x58] sm:$0xf]
      %v5819 = vld [vmem:[%s2148 + $0x5c] sm:$0xf]
      %v5820 = vld [vmem:[%s2148 + $0x60] sm:$0xf]
      %v5821 = vld [vmem:[%s2148 + $0x64] sm:$0xf]
      %v5822 = vld [vmem:[%s2148 + $0x68] sm:$0xf]
      %v5823 = vld [vmem:[%s2148 + $0x6c] sm:$0xf]
      %v5824 = vld [vmem:[%s2148 + $0x70] sm:$0xf]
      %v5825 = vld [vmem:[%s2148 + $0x74] sm:$0xf]
      %v5826 = vld [vmem:[%s2148 + $0x78] sm:$0xf]
      %v5827 = vld [vmem:[%s2148 + $0x7c] sm:$0xf]
      %s5828 = scalar_lea.vmem %s5, 192
      %v5829 = vld [vmem:[%s5828] sm:$0xf]
      %v5830 = vld [vmem:[%s5828 + $0x4] sm:$0xf]
      %v5831 = vld [vmem:[%s5828 + $0x8] sm:$0xf]
      %v5832 = vld [vmem:[%s5828 + $0xc] sm:$0xf]
      %v5833 = vld [vmem:[%s5828 + $0x10] sm:$0xf]
      %v5834 = vld [vmem:[%s5828 + $0x14] sm:$0xf]
      %v5835 = vld [vmem:[%s5828 + $0x18] sm:$0xf]
      %v5836 = vld [vmem:[%s5828 + $0x1c] sm:$0xf]
      %v5837 = vld [vmem:[%s5828 + $0x20] sm:$0xf]
      %v5838 = vld [vmem:[%s5828 + $0x24] sm:$0xf]
      %v5839 = vld [vmem:[%s5828 + $0x28] sm:$0xf]
      %v5840 = vld [vmem:[%s5828 + $0x2c] sm:$0xf]
      %v5841 = vld [vmem:[%s5828 + $0x30] sm:$0xf]
      %v5842 = vld [vmem:[%s5828 + $0x34] sm:$0xf]
      %v5843 = vld [vmem:[%s5828 + $0x38] sm:$0xf]
      %v5844 = vld [vmem:[%s5828 + $0x3c] sm:$0xf]
      %v5877 = vunpack.c.l.b16 %v5796
      %v5878 = vunpack.c.l.b16 %v5797
      %v5879 = vunpack.c.l.b16 %v5798
      %v5880 = vunpack.c.l.b16 %v5799
      %v5881 = vunpack.c.l.b16 %v5800
      %v5882 = vunpack.c.l.b16 %v5801
      %v5883 = vunpack.c.l.b16 %v5802
      %v5884 = vunpack.c.l.b16 %v5803
      %v5885 = vunpack.c.l.b16 %v5804
      %v5886 = vunpack.c.l.b16 %v5805
      %v5887 = vunpack.c.l.b16 %v5806
      %v5888 = vunpack.c.l.b16 %v5807
      %v5889 = vunpack.c.l.b16 %v5808
      %v5890 = vunpack.c.l.b16 %v5809
      %v5891 = vunpack.c.l.b16 %v5810
      %v5892 = vunpack.c.l.b16 %v5811
      %v5893 = vunpack.c.l.b16 %v5812
      %v5894 = vunpack.c.l.b16 %v5813
      %v5895 = vunpack.c.l.b16 %v5814
      %v5896 = vunpack.c.l.b16 %v5815
      %v5897 = vunpack.c.l.b16 %v5816
      %v5898 = vunpack.c.l.b16 %v5817
      %v5899 = vunpack.c.l.b16 %v5818
      %v5900 = vunpack.c.l.b16 %v5819
      %v5901 = vunpack.c.l.b16 %v5820
      %v5902 = vunpack.c.l.b16 %v5821
      %v5903 = vunpack.c.l.b16 %v5822
      %v5904 = vunpack.c.l.b16 %v5823
      %v5905 = vunpack.c.l.b16 %v5824
      %v5906 = vunpack.c.l.b16 %v5825
      %v5907 = vunpack.c.l.b16 %v5826
      %v5908 = vunpack.c.l.b16 %v5827
      %v5909 = vpack.c.b16 %v5878, %v5877
      %v5910 = vpack.c.b16 %v5880, %v5879
      %v5911 = vpack.c.b16 %v5882, %v5881
      %v5912 = vpack.c.b16 %v5884, %v5883
      %v5913 = vpack.c.b16 %v5886, %v5885
      %v5914 = vpack.c.b16 %v5888, %v5887
      %v5915 = vpack.c.b16 %v5890, %v5889
      %v5916 = vpack.c.b16 %v5892, %v5891
      %v5917 = vpack.c.b16 %v5894, %v5893
      %v5918 = vpack.c.b16 %v5896, %v5895
      %v5919 = vpack.c.b16 %v5898, %v5897
      %v5920 = vpack.c.b16 %v5900, %v5899
      %v5921 = vpack.c.b16 %v5902, %v5901
      %v5922 = vpack.c.b16 %v5904, %v5903
      %v5923 = vpack.c.b16 %v5906, %v5905
      %v5924 = vpack.c.b16 %v5908, %v5907
      %v5957 = vunpack.c.l.b16 %v5829
      %v5958 = vunpack.c.l.b16 %v5830
      %v5959 = vunpack.c.l.b16 %v5831
      %v5960 = vunpack.c.l.b16 %v5832
      %v5961 = vunpack.c.l.b16 %v5833
      %v5962 = vunpack.c.l.b16 %v5834
      %v5963 = vunpack.c.l.b16 %v5835
      %v5964 = vunpack.c.l.b16 %v5836
      %v5965 = vunpack.c.l.b16 %v5837
      %v5966 = vunpack.c.l.b16 %v5838
      %v5967 = vunpack.c.l.b16 %v5839
      %v5968 = vunpack.c.l.b16 %v5840
      %v5969 = vunpack.c.l.b16 %v5841
      %v5970 = vunpack.c.l.b16 %v5842
      %v5971 = vunpack.c.l.b16 %v5843
      %v5972 = vunpack.c.l.b16 %v5844
      %v5973 = vpack.c.b16 %v5958, %v5957
      %v5974 = vpack.c.b16 %v5960, %v5959
      %v5975 = vpack.c.b16 %v5962, %v5961
      %v5976 = vpack.c.b16 %v5964, %v5963
      %v5977 = vpack.c.b16 %v5966, %v5965
      %v5978 = vpack.c.b16 %v5968, %v5967
      %v5979 = vpack.c.b16 %v5970, %v5969
      %v5980 = vpack.c.b16 %v5972, %v5971
      %5989 = vmatpush.bf16.msra.mxu0 %v5980
      %5990 = vmatpush.bf16.msra.mxu0 %v5979
      %5991 = vmatpush.bf16.msra.mxu0 %v5978
      %5992 = vmatpush.bf16.msra.mxu0 %v5977
      %5993 = vmatpush.bf16.msra.mxu0 %v5976
      %5994 = vmatpush.bf16.msra.mxu0 %v5975
      %5995 = vmatpush.bf16.msra.mxu0 %v5974
      %5996 = vmatpush.bf16.msra.mxu0 %v5973
      %5997 = vmatmul.bf16.gmra.mxu0 %v5909
      %v5998 = vpop.f32.mrf.mxu0
      %v5999 = vadd.f32 0.0, %v5998
      %v6000 = vpop.f32.mrf.mxu0
      %v6001 = vadd.f32 0.0, %v6000
      %6002 = vmatmul.bf16.gmra.mxu0 %v5910
      %v6003 = vpop.f32.mrf.mxu0
      %v6004 = vadd.f32 0.0, %v6003
      %v6005 = vpop.f32.mrf.mxu0
      %v6006 = vadd.f32 0.0, %v6005
      %6007 = vmatmul.bf16.gmra.mxu0 %v5911
      %v6008 = vpop.f32.mrf.mxu0
      %v6009 = vadd.f32 0.0, %v6008
      %v6010 = vpop.f32.mrf.mxu0
      %v6011 = vadd.f32 0.0, %v6010
      %6012 = vmatmul.bf16.gmra.mxu0 %v5912
      %v6013 = vpop.f32.mrf.mxu0
      %v6014 = vadd.f32 0.0, %v6013
      %v6015 = vpop.f32.mrf.mxu0
      %v6016 = vadd.f32 0.0, %v6015
      %6017 = vmatmul.bf16.gmra.mxu0 %v5913
      %v6018 = vpop.f32.mrf.mxu0
      %v6019 = vadd.f32 0.0, %v6018
      %v6020 = vpop.f32.mrf.mxu0
      %v6021 = vadd.f32 0.0, %v6020
      %6022 = vmatmul.bf16.gmra.mxu0 %v5914
      %v6023 = vpop.f32.mrf.mxu0
      %v6024 = vadd.f32 0.0, %v6023
      %v6025 = vpop.f32.mrf.mxu0
      %v6026 = vadd.f32 0.0, %v6025
      %6027 = vmatmul.bf16.gmra.mxu0 %v5915
      %v6028 = vpop.f32.mrf.mxu0
      %v6029 = vadd.f32 0.0, %v6028
      %v6030 = vpop.f32.mrf.mxu0
      %v6031 = vadd.f32 0.0, %v6030
      %6032 = vmatmul.bf16.gmra.mxu0 %v5916
      %v6033 = vpop.f32.mrf.mxu0
      %v6034 = vadd.f32 0.0, %v6033
      %v6035 = vpop.f32.mrf.mxu0
      %v6036 = vadd.f32 0.0, %v6035
      %6037 = vmatmul.bf16.gmra.mxu0 %v5917
      %v6038 = vpop.f32.mrf.mxu0
      %v6039 = vadd.f32 0.0, %v6038
      %v6040 = vpop.f32.mrf.mxu0
      %v6041 = vadd.f32 0.0, %v6040
      %6042 = vmatmul.bf16.gmra.mxu0 %v5918
      %v6043 = vpop.f32.mrf.mxu0
      %v6044 = vadd.f32 0.0, %v6043
      %v6045 = vpop.f32.mrf.mxu0
      %v6046 = vadd.f32 0.0, %v6045
      %6047 = vmatmul.bf16.gmra.mxu0 %v5919
      %v6048 = vpop.f32.mrf.mxu0
      %v6049 = vadd.f32 0.0, %v6048
      %v6050 = vpop.f32.mrf.mxu0
      %v6051 = vadd.f32 0.0, %v6050
      %6052 = vmatmul.bf16.gmra.mxu0 %v5920
      %v6053 = vpop.f32.mrf.mxu0
      %v6054 = vadd.f32 0.0, %v6053
      %v6055 = vpop.f32.mrf.mxu0
      %v6056 = vadd.f32 0.0, %v6055
      %6057 = vmatmul.bf16.gmra.mxu0 %v5921
      %v6058 = vpop.f32.mrf.mxu0
      %v6059 = vadd.f32 0.0, %v6058
      %v6060 = vpop.f32.mrf.mxu0
      %v6061 = vadd.f32 0.0, %v6060
      %6062 = vmatmul.bf16.gmra.mxu0 %v5922
      %v6063 = vpop.f32.mrf.mxu0
      %v6064 = vadd.f32 0.0, %v6063
      %v6065 = vpop.f32.mrf.mxu0
      %v6066 = vadd.f32 0.0, %v6065
      %6067 = vmatmul.bf16.gmra.mxu0 %v5923
      %v6068 = vpop.f32.mrf.mxu0
      %v6069 = vadd.f32 0.0, %v6068
      %v6070 = vpop.f32.mrf.mxu0
      %v6071 = vadd.f32 0.0, %v6070
      %6072 = vmatmul.bf16.gmra.mxu0 %v5924
      %v6073 = vpop.f32.mrf.mxu0
      %v6074 = vadd.f32 0.0, %v6073
      %v6075 = vpop.f32.mrf.mxu0
      %v6076 = vadd.f32 0.0, %v6075
      %6077 = vdwg.mxu0
      %v6078 = vadd.f32 %v5764, %v5999
      %v6079 = vadd.f32 %v5765, %v6001
      %v6080 = vadd.f32 %v5766, %v6004
      %v6081 = vadd.f32 %v5767, %v6006
      %v6082 = vadd.f32 %v5768, %v6009
      %v6083 = vadd.f32 %v5769, %v6011
      %v6084 = vadd.f32 %v5770, %v6014
      %v6085 = vadd.f32 %v5771, %v6016
      %v6086 = vadd.f32 %v5772, %v6019
      %v6087 = vadd.f32 %v5773, %v6021
      %v6088 = vadd.f32 %v5774, %v6024
      %v6089 = vadd.f32 %v5775, %v6026
      %v6090 = vadd.f32 %v5776, %v6029
      %v6091 = vadd.f32 %v5777, %v6031
      %v6092 = vadd.f32 %v5778, %v6034
      %v6093 = vadd.f32 %v5779, %v6036
      %v6094 = vadd.f32 %v5780, %v6039
      %v6095 = vadd.f32 %v5781, %v6041
      %v6096 = vadd.f32 %v5782, %v6044
      %v6097 = vadd.f32 %v5783, %v6046
      %v6098 = vadd.f32 %v5784, %v6049
      %v6099 = vadd.f32 %v5785, %v6051
      %v6100 = vadd.f32 %v5786, %v6054
      %v6101 = vadd.f32 %v5787, %v6056
      %v6102 = vadd.f32 %v5788, %v6059
      %v6103 = vadd.f32 %v5789, %v6061
      %v6104 = vadd.f32 %v5790, %v6064
      %v6105 = vadd.f32 %v5791, %v6066
      %v6106 = vadd.f32 %v5792, %v6069
      %v6107 = vadd.f32 %v5793, %v6071
      %v6108 = vadd.f32 %v5794, %v6074
      %v6109 = vadd.f32 %v5795, %v6076
      %v6110 = vld [vmem:[%s2463] sm:$0xf]
      %v6111 = vld [vmem:[%s2463 + $0x4] sm:$0xf]
      %v6112 = vld [vmem:[%s2463 + $0x8] sm:$0xf]
      %v6113 = vld [vmem:[%s2463 + $0xc] sm:$0xf]
      %v6114 = vld [vmem:[%s2463 + $0x10] sm:$0xf]
      %v6115 = vld [vmem:[%s2463 + $0x14] sm:$0xf]
      %v6116 = vld [vmem:[%s2463 + $0x18] sm:$0xf]
      %v6117 = vld [vmem:[%s2463 + $0x1c] sm:$0xf]
      %v6118 = vld [vmem:[%s2463 + $0x20] sm:$0xf]
      %v6119 = vld [vmem:[%s2463 + $0x24] sm:$0xf]
      %v6120 = vld [vmem:[%s2463 + $0x28] sm:$0xf]
      %v6121 = vld [vmem:[%s2463 + $0x2c] sm:$0xf]
      %v6122 = vld [vmem:[%s2463 + $0x30] sm:$0xf]
      %v6123 = vld [vmem:[%s2463 + $0x34] sm:$0xf]
      %v6124 = vld [vmem:[%s2463 + $0x38] sm:$0xf]
      %v6125 = vld [vmem:[%s2463 + $0x3c] sm:$0xf]
      %v6126 = vld [vmem:[%s2463 + $0x40] sm:$0xf]
      %v6127 = vld [vmem:[%s2463 + $0x44] sm:$0xf]
      %v6128 = vld [vmem:[%s2463 + $0x48] sm:$0xf]
      %v6129 = vld [vmem:[%s2463 + $0x4c] sm:$0xf]
      %v6130 = vld [vmem:[%s2463 + $0x50] sm:$0xf]
      %v6131 = vld [vmem:[%s2463 + $0x54] sm:$0xf]
      %v6132 = vld [vmem:[%s2463 + $0x58] sm:$0xf]
      %v6133 = vld [vmem:[%s2463 + $0x5c] sm:$0xf]
      %v6134 = vld [vmem:[%s2463 + $0x60] sm:$0xf]
      %v6135 = vld [vmem:[%s2463 + $0x64] sm:$0xf]
      %v6136 = vld [vmem:[%s2463 + $0x68] sm:$0xf]
      %v6137 = vld [vmem:[%s2463 + $0x6c] sm:$0xf]
      %v6138 = vld [vmem:[%s2463 + $0x70] sm:$0xf]
      %v6139 = vld [vmem:[%s2463 + $0x74] sm:$0xf]
      %v6140 = vld [vmem:[%s2463 + $0x78] sm:$0xf]
      %v6141 = vld [vmem:[%s2463 + $0x7c] sm:$0xf]
      %s6142 = scalar_lea.vmem %s5, 256
      %v6143 = vld [vmem:[%s6142] sm:$0xf]
      %v6144 = vld [vmem:[%s6142 + $0x4] sm:$0xf]
      %v6145 = vld [vmem:[%s6142 + $0x8] sm:$0xf]
      %v6146 = vld [vmem:[%s6142 + $0xc] sm:$0xf]
      %v6147 = vld [vmem:[%s6142 + $0x10] sm:$0xf]
      %v6148 = vld [vmem:[%s6142 + $0x14] sm:$0xf]
      %v6149 = vld [vmem:[%s6142 + $0x18] sm:$0xf]
      %v6150 = vld [vmem:[%s6142 + $0x1c] sm:$0xf]
      %v6151 = vld [vmem:[%s6142 + $0x20] sm:$0xf]
      %v6152 = vld [vmem:[%s6142 + $0x24] sm:$0xf]
      %v6153 = vld [vmem:[%s6142 + $0x28] sm:$0xf]
      %v6154 = vld [vmem:[%s6142 + $0x2c] sm:$0xf]
      %v6155 = vld [vmem:[%s6142 + $0x30] sm:$0xf]
      %v6156 = vld [vmem:[%s6142 + $0x34] sm:$0xf]
      %v6157 = vld [vmem:[%s6142 + $0x38] sm:$0xf]
      %v6158 = vld [vmem:[%s6142 + $0x3c] sm:$0xf]
      %v6191 = vunpack.c.l.b16 %v6110
      %v6192 = vunpack.c.l.b16 %v6111
      %v6193 = vunpack.c.l.b16 %v6112
      %v6194 = vunpack.c.l.b16 %v6113
      %v6195 = vunpack.c.l.b16 %v6114
      %v6196 = vunpack.c.l.b16 %v6115
      %v6197 = vunpack.c.l.b16 %v6116
      %v6198 = vunpack.c.l.b16 %v6117
      %v6199 = vunpack.c.l.b16 %v6118
      %v6200 = vunpack.c.l.b16 %v6119
      %v6201 = vunpack.c.l.b16 %v6120
      %v6202 = vunpack.c.l.b16 %v6121
      %v6203 = vunpack.c.l.b16 %v6122
      %v6204 = vunpack.c.l.b16 %v6123
      %v6205 = vunpack.c.l.b16 %v6124
      %v6206 = vunpack.c.l.b16 %v6125
      %v6207 = vunpack.c.l.b16 %v6126
      %v6208 = vunpack.c.l.b16 %v6127
      %v6209 = vunpack.c.l.b16 %v6128
      %v6210 = vunpack.c.l.b16 %v6129
      %v6211 = vunpack.c.l.b16 %v6130
      %v6212 = vunpack.c.l.b16 %v6131
      %v6213 = vunpack.c.l.b16 %v6132
      %v6214 = vunpack.c.l.b16 %v6133
      %v6215 = vunpack.c.l.b16 %v6134
      %v6216 = vunpack.c.l.b16 %v6135
      %v6217 = vunpack.c.l.b16 %v6136
      %v6218 = vunpack.c.l.b16 %v6137
      %v6219 = vunpack.c.l.b16 %v6138
      %v6220 = vunpack.c.l.b16 %v6139
      %v6221 = vunpack.c.l.b16 %v6140
      %v6222 = vunpack.c.l.b16 %v6141
      %v6223 = vpack.c.b16 %v6192, %v6191
      %v6224 = vpack.c.b16 %v6194, %v6193
      %v6225 = vpack.c.b16 %v6196, %v6195
      %v6226 = vpack.c.b16 %v6198, %v6197
      %v6227 = vpack.c.b16 %v6200, %v6199
      %v6228 = vpack.c.b16 %v6202, %v6201
      %v6229 = vpack.c.b16 %v6204, %v6203
      %v6230 = vpack.c.b16 %v6206, %v6205
      %v6231 = vpack.c.b16 %v6208, %v6207
      %v6232 = vpack.c.b16 %v6210, %v6209
      %v6233 = vpack.c.b16 %v6212, %v6211
      %v6234 = vpack.c.b16 %v6214, %v6213
      %v6235 = vpack.c.b16 %v6216, %v6215
      %v6236 = vpack.c.b16 %v6218, %v6217
      %v6237 = vpack.c.b16 %v6220, %v6219
      %v6238 = vpack.c.b16 %v6222, %v6221
      %v6271 = vunpack.c.l.b16 %v6143
      %v6272 = vunpack.c.l.b16 %v6144
      %v6273 = vunpack.c.l.b16 %v6145
      %v6274 = vunpack.c.l.b16 %v6146
      %v6275 = vunpack.c.l.b16 %v6147
      %v6276 = vunpack.c.l.b16 %v6148
      %v6277 = vunpack.c.l.b16 %v6149
      %v6278 = vunpack.c.l.b16 %v6150
      %v6279 = vunpack.c.l.b16 %v6151
      %v6280 = vunpack.c.l.b16 %v6152
      %v6281 = vunpack.c.l.b16 %v6153
      %v6282 = vunpack.c.l.b16 %v6154
      %v6283 = vunpack.c.l.b16 %v6155
      %v6284 = vunpack.c.l.b16 %v6156
      %v6285 = vunpack.c.l.b16 %v6157
      %v6286 = vunpack.c.l.b16 %v6158
      %v6287 = vpack.c.b16 %v6272, %v6271
      %v6288 = vpack.c.b16 %v6274, %v6273
      %v6289 = vpack.c.b16 %v6276, %v6275
      %v6290 = vpack.c.b16 %v6278, %v6277
      %v6291 = vpack.c.b16 %v6280, %v6279
      %v6292 = vpack.c.b16 %v6282, %v6281
      %v6293 = vpack.c.b16 %v6284, %v6283
      %v6294 = vpack.c.b16 %v6286, %v6285
      %6303 = vmatpush.bf16.msra.mxu0 %v6294
      %6304 = vmatpush.bf16.msra.mxu0 %v6293
      %6305 = vmatpush.bf16.msra.mxu0 %v6292
      %6306 = vmatpush.bf16.msra.mxu0 %v6291
      %6307 = vmatpush.bf16.msra.mxu0 %v6290
      %6308 = vmatpush.bf16.msra.mxu0 %v6289
      %6309 = vmatpush.bf16.msra.mxu0 %v6288
      %6310 = vmatpush.bf16.msra.mxu0 %v6287
      %6311 = vmatmul.bf16.gmra.mxu0 %v6223
      %v6312 = vpop.f32.mrf.mxu0
      %v6313 = vadd.f32 0.0, %v6312
      %v6314 = vpop.f32.mrf.mxu0
      %v6315 = vadd.f32 0.0, %v6314
      %6316 = vmatmul.bf16.gmra.mxu0 %v6224
      %v6317 = vpop.f32.mrf.mxu0
      %v6318 = vadd.f32 0.0, %v6317
      %v6319 = vpop.f32.mrf.mxu0
      %v6320 = vadd.f32 0.0, %v6319
      %6321 = vmatmul.bf16.gmra.mxu0 %v6225
      %v6322 = vpop.f32.mrf.mxu0
      %v6323 = vadd.f32 0.0, %v6322
      %v6324 = vpop.f32.mrf.mxu0
      %v6325 = vadd.f32 0.0, %v6324
      %6326 = vmatmul.bf16.gmra.mxu0 %v6226
      %v6327 = vpop.f32.mrf.mxu0
      %v6328 = vadd.f32 0.0, %v6327
      %v6329 = vpop.f32.mrf.mxu0
      %v6330 = vadd.f32 0.0, %v6329
      %6331 = vmatmul.bf16.gmra.mxu0 %v6227
      %v6332 = vpop.f32.mrf.mxu0
      %v6333 = vadd.f32 0.0, %v6332
      %v6334 = vpop.f32.mrf.mxu0
      %v6335 = vadd.f32 0.0, %v6334
      %6336 = vmatmul.bf16.gmra.mxu0 %v6228
      %v6337 = vpop.f32.mrf.mxu0
      %v6338 = vadd.f32 0.0, %v6337
      %v6339 = vpop.f32.mrf.mxu0
      %v6340 = vadd.f32 0.0, %v6339
      %6341 = vmatmul.bf16.gmra.mxu0 %v6229
      %v6342 = vpop.f32.mrf.mxu0
      %v6343 = vadd.f32 0.0, %v6342
      %v6344 = vpop.f32.mrf.mxu0
      %v6345 = vadd.f32 0.0, %v6344
      %6346 = vmatmul.bf16.gmra.mxu0 %v6230
      %v6347 = vpop.f32.mrf.mxu0
      %v6348 = vadd.f32 0.0, %v6347
      %v6349 = vpop.f32.mrf.mxu0
      %v6350 = vadd.f32 0.0, %v6349
      %6351 = vmatmul.bf16.gmra.mxu0 %v6231
      %v6352 = vpop.f32.mrf.mxu0
      %v6353 = vadd.f32 0.0, %v6352
      %v6354 = vpop.f32.mrf.mxu0
      %v6355 = vadd.f32 0.0, %v6354
      %6356 = vmatmul.bf16.gmra.mxu0 %v6232
      %v6357 = vpop.f32.mrf.mxu0
      %v6358 = vadd.f32 0.0, %v6357
      %v6359 = vpop.f32.mrf.mxu0
      %v6360 = vadd.f32 0.0, %v6359
      %6361 = vmatmul.bf16.gmra.mxu0 %v6233
      %v6362 = vpop.f32.mrf.mxu0
      %v6363 = vadd.f32 0.0, %v6362
      %v6364 = vpop.f32.mrf.mxu0
      %v6365 = vadd.f32 0.0, %v6364
      %6366 = vmatmul.bf16.gmra.mxu0 %v6234
      %v6367 = vpop.f32.mrf.mxu0
      %v6368 = vadd.f32 0.0, %v6367
      %v6369 = vpop.f32.mrf.mxu0
      %v6370 = vadd.f32 0.0, %v6369
      %6371 = vmatmul.bf16.gmra.mxu0 %v6235
      %v6372 = vpop.f32.mrf.mxu0
      %v6373 = vadd.f32 0.0, %v6372
      %v6374 = vpop.f32.mrf.mxu0
      %v6375 = vadd.f32 0.0, %v6374
      %6376 = vmatmul.bf16.gmra.mxu0 %v6236
      %v6377 = vpop.f32.mrf.mxu0
      %v6378 = vadd.f32 0.0, %v6377
      %v6379 = vpop.f32.mrf.mxu0
      %v6380 = vadd.f32 0.0, %v6379
      %6381 = vmatmul.bf16.gmra.mxu0 %v6237
      %v6382 = vpop.f32.mrf.mxu0
      %v6383 = vadd.f32 0.0, %v6382
      %v6384 = vpop.f32.mrf.mxu0
      %v6385 = vadd.f32 0.0, %v6384
      %6386 = vmatmul.bf16.gmra.mxu0 %v6238
      %v6387 = vpop.f32.mrf.mxu0
      %v6388 = vadd.f32 0.0, %v6387
      %v6389 = vpop.f32.mrf.mxu0
      %v6390 = vadd.f32 0.0, %v6389
      %6391 = vdwg.mxu0
      %v6392 = vadd.f32 %v6078, %v6313
      %v6393 = vadd.f32 %v6079, %v6315
      %v6394 = vadd.f32 %v6080, %v6318
      %v6395 = vadd.f32 %v6081, %v6320
      %v6396 = vadd.f32 %v6082, %v6323
      %v6397 = vadd.f32 %v6083, %v6325
      %v6398 = vadd.f32 %v6084, %v6328
      %v6399 = vadd.f32 %v6085, %v6330
      %v6400 = vadd.f32 %v6086, %v6333
      %v6401 = vadd.f32 %v6087, %v6335
      %v6402 = vadd.f32 %v6088, %v6338
      %v6403 = vadd.f32 %v6089, %v6340
      %v6404 = vadd.f32 %v6090, %v6343
      %v6405 = vadd.f32 %v6091, %v6345
      %v6406 = vadd.f32 %v6092, %v6348
      %v6407 = vadd.f32 %v6093, %v6350
      %v6408 = vadd.f32 %v6094, %v6353
      %v6409 = vadd.f32 %v6095, %v6355
      %v6410 = vadd.f32 %v6096, %v6358
      %v6411 = vadd.f32 %v6097, %v6360
      %v6412 = vadd.f32 %v6098, %v6363
      %v6413 = vadd.f32 %v6099, %v6365
      %v6414 = vadd.f32 %v6100, %v6368
      %v6415 = vadd.f32 %v6101, %v6370
      %v6416 = vadd.f32 %v6102, %v6373
      %v6417 = vadd.f32 %v6103, %v6375
      %v6418 = vadd.f32 %v6104, %v6378
      %v6419 = vadd.f32 %v6105, %v6380
      %v6420 = vadd.f32 %v6106, %v6383
      %v6421 = vadd.f32 %v6107, %v6385
      %v6422 = vadd.f32 %v6108, %v6388
      %v6423 = vadd.f32 %v6109, %v6390
      %v6424 = vld [vmem:[%s2778] sm:$0xf]
      %v6425 = vld [vmem:[%s2778 + $0x4] sm:$0xf]
      %v6426 = vld [vmem:[%s2778 + $0x8] sm:$0xf]
      %v6427 = vld [vmem:[%s2778 + $0xc] sm:$0xf]
      %v6428 = vld [vmem:[%s2778 + $0x10] sm:$0xf]
      %v6429 = vld [vmem:[%s2778 + $0x14] sm:$0xf]
      %v6430 = vld [vmem:[%s2778 + $0x18] sm:$0xf]
      %v6431 = vld [vmem:[%s2778 + $0x1c] sm:$0xf]
      %v6432 = vld [vmem:[%s2778 + $0x20] sm:$0xf]
      %v6433 = vld [vmem:[%s2778 + $0x24] sm:$0xf]
      %v6434 = vld [vmem:[%s2778 + $0x28] sm:$0xf]
      %v6435 = vld [vmem:[%s2778 + $0x2c] sm:$0xf]
      %v6436 = vld [vmem:[%s2778 + $0x30] sm:$0xf]
      %v6437 = vld [vmem:[%s2778 + $0x34] sm:$0xf]
      %v6438 = vld [vmem:[%s2778 + $0x38] sm:$0xf]
      %v6439 = vld [vmem:[%s2778 + $0x3c] sm:$0xf]
      %v6440 = vld [vmem:[%s2778 + $0x40] sm:$0xf]
      %v6441 = vld [vmem:[%s2778 + $0x44] sm:$0xf]
      %v6442 = vld [vmem:[%s2778 + $0x48] sm:$0xf]
      %v6443 = vld [vmem:[%s2778 + $0x4c] sm:$0xf]
      %v6444 = vld [vmem:[%s2778 + $0x50] sm:$0xf]
      %v6445 = vld [vmem:[%s2778 + $0x54] sm:$0xf]
      %v6446 = vld [vmem:[%s2778 + $0x58] sm:$0xf]
      %v6447 = vld [vmem:[%s2778 + $0x5c] sm:$0xf]
      %v6448 = vld [vmem:[%s2778 + $0x60] sm:$0xf]
      %v6449 = vld [vmem:[%s2778 + $0x64] sm:$0xf]
      %v6450 = vld [vmem:[%s2778 + $0x68] sm:$0xf]
      %v6451 = vld [vmem:[%s2778 + $0x6c] sm:$0xf]
      %v6452 = vld [vmem:[%s2778 + $0x70] sm:$0xf]
      %v6453 = vld [vmem:[%s2778 + $0x74] sm:$0xf]
      %v6454 = vld [vmem:[%s2778 + $0x78] sm:$0xf]
      %v6455 = vld [vmem:[%s2778 + $0x7c] sm:$0xf]
      %s6456 = scalar_lea.vmem %s5, 320
      %v6457 = vld [vmem:[%s6456] sm:$0xf]
      %v6458 = vld [vmem:[%s6456 + $0x4] sm:$0xf]
      %v6459 = vld [vmem:[%s6456 + $0x8] sm:$0xf]
      %v6460 = vld [vmem:[%s6456 + $0xc] sm:$0xf]
      %v6461 = vld [vmem:[%s6456 + $0x10] sm:$0xf]
      %v6462 = vld [vmem:[%s6456 + $0x14] sm:$0xf]
      %v6463 = vld [vmem:[%s6456 + $0x18] sm:$0xf]
      %v6464 = vld [vmem:[%s6456 + $0x1c] sm:$0xf]
      %v6465 = vld [vmem:[%s6456 + $0x20] sm:$0xf]
      %v6466 = vld [vmem:[%s6456 + $0x24] sm:$0xf]
      %v6467 = vld [vmem:[%s6456 + $0x28] sm:$0xf]
      %v6468 = vld [vmem:[%s6456 + $0x2c] sm:$0xf]
      %v6469 = vld [vmem:[%s6456 + $0x30] sm:$0xf]
      %v6470 = vld [vmem:[%s6456 + $0x34] sm:$0xf]
      %v6471 = vld [vmem:[%s6456 + $0x38] sm:$0xf]
      %v6472 = vld [vmem:[%s6456 + $0x3c] sm:$0xf]
      %v6505 = vunpack.c.l.b16 %v6424
      %v6506 = vunpack.c.l.b16 %v6425
      %v6507 = vunpack.c.l.b16 %v6426
      %v6508 = vunpack.c.l.b16 %v6427
      %v6509 = vunpack.c.l.b16 %v6428
      %v6510 = vunpack.c.l.b16 %v6429
      %v6511 = vunpack.c.l.b16 %v6430
      %v6512 = vunpack.c.l.b16 %v6431
      %v6513 = vunpack.c.l.b16 %v6432
      %v6514 = vunpack.c.l.b16 %v6433
      %v6515 = vunpack.c.l.b16 %v6434
      %v6516 = vunpack.c.l.b16 %v6435
      %v6517 = vunpack.c.l.b16 %v6436
      %v6518 = vunpack.c.l.b16 %v6437
      %v6519 = vunpack.c.l.b16 %v6438
      %v6520 = vunpack.c.l.b16 %v6439
      %v6521 = vunpack.c.l.b16 %v6440
      %v6522 = vunpack.c.l.b16 %v6441
      %v6523 = vunpack.c.l.b16 %v6442
      %v6524 = vunpack.c.l.b16 %v6443
      %v6525 = vunpack.c.l.b16 %v6444
      %v6526 = vunpack.c.l.b16 %v6445
      %v6527 = vunpack.c.l.b16 %v6446
      %v6528 = vunpack.c.l.b16 %v6447
      %v6529 = vunpack.c.l.b16 %v6448
      %v6530 = vunpack.c.l.b16 %v6449
      %v6531 = vunpack.c.l.b16 %v6450
      %v6532 = vunpack.c.l.b16 %v6451
      %v6533 = vunpack.c.l.b16 %v6452
      %v6534 = vunpack.c.l.b16 %v6453
      %v6535 = vunpack.c.l.b16 %v6454
      %v6536 = vunpack.c.l.b16 %v6455
      %v6537 = vpack.c.b16 %v6506, %v6505
      %v6538 = vpack.c.b16 %v6508, %v6507
      %v6539 = vpack.c.b16 %v6510, %v6509
      %v6540 = vpack.c.b16 %v6512, %v6511
      %v6541 = vpack.c.b16 %v6514, %v6513
      %v6542 = vpack.c.b16 %v6516, %v6515
      %v6543 = vpack.c.b16 %v6518, %v6517
      %v6544 = vpack.c.b16 %v6520, %v6519
      %v6545 = vpack.c.b16 %v6522, %v6521
      %v6546 = vpack.c.b16 %v6524, %v6523
      %v6547 = vpack.c.b16 %v6526, %v6525
      %v6548 = vpack.c.b16 %v6528, %v6527
      %v6549 = vpack.c.b16 %v6530, %v6529
      %v6550 = vpack.c.b16 %v6532, %v6531
      %v6551 = vpack.c.b16 %v6534, %v6533
      %v6552 = vpack.c.b16 %v6536, %v6535
      %v6585 = vunpack.c.l.b16 %v6457
      %v6586 = vunpack.c.l.b16 %v6458
      %v6587 = vunpack.c.l.b16 %v6459
      %v6588 = vunpack.c.l.b16 %v6460
      %v6589 = vunpack.c.l.b16 %v6461
      %v6590 = vunpack.c.l.b16 %v6462
      %v6591 = vunpack.c.l.b16 %v6463
      %v6592 = vunpack.c.l.b16 %v6464
      %v6593 = vunpack.c.l.b16 %v6465
      %v6594 = vunpack.c.l.b16 %v6466
      %v6595 = vunpack.c.l.b16 %v6467
      %v6596 = vunpack.c.l.b16 %v6468
      %v6597 = vunpack.c.l.b16 %v6469
      %v6598 = vunpack.c.l.b16 %v6470
      %v6599 = vunpack.c.l.b16 %v6471
      %v6600 = vunpack.c.l.b16 %v6472
      %v6601 = vpack.c.b16 %v6586, %v6585
      %v6602 = vpack.c.b16 %v6588, %v6587
      %v6603 = vpack.c.b16 %v6590, %v6589
      %v6604 = vpack.c.b16 %v6592, %v6591
      %v6605 = vpack.c.b16 %v6594, %v6593
      %v6606 = vpack.c.b16 %v6596, %v6595
      %v6607 = vpack.c.b16 %v6598, %v6597
      %v6608 = vpack.c.b16 %v6600, %v6599
      %6617 = vmatpush.bf16.msra.mxu0 %v6608
      %6618 = vmatpush.bf16.msra.mxu0 %v6607
      %6619 = vmatpush.bf16.msra.mxu0 %v6606
      %6620 = vmatpush.bf16.msra.mxu0 %v6605
      %6621 = vmatpush.bf16.msra.mxu0 %v6604
      %6622 = vmatpush.bf16.msra.mxu0 %v6603
      %6623 = vmatpush.bf16.msra.mxu0 %v6602
      %6624 = vmatpush.bf16.msra.mxu0 %v6601
      %6625 = vmatmul.bf16.gmra.mxu0 %v6537
      %v6626 = vpop.f32.mrf.mxu0
      %v6627 = vadd.f32 0.0, %v6626
      %v6628 = vpop.f32.mrf.mxu0
      %v6629 = vadd.f32 0.0, %v6628
      %6630 = vmatmul.bf16.gmra.mxu0 %v6538
      %v6631 = vpop.f32.mrf.mxu0
      %v6632 = vadd.f32 0.0, %v6631
      %v6633 = vpop.f32.mrf.mxu0
      %v6634 = vadd.f32 0.0, %v6633
      %6635 = vmatmul.bf16.gmra.mxu0 %v6539
      %v6636 = vpop.f32.mrf.mxu0
      %v6637 = vadd.f32 0.0, %v6636
      %v6638 = vpop.f32.mrf.mxu0
      %v6639 = vadd.f32 0.0, %v6638
      %6640 = vmatmul.bf16.gmra.mxu0 %v6540
      %v6641 = vpop.f32.mrf.mxu0
      %v6642 = vadd.f32 0.0, %v6641
      %v6643 = vpop.f32.mrf.mxu0
      %v6644 = vadd.f32 0.0, %v6643
      %6645 = vmatmul.bf16.gmra.mxu0 %v6541
      %v6646 = vpop.f32.mrf.mxu0
      %v6647 = vadd.f32 0.0, %v6646
      %v6648 = vpop.f32.mrf.mxu0
      %v6649 = vadd.f32 0.0, %v6648
      %6650 = vmatmul.bf16.gmra.mxu0 %v6542
      %v6651 = vpop.f32.mrf.mxu0
      %v6652 = vadd.f32 0.0, %v6651
      %v6653 = vpop.f32.mrf.mxu0
      %v6654 = vadd.f32 0.0, %v6653
      %6655 = vmatmul.bf16.gmra.mxu0 %v6543
      %v6656 = vpop.f32.mrf.mxu0
      %v6657 = vadd.f32 0.0, %v6656
      %v6658 = vpop.f32.mrf.mxu0
      %v6659 = vadd.f32 0.0, %v6658
      %6660 = vmatmul.bf16.gmra.mxu0 %v6544
      %v6661 = vpop.f32.mrf.mxu0
      %v6662 = vadd.f32 0.0, %v6661
      %v6663 = vpop.f32.mrf.mxu0
      %v6664 = vadd.f32 0.0, %v6663
      %6665 = vmatmul.bf16.gmra.mxu0 %v6545
      %v6666 = vpop.f32.mrf.mxu0
      %v6667 = vadd.f32 0.0, %v6666
      %v6668 = vpop.f32.mrf.mxu0
      %v6669 = vadd.f32 0.0, %v6668
      %6670 = vmatmul.bf16.gmra.mxu0 %v6546
      %v6671 = vpop.f32.mrf.mxu0
      %v6672 = vadd.f32 0.0, %v6671
      %v6673 = vpop.f32.mrf.mxu0
      %v6674 = vadd.f32 0.0, %v6673
      %6675 = vmatmul.bf16.gmra.mxu0 %v6547
      %v6676 = vpop.f32.mrf.mxu0
      %v6677 = vadd.f32 0.0, %v6676
      %v6678 = vpop.f32.mrf.mxu0
      %v6679 = vadd.f32 0.0, %v6678
      %6680 = vmatmul.bf16.gmra.mxu0 %v6548
      %v6681 = vpop.f32.mrf.mxu0
      %v6682 = vadd.f32 0.0, %v6681
      %v6683 = vpop.f32.mrf.mxu0
      %v6684 = vadd.f32 0.0, %v6683
      %6685 = vmatmul.bf16.gmra.mxu0 %v6549
      %v6686 = vpop.f32.mrf.mxu0
      %v6687 = vadd.f32 0.0, %v6686
      %v6688 = vpop.f32.mrf.mxu0
      %v6689 = vadd.f32 0.0, %v6688
      %6690 = vmatmul.bf16.gmra.mxu0 %v6550
      %v6691 = vpop.f32.mrf.mxu0
      %v6692 = vadd.f32 0.0, %v6691
      %v6693 = vpop.f32.mrf.mxu0
      %v6694 = vadd.f32 0.0, %v6693
      %6695 = vmatmul.bf16.gmra.mxu0 %v6551
      %v6696 = vpop.f32.mrf.mxu0
      %v6697 = vadd.f32 0.0, %v6696
      %v6698 = vpop.f32.mrf.mxu0
      %v6699 = vadd.f32 0.0, %v6698
      %6700 = vmatmul.bf16.gmra.mxu0 %v6552
      %v6701 = vpop.f32.mrf.mxu0
      %v6702 = vadd.f32 0.0, %v6701
      %v6703 = vpop.f32.mrf.mxu0
      %v6704 = vadd.f32 0.0, %v6703
      %6705 = vdwg.mxu0
      %v6706 = vadd.f32 %v6392, %v6627
      %v6707 = vadd.f32 %v6393, %v6629
      %v6708 = vadd.f32 %v6394, %v6632
      %v6709 = vadd.f32 %v6395, %v6634
      %v6710 = vadd.f32 %v6396, %v6637
      %v6711 = vadd.f32 %v6397, %v6639
      %v6712 = vadd.f32 %v6398, %v6642
      %v6713 = vadd.f32 %v6399, %v6644
      %v6714 = vadd.f32 %v6400, %v6647
      %v6715 = vadd.f32 %v6401, %v6649
      %v6716 = vadd.f32 %v6402, %v6652
      %v6717 = vadd.f32 %v6403, %v6654
      %v6718 = vadd.f32 %v6404, %v6657
      %v6719 = vadd.f32 %v6405, %v6659
      %v6720 = vadd.f32 %v6406, %v6662
      %v6721 = vadd.f32 %v6407, %v6664
      %v6722 = vadd.f32 %v6408, %v6667
      %v6723 = vadd.f32 %v6409, %v6669
      %v6724 = vadd.f32 %v6410, %v6672
      %v6725 = vadd.f32 %v6411, %v6674
      %v6726 = vadd.f32 %v6412, %v6677
      %v6727 = vadd.f32 %v6413, %v6679
      %v6728 = vadd.f32 %v6414, %v6682
      %v6729 = vadd.f32 %v6415, %v6684
      %v6730 = vadd.f32 %v6416, %v6687
      %v6731 = vadd.f32 %v6417, %v6689
      %v6732 = vadd.f32 %v6418, %v6692
      %v6733 = vadd.f32 %v6419, %v6694
      %v6734 = vadd.f32 %v6420, %v6697
      %v6735 = vadd.f32 %v6421, %v6699
      %v6736 = vadd.f32 %v6422, %v6702
      %v6737 = vadd.f32 %v6423, %v6704
      %v6738 = vld [vmem:[%s3093] sm:$0xf]
      %v6739 = vld [vmem:[%s3093 + $0x4] sm:$0xf]
      %v6740 = vld [vmem:[%s3093 + $0x8] sm:$0xf]
      %v6741 = vld [vmem:[%s3093 + $0xc] sm:$0xf]
      %v6742 = vld [vmem:[%s3093 + $0x10] sm:$0xf]
      %v6743 = vld [vmem:[%s3093 + $0x14] sm:$0xf]
      %v6744 = vld [vmem:[%s3093 + $0x18] sm:$0xf]
      %v6745 = vld [vmem:[%s3093 + $0x1c] sm:$0xf]
      %v6746 = vld [vmem:[%s3093 + $0x20] sm:$0xf]
      %v6747 = vld [vmem:[%s3093 + $0x24] sm:$0xf]
      %v6748 = vld [vmem:[%s3093 + $0x28] sm:$0xf]
      %v6749 = vld [vmem:[%s3093 + $0x2c] sm:$0xf]
      %v6750 = vld [vmem:[%s3093 + $0x30] sm:$0xf]
      %v6751 = vld [vmem:[%s3093 + $0x34] sm:$0xf]
      %v6752 = vld [vmem:[%s3093 + $0x38] sm:$0xf]
      %v6753 = vld [vmem:[%s3093 + $0x3c] sm:$0xf]
      %v6754 = vld [vmem:[%s3093 + $0x40] sm:$0xf]
      %v6755 = vld [vmem:[%s3093 + $0x44] sm:$0xf]
      %v6756 = vld [vmem:[%s3093 + $0x48] sm:$0xf]
      %v6757 = vld [vmem:[%s3093 + $0x4c] sm:$0xf]
      %v6758 = vld [vmem:[%s3093 + $0x50] sm:$0xf]
      %v6759 = vld [vmem:[%s3093 + $0x54] sm:$0xf]
      %v6760 = vld [vmem:[%s3093 + $0x58] sm:$0xf]
      %v6761 = vld [vmem:[%s3093 + $0x5c] sm:$0xf]
      %v6762 = vld [vmem:[%s3093 + $0x60] sm:$0xf]
      %v6763 = vld [vmem:[%s3093 + $0x64] sm:$0xf]
      %v6764 = vld [vmem:[%s3093 + $0x68] sm:$0xf]
      %v6765 = vld [vmem:[%s3093 + $0x6c] sm:$0xf]
      %v6766 = vld [vmem:[%s3093 + $0x70] sm:$0xf]
      %v6767 = vld [vmem:[%s3093 + $0x74] sm:$0xf]
      %v6768 = vld [vmem:[%s3093 + $0x78] sm:$0xf]
      %v6769 = vld [vmem:[%s3093 + $0x7c] sm:$0xf]
      %s6770 = scalar_lea.vmem %s5, 384
      %v6771 = vld [vmem:[%s6770] sm:$0xf]
      %v6772 = vld [vmem:[%s6770 + $0x4] sm:$0xf]
      %v6773 = vld [vmem:[%s6770 + $0x8] sm:$0xf]
      %v6774 = vld [vmem:[%s6770 + $0xc] sm:$0xf]
      %v6775 = vld [vmem:[%s6770 + $0x10] sm:$0xf]
      %v6776 = vld [vmem:[%s6770 + $0x14] sm:$0xf]
      %v6777 = vld [vmem:[%s6770 + $0x18] sm:$0xf]
      %v6778 = vld [vmem:[%s6770 + $0x1c] sm:$0xf]
      %v6779 = vld [vmem:[%s6770 + $0x20] sm:$0xf]
      %v6780 = vld [vmem:[%s6770 + $0x24] sm:$0xf]
      %v6781 = vld [vmem:[%s6770 + $0x28] sm:$0xf]
      %v6782 = vld [vmem:[%s6770 + $0x2c] sm:$0xf]
      %v6783 = vld [vmem:[%s6770 + $0x30] sm:$0xf]
      %v6784 = vld [vmem:[%s6770 + $0x34] sm:$0xf]
      %v6785 = vld [vmem:[%s6770 + $0x38] sm:$0xf]
      %v6786 = vld [vmem:[%s6770 + $0x3c] sm:$0xf]
      %v6819 = vunpack.c.l.b16 %v6738
      %v6820 = vunpack.c.l.b16 %v6739
      %v6821 = vunpack.c.l.b16 %v6740
      %v6822 = vunpack.c.l.b16 %v6741
      %v6823 = vunpack.c.l.b16 %v6742
      %v6824 = vunpack.c.l.b16 %v6743
      %v6825 = vunpack.c.l.b16 %v6744
      %v6826 = vunpack.c.l.b16 %v6745
      %v6827 = vunpack.c.l.b16 %v6746
      %v6828 = vunpack.c.l.b16 %v6747
      %v6829 = vunpack.c.l.b16 %v6748
      %v6830 = vunpack.c.l.b16 %v6749
      %v6831 = vunpack.c.l.b16 %v6750
      %v6832 = vunpack.c.l.b16 %v6751
      %v6833 = vunpack.c.l.b16 %v6752
      %v6834 = vunpack.c.l.b16 %v6753
      %v6835 = vunpack.c.l.b16 %v6754
      %v6836 = vunpack.c.l.b16 %v6755
      %v6837 = vunpack.c.l.b16 %v6756
      %v6838 = vunpack.c.l.b16 %v6757
      %v6839 = vunpack.c.l.b16 %v6758
      %v6840 = vunpack.c.l.b16 %v6759
      %v6841 = vunpack.c.l.b16 %v6760
      %v6842 = vunpack.c.l.b16 %v6761
      %v6843 = vunpack.c.l.b16 %v6762
      %v6844 = vunpack.c.l.b16 %v6763
      %v6845 = vunpack.c.l.b16 %v6764
      %v6846 = vunpack.c.l.b16 %v6765
      %v6847 = vunpack.c.l.b16 %v6766
      %v6848 = vunpack.c.l.b16 %v6767
      %v6849 = vunpack.c.l.b16 %v6768
      %v6850 = vunpack.c.l.b16 %v6769
      %v6851 = vpack.c.b16 %v6820, %v6819
      %v6852 = vpack.c.b16 %v6822, %v6821
      %v6853 = vpack.c.b16 %v6824, %v6823
      %v6854 = vpack.c.b16 %v6826, %v6825
      %v6855 = vpack.c.b16 %v6828, %v6827
      %v6856 = vpack.c.b16 %v6830, %v6829
      %v6857 = vpack.c.b16 %v6832, %v6831
      %v6858 = vpack.c.b16 %v6834, %v6833
      %v6859 = vpack.c.b16 %v6836, %v6835
      %v6860 = vpack.c.b16 %v6838, %v6837
      %v6861 = vpack.c.b16 %v6840, %v6839
      %v6862 = vpack.c.b16 %v6842, %v6841
      %v6863 = vpack.c.b16 %v6844, %v6843
      %v6864 = vpack.c.b16 %v6846, %v6845
      %v6865 = vpack.c.b16 %v6848, %v6847
      %v6866 = vpack.c.b16 %v6850, %v6849
      %v6899 = vunpack.c.l.b16 %v6771
      %v6900 = vunpack.c.l.b16 %v6772
      %v6901 = vunpack.c.l.b16 %v6773
      %v6902 = vunpack.c.l.b16 %v6774
      %v6903 = vunpack.c.l.b16 %v6775
      %v6904 = vunpack.c.l.b16 %v6776
      %v6905 = vunpack.c.l.b16 %v6777
      %v6906 = vunpack.c.l.b16 %v6778
      %v6907 = vunpack.c.l.b16 %v6779
      %v6908 = vunpack.c.l.b16 %v6780
      %v6909 = vunpack.c.l.b16 %v6781
      %v6910 = vunpack.c.l.b16 %v6782
      %v6911 = vunpack.c.l.b16 %v6783
      %v6912 = vunpack.c.l.b16 %v6784
      %v6913 = vunpack.c.l.b16 %v6785
      %v6914 = vunpack.c.l.b16 %v6786
      %v6915 = vpack.c.b16 %v6900, %v6899
      %v6916 = vpack.c.b16 %v6902, %v6901
      %v6917 = vpack.c.b16 %v6904, %v6903
      %v6918 = vpack.c.b16 %v6906, %v6905
      %v6919 = vpack.c.b16 %v6908, %v6907
      %v6920 = vpack.c.b16 %v6910, %v6909
      %v6921 = vpack.c.b16 %v6912, %v6911
      %v6922 = vpack.c.b16 %v6914, %v6913
      %6931 = vmatpush.bf16.msra.mxu0 %v6922
      %6932 = vmatpush.bf16.msra.mxu0 %v6921
      %6933 = vmatpush.bf16.msra.mxu0 %v6920
      %6934 = vmatpush.bf16.msra.mxu0 %v6919
      %6935 = vmatpush.bf16.msra.mxu0 %v6918
      %6936 = vmatpush.bf16.msra.mxu0 %v6917
      %6937 = vmatpush.bf16.msra.mxu0 %v6916
      %6938 = vmatpush.bf16.msra.mxu0 %v6915
      %6939 = vmatmul.bf16.gmra.mxu0 %v6851
      %v6940 = vpop.f32.mrf.mxu0
      %v6941 = vadd.f32 0.0, %v6940
      %v6942 = vpop.f32.mrf.mxu0
      %v6943 = vadd.f32 0.0, %v6942
      %6944 = vmatmul.bf16.gmra.mxu0 %v6852
      %v6945 = vpop.f32.mrf.mxu0
      %v6946 = vadd.f32 0.0, %v6945
      %v6947 = vpop.f32.mrf.mxu0
      %v6948 = vadd.f32 0.0, %v6947
      %6949 = vmatmul.bf16.gmra.mxu0 %v6853
      %v6950 = vpop.f32.mrf.mxu0
      %v6951 = vadd.f32 0.0, %v6950
      %v6952 = vpop.f32.mrf.mxu0
      %v6953 = vadd.f32 0.0, %v6952
      %6954 = vmatmul.bf16.gmra.mxu0 %v6854
      %v6955 = vpop.f32.mrf.mxu0
      %v6956 = vadd.f32 0.0, %v6955
      %v6957 = vpop.f32.mrf.mxu0
      %v6958 = vadd.f32 0.0, %v6957
      %6959 = vmatmul.bf16.gmra.mxu0 %v6855
      %v6960 = vpop.f32.mrf.mxu0
      %v6961 = vadd.f32 0.0, %v6960
      %v6962 = vpop.f32.mrf.mxu0
      %v6963 = vadd.f32 0.0, %v6962
      %6964 = vmatmul.bf16.gmra.mxu0 %v6856
      %v6965 = vpop.f32.mrf.mxu0
      %v6966 = vadd.f32 0.0, %v6965
      %v6967 = vpop.f32.mrf.mxu0
      %v6968 = vadd.f32 0.0, %v6967
      %6969 = vmatmul.bf16.gmra.mxu0 %v6857
      %v6970 = vpop.f32.mrf.mxu0
      %v6971 = vadd.f32 0.0, %v6970
      %v6972 = vpop.f32.mrf.mxu0
      %v6973 = vadd.f32 0.0, %v6972
      %6974 = vmatmul.bf16.gmra.mxu0 %v6858
      %v6975 = vpop.f32.mrf.mxu0
      %v6976 = vadd.f32 0.0, %v6975
      %v6977 = vpop.f32.mrf.mxu0
      %v6978 = vadd.f32 0.0, %v6977
      %6979 = vmatmul.bf16.gmra.mxu0 %v6859
      %v6980 = vpop.f32.mrf.mxu0
      %v6981 = vadd.f32 0.0, %v6980
      %v6982 = vpop.f32.mrf.mxu0
      %v6983 = vadd.f32 0.0, %v6982
      %6984 = vmatmul.bf16.gmra.mxu0 %v6860
      %v6985 = vpop.f32.mrf.mxu0
      %v6986 = vadd.f32 0.0, %v6985
      %v6987 = vpop.f32.mrf.mxu0
      %v6988 = vadd.f32 0.0, %v6987
      %6989 = vmatmul.bf16.gmra.mxu0 %v6861
      %v6990 = vpop.f32.mrf.mxu0
      %v6991 = vadd.f32 0.0, %v6990
      %v6992 = vpop.f32.mrf.mxu0
      %v6993 = vadd.f32 0.0, %v6992
      %6994 = vmatmul.bf16.gmra.mxu0 %v6862
      %v6995 = vpop.f32.mrf.mxu0
      %v6996 = vadd.f32 0.0, %v6995
      %v6997 = vpop.f32.mrf.mxu0
      %v6998 = vadd.f32 0.0, %v6997
      %6999 = vmatmul.bf16.gmra.mxu0 %v6863
      %v7000 = vpop.f32.mrf.mxu0
      %v7001 = vadd.f32 0.0, %v7000
      %v7002 = vpop.f32.mrf.mxu0
      %v7003 = vadd.f32 0.0, %v7002
      %7004 = vmatmul.bf16.gmra.mxu0 %v6864
      %v7005 = vpop.f32.mrf.mxu0
      %v7006 = vadd.f32 0.0, %v7005
      %v7007 = vpop.f32.mrf.mxu0
      %v7008 = vadd.f32 0.0, %v7007
      %7009 = vmatmul.bf16.gmra.mxu0 %v6865
      %v7010 = vpop.f32.mrf.mxu0
      %v7011 = vadd.f32 0.0, %v7010
      %v7012 = vpop.f32.mrf.mxu0
      %v7013 = vadd.f32 0.0, %v7012
      %7014 = vmatmul.bf16.gmra.mxu0 %v6866
      %v7015 = vpop.f32.mrf.mxu0
      %v7016 = vadd.f32 0.0, %v7015
      %v7017 = vpop.f32.mrf.mxu0
      %v7018 = vadd.f32 0.0, %v7017
      %7019 = vdwg.mxu0
      %v7020 = vadd.f32 %v6706, %v6941
      %v7021 = vadd.f32 %v6707, %v6943
      %v7022 = vadd.f32 %v6708, %v6946
      %v7023 = vadd.f32 %v6709, %v6948
      %v7024 = vadd.f32 %v6710, %v6951
      %v7025 = vadd.f32 %v6711, %v6953
      %v7026 = vadd.f32 %v6712, %v6956
      %v7027 = vadd.f32 %v6713, %v6958
      %v7028 = vadd.f32 %v6714, %v6961
      %v7029 = vadd.f32 %v6715, %v6963
      %v7030 = vadd.f32 %v6716, %v6966
      %v7031 = vadd.f32 %v6717, %v6968
      %v7032 = vadd.f32 %v6718, %v6971
      %v7033 = vadd.f32 %v6719, %v6973
      %v7034 = vadd.f32 %v6720, %v6976
      %v7035 = vadd.f32 %v6721, %v6978
      %v7036 = vadd.f32 %v6722, %v6981
      %v7037 = vadd.f32 %v6723, %v6983
      %v7038 = vadd.f32 %v6724, %v6986
      %v7039 = vadd.f32 %v6725, %v6988
      %v7040 = vadd.f32 %v6726, %v6991
      %v7041 = vadd.f32 %v6727, %v6993
      %v7042 = vadd.f32 %v6728, %v6996
      %v7043 = vadd.f32 %v6729, %v6998
      %v7044 = vadd.f32 %v6730, %v7001
      %v7045 = vadd.f32 %v6731, %v7003
      %v7046 = vadd.f32 %v6732, %v7006
      %v7047 = vadd.f32 %v6733, %v7008
      %v7048 = vadd.f32 %v6734, %v7011
      %v7049 = vadd.f32 %v6735, %v7013
      %v7050 = vadd.f32 %v6736, %v7016
      %v7051 = vadd.f32 %v6737, %v7018
      %v7052 = vld [vmem:[%s3408] sm:$0xf]
      %v7053 = vld [vmem:[%s3408 + $0x4] sm:$0xf]
      %v7054 = vld [vmem:[%s3408 + $0x8] sm:$0xf]
      %v7055 = vld [vmem:[%s3408 + $0xc] sm:$0xf]
      %v7056 = vld [vmem:[%s3408 + $0x10] sm:$0xf]
      %v7057 = vld [vmem:[%s3408 + $0x14] sm:$0xf]
      %v7058 = vld [vmem:[%s3408 + $0x18] sm:$0xf]
      %v7059 = vld [vmem:[%s3408 + $0x1c] sm:$0xf]
      %v7060 = vld [vmem:[%s3408 + $0x20] sm:$0xf]
      %v7061 = vld [vmem:[%s3408 + $0x24] sm:$0xf]
      %v7062 = vld [vmem:[%s3408 + $0x28] sm:$0xf]
      %v7063 = vld [vmem:[%s3408 + $0x2c] sm:$0xf]
      %v7064 = vld [vmem:[%s3408 + $0x30] sm:$0xf]
      %v7065 = vld [vmem:[%s3408 + $0x34] sm:$0xf]
      %v7066 = vld [vmem:[%s3408 + $0x38] sm:$0xf]
      %v7067 = vld [vmem:[%s3408 + $0x3c] sm:$0xf]
      %v7068 = vld [vmem:[%s3408 + $0x40] sm:$0xf]
      %v7069 = vld [vmem:[%s3408 + $0x44] sm:$0xf]
      %v7070 = vld [vmem:[%s3408 + $0x48] sm:$0xf]
      %v7071 = vld [vmem:[%s3408 + $0x4c] sm:$0xf]
      %v7072 = vld [vmem:[%s3408 + $0x50] sm:$0xf]
      %v7073 = vld [vmem:[%s3408 + $0x54] sm:$0xf]
      %v7074 = vld [vmem:[%s3408 + $0x58] sm:$0xf]
      %v7075 = vld [vmem:[%s3408 + $0x5c] sm:$0xf]
      %v7076 = vld [vmem:[%s3408 + $0x60] sm:$0xf]
      %v7077 = vld [vmem:[%s3408 + $0x64] sm:$0xf]
      %v7078 = vld [vmem:[%s3408 + $0x68] sm:$0xf]
      %v7079 = vld [vmem:[%s3408 + $0x6c] sm:$0xf]
      %v7080 = vld [vmem:[%s3408 + $0x70] sm:$0xf]
      %v7081 = vld [vmem:[%s3408 + $0x74] sm:$0xf]
      %v7082 = vld [vmem:[%s3408 + $0x78] sm:$0xf]
      %v7083 = vld [vmem:[%s3408 + $0x7c] sm:$0xf]
      %s7084 = scalar_lea.vmem %s5, 448
      %v7085 = vld [vmem:[%s7084] sm:$0xf]
      %v7086 = vld [vmem:[%s7084 + $0x4] sm:$0xf]
      %v7087 = vld [vmem:[%s7084 + $0x8] sm:$0xf]
      %v7088 = vld [vmem:[%s7084 + $0xc] sm:$0xf]
      %v7089 = vld [vmem:[%s7084 + $0x10] sm:$0xf]
      %v7090 = vld [vmem:[%s7084 + $0x14] sm:$0xf]
      %v7091 = vld [vmem:[%s7084 + $0x18] sm:$0xf]
      %v7092 = vld [vmem:[%s7084 + $0x1c] sm:$0xf]
      %v7093 = vld [vmem:[%s7084 + $0x20] sm:$0xf]
      %v7094 = vld [vmem:[%s7084 + $0x24] sm:$0xf]
      %v7095 = vld [vmem:[%s7084 + $0x28] sm:$0xf]
      %v7096 = vld [vmem:[%s7084 + $0x2c] sm:$0xf]
      %v7097 = vld [vmem:[%s7084 + $0x30] sm:$0xf]
      %v7098 = vld [vmem:[%s7084 + $0x34] sm:$0xf]
      %v7099 = vld [vmem:[%s7084 + $0x38] sm:$0xf]
      %v7100 = vld [vmem:[%s7084 + $0x3c] sm:$0xf]
      %v7133 = vunpack.c.l.b16 %v7052
      %v7134 = vunpack.c.l.b16 %v7053
      %v7135 = vunpack.c.l.b16 %v7054
      %v7136 = vunpack.c.l.b16 %v7055
      %v7137 = vunpack.c.l.b16 %v7056
      %v7138 = vunpack.c.l.b16 %v7057
      %v7139 = vunpack.c.l.b16 %v7058
      %v7140 = vunpack.c.l.b16 %v7059
      %v7141 = vunpack.c.l.b16 %v7060
      %v7142 = vunpack.c.l.b16 %v7061
      %v7143 = vunpack.c.l.b16 %v7062
      %v7144 = vunpack.c.l.b16 %v7063
      %v7145 = vunpack.c.l.b16 %v7064
      %v7146 = vunpack.c.l.b16 %v7065
      %v7147 = vunpack.c.l.b16 %v7066
      %v7148 = vunpack.c.l.b16 %v7067
      %v7149 = vunpack.c.l.b16 %v7068
      %v7150 = vunpack.c.l.b16 %v7069
      %v7151 = vunpack.c.l.b16 %v7070
      %v7152 = vunpack.c.l.b16 %v7071
      %v7153 = vunpack.c.l.b16 %v7072
      %v7154 = vunpack.c.l.b16 %v7073
      %v7155 = vunpack.c.l.b16 %v7074
      %v7156 = vunpack.c.l.b16 %v7075
      %v7157 = vunpack.c.l.b16 %v7076
      %v7158 = vunpack.c.l.b16 %v7077
      %v7159 = vunpack.c.l.b16 %v7078
      %v7160 = vunpack.c.l.b16 %v7079
      %v7161 = vunpack.c.l.b16 %v7080
      %v7162 = vunpack.c.l.b16 %v7081
      %v7163 = vunpack.c.l.b16 %v7082
      %v7164 = vunpack.c.l.b16 %v7083
      %v7165 = vpack.c.b16 %v7134, %v7133
      %v7166 = vpack.c.b16 %v7136, %v7135
      %v7167 = vpack.c.b16 %v7138, %v7137
      %v7168 = vpack.c.b16 %v7140, %v7139
      %v7169 = vpack.c.b16 %v7142, %v7141
      %v7170 = vpack.c.b16 %v7144, %v7143
      %v7171 = vpack.c.b16 %v7146, %v7145
      %v7172 = vpack.c.b16 %v7148, %v7147
      %v7173 = vpack.c.b16 %v7150, %v7149
      %v7174 = vpack.c.b16 %v7152, %v7151
      %v7175 = vpack.c.b16 %v7154, %v7153
      %v7176 = vpack.c.b16 %v7156, %v7155
      %v7177 = vpack.c.b16 %v7158, %v7157
      %v7178 = vpack.c.b16 %v7160, %v7159
      %v7179 = vpack.c.b16 %v7162, %v7161
      %v7180 = vpack.c.b16 %v7164, %v7163
      %v7213 = vunpack.c.l.b16 %v7085
      %v7214 = vunpack.c.l.b16 %v7086
      %v7215 = vunpack.c.l.b16 %v7087
      %v7216 = vunpack.c.l.b16 %v7088
      %v7217 = vunpack.c.l.b16 %v7089
      %v7218 = vunpack.c.l.b16 %v7090
      %v7219 = vunpack.c.l.b16 %v7091
      %v7220 = vunpack.c.l.b16 %v7092
      %v7221 = vunpack.c.l.b16 %v7093
      %v7222 = vunpack.c.l.b16 %v7094
      %v7223 = vunpack.c.l.b16 %v7095
      %v7224 = vunpack.c.l.b16 %v7096
      %v7225 = vunpack.c.l.b16 %v7097
      %v7226 = vunpack.c.l.b16 %v7098
      %v7227 = vunpack.c.l.b16 %v7099
      %v7228 = vunpack.c.l.b16 %v7100
      %v7229 = vpack.c.b16 %v7214, %v7213
      %v7230 = vpack.c.b16 %v7216, %v7215
      %v7231 = vpack.c.b16 %v7218, %v7217
      %v7232 = vpack.c.b16 %v7220, %v7219
      %v7233 = vpack.c.b16 %v7222, %v7221
      %v7234 = vpack.c.b16 %v7224, %v7223
      %v7235 = vpack.c.b16 %v7226, %v7225
      %v7236 = vpack.c.b16 %v7228, %v7227
      %7245 = vmatpush.bf16.msra.mxu0 %v7236
      %7246 = vmatpush.bf16.msra.mxu0 %v7235
      %7247 = vmatpush.bf16.msra.mxu0 %v7234
      %7248 = vmatpush.bf16.msra.mxu0 %v7233
      %7249 = vmatpush.bf16.msra.mxu0 %v7232
      %7250 = vmatpush.bf16.msra.mxu0 %v7231
      %7251 = vmatpush.bf16.msra.mxu0 %v7230
      %7252 = vmatpush.bf16.msra.mxu0 %v7229
      %7253 = vmatmul.bf16.gmra.mxu0 %v7165
      %v7254 = vpop.f32.mrf.mxu0
      %v7255 = vadd.f32 0.0, %v7254
      %v7256 = vpop.f32.mrf.mxu0
      %v7257 = vadd.f32 0.0, %v7256
      %7258 = vmatmul.bf16.gmra.mxu0 %v7166
      %v7259 = vpop.f32.mrf.mxu0
      %v7260 = vadd.f32 0.0, %v7259
      %v7261 = vpop.f32.mrf.mxu0
      %v7262 = vadd.f32 0.0, %v7261
      %7263 = vmatmul.bf16.gmra.mxu0 %v7167
      %v7264 = vpop.f32.mrf.mxu0
      %v7265 = vadd.f32 0.0, %v7264
      %v7266 = vpop.f32.mrf.mxu0
      %v7267 = vadd.f32 0.0, %v7266
      %7268 = vmatmul.bf16.gmra.mxu0 %v7168
      %v7269 = vpop.f32.mrf.mxu0
      %v7270 = vadd.f32 0.0, %v7269
      %v7271 = vpop.f32.mrf.mxu0
      %v7272 = vadd.f32 0.0, %v7271
      %7273 = vmatmul.bf16.gmra.mxu0 %v7169
      %v7274 = vpop.f32.mrf.mxu0
      %v7275 = vadd.f32 0.0, %v7274
      %v7276 = vpop.f32.mrf.mxu0
      %v7277 = vadd.f32 0.0, %v7276
      %7278 = vmatmul.bf16.gmra.mxu0 %v7170
      %v7279 = vpop.f32.mrf.mxu0
      %v7280 = vadd.f32 0.0, %v7279
      %v7281 = vpop.f32.mrf.mxu0
      %v7282 = vadd.f32 0.0, %v7281
      %7283 = vmatmul.bf16.gmra.mxu0 %v7171
      %v7284 = vpop.f32.mrf.mxu0
      %v7285 = vadd.f32 0.0, %v7284
      %v7286 = vpop.f32.mrf.mxu0
      %v7287 = vadd.f32 0.0, %v7286
      %7288 = vmatmul.bf16.gmra.mxu0 %v7172
      %v7289 = vpop.f32.mrf.mxu0
      %v7290 = vadd.f32 0.0, %v7289
      %v7291 = vpop.f32.mrf.mxu0
      %v7292 = vadd.f32 0.0, %v7291
      %7293 = vmatmul.bf16.gmra.mxu0 %v7173
      %v7294 = vpop.f32.mrf.mxu0
      %v7295 = vadd.f32 0.0, %v7294
      %v7296 = vpop.f32.mrf.mxu0
      %v7297 = vadd.f32 0.0, %v7296
      %7298 = vmatmul.bf16.gmra.mxu0 %v7174
      %v7299 = vpop.f32.mrf.mxu0
      %v7300 = vadd.f32 0.0, %v7299
      %v7301 = vpop.f32.mrf.mxu0
      %v7302 = vadd.f32 0.0, %v7301
      %7303 = vmatmul.bf16.gmra.mxu0 %v7175
      %v7304 = vpop.f32.mrf.mxu0
      %v7305 = vadd.f32 0.0, %v7304
      %v7306 = vpop.f32.mrf.mxu0
      %v7307 = vadd.f32 0.0, %v7306
      %7308 = vmatmul.bf16.gmra.mxu0 %v7176
      %v7309 = vpop.f32.mrf.mxu0
      %v7310 = vadd.f32 0.0, %v7309
      %v7311 = vpop.f32.mrf.mxu0
      %v7312 = vadd.f32 0.0, %v7311
      %7313 = vmatmul.bf16.gmra.mxu0 %v7177
      %v7314 = vpop.f32.mrf.mxu0
      %v7315 = vadd.f32 0.0, %v7314
      %v7316 = vpop.f32.mrf.mxu0
      %v7317 = vadd.f32 0.0, %v7316
      %7318 = vmatmul.bf16.gmra.mxu0 %v7178
      %v7319 = vpop.f32.mrf.mxu0
      %v7320 = vadd.f32 0.0, %v7319
      %v7321 = vpop.f32.mrf.mxu0
      %v7322 = vadd.f32 0.0, %v7321
      %7323 = vmatmul.bf16.gmra.mxu0 %v7179
      %v7324 = vpop.f32.mrf.mxu0
      %v7325 = vadd.f32 0.0, %v7324
      %v7326 = vpop.f32.mrf.mxu0
      %v7327 = vadd.f32 0.0, %v7326
      %7328 = vmatmul.bf16.gmra.mxu0 %v7180
      %v7329 = vpop.f32.mrf.mxu0
      %v7330 = vadd.f32 0.0, %v7329
      %v7331 = vpop.f32.mrf.mxu0
      %v7332 = vadd.f32 0.0, %v7331
      %7333 = vdwg.mxu0
      %v7334 = vadd.f32 %v7020, %v7255
      %v7335 = vadd.f32 %v7021, %v7257
      %v7336 = vadd.f32 %v7022, %v7260
      %v7337 = vadd.f32 %v7023, %v7262
      %v7338 = vadd.f32 %v7024, %v7265
      %v7339 = vadd.f32 %v7025, %v7267
      %v7340 = vadd.f32 %v7026, %v7270
      %v7341 = vadd.f32 %v7027, %v7272
      %v7342 = vadd.f32 %v7028, %v7275
      %v7343 = vadd.f32 %v7029, %v7277
      %v7344 = vadd.f32 %v7030, %v7280
      %v7345 = vadd.f32 %v7031, %v7282
      %v7346 = vadd.f32 %v7032, %v7285
      %v7347 = vadd.f32 %v7033, %v7287
      %v7348 = vadd.f32 %v7034, %v7290
      %v7349 = vadd.f32 %v7035, %v7292
      %v7350 = vadd.f32 %v7036, %v7295
      %v7351 = vadd.f32 %v7037, %v7297
      %v7352 = vadd.f32 %v7038, %v7300
      %v7353 = vadd.f32 %v7039, %v7302
      %v7354 = vadd.f32 %v7040, %v7305
      %v7355 = vadd.f32 %v7041, %v7307
      %v7356 = vadd.f32 %v7042, %v7310
      %v7357 = vadd.f32 %v7043, %v7312
      %v7358 = vadd.f32 %v7044, %v7315
      %v7359 = vadd.f32 %v7045, %v7317
      %v7360 = vadd.f32 %v7046, %v7320
      %v7361 = vadd.f32 %v7047, %v7322
      %v7362 = vadd.f32 %v7048, %v7325
      %v7363 = vadd.f32 %v7049, %v7327
      %v7364 = vadd.f32 %v7050, %v7330
      %v7365 = vadd.f32 %v7051, %v7332
      %v7366 = vld [vmem:[%s3723] sm:$0xf]
      %v7367 = vld [vmem:[%s3723 + $0x4] sm:$0xf]
      %v7368 = vld [vmem:[%s3723 + $0x8] sm:$0xf]
      %v7369 = vld [vmem:[%s3723 + $0xc] sm:$0xf]
      %v7370 = vld [vmem:[%s3723 + $0x10] sm:$0xf]
      %v7371 = vld [vmem:[%s3723 + $0x14] sm:$0xf]
      %v7372 = vld [vmem:[%s3723 + $0x18] sm:$0xf]
      %v7373 = vld [vmem:[%s3723 + $0x1c] sm:$0xf]
      %v7374 = vld [vmem:[%s3723 + $0x20] sm:$0xf]
      %v7375 = vld [vmem:[%s3723 + $0x24] sm:$0xf]
      %v7376 = vld [vmem:[%s3723 + $0x28] sm:$0xf]
      %v7377 = vld [vmem:[%s3723 + $0x2c] sm:$0xf]
      %v7378 = vld [vmem:[%s3723 + $0x30] sm:$0xf]
      %v7379 = vld [vmem:[%s3723 + $0x34] sm:$0xf]
      %v7380 = vld [vmem:[%s3723 + $0x38] sm:$0xf]
      %v7381 = vld [vmem:[%s3723 + $0x3c] sm:$0xf]
      %v7382 = vld [vmem:[%s3723 + $0x40] sm:$0xf]
      %v7383 = vld [vmem:[%s3723 + $0x44] sm:$0xf]
      %v7384 = vld [vmem:[%s3723 + $0x48] sm:$0xf]
      %v7385 = vld [vmem:[%s3723 + $0x4c] sm:$0xf]
      %v7386 = vld [vmem:[%s3723 + $0x50] sm:$0xf]
      %v7387 = vld [vmem:[%s3723 + $0x54] sm:$0xf]
      %v7388 = vld [vmem:[%s3723 + $0x58] sm:$0xf]
      %v7389 = vld [vmem:[%s3723 + $0x5c] sm:$0xf]
      %v7390 = vld [vmem:[%s3723 + $0x60] sm:$0xf]
      %v7391 = vld [vmem:[%s3723 + $0x64] sm:$0xf]
      %v7392 = vld [vmem:[%s3723 + $0x68] sm:$0xf]
      %v7393 = vld [vmem:[%s3723 + $0x6c] sm:$0xf]
      %v7394 = vld [vmem:[%s3723 + $0x70] sm:$0xf]
      %v7395 = vld [vmem:[%s3723 + $0x74] sm:$0xf]
      %v7396 = vld [vmem:[%s3723 + $0x78] sm:$0xf]
      %v7397 = vld [vmem:[%s3723 + $0x7c] sm:$0xf]
      %s7398 = scalar_lea.vmem %s5, 512
      %v7399 = vld [vmem:[%s7398] sm:$0xf]
      %v7400 = vld [vmem:[%s7398 + $0x4] sm:$0xf]
      %v7401 = vld [vmem:[%s7398 + $0x8] sm:$0xf]
      %v7402 = vld [vmem:[%s7398 + $0xc] sm:$0xf]
      %v7403 = vld [vmem:[%s7398 + $0x10] sm:$0xf]
      %v7404 = vld [vmem:[%s7398 + $0x14] sm:$0xf]
      %v7405 = vld [vmem:[%s7398 + $0x18] sm:$0xf]
      %v7406 = vld [vmem:[%s7398 + $0x1c] sm:$0xf]
      %v7407 = vld [vmem:[%s7398 + $0x20] sm:$0xf]
      %v7408 = vld [vmem:[%s7398 + $0x24] sm:$0xf]
      %v7409 = vld [vmem:[%s7398 + $0x28] sm:$0xf]
      %v7410 = vld [vmem:[%s7398 + $0x2c] sm:$0xf]
      %v7411 = vld [vmem:[%s7398 + $0x30] sm:$0xf]
      %v7412 = vld [vmem:[%s7398 + $0x34] sm:$0xf]
      %v7413 = vld [vmem:[%s7398 + $0x38] sm:$0xf]
      %v7414 = vld [vmem:[%s7398 + $0x3c] sm:$0xf]
      %v7447 = vunpack.c.l.b16 %v7366
      %v7448 = vunpack.c.l.b16 %v7367
      %v7449 = vunpack.c.l.b16 %v7368
      %v7450 = vunpack.c.l.b16 %v7369
      %v7451 = vunpack.c.l.b16 %v7370
      %v7452 = vunpack.c.l.b16 %v7371
      %v7453 = vunpack.c.l.b16 %v7372
      %v7454 = vunpack.c.l.b16 %v7373
      %v7455 = vunpack.c.l.b16 %v7374
      %v7456 = vunpack.c.l.b16 %v7375
      %v7457 = vunpack.c.l.b16 %v7376
      %v7458 = vunpack.c.l.b16 %v7377
      %v7459 = vunpack.c.l.b16 %v7378
      %v7460 = vunpack.c.l.b16 %v7379
      %v7461 = vunpack.c.l.b16 %v7380
      %v7462 = vunpack.c.l.b16 %v7381
      %v7463 = vunpack.c.l.b16 %v7382
      %v7464 = vunpack.c.l.b16 %v7383
      %v7465 = vunpack.c.l.b16 %v7384
      %v7466 = vunpack.c.l.b16 %v7385
      %v7467 = vunpack.c.l.b16 %v7386
      %v7468 = vunpack.c.l.b16 %v7387
      %v7469 = vunpack.c.l.b16 %v7388
      %v7470 = vunpack.c.l.b16 %v7389
      %v7471 = vunpack.c.l.b16 %v7390
      %v7472 = vunpack.c.l.b16 %v7391
      %v7473 = vunpack.c.l.b16 %v7392
      %v7474 = vunpack.c.l.b16 %v7393
      %v7475 = vunpack.c.l.b16 %v7394
      %v7476 = vunpack.c.l.b16 %v7395
      %v7477 = vunpack.c.l.b16 %v7396
      %v7478 = vunpack.c.l.b16 %v7397
      %v7479 = vpack.c.b16 %v7448, %v7447
      %v7480 = vpack.c.b16 %v7450, %v7449
      %v7481 = vpack.c.b16 %v7452, %v7451
      %v7482 = vpack.c.b16 %v7454, %v7453
      %v7483 = vpack.c.b16 %v7456, %v7455
      %v7484 = vpack.c.b16 %v7458, %v7457
      %v7485 = vpack.c.b16 %v7460, %v7459
      %v7486 = vpack.c.b16 %v7462, %v7461
      %v7487 = vpack.c.b16 %v7464, %v7463
      %v7488 = vpack.c.b16 %v7466, %v7465
      %v7489 = vpack.c.b16 %v7468, %v7467
      %v7490 = vpack.c.b16 %v7470, %v7469
      %v7491 = vpack.c.b16 %v7472, %v7471
      %v7492 = vpack.c.b16 %v7474, %v7473
      %v7493 = vpack.c.b16 %v7476, %v7475
      %v7494 = vpack.c.b16 %v7478, %v7477
      %v7527 = vunpack.c.l.b16 %v7399
      %v7528 = vunpack.c.l.b16 %v7400
      %v7529 = vunpack.c.l.b16 %v7401
      %v7530 = vunpack.c.l.b16 %v7402
      %v7531 = vunpack.c.l.b16 %v7403
      %v7532 = vunpack.c.l.b16 %v7404
      %v7533 = vunpack.c.l.b16 %v7405
      %v7534 = vunpack.c.l.b16 %v7406
      %v7535 = vunpack.c.l.b16 %v7407
      %v7536 = vunpack.c.l.b16 %v7408
      %v7537 = vunpack.c.l.b16 %v7409
      %v7538 = vunpack.c.l.b16 %v7410
      %v7539 = vunpack.c.l.b16 %v7411
      %v7540 = vunpack.c.l.b16 %v7412
      %v7541 = vunpack.c.l.b16 %v7413
      %v7542 = vunpack.c.l.b16 %v7414
      %v7543 = vpack.c.b16 %v7528, %v7527
      %v7544 = vpack.c.b16 %v7530, %v7529
      %v7545 = vpack.c.b16 %v7532, %v7531
      %v7546 = vpack.c.b16 %v7534, %v7533
      %v7547 = vpack.c.b16 %v7536, %v7535
      %v7548 = vpack.c.b16 %v7538, %v7537
      %v7549 = vpack.c.b16 %v7540, %v7539
      %v7550 = vpack.c.b16 %v7542, %v7541
      %7559 = vmatpush.bf16.msra.mxu0 %v7550
      %7560 = vmatpush.bf16.msra.mxu0 %v7549
      %7561 = vmatpush.bf16.msra.mxu0 %v7548
      %7562 = vmatpush.bf16.msra.mxu0 %v7547
      %7563 = vmatpush.bf16.msra.mxu0 %v7546
      %7564 = vmatpush.bf16.msra.mxu0 %v7545
      %7565 = vmatpush.bf16.msra.mxu0 %v7544
      %7566 = vmatpush.bf16.msra.mxu0 %v7543
      %7567 = vmatmul.bf16.gmra.mxu0 %v7479
      %v7568 = vpop.f32.mrf.mxu0
      %v7569 = vadd.f32 0.0, %v7568
      %v7570 = vpop.f32.mrf.mxu0
      %v7571 = vadd.f32 0.0, %v7570
      %7572 = vmatmul.bf16.gmra.mxu0 %v7480
      %v7573 = vpop.f32.mrf.mxu0
      %v7574 = vadd.f32 0.0, %v7573
      %v7575 = vpop.f32.mrf.mxu0
      %v7576 = vadd.f32 0.0, %v7575
      %7577 = vmatmul.bf16.gmra.mxu0 %v7481
      %v7578 = vpop.f32.mrf.mxu0
      %v7579 = vadd.f32 0.0, %v7578
      %v7580 = vpop.f32.mrf.mxu0
      %v7581 = vadd.f32 0.0, %v7580
      %7582 = vmatmul.bf16.gmra.mxu0 %v7482
      %v7583 = vpop.f32.mrf.mxu0
      %v7584 = vadd.f32 0.0, %v7583
      %v7585 = vpop.f32.mrf.mxu0
      %v7586 = vadd.f32 0.0, %v7585
      %7587 = vmatmul.bf16.gmra.mxu0 %v7483
      %v7588 = vpop.f32.mrf.mxu0
      %v7589 = vadd.f32 0.0, %v7588
      %v7590 = vpop.f32.mrf.mxu0
      %v7591 = vadd.f32 0.0, %v7590
      %7592 = vmatmul.bf16.gmra.mxu0 %v7484
      %v7593 = vpop.f32.mrf.mxu0
      %v7594 = vadd.f32 0.0, %v7593
      %v7595 = vpop.f32.mrf.mxu0
      %v7596 = vadd.f32 0.0, %v7595
      %7597 = vmatmul.bf16.gmra.mxu0 %v7485
      %v7598 = vpop.f32.mrf.mxu0
      %v7599 = vadd.f32 0.0, %v7598
      %v7600 = vpop.f32.mrf.mxu0
      %v7601 = vadd.f32 0.0, %v7600
      %7602 = vmatmul.bf16.gmra.mxu0 %v7486
      %v7603 = vpop.f32.mrf.mxu0
      %v7604 = vadd.f32 0.0, %v7603
      %v7605 = vpop.f32.mrf.mxu0
      %v7606 = vadd.f32 0.0, %v7605
      %7607 = vmatmul.bf16.gmra.mxu0 %v7487
      %v7608 = vpop.f32.mrf.mxu0
      %v7609 = vadd.f32 0.0, %v7608
      %v7610 = vpop.f32.mrf.mxu0
      %v7611 = vadd.f32 0.0, %v7610
      %7612 = vmatmul.bf16.gmra.mxu0 %v7488
      %v7613 = vpop.f32.mrf.mxu0
      %v7614 = vadd.f32 0.0, %v7613
      %v7615 = vpop.f32.mrf.mxu0
      %v7616 = vadd.f32 0.0, %v7615
      %7617 = vmatmul.bf16.gmra.mxu0 %v7489
      %v7618 = vpop.f32.mrf.mxu0
      %v7619 = vadd.f32 0.0, %v7618
      %v7620 = vpop.f32.mrf.mxu0
      %v7621 = vadd.f32 0.0, %v7620
      %7622 = vmatmul.bf16.gmra.mxu0 %v7490
      %v7623 = vpop.f32.mrf.mxu0
      %v7624 = vadd.f32 0.0, %v7623
      %v7625 = vpop.f32.mrf.mxu0
      %v7626 = vadd.f32 0.0, %v7625
      %7627 = vmatmul.bf16.gmra.mxu0 %v7491
      %v7628 = vpop.f32.mrf.mxu0
      %v7629 = vadd.f32 0.0, %v7628
      %v7630 = vpop.f32.mrf.mxu0
      %v7631 = vadd.f32 0.0, %v7630
      %7632 = vmatmul.bf16.gmra.mxu0 %v7492
      %v7633 = vpop.f32.mrf.mxu0
      %v7634 = vadd.f32 0.0, %v7633
      %v7635 = vpop.f32.mrf.mxu0
      %v7636 = vadd.f32 0.0, %v7635
      %7637 = vmatmul.bf16.gmra.mxu0 %v7493
      %v7638 = vpop.f32.mrf.mxu0
      %v7639 = vadd.f32 0.0, %v7638
      %v7640 = vpop.f32.mrf.mxu0
      %v7641 = vadd.f32 0.0, %v7640
      %7642 = vmatmul.bf16.gmra.mxu0 %v7494
      %v7643 = vpop.f32.mrf.mxu0
      %v7644 = vadd.f32 0.0, %v7643
      %v7645 = vpop.f32.mrf.mxu0
      %v7646 = vadd.f32 0.0, %v7645
      %7647 = vdwg.mxu0
      %v7648 = vadd.f32 %v7334, %v7569
      %v7649 = vadd.f32 %v7335, %v7571
      %v7650 = vadd.f32 %v7336, %v7574
      %v7651 = vadd.f32 %v7337, %v7576
      %v7652 = vadd.f32 %v7338, %v7579
      %v7653 = vadd.f32 %v7339, %v7581
      %v7654 = vadd.f32 %v7340, %v7584
      %v7655 = vadd.f32 %v7341, %v7586
      %v7656 = vadd.f32 %v7342, %v7589
      %v7657 = vadd.f32 %v7343, %v7591
      %v7658 = vadd.f32 %v7344, %v7594
      %v7659 = vadd.f32 %v7345, %v7596
      %v7660 = vadd.f32 %v7346, %v7599
      %v7661 = vadd.f32 %v7347, %v7601
      %v7662 = vadd.f32 %v7348, %v7604
      %v7663 = vadd.f32 %v7349, %v7606
      %v7664 = vadd.f32 %v7350, %v7609
      %v7665 = vadd.f32 %v7351, %v7611
      %v7666 = vadd.f32 %v7352, %v7614
      %v7667 = vadd.f32 %v7353, %v7616
      %v7668 = vadd.f32 %v7354, %v7619
      %v7669 = vadd.f32 %v7355, %v7621
      %v7670 = vadd.f32 %v7356, %v7624
      %v7671 = vadd.f32 %v7357, %v7626
      %v7672 = vadd.f32 %v7358, %v7629
      %v7673 = vadd.f32 %v7359, %v7631
      %v7674 = vadd.f32 %v7360, %v7634
      %v7675 = vadd.f32 %v7361, %v7636
      %v7676 = vadd.f32 %v7362, %v7639
      %v7677 = vadd.f32 %v7363, %v7641
      %v7678 = vadd.f32 %v7364, %v7644
      %v7679 = vadd.f32 %v7365, %v7646
      %v7680 = vld [vmem:[%s6] sm:$0x1]
      %v7682 = vperm.slane %v7680, 0
      %v7684 = vmul.f32 %v7648, %v7682
      %v7685 = vmul.f32 %v7649, %v7682
      %v7686 = vmul.f32 %v7650, %v7682
      %v7687 = vmul.f32 %v7651, %v7682
      %v7688 = vmul.f32 %v7652, %v7682
      %v7689 = vmul.f32 %v7653, %v7682
      %v7690 = vmul.f32 %v7654, %v7682
      %v7691 = vmul.f32 %v7655, %v7682
      %v7692 = vmul.f32 %v7656, %v7682
      %v7693 = vmul.f32 %v7657, %v7682
      %v7694 = vmul.f32 %v7658, %v7682
      %v7695 = vmul.f32 %v7659, %v7682
      %v7696 = vmul.f32 %v7660, %v7682
      %v7697 = vmul.f32 %v7661, %v7682
      %v7698 = vmul.f32 %v7662, %v7682
      %v7699 = vmul.f32 %v7663, %v7682
      %v7700 = vmul.f32 %v7664, %v7682
      %v7701 = vmul.f32 %v7665, %v7682
      %v7702 = vmul.f32 %v7666, %v7682
      %v7703 = vmul.f32 %v7667, %v7682
      %v7704 = vmul.f32 %v7668, %v7682
      %v7705 = vmul.f32 %v7669, %v7682
      %v7706 = vmul.f32 %v7670, %v7682
      %v7707 = vmul.f32 %v7671, %v7682
      %v7708 = vmul.f32 %v7672, %v7682
      %v7709 = vmul.f32 %v7673, %v7682
      %v7710 = vmul.f32 %v7674, %v7682
      %v7711 = vmul.f32 %v7675, %v7682
      %v7712 = vmul.f32 %v7676, %v7682
      %v7713 = vmul.f32 %v7677, %v7682
      %v7714 = vmul.f32 %v7678, %v7682
      %v7715 = vmul.f32 %v7679, %v7682
      %v7716 = vld [vmem:[%s7] sm:$0x1]
      %v7718 = vperm.slane %v7716, 0
      %v7720 = vadd.f32 %v7684, %v7718
      %v7721 = vadd.f32 %v7685, %v7718
      %v7722 = vadd.f32 %v7686, %v7718
      %v7723 = vadd.f32 %v7687, %v7718
      %v7724 = vadd.f32 %v7688, %v7718
      %v7725 = vadd.f32 %v7689, %v7718
      %v7726 = vadd.f32 %v7690, %v7718
      %v7727 = vadd.f32 %v7691, %v7718
      %v7728 = vadd.f32 %v7692, %v7718
      %v7729 = vadd.f32 %v7693, %v7718
      %v7730 = vadd.f32 %v7694, %v7718
      %v7731 = vadd.f32 %v7695, %v7718
      %v7732 = vadd.f32 %v7696, %v7718
      %v7733 = vadd.f32 %v7697, %v7718
      %v7734 = vadd.f32 %v7698, %v7718
      %v7735 = vadd.f32 %v7699, %v7718
      %v7736 = vadd.f32 %v7700, %v7718
      %v7737 = vadd.f32 %v7701, %v7718
      %v7738 = vadd.f32 %v7702, %v7718
      %v7739 = vadd.f32 %v7703, %v7718
      %v7740 = vadd.f32 %v7704, %v7718
      %v7741 = vadd.f32 %v7705, %v7718
      %v7742 = vadd.f32 %v7706, %v7718
      %v7743 = vadd.f32 %v7707, %v7718
      %v7744 = vadd.f32 %v7708, %v7718
      %v7745 = vadd.f32 %v7709, %v7718
      %v7746 = vadd.f32 %v7710, %v7718
      %v7747 = vadd.f32 %v7711, %v7718
      %v7748 = vadd.f32 %v7712, %v7718
      %v7749 = vadd.f32 %v7713, %v7718
      %v7750 = vadd.f32 %v7714, %v7718
      %v7751 = vadd.f32 %v7715, %v7718
      %v7752 = vld [vmem:[%s320] sm:$0xff]
      %v7753 = vld [vmem:[%s320 + $0x8] sm:$0xff]
      %v7754 = vld [vmem:[%s320 + $0x10] sm:$0xff]
      %v7755 = vld [vmem:[%s320 + $0x18] sm:$0xff]
      %v7756 = vld [vmem:[%s320 + $0x20] sm:$0xff]
      %v7757 = vld [vmem:[%s320 + $0x28] sm:$0xff]
      %v7758 = vld [vmem:[%s320 + $0x30] sm:$0xff]
      %v7759 = vld [vmem:[%s320 + $0x38] sm:$0xff]
      %v7760 = vld [vmem:[%s320 + $0x40] sm:$0xff]
      %v7761 = vld [vmem:[%s320 + $0x48] sm:$0xff]
      %v7762 = vld [vmem:[%s320 + $0x50] sm:$0xff]
      %v7763 = vld [vmem:[%s320 + $0x58] sm:$0xff]
      %v7764 = vld [vmem:[%s320 + $0x60] sm:$0xff]
      %v7765 = vld [vmem:[%s320 + $0x68] sm:$0xff]
      %v7766 = vld [vmem:[%s320 + $0x70] sm:$0xff]
      %v7767 = vld [vmem:[%s320 + $0x78] sm:$0xff]
      %v7768 = vld [vmem:[%s320 + $0x80] sm:$0xff]
      %v7769 = vld [vmem:[%s320 + $0x88] sm:$0xff]
      %v7770 = vld [vmem:[%s320 + $0x90] sm:$0xff]
      %v7771 = vld [vmem:[%s320 + $0x98] sm:$0xff]
      %v7772 = vld [vmem:[%s320 + $0xa0] sm:$0xff]
      %v7773 = vld [vmem:[%s320 + $0xa8] sm:$0xff]
      %v7774 = vld [vmem:[%s320 + $0xb0] sm:$0xff]
      %v7775 = vld [vmem:[%s320 + $0xb8] sm:$0xff]
      %v7776 = vld [vmem:[%s320 + $0xc0] sm:$0xff]
      %v7777 = vld [vmem:[%s320 + $0xc8] sm:$0xff]
      %v7778 = vld [vmem:[%s320 + $0xd0] sm:$0xff]
      %v7779 = vld [vmem:[%s320 + $0xd8] sm:$0xff]
      %v7780 = vld [vmem:[%s320 + $0xe0] sm:$0xff]
      %v7781 = vld [vmem:[%s320 + $0xe8] sm:$0xff]
      %v7782 = vld [vmem:[%s320 + $0xf0] sm:$0xff]
      %v7783 = vld [vmem:[%s320 + $0xf8] sm:$0xff]
      %v7784 = vadd.f32 %v7720, %v7752
      %v7785 = vadd.f32 %v7721, %v7753
      %v7786 = vadd.f32 %v7722, %v7754
      %v7787 = vadd.f32 %v7723, %v7755
      %v7788 = vadd.f32 %v7724, %v7756
      %v7789 = vadd.f32 %v7725, %v7757
      %v7790 = vadd.f32 %v7726, %v7758
      %v7791 = vadd.f32 %v7727, %v7759
      %v7792 = vadd.f32 %v7728, %v7760
      %v7793 = vadd.f32 %v7729, %v7761
      %v7794 = vadd.f32 %v7730, %v7762
      %v7795 = vadd.f32 %v7731, %v7763
      %v7796 = vadd.f32 %v7732, %v7764
      %v7797 = vadd.f32 %v7733, %v7765
      %v7798 = vadd.f32 %v7734, %v7766
      %v7799 = vadd.f32 %v7735, %v7767
      %v7800 = vadd.f32 %v7736, %v7768
      %v7801 = vadd.f32 %v7737, %v7769
      %v7802 = vadd.f32 %v7738, %v7770
      %v7803 = vadd.f32 %v7739, %v7771
      %v7804 = vadd.f32 %v7740, %v7772
      %v7805 = vadd.f32 %v7741, %v7773
      %v7806 = vadd.f32 %v7742, %v7774
      %v7807 = vadd.f32 %v7743, %v7775
      %v7808 = vadd.f32 %v7744, %v7776
      %v7809 = vadd.f32 %v7745, %v7777
      %v7810 = vadd.f32 %v7746, %v7778
      %v7811 = vadd.f32 %v7747, %v7779
      %v7812 = vadd.f32 %v7748, %v7780
      %v7813 = vadd.f32 %v7749, %v7781
      %v7814 = vadd.f32 %v7750, %v7782
      %v7815 = vadd.f32 %v7751, %v7783
      %v7816 = vmax.f32 %v7784, 0.0
      %v7817 = vmax.f32 %v7785, 0.0
      %v7818 = vmax.f32 %v7786, 0.0
      %v7819 = vmax.f32 %v7787, 0.0
      %v7820 = vmax.f32 %v7788, 0.0
      %v7821 = vmax.f32 %v7789, 0.0
      %v7822 = vmax.f32 %v7790, 0.0
      %v7823 = vmax.f32 %v7791, 0.0
      %v7824 = vmax.f32 %v7792, 0.0
      %v7825 = vmax.f32 %v7793, 0.0
      %v7826 = vmax.f32 %v7794, 0.0
      %v7827 = vmax.f32 %v7795, 0.0
      %v7828 = vmax.f32 %v7796, 0.0
      %v7829 = vmax.f32 %v7797, 0.0
      %v7830 = vmax.f32 %v7798, 0.0
      %v7831 = vmax.f32 %v7799, 0.0
      %v7832 = vmax.f32 %v7800, 0.0
      %v7833 = vmax.f32 %v7801, 0.0
      %v7834 = vmax.f32 %v7802, 0.0
      %v7835 = vmax.f32 %v7803, 0.0
      %v7836 = vmax.f32 %v7804, 0.0
      %v7837 = vmax.f32 %v7805, 0.0
      %v7838 = vmax.f32 %v7806, 0.0
      %v7839 = vmax.f32 %v7807, 0.0
      %v7840 = vmax.f32 %v7808, 0.0
      %v7841 = vmax.f32 %v7809, 0.0
      %v7842 = vmax.f32 %v7810, 0.0
      %v7843 = vmax.f32 %v7811, 0.0
      %v7844 = vmax.f32 %v7812, 0.0
      %v7845 = vmax.f32 %v7813, 0.0
      %v7846 = vmax.f32 %v7814, 0.0
      %v7847 = vmax.f32 %v7815, 0.0
      %7848 = vst [vmem:[%s325] sm:$0xff] %v7816
      %7849 = vst [vmem:[%s325 + $0x8] sm:$0xff] %v7817
      %7850 = vst [vmem:[%s325 + $0x10] sm:$0xff] %v7818
      %7851 = vst [vmem:[%s325 + $0x18] sm:$0xff] %v7819
      %7852 = vst [vmem:[%s325 + $0x20] sm:$0xff] %v7820
      %7853 = vst [vmem:[%s325 + $0x28] sm:$0xff] %v7821
      %7854 = vst [vmem:[%s325 + $0x30] sm:$0xff] %v7822
      %7855 = vst [vmem:[%s325 + $0x38] sm:$0xff] %v7823
      %7856 = vst [vmem:[%s325 + $0x40] sm:$0xff] %v7824
      %7857 = vst [vmem:[%s325 + $0x48] sm:$0xff] %v7825
      %7858 = vst [vmem:[%s325 + $0x50] sm:$0xff] %v7826
      %7859 = vst [vmem:[%s325 + $0x58] sm:$0xff] %v7827
      %7860 = vst [vmem:[%s325 + $0x60] sm:$0xff] %v7828
      %7861 = vst [vmem:[%s325 + $0x68] sm:$0xff] %v7829
      %7862 = vst [vmem:[%s325 + $0x70] sm:$0xff] %v7830
      %7863 = vst [vmem:[%s325 + $0x78] sm:$0xff] %v7831
      %7864 = vst [vmem:[%s325 + $0x80] sm:$0xff] %v7832
      %7865 = vst [vmem:[%s325 + $0x88] sm:$0xff] %v7833
      %7866 = vst [vmem:[%s325 + $0x90] sm:$0xff] %v7834
      %7867 = vst [vmem:[%s325 + $0x98] sm:$0xff] %v7835
      %7868 = vst [vmem:[%s325 + $0xa0] sm:$0xff] %v7836
      %7869 = vst [vmem:[%s325 + $0xa8] sm:$0xff] %v7837
      %7870 = vst [vmem:[%s325 + $0xb0] sm:$0xff] %v7838
      %7871 = vst [vmem:[%s325 + $0xb8] sm:$0xff] %v7839
      %7872 = vst [vmem:[%s325 + $0xc0] sm:$0xff] %v7840
      %7873 = vst [vmem:[%s325 + $0xc8] sm:$0xff] %v7841
      %7874 = vst [vmem:[%s325 + $0xd0] sm:$0xff] %v7842
      %7875 = vst [vmem:[%s325 + $0xd8] sm:$0xff] %v7843
      %7876 = vst [vmem:[%s325 + $0xe0] sm:$0xff] %v7844
      %7877 = vst [vmem:[%s325 + $0xe8] sm:$0xff] %v7845
      %7878 = vst [vmem:[%s325 + $0xf0] sm:$0xff] %v7846
      %7879 = vst [vmem:[%s325 + $0xf8] sm:$0xff] %v7847
      %p7880 = scmp.lt.s32.totalorder %s19, 1
      %s7881 = scalar_select %p7880, %s19, 1
      %s7882 = smul.addr %s7881, 32
      %s7883 = smul.addr %s7882, 8
      %s7884 = scalar_lea.vmem %s8, %s7883
      // Predicated region
      $region53: #{residual_block_pallas.1} parent=51 // pred_check
        %p7885 = pneg %p215
      $region54: #{residual_block_pallas.1} parent=51 // pred_check_branch
        %7887 = sbr.rel (%p7885) target = $region56
      $region55: #{residual_block_pallas.1} parent=51 // pred_region
        _
      $region56: #{residual_block_pallas.1} parent=51 // pred_fallthru
        _
    $region52: #{residual_block_pallas.1} parent=5 // pred_fallthru
      _
    %p7888 = scmp.le.s32.totalorder 2, %s14
    // Predicated region
    $region57: #{residual_block_pallas.1} parent=5 // pred_check
      %p7889 = pneg %p7888
    $region58: #{residual_block_pallas.1} parent=5 // pred_check_branch
      %7891 = sbr.rel (%p7889) target = $region60
    $region59: #{residual_block_pallas.1} parent=5 // pred_region
      %s7892 = ssub.s32 %s14, 2
      // Predicated region
      $region61: #{residual_block_pallas.1} parent=59 // pred_check
        %p7893 = pneg %p221
      $region62: #{residual_block_pallas.1} parent=59 // pred_check_branch
        %7895 = sbr.rel (%p7893) target = $region64
      $region63: #{residual_block_pallas.1} parent=59 // pred_region
        %p7896 = scmp.lt.s32.totalorder %s20, 1
        %s7897 = scalar_select %p7896, %s20, 1
        %s7898 = smul.addr %s7897, 32
        %s7899 = smul.addr %s7898, 8
        %s7900 = scalar_lea.vmem %s8, %s7899
      $region64: #{residual_block_pallas.1} parent=59 // pred_fallthru
        _
    $region60: #{residual_block_pallas.1} parent=5 // pred_fallthru
      _
  $region6: #{residual_block_pallas.1} parent=0 // loop_footer
    %s18 = sadd.s32 1, %s14
  $region7: #{residual_block_pallas.1} parent=0 // loop_footer_branch
    %13 = sbr.rel target = $region3
  $region8: #{residual_block_pallas.1} parent=0 // loop_exit
    _

</llo_original>
